<compile_context>
chip_gen: v7x
topology: tpu7x:2x2x1
jax: 0.10.0
libtpu: 0.0.40
codegen_flags: <defaults>
</compile_context>

<pallas_src>
import functools

import jax
import jax.numpy as jnp
from jax.experimental import pallas as pl
from jax.experimental.pallas import tpu as pltpu


_VMEM_LIMIT = 32 * 1024 * 1024


# ----------------------------------------------------------------------------
# Pallas kernels
# ----------------------------------------------------------------------------
def _conv_tap_kernel(xh_ref, w_ref, b_ref, o_ref, acc_ref,
                     *, stride, kw, th, wo, lrelu, instnorm):
    """One (batch, output-row-block) tile; grid axis 2 reduces over the kh taps.

    xh_ref : (TH, Wp, Cin)    H-shifted + H-strided view of the padded input
    w_ref  : (kw, Cin, Cout)  weights of the current kh tap
    b_ref  : (1, Cout)
    o_ref  : (TH*Wo, Cout)
    acc_ref: (TH*Wo, Cout)    f32 accumulator, persists across the kh axis

    When `instnorm` is True the row block covers the FULL spatial extent of one
    image, so per-(n, c) InstanceNorm stats computed on the accumulator tile in
    the epilogue are exact; this fuses Conv + InstanceNorm + LeakyReLU into one
    kernel (no intermediate HBM round-trip).
    """
    ki = pl.program_id(2)

    @pl.when(ki == 0)
    def _():
        acc_ref[...] = jnp.zeros_like(acc_ref)

    acc = acc_ref[...]
    for kj in range(kw):                                  # unrolled kw taps
        if stride == 1:
            xs = xh_ref[:, kj:kj + wo, :]                 # (TH, Wo, Cin)
        else:
            # strided (sublane) load replaces the W half of im2col
            xs = xh_ref[:, pl.ds(kj, wo, stride=stride), :]
        if xs.shape[-1] == 1:
            # Cin == 1 (first layer): outer product on the VPU instead of a
            # degenerate K=1 MXU matmul.
            acc = acc + xs.reshape(th * wo, 1) * w_ref[kj]
        else:
            acc = acc + jnp.dot(xs.reshape(th * wo, -1), w_ref[kj],
                                preferred_element_type=jnp.float32)
    acc_ref[...] = acc

    @pl.when(ki == pl.num_programs(2) - 1)
    def _():
        y = acc + b_ref[...]
        if instnorm:
            # InstanceNorm2d(affine=False, eps=1e-5, biased var); stats over the
            # full spatial extent (axis 0 of the flattened (Ho*Wo, Cout) tile).
            mean = jnp.mean(y, axis=0, keepdims=True)
            ctr = y - mean
            var = jnp.mean(ctr * ctr, axis=0, keepdims=True)
            y = ctr * jax.lax.rsqrt(var + 1e-5)
        if lrelu:
            y = jnp.where(y >= 0.0, y, 0.2 * y)
        o_ref[...] = y


def _instnorm_lrelu_kernel(x_ref, o_ref):
    """Standalone InstanceNorm2d + LeakyReLU(0.2) fallback (used only when the
    conv output could not keep its full spatial extent in one row block).

    x_ref: (H*W, TC) — one image, one (<=128)-channel block; stats over axis 0.
    """
    x = x_ref[...]
    mean = jnp.mean(x, axis=0, keepdims=True)
    ctr = x - mean
    var = jnp.mean(ctr * ctr, axis=0, keepdims=True)
    y = ctr * jax.lax.rsqrt(var + 1e-5)
    o_ref[...] = jnp.where(y >= 0.0, y, 0.2 * y)


# ----------------------------------------------------------------------------
# Wrappers (glue: padding, view stacking, pallas_call plumbing)
# ----------------------------------------------------------------------------
def _pick_row_block(ho, wo, wp, cin, cout, prefer_full=False):
    """Largest output-row block whose tiles stay within a per-tile byte budget.

    With `prefer_full` (InstanceNorm fusion requested) the budget is raised so
    the full spatial extent is kept in one block whenever it comfortably fits.
    """
    bytes_per_row = 4 * max(wp * cin, 2 * wo * cout)
    budget = (8 if prefer_full else 2) * 1024 * 1024
    th = max(1, budget // max(1, bytes_per_row))
    th = min(ho, th)
    # keep the flattened output row-block (TH*Wo) sublane-aligned when tiling Ho
    while th < ho and (th * wo) % 8 != 0:
        th += 1
    return th


def conv2d_pallas(x_nhwc, w_oihw, b, *, stride, padding, lrelu, instnorm=False):
    """Conv2d (cross-correlation, same semantics as nn.Conv2d) + bias
    (+ optionally fused InstanceNorm2d and/or LeakyReLU) as a tiled Pallas kernel.

    Returns (output NHWC, fused_instnorm_flag).
    """
    N, H, W, Cin = x_nhwc.shape
    Cout, _, kh, kw = w_oihw.shape
    Ho = (H + 2 * padding - kh) // stride + 1
    Wo = (W + 2 * padding - kw) // stride + 1
    Wp = W + 2 * padding

    xp = jnp.pad(x_nhwc, ((0, 0), (padding, padding), (padding, padding), (0, 0)))
    # kh H-shifted, H-strided views: (kh, N, Ho, Wp, Cin).  Replaces the kh*kw
    # im2col materialization; the kw taps never touch HBM.
    xh = jnp.stack(
        [jax.lax.slice(xp, (0, ki, 0, 0),
                       (N, ki + (Ho - 1) * stride + 1, Wp, Cin),
                       (1, stride, 1, 1))
         for ki in range(kh)], axis=0)

    # weights (Cout, Cin, kh, kw) -> (kh, kw, Cin, Cout)
    wt = jnp.transpose(w_oihw, (2, 3, 1, 0))

    # Lane-dense output for the final Cout=1 conv: pad to 128 columns, slice
    # channel 0 outside the kernel.
    if Cout < 8:
        Cout_p = 128
        wt = jnp.pad(wt, ((0, 0), (0, 0), (0, 0), (0, Cout_p - Cout)))
        bp = jnp.pad(b, (0, Cout_p - Cout))
    else:
        Cout_p = Cout
        bp = b
    bp = bp.reshape(1, Cout_p)

    TH = _pick_row_block(Ho, Wo, Wp, Cin, Cout_p, prefer_full=instnorm)
    nH = (Ho + TH - 1) // TH
    rows = TH * Wo

    # Fuse InstanceNorm (+ trailing LeakyReLU) only when the row block holds the
    # full spatial extent, so per-(n, c) stats on the tile are exact.
    fuse_norm = instnorm and nH == 1 and Cout_p == Cout
    apply_lrelu = lrelu and (fuse_norm or not instnorm)

    kernel = functools.partial(_conv_tap_kernel, stride=stride, kw=kw,
                               th=TH, wo=Wo, lrelu=apply_lrelu,
                               instnorm=fuse_norm)

    flops = 2 * N * Ho * Wo * kh * kw * Cin * Cout_p
    if fuse_norm:
        flops += 8 * N * Ho * Wo * Cout_p
    bytes_accessed = 4 * (xh.size + wt.size + N * Ho * Wo * Cout_p)

    out = pl.pallas_call(
        kernel,
        out_shape=jax.ShapeDtypeStruct((N, Ho * Wo, Cout_p), jnp.float32),
        grid_spec=pltpu.PrefetchScalarGridSpec(
            num_scalar_prefetch=0,
            grid=(N, nH, kh),
            in_specs=[
                pl.BlockSpec((None, None, TH, Wp, Cin),
                             lambda n, h, ki: (ki, n, h, 0, 0)),
                pl.BlockSpec((None, kw, Cin, Cout_p),
                             lambda n, h, ki: (ki, 0, 0, 0)),
                pl.BlockSpec((1, Cout_p), lambda n, h, ki: (0, 0)),
            ],
            out_specs=pl.BlockSpec((None, rows, Cout_p),
                                   lambda n, h, ki: (n, h, 0)),
            scratch_shapes=[pltpu.VMEM((rows, Cout_p), jnp.float32)],
        ),
        compiler_params=pltpu.CompilerParams(
            dimension_semantics=("parallel", "parallel", "arbitrary"),
            vmem_limit_bytes=_VMEM_LIMIT),
        cost_estimate=pl.CostEstimate(
            flops=flops,
            transcendentals=(N * Cout_p) if fuse_norm else 0,
            bytes_accessed=bytes_accessed),
    )(xh, wt, bp)

    out = out.reshape(N, Ho, Wo, Cout_p)
    if Cout_p != Cout:
        out = out[..., :Cout]
    return out, fuse_norm


def instnorm_lrelu_pallas(x_nhwc):
    """Fallback InstanceNorm2d + LeakyReLU(0.2) kernel (only used when the conv
    could not fuse the norm, i.e. its output was row-tiled)."""
    N, H, W, C = x_nhwc.shape
    HW = H * W
    x = x_nhwc.reshape(N, HW, C)
    TC = C if C <= 128 else 128
    assert C % TC == 0
    out = pl.pallas_call(
        _instnorm_lrelu_kernel,
        out_shape=jax.ShapeDtypeStruct((N, HW, C), jnp.float32),
        grid_spec=pltpu.PrefetchScalarGridSpec(
            num_scalar_prefetch=0,
            grid=(N, C // TC),
            in_specs=[pl.BlockSpec((None, HW, TC), lambda n, c: (n, 0, c))],
            out_specs=pl.BlockSpec((None, HW, TC), lambda n, c: (n, 0, c)),
        ),
        compiler_params=pltpu.CompilerParams(
            dimension_semantics=("parallel", "parallel"),
            vmem_limit_bytes=_VMEM_LIMIT),
        cost_estimate=pl.CostEstimate(flops=10 * N * HW * C,
                                      transcendentals=N * C,
                                      bytes_accessed=8 * N * HW * C),
    )(x)
    return out.reshape(N, H, W, C)


def conv_block(x, w, b, *, stride, padding, lrelu=False, instnorm=False):
    """Conv (+ optional InstanceNorm + LeakyReLU), fused into one kernel when
    possible, otherwise conv kernel followed by the norm/activation kernel."""
    y, fused_norm = conv2d_pallas(x, w, b, stride=stride, padding=padding,
                                  lrelu=lrelu, instnorm=instnorm)
    if instnorm and not fused_norm:
        y = instnorm_lrelu_pallas(y)
    return y


# ----------------------------------------------------------------------------
# Parameter construction (deterministic, synthetic)
# ----------------------------------------------------------------------------
def spectral_normalize(w, n_iter=30, eps=1e-12):
    """w / sigma_max(w.reshape(Cout, -1)), deterministic power iteration."""
    # TODO(synk): PyTorch's spectral_norm does one power-iteration step per
    # forward with a persistent random `u`; here we use the converged sigma at
    # parameter-setup time (same value in the limit).
    cout = w.shape[0]
    wmat = w.reshape(cout, -1)
    u = jnp.ones((cout,), jnp.float32) / jnp.sqrt(jnp.float32(cout))
    for _ in range(n_iter):
        v = wmat.T @ u
        v = v / (jnp.linalg.norm(v) + eps)
        u = wmat @ v
        u = u / (jnp.linalg.norm(u) + eps)
    sigma = u @ (wmat @ v)
    return w / sigma


def make_params(key, in_channels=1):
    layer_cfg = [
        (64, in_channels, 4),
        (128, 64, 4),
        (256, 128, 4),
        (512, 256, 4),
        (1, 512, 4),
    ]
    params = []
    for i, (cout, cin, k) in enumerate(layer_cfg):
        kw_, kb_ = jax.random.split(jax.random.fold_in(key, i))
        fan_in = cin * k * k
        w = jax.random.normal(kw_, (cout, cin, k, k), jnp.float32) / jnp.sqrt(fan_in)
        b = 0.01 * jax.random.normal(kb_, (cout,), jnp.float32)
        params.append((spectral_normalize(w), b))
    return params


# ----------------------------------------------------------------------------
# Forward pass
# ----------------------------------------------------------------------------
def mri_discriminator_forward(x_nchw, params):
    x = jnp.transpose(x_nchw, (0, 2, 3, 1))  # NCHW -> NHWC

    (w1, b1), (w2, b2), (w3, b3), (w4, b4), (w5, b5) = params

    x = conv_block(x, w1, b1, stride=2, padding=1, lrelu=True, instnorm=False)
    x = conv_block(x, w2, b2, stride=2, padding=1, lrelu=True, instnorm=True)
    x = conv_block(x, w3, b3, stride=2, padding=1, lrelu=True, instnorm=True)
    x = conv_block(x, w4, b4, stride=1, padding=1, lrelu=True, instnorm=True)
    x = conv_block(x, w5, b5, stride=1, padding=1, lrelu=False, instnorm=False)

    return jnp.transpose(x, (0, 3, 1, 2))  # NHWC -> NCHW


# ----------------------------------------------------------------------------
# Pure-JAX reference (correctness check)
# ----------------------------------------------------------------------------
def _ref_conv(x_nchw, w, b, stride, padding):
    y = jax.lax.conv_general_dilated(
        x_nchw, w, (stride, stride), [(padding, padding)] * 2,
        dimension_numbers=("NCHW", "OIHW", "NCHW"))
    return y + b[None, :, None, None]


def _ref_instnorm_lrelu(x_nchw):
    mean = jnp.mean(x_nchw, axis=(2, 3), keepdims=True)
    var = jnp.mean((x_nchw - mean) ** 2, axis=(2, 3), keepdims=True)
    y = (x_nchw - mean) * jax.lax.rsqrt(var + 1e-5)
    return jnp.where(y >= 0.0, y, 0.2 * y)


def reference_forward(x, params):
    (w1, b1), (w2, b2), (w3, b3), (w4, b4), (w5, b5) = params
    h = _ref_conv(x, w1, b1, 2, 1)
    h = jnp.where(h >= 0.0, h, 0.2 * h)
    h = _ref_instnorm_lrelu(_ref_conv(h, w2, b2, 2, 1))
    h = _ref_instnorm_lrelu(_ref_conv(h, w3, b3, 2, 1))
    h = _ref_instnorm_lrelu(_ref_conv(h, w4, b4, 1, 1))
    return _ref_conv(h, w5, b5, 1, 1)


# ----------------------------------------------------------------------------
if __name__ == "__main__":
    key = jax.random.PRNGKey(0)
    k_x, k_p = jax.random.split(key)

    # NCHW input, matching the PyTorch module (in_channels=1).
    # 32x32 is the smallest power-of-two spatial size that survives all 5 convs.
    x = jax.random.normal(k_x, (2, 1, 32, 32), jnp.float32)
    params = make_params(k_p, in_channels=1)

    fwd = jax.jit(lambda xx: mri_discriminator_forward(xx, params))
    out = jax.block_until_ready(fwd(x))
    assert out.shape == (2, 1, 2, 2), out.shape

    ref = reference_forward(x, params)
    err = float(jnp.max(jnp.abs(out - ref)))
    assert jnp.allclose(out, ref, rtol=1e-3, atol=1e-3), err

    print("KERNEL_OK")
</pallas_src>

<mosaic_0001>
module attributes {stable_mosaic.version = 11 : i64} {
  func.func @_conv_tap_kernel(%arg0: i32, %arg1: i32, %arg2: i32, %arg3: memref<1x1x16x34x1xf32, #tpu.memory_space<vmem>>, %arg4: memref<1x4x1x64xf32, #tpu.memory_space<vmem>>, %arg5: memref<1x64xf32, #tpu.memory_space<vmem>>, %arg6: memref<1x256x64xf32, #tpu.memory_space<vmem>>, %arg7: memref<256x64xf32, #tpu.memory_space<vmem>>) attributes {dimension_semantics = [#tpu.dimension_semantics<parallel>, #tpu.dimension_semantics<parallel>, #tpu.dimension_semantics<arbitrary>], iteration_bounds = array<i64: 2, 1, 4>, scalar_prefetch = 0 : i64, scratch_operands = 1 : i64, tpu.core_type = #tpu.core_type<tc>, window_params = [{transform_indices = @transform_0, window_bounds = array<i64: 1, 1, 16, 34, 1>}, {transform_indices = @transform_1, window_bounds = array<i64: 1, 4, 1, 64>}, {pipeline_mode = #tpu.pipeline_mode<synchronous>, transform_indices = @transform_2, window_bounds = array<i64: 1, 64>}, {transform_indices = @transform_3, window_bounds = array<i64: 1, 256, 64>}]} {
    %c0_i32 = arith.constant 0 : i32
    %0 = arith.cmpi eq, %arg2, %c0_i32 : i32
    %1 = arith.extui %0 : i1 to i32
    %c0_i32_0 = arith.constant 0 : i32
    %2 = arith.cmpi ne, %1, %c0_i32_0 : i32
    scf.if %2 {
      %cst = arith.constant 0.000000e+00 : f32
      %44 = vector.broadcast %cst : f32 to vector<256x64xf32>
      %c0_38 = arith.constant 0 : index
      %c0_39 = arith.constant 0 : index
      %45 = vector.load %arg7[%c0_38, %c0_39] : memref<256x64xf32, #tpu.memory_space<vmem>>, vector<256x64xf32>
      tpu.vector_store %arg7[%c0_38, %c0_39], %44 {strides = array<i32>} : memref<256x64xf32, #tpu.memory_space<vmem>>, vector<256x64xf32>,
    } else {
    }
    %c0 = arith.constant 0 : index
    %c0_1 = arith.constant 0 : index
    %3 = vector.load %arg7[%c0, %c0_1] : memref<256x64xf32, #tpu.memory_space<vmem>>, vector<256x64xf32>
    %c0_2 = arith.constant 0 : index
    %c0_3 = arith.constant 0 : index
    %c0_4 = arith.constant 0 : index
    %c0_5 = arith.constant 0 : index
    %c0_6 = arith.constant 0 : index
    %4 = tpu.strided_load %arg3[%c0_2, %c0_3, %c0_4, %c0_5, %c0_6] {strides = array<i32: 1, 1, 1, 2, 1>} : memref<1x1x16x34x1xf32, #tpu.memory_space<vmem>>, vector<1x1x16x16x1xf32>
    %5 = vector.shape_cast %4 : vector<1x1x16x16x1xf32> to vector<16x16x1xf32>
    %6 = vector.shape_cast %5 : vector<16x16x1xf32> to vector<256x1xf32>
    %c0_7 = arith.constant 0 : index
    %c0_8 = arith.constant 0 : index
    %c0_9 = arith.constant 0 : index
    %c0_10 = arith.constant 0 : index
    %7 = vector.load %arg4[%c0_7, %c0_8, %c0_9, %c0_10] : memref<1x4x1x64xf32, #tpu.memory_space<vmem>>, vector<1x1x1x64xf32>
    %8 = vector.shape_cast %7 : vector<1x1x1x64xf32> to vector<1x64xf32>
    %9 = vector.broadcast %6 : vector<256x1xf32> to vector<256x64xf32>
    %10 = vector.broadcast %8 : vector<1x64xf32> to vector<256x64xf32>
    %11 = arith.mulf %9, %10 : vector<256x64xf32>
    %12 = arith.addf %3, %11 : vector<256x64xf32>
    %c0_11 = arith.constant 0 : index
    %c0_12 = arith.constant 0 : index
    %c0_13 = arith.constant 0 : index
    %c1 = arith.constant 1 : index
    %c0_14 = arith.constant 0 : index
    %13 = tpu.strided_load %arg3[%c0_11, %c0_12, %c0_13, %c1, %c0_14] {strides = array<i32: 1, 1, 1, 2, 1>} : memref<1x1x16x34x1xf32, #tpu.memory_space<vmem>>, vector<1x1x16x16x1xf32>
    %14 = vector.shape_cast %13 : vector<1x1x16x16x1xf32> to vector<16x16x1xf32>
    %15 = vector.shape_cast %14 : vector<16x16x1xf32> to vector<256x1xf32>
    %c0_15 = arith.constant 0 : index
    %c1_16 = arith.constant 1 : index
    %c0_17 = arith.constant 0 : index
    %c0_18 = arith.constant 0 : index
    %16 = vector.load %arg4[%c0_15, %c1_16, %c0_17, %c0_18] : memref<1x4x1x64xf32, #tpu.memory_space<vmem>>, vector<1x1x1x64xf32>
    %17 = vector.shape_cast %16 : vector<1x1x1x64xf32> to vector<1x64xf32>
    %18 = vector.broadcast %15 : vector<256x1xf32> to vector<256x64xf32>
    %19 = vector.broadcast %17 : vector<1x64xf32> to vector<256x64xf32>
    %20 = arith.mulf %18, %19 : vector<256x64xf32>
    %21 = arith.addf %12, %20 : vector<256x64xf32>
    %c0_19 = arith.constant 0 : index
    %c0_20 = arith.constant 0 : index
    %c0_21 = arith.constant 0 : index
    %c2 = arith.constant 2 : index
    %c0_22 = arith.constant 0 : index
    %22 = tpu.strided_load %arg3[%c0_19, %c0_20, %c0_21, %c2, %c0_22] {strides = array<i32: 1, 1, 1, 2, 1>} : memref<1x1x16x34x1xf32, #tpu.memory_space<vmem>>, vector<1x1x16x16x1xf32>
    %23 = vector.shape_cast %22 : vector<1x1x16x16x1xf32> to vector<16x16x1xf32>
    %24 = vector.shape_cast %23 : vector<16x16x1xf32> to vector<256x1xf32>
    %c0_23 = arith.constant 0 : index
    %c2_24 = arith.constant 2 : index
    %c0_25 = arith.constant 0 : index
    %c0_26 = arith.constant 0 : index
    %25 = vector.load %arg4[%c0_23, %c2_24, %c0_25, %c0_26] : memref<1x4x1x64xf32, #tpu.memory_space<vmem>>, vector<1x1x1x64xf32>
    %26 = vector.shape_cast %25 : vector<1x1x1x64xf32> to vector<1x64xf32>
    %27 = vector.broadcast %24 : vector<256x1xf32> to vector<256x64xf32>
    %28 = vector.broadcast %26 : vector<1x64xf32> to vector<256x64xf32>
    %29 = arith.mulf %27, %28 : vector<256x64xf32>
    %30 = arith.addf %21, %29 : vector<256x64xf32>
    %c0_27 = arith.constant 0 : index
    %c0_28 = arith.constant 0 : index
    %c0_29 = arith.constant 0 : index
    %c3 = arith.constant 3 : index
    %c0_30 = arith.constant 0 : index
    %31 = tpu.strided_load %arg3[%c0_27, %c0_28, %c0_29, %c3, %c0_30] {strides = array<i32: 1, 1, 1, 2, 1>} : memref<1x1x16x34x1xf32, #tpu.memory_space<vmem>>, vector<1x1x16x16x1xf32>
    %32 = vector.shape_cast %31 : vector<1x1x16x16x1xf32> to vector<16x16x1xf32>
    %33 = vector.shape_cast %32 : vector<16x16x1xf32> to vector<256x1xf32>
    %c0_31 = arith.constant 0 : index
    %c3_32 = arith.constant 3 : index
    %c0_33 = arith.constant 0 : index
    %c0_34 = arith.constant 0 : index
    %34 = vector.load %arg4[%c0_31, %c3_32, %c0_33, %c0_34] : memref<1x4x1x64xf32, #tpu.memory_space<vmem>>, vector<1x1x1x64xf32>
    %35 = vector.shape_cast %34 : vector<1x1x1x64xf32> to vector<1x64xf32>
    %36 = vector.broadcast %33 : vector<256x1xf32> to vector<256x64xf32>
    %37 = vector.broadcast %35 : vector<1x64xf32> to vector<256x64xf32>
    %38 = arith.mulf %36, %37 : vector<256x64xf32>
    %39 = arith.addf %30, %38 : vector<256x64xf32>
    %c0_35 = arith.constant 0 : index
    %c0_36 = arith.constant 0 : index
    %40 = vector.load %arg7[%c0_35, %c0_36] : memref<256x64xf32, #tpu.memory_space<vmem>>, vector<256x64xf32>
    tpu.vector_store %arg7[%c0_35, %c0_36], %39 {strides = array<i32>} : memref<256x64xf32, #tpu.memory_space<vmem>>, vector<256x64xf32>,
    %c3_i32 = arith.constant 3 : i32
    %41 = arith.cmpi eq, %arg2, %c3_i32 : i32
    %42 = arith.extui %41 : i1 to i32
    %c0_i32_37 = arith.constant 0 : i32
    %43 = arith.cmpi ne, %42, %c0_i32_37 : i32
    scf.if %43 {
      %c0_38 = arith.constant 0 : index
      %c0_39 = arith.constant 0 : index
      %44 = vector.load %arg5[%c0_38, %c0_39] : memref<1x64xf32, #tpu.memory_space<vmem>>, vector<1x64xf32>
      %45 = vector.broadcast %44 : vector<1x64xf32> to vector<256x64xf32>
      %46 = arith.addf %39, %45 : vector<256x64xf32>
      %cst = arith.constant 0.000000e+00 : f32
      %47 = vector.broadcast %cst : f32 to vector<256x64xf32>
      %48 = arith.cmpf oge, %46, %47 : vector<256x64xf32>
      %cst_40 = arith.constant 2.000000e-01 : f32
      %49 = vector.broadcast %cst_40 : f32 to vector<256x64xf32>
      %50 = arith.mulf %49, %46 : vector<256x64xf32>
      %51 = arith.select %48, %46, %50 : vector<256x64xi1>, vector<256x64xf32>
      %c0_41 = arith.constant 0 : index
      %c0_42 = arith.constant 0 : index
      %c0_43 = arith.constant 0 : index
      %52 = vector.load %arg6[%c0_41, %c0_42, %c0_43] : memref<1x256x64xf32, #tpu.memory_space<vmem>>, vector<1x256x64xf32>
      %53 = vector.shape_cast %52 : vector<1x256x64xf32> to vector<256x64xf32>
      %54 = vector.shape_cast %51 : vector<256x64xf32> to vector<1x256x64xf32>
      tpu.vector_store %arg6[%c0_41, %c0_42, %c0_43], %54 {strides = array<i32>} : memref<1x256x64xf32, #tpu.memory_space<vmem>>, vector<1x256x64xf32>,
    } else {
    }
    return
  }
  func.func @transform_0(%arg0: i32, %arg1: i32, %arg2: i32) -> (i32, i32, i32, i32, i32) {
    %c0_i32 = arith.constant 0 : i32
    %c0_i32_0 = arith.constant 0 : i32
    %c0_i32_1 = arith.constant 0 : i32
    return %arg2, %arg0, %arg1, %c0_i32, %c0_i32_0 : i32, i32, i32, i32, i32
  }
  func.func @transform_1(%arg0: i32, %arg1: i32, %arg2: i32) -> (i32, i32, i32, i32) {
    %c0_i32 = arith.constant 0 : i32
    %c0_i32_0 = arith.constant 0 : i32
    %c0_i32_1 = arith.constant 0 : i32
    %c0_i32_2 = arith.constant 0 : i32
    return %arg2, %c0_i32, %c0_i32_0, %c0_i32_1 : i32, i32, i32, i32
  }
  func.func @transform_2(%arg0: i32, %arg1: i32, %arg2: i32) -> (i32, i32) {
    %c0_i32 = arith.constant 0 : i32
    %c0_i32_0 = arith.constant 0 : i32
    %c0_i32_1 = arith.constant 0 : i32
    return %c0_i32, %c0_i32_0 : i32, i32
  }
  func.func @transform_3(%arg0: i32, %arg1: i32, %arg2: i32) -> (i32, i32, i32) {
    %c0_i32 = arith.constant 0 : i32
    %c0_i32_0 = arith.constant 0 : i32
    return %arg0, %arg1, %c0_i32 : i32, i32, i32
  }
}

module attributes {stable_mosaic.version = 11 : i64} {
  func.func @_conv_tap_kernel(%arg0: i32, %arg1: i32, %arg2: i32, %arg3: memref<1x1x8x18x64xf32, #tpu.memory_space<vmem>>, %arg4: memref<1x4x64x128xf32, #tpu.memory_space<vmem>>, %arg5: memref<1x128xf32, #tpu.memory_space<vmem>>, %arg6: memref<1x64x128xf32, #tpu.memory_space<vmem>>, %arg7: memref<64x128xf32, #tpu.memory_space<vmem>>) attributes {dimension_semantics = [#tpu.dimension_semantics<parallel>, #tpu.dimension_semantics<parallel>, #tpu.dimension_semantics<arbitrary>], iteration_bounds = array<i64: 2, 1, 4>, scalar_prefetch = 0 : i64, scratch_operands = 1 : i64, tpu.core_type = #tpu.core_type<tc>, window_params = [{transform_indices = @transform_0, window_bounds = array<i64: 1, 1, 8, 18, 64>}, {transform_indices = @transform_1, window_bounds = array<i64: 1, 4, 64, 128>}, {pipeline_mode = #tpu.pipeline_mode<synchronous>, transform_indices = @transform_2, window_bounds = array<i64: 1, 128>}, {transform_indices = @transform_3, window_bounds = array<i64: 1, 64, 128>}]} {
    %c0_i32 = arith.constant 0 : i32
    %0 = arith.cmpi eq, %arg2, %c0_i32 : i32
    %1 = arith.extui %0 : i1 to i32
    %c0_i32_0 = arith.constant 0 : i32
    %2 = arith.cmpi ne, %1, %c0_i32_0 : i32
    scf.if %2 {
      %cst_41 = arith.constant 0.000000e+00 : f32
      %36 = vector.broadcast %cst_41 : f32 to vector<64x128xf32>
      %c0_42 = arith.constant 0 : index
      %c0_43 = arith.constant 0 : index
      %37 = vector.load %arg7[%c0_42, %c0_43] : memref<64x128xf32, #tpu.memory_space<vmem>>, vector<64x128xf32>
      tpu.vector_store %arg7[%c0_42, %c0_43], %36 {strides = array<i32>} : memref<64x128xf32, #tpu.memory_space<vmem>>, vector<64x128xf32>,
    } else {
    }
    %c0 = arith.constant 0 : index
    %c0_1 = arith.constant 0 : index
    %3 = vector.load %arg7[%c0, %c0_1] : memref<64x128xf32, #tpu.memory_space<vmem>>, vector<64x128xf32>
    %c0_2 = arith.constant 0 : index
    %c0_3 = arith.constant 0 : index
    %c0_4 = arith.constant 0 : index
    %c0_5 = arith.constant 0 : index
    %c0_6 = arith.constant 0 : index
    %4 = tpu.strided_load %arg3[%c0_2, %c0_3, %c0_4, %c0_5, %c0_6] {strides = array<i32: 1, 1, 1, 2, 1>} : memref<1x1x8x18x64xf32, #tpu.memory_space<vmem>>, vector<1x1x8x8x64xf32>
    %5 = vector.shape_cast %4 : vector<1x1x8x8x64xf32> to vector<8x8x64xf32>
    %6 = vector.shape_cast %5 : vector<8x8x64xf32> to vector<64x64xf32>
    %c0_7 = arith.constant 0 : index
    %c0_8 = arith.constant 0 : index
    %c0_9 = arith.constant 0 : index
    %c0_10 = arith.constant 0 : index
    %7 = vector.load %arg4[%c0_7, %c0_8, %c0_9, %c0_10] : memref<1x4x64x128xf32, #tpu.memory_space<vmem>>, vector<1x1x64x128xf32>
    %8 = vector.shape_cast %7 : vector<1x1x64x128xf32> to vector<64x128xf32>
    %cst = arith.constant dense<0.000000e+00> : vector<64x128xf32>
    %9 = tpu.matmul %6, %8, %cst {dimension_numbers = #tpu.dot_dimension_numbers<[1], [0], [0], [1], [0, 0, 1, 1], [], []>} : vector<64x64xf32>, vector<64x128xf32>, vector<64x128xf32> -> vector<64x128xf32>
    %10 = arith.addf %3, %9 : vector<64x128xf32>
    %c0_11 = arith.constant 0 : index
    %c0_12 = arith.constant 0 : index
    %c0_13 = arith.constant 0 : index
    %c1 = arith.constant 1 : index
    %c0_14 = arith.constant 0 : index
    %11 = tpu.strided_load %arg3[%c0_11, %c0_12, %c0_13, %c1, %c0_14] {strides = array<i32: 1, 1, 1, 2, 1>} : memref<1x1x8x18x64xf32, #tpu.memory_space<vmem>>, vector<1x1x8x8x64xf32>
    %12 = vector.shape_cast %11 : vector<1x1x8x8x64xf32> to vector<8x8x64xf32>
    %13 = vector.shape_cast %12 : vector<8x8x64xf32> to vector<64x64xf32>
    %c0_15 = arith.constant 0 : index
    %c1_16 = arith.constant 1 : index
    %c0_17 = arith.constant 0 : index
    %c0_18 = arith.constant 0 : index
    %14 = vector.load %arg4[%c0_15, %c1_16, %c0_17, %c0_18] : memref<1x4x64x128xf32, #tpu.memory_space<vmem>>, vector<1x1x64x128xf32>
    %15 = vector.shape_cast %14 : vector<1x1x64x128xf32> to vector<64x128xf32>
    %cst_19 = arith.constant dense<0.000000e+00> : vector<64x128xf32>
    %16 = tpu.matmul %13, %15, %cst_19 {dimension_numbers = #tpu.dot_dimension_numbers<[1], [0], [0], [1], [0, 0, 1, 1], [], []>} : vector<64x64xf32>, vector<64x128xf32>, vector<64x128xf32> -> vector<64x128xf32>
    %17 = arith.addf %10, %16 : vector<64x128xf32>
    %c0_20 = arith.constant 0 : index
    %c0_21 = arith.constant 0 : index
    %c0_22 = arith.constant 0 : index
    %c2 = arith.constant 2 : index
    %c0_23 = arith.constant 0 : index
    %18 = tpu.strided_load %arg3[%c0_20, %c0_21, %c0_22, %c2, %c0_23] {strides = array<i32: 1, 1, 1, 2, 1>} : memref<1x1x8x18x64xf32, #tpu.memory_space<vmem>>, vector<1x1x8x8x64xf32>
    %19 = vector.shape_cast %18 : vector<1x1x8x8x64xf32> to vector<8x8x64xf32>
    %20 = vector.shape_cast %19 : vector<8x8x64xf32> to vector<64x64xf32>
    %c0_24 = arith.constant 0 : index
    %c2_25 = arith.constant 2 : index
    %c0_26 = arith.constant 0 : index
    %c0_27 = arith.constant 0 : index
    %21 = vector.load %arg4[%c0_24, %c2_25, %c0_26, %c0_27] : memref<1x4x64x128xf32, #tpu.memory_space<vmem>>, vector<1x1x64x128xf32>
    %22 = vector.shape_cast %21 : vector<1x1x64x128xf32> to vector<64x128xf32>
    %cst_28 = arith.constant dense<0.000000e+00> : vector<64x128xf32>
    %23 = tpu.matmul %20, %22, %cst_28 {dimension_numbers = #tpu.dot_dimension_numbers<[1], [0], [0], [1], [0, 0, 1, 1], [], []>} : vector<64x64xf32>, vector<64x128xf32>, vector<64x128xf32> -> vector<64x128xf32>
    %24 = arith.addf %17, %23 : vector<64x128xf32>
    %c0_29 = arith.constant 0 : index
    %c0_30 = arith.constant 0 : index
    %c0_31 = arith.constant 0 : index
    %c3 = arith.constant 3 : index
    %c0_32 = arith.constant 0 : index
    %25 = tpu.strided_load %arg3[%c0_29, %c0_30, %c0_31, %c3, %c0_32] {strides = array<i32: 1, 1, 1, 2, 1>} : memref<1x1x8x18x64xf32, #tpu.memory_space<vmem>>, vector<1x1x8x8x64xf32>
    %26 = vector.shape_cast %25 : vector<1x1x8x8x64xf32> to vector<8x8x64xf32>
    %27 = vector.shape_cast %26 : vector<8x8x64xf32> to vector<64x64xf32>
    %c0_33 = arith.constant 0 : index
    %c3_34 = arith.constant 3 : index
    %c0_35 = arith.constant 0 : index
    %c0_36 = arith.constant 0 : index
    %28 = vector.load %arg4[%c0_33, %c3_34, %c0_35, %c0_36] : memref<1x4x64x128xf32, #tpu.memory_space<vmem>>, vector<1x1x64x128xf32>
    %29 = vector.shape_cast %28 : vector<1x1x64x128xf32> to vector<64x128xf32>
    %cst_37 = arith.constant dense<0.000000e+00> : vector<64x128xf32>
    %30 = tpu.matmul %27, %29, %cst_37 {dimension_numbers = #tpu.dot_dimension_numbers<[1], [0], [0], [1], [0, 0, 1, 1], [], []>} : vector<64x64xf32>, vector<64x128xf32>, vector<64x128xf32> -> vector<64x128xf32>
    %31 = arith.addf %24, %30 : vector<64x128xf32>
    %c0_38 = arith.constant 0 : index
    %c0_39 = arith.constant 0 : index
    %32 = vector.load %arg7[%c0_38, %c0_39] : memref<64x128xf32, #tpu.memory_space<vmem>>, vector<64x128xf32>
    tpu.vector_store %arg7[%c0_38, %c0_39], %31 {strides = array<i32>} : memref<64x128xf32, #tpu.memory_space<vmem>>, vector<64x128xf32>,
    %c3_i32 = arith.constant 3 : i32
    %33 = arith.cmpi eq, %arg2, %c3_i32 : i32
    %34 = arith.extui %33 : i1 to i32
    %c0_i32_40 = arith.constant 0 : i32
    %35 = arith.cmpi ne, %34, %c0_i32_40 : i32
    scf.if %35 {
      %c0_41 = arith.constant 0 : index
      %c0_42 = arith.constant 0 : index
      %36 = vector.load %arg5[%c0_41, %c0_42] : memref<1x128xf32, #tpu.memory_space<vmem>>, vector<1x128xf32>
      %37 = vector.broadcast %36 : vector<1x128xf32> to vector<64x128xf32>
      %38 = arith.addf %31, %37 : vector<64x128xf32>
      %cst_43 = arith.constant dense<0.000000e+00> : vector<128xf32>
      %39 = vector.multi_reduction <add>, %38, %cst_43 [0] : vector<64x128xf32> to vector<128xf32>
      %40 = vector.shape_cast %39 : vector<128xf32> to vector<1x128xf32>
      %cst_44 = arith.constant 6.400000e+01 : f32
      %41 = vector.broadcast %cst_44 : f32 to vector<1x128xf32>
      %42 = arith.divf %40, %41 : vector<1x128xf32>
      %43 = vector.broadcast %42 : vector<1x128xf32> to vector<64x128xf32>
      %44 = arith.subf %38, %43 : vector<64x128xf32>
      %45 = arith.mulf %44, %44 : vector<64x128xf32>
      %cst_45 = arith.constant dense<0.000000e+00> : vector<128xf32>
      %46 = vector.multi_reduction <add>, %45, %cst_45 [0] : vector<64x128xf32> to vector<128xf32>
      %47 = vector.shape_cast %46 : vector<128xf32> to vector<1x128xf32>
      %cst_46 = arith.constant 6.400000e+01 : f32
      %48 = vector.broadcast %cst_46 : f32 to vector<1x128xf32>
      %49 = arith.divf %47, %48 : vector<1x128xf32>
      %cst_47 = arith.constant 9.99999974E-6 : f32
      %50 = vector.broadcast %cst_47 : f32 to vector<1x128xf32>
      %51 = arith.addf %49, %50 : vector<1x128xf32>
      %52 = math.rsqrt %51 : vector<1x128xf32>
      %53 = vector.broadcast %52 : vector<1x128xf32> to vector<64x128xf32>
      %54 = arith.mulf %44, %53 : vector<64x128xf32>
      %cst_48 = arith.constant 0.000000e+00 : f32
      %55 = vector.broadcast %cst_48 : f32 to vector<64x128xf32>
      %56 = arith.cmpf oge, %54, %55 : vector<64x128xf32>
      %cst_49 = arith.constant 2.000000e-01 : f32
      %57 = vector.broadcast %cst_49 : f32 to vector<64x128xf32>
      %58 = arith.mulf %57, %54 : vector<64x128xf32>
      %59 = arith.select %56, %54, %58 : vector<64x128xi1>, vector<64x128xf32>
      %c0_50 = arith.constant 0 : index
      %c0_51 = arith.constant 0 : index
      %c0_52 = arith.constant 0 : index
      %60 = vector.load %arg6[%c0_50, %c0_51, %c0_52] : memref<1x64x128xf32, #tpu.memory_space<vmem>>, vector<1x64x128xf32>
      %61 = vector.shape_cast %60 : vector<1x64x128xf32> to vector<64x128xf32>
      %62 = vector.shape_cast %59 : vector<64x128xf32> to vector<1x64x128xf32>
      tpu.vector_store %arg6[%c0_50, %c0_51, %c0_52], %62 {strides = array<i32>} : memref<1x64x128xf32, #tpu.memory_space<vmem>>, vector<1x64x128xf32>,
    } else {
    }
    return
  }
  func.func @transform_0(%arg0: i32, %arg1: i32, %arg2: i32) -> (i32, i32, i32, i32, i32) {
    %c0_i32 = arith.constant 0 : i32
    %c0_i32_0 = arith.constant 0 : i32
    %c0_i32_1 = arith.constant 0 : i32
    return %arg2, %arg0, %arg1, %c0_i32, %c0_i32_0 : i32, i32, i32, i32, i32
  }
  func.func @transform_1(%arg0: i32, %arg1: i32, %arg2: i32) -> (i32, i32, i32, i32) {
    %c0_i32 = arith.constant 0 : i32
    %c0_i32_0 = arith.constant 0 : i32
    %c0_i32_1 = arith.constant 0 : i32
    %c0_i32_2 = arith.constant 0 : i32
    return %arg2, %c0_i32, %c0_i32_0, %c0_i32_1 : i32, i32, i32, i32
  }
  func.func @transform_2(%arg0: i32, %arg1: i32, %arg2: i32) -> (i32, i32) {
    %c0_i32 = arith.constant 0 : i32
    %c0_i32_0 = arith.constant 0 : i32
    %c0_i32_1 = arith.constant 0 : i32
    return %c0_i32, %c0_i32_0 : i32, i32
  }
  func.func @transform_3(%arg0: i32, %arg1: i32, %arg2: i32) -> (i32, i32, i32) {
    %c0_i32 = arith.constant 0 : i32
    %c0_i32_0 = arith.constant 0 : i32
    return %arg0, %arg1, %c0_i32 : i32, i32, i32
  }
}

module attributes {stable_mosaic.version = 11 : i64} {
  func.func @_conv_tap_kernel(%arg0: i32, %arg1: i32, %arg2: i32, %arg3: memref<1x1x4x10x128xf32, #tpu.memory_space<vmem>>, %arg4: memref<1x4x128x256xf32, #tpu.memory_space<vmem>>, %arg5: memref<1x256xf32, #tpu.memory_space<vmem>>, %arg6: memref<1x16x256xf32, #tpu.memory_space<vmem>>, %arg7: memref<16x256xf32, #tpu.memory_space<vmem>>) attributes {dimension_semantics = [#tpu.dimension_semantics<parallel>, #tpu.dimension_semantics<parallel>, #tpu.dimension_semantics<arbitrary>], iteration_bounds = array<i64: 2, 1, 4>, scalar_prefetch = 0 : i64, scratch_operands = 1 : i64, tpu.core_type = #tpu.core_type<tc>, window_params = [{transform_indices = @transform_0, window_bounds = array<i64: 1, 1, 4, 10, 128>}, {transform_indices = @transform_1, window_bounds = array<i64: 1, 4, 128, 256>}, {pipeline_mode = #tpu.pipeline_mode<synchronous>, transform_indices = @transform_2, window_bounds = array<i64: 1, 256>}, {transform_indices = @transform_3, window_bounds = array<i64: 1, 16, 256>}]} {
    %c0_i32 = arith.constant 0 : i32
    %0 = arith.cmpi eq, %arg2, %c0_i32 : i32
    %1 = arith.extui %0 : i1 to i32
    %c0_i32_0 = arith.constant 0 : i32
    %2 = arith.cmpi ne, %1, %c0_i32_0 : i32
    scf.if %2 {
      %cst_41 = arith.constant 0.000000e+00 : f32
      %36 = vector.broadcast %cst_41 : f32 to vector<16x256xf32>
      %c0_42 = arith.constant 0 : index
      %c0_43 = arith.constant 0 : index
      %37 = vector.load %arg7[%c0_42, %c0_43] : memref<16x256xf32, #tpu.memory_space<vmem>>, vector<16x256xf32>
      tpu.vector_store %arg7[%c0_42, %c0_43], %36 {strides = array<i32>} : memref<16x256xf32, #tpu.memory_space<vmem>>, vector<16x256xf32>,
    } else {
    }
    %c0 = arith.constant 0 : index
    %c0_1 = arith.constant 0 : index
    %3 = vector.load %arg7[%c0, %c0_1] : memref<16x256xf32, #tpu.memory_space<vmem>>, vector<16x256xf32>
    %c0_2 = arith.constant 0 : index
    %c0_3 = arith.constant 0 : index
    %c0_4 = arith.constant 0 : index
    %c0_5 = arith.constant 0 : index
    %c0_6 = arith.constant 0 : index
    %4 = tpu.strided_load %arg3[%c0_2, %c0_3, %c0_4, %c0_5, %c0_6] {strides = array<i32: 1, 1, 1, 2, 1>} : memref<1x1x4x10x128xf32, #tpu.memory_space<vmem>>, vector<1x1x4x4x128xf32>
    %5 = vector.shape_cast %4 : vector<1x1x4x4x128xf32> to vector<4x4x128xf32>
    %6 = vector.shape_cast %5 : vector<4x4x128xf32> to vector<16x128xf32>
    %c0_7 = arith.constant 0 : index
    %c0_8 = arith.constant 0 : index
    %c0_9 = arith.constant 0 : index
    %c0_10 = arith.constant 0 : index
    %7 = vector.load %arg4[%c0_7, %c0_8, %c0_9, %c0_10] : memref<1x4x128x256xf32, #tpu.memory_space<vmem>>, vector<1x1x128x256xf32>
    %8 = vector.shape_cast %7 : vector<1x1x128x256xf32> to vector<128x256xf32>
    %cst = arith.constant dense<0.000000e+00> : vector<16x256xf32>
    %9 = tpu.matmul %6, %8, %cst {dimension_numbers = #tpu.dot_dimension_numbers<[1], [0], [0], [1], [0, 0, 1, 1], [], []>} : vector<16x128xf32>, vector<128x256xf32>, vector<16x256xf32> -> vector<16x256xf32>
    %10 = arith.addf %3, %9 : vector<16x256xf32>
    %c0_11 = arith.constant 0 : index
    %c0_12 = arith.constant 0 : index
    %c0_13 = arith.constant 0 : index
    %c1 = arith.constant 1 : index
    %c0_14 = arith.constant 0 : index
    %11 = tpu.strided_load %arg3[%c0_11, %c0_12, %c0_13, %c1, %c0_14] {strides = array<i32: 1, 1, 1, 2, 1>} : memref<1x1x4x10x128xf32, #tpu.memory_space<vmem>>, vector<1x1x4x4x128xf32>
    %12 = vector.shape_cast %11 : vector<1x1x4x4x128xf32> to vector<4x4x128xf32>
    %13 = vector.shape_cast %12 : vector<4x4x128xf32> to vector<16x128xf32>
    %c0_15 = arith.constant 0 : index
    %c1_16 = arith.constant 1 : index
    %c0_17 = arith.constant 0 : index
    %c0_18 = arith.constant 0 : index
    %14 = vector.load %arg4[%c0_15, %c1_16, %c0_17, %c0_18] : memref<1x4x128x256xf32, #tpu.memory_space<vmem>>, vector<1x1x128x256xf32>
    %15 = vector.shape_cast %14 : vector<1x1x128x256xf32> to vector<128x256xf32>
    %cst_19 = arith.constant dense<0.000000e+00> : vector<16x256xf32>
    %16 = tpu.matmul %13, %15, %cst_19 {dimension_numbers = #tpu.dot_dimension_numbers<[1], [0], [0], [1], [0, 0, 1, 1], [], []>} : vector<16x128xf32>, vector<128x256xf32>, vector<16x256xf32> -> vector<16x256xf32>
    %17 = arith.addf %10, %16 : vector<16x256xf32>
    %c0_20 = arith.constant 0 : index
    %c0_21 = arith.constant 0 : index
    %c0_22 = arith.constant 0 : index
    %c2 = arith.constant 2 : index
    %c0_23 = arith.constant 0 : index
    %18 = tpu.strided_load %arg3[%c0_20, %c0_21, %c0_22, %c2, %c0_23] {strides = array<i32: 1, 1, 1, 2, 1>} : memref<1x1x4x10x128xf32, #tpu.memory_space<vmem>>, vector<1x1x4x4x128xf32>
    %19 = vector.shape_cast %18 : vector<1x1x4x4x128xf32> to vector<4x4x128xf32>
    %20 = vector.shape_cast %19 : vector<4x4x128xf32> to vector<16x128xf32>
    %c0_24 = arith.constant 0 : index
    %c2_25 = arith.constant 2 : index
    %c0_26 = arith.constant 0 : index
    %c0_27 = arith.constant 0 : index
    %21 = vector.load %arg4[%c0_24, %c2_25, %c0_26, %c0_27] : memref<1x4x128x256xf32, #tpu.memory_space<vmem>>, vector<1x1x128x256xf32>
    %22 = vector.shape_cast %21 : vector<1x1x128x256xf32> to vector<128x256xf32>
    %cst_28 = arith.constant dense<0.000000e+00> : vector<16x256xf32>
    %23 = tpu.matmul %20, %22, %cst_28 {dimension_numbers = #tpu.dot_dimension_numbers<[1], [0], [0], [1], [0, 0, 1, 1], [], []>} : vector<16x128xf32>, vector<128x256xf32>, vector<16x256xf32> -> vector<16x256xf32>
    %24 = arith.addf %17, %23 : vector<16x256xf32>
    %c0_29 = arith.constant 0 : index
    %c0_30 = arith.constant 0 : index
    %c0_31 = arith.constant 0 : index
    %c3 = arith.constant 3 : index
    %c0_32 = arith.constant 0 : index
    %25 = tpu.strided_load %arg3[%c0_29, %c0_30, %c0_31, %c3, %c0_32] {strides = array<i32: 1, 1, 1, 2, 1>} : memref<1x1x4x10x128xf32, #tpu.memory_space<vmem>>, vector<1x1x4x4x128xf32>
    %26 = vector.shape_cast %25 : vector<1x1x4x4x128xf32> to vector<4x4x128xf32>
    %27 = vector.shape_cast %26 : vector<4x4x128xf32> to vector<16x128xf32>
    %c0_33 = arith.constant 0 : index
    %c3_34 = arith.constant 3 : index
    %c0_35 = arith.constant 0 : index
    %c0_36 = arith.constant 0 : index
    %28 = vector.load %arg4[%c0_33, %c3_34, %c0_35, %c0_36] : memref<1x4x128x256xf32, #tpu.memory_space<vmem>>, vector<1x1x128x256xf32>
    %29 = vector.shape_cast %28 : vector<1x1x128x256xf32> to vector<128x256xf32>
    %cst_37 = arith.constant dense<0.000000e+00> : vector<16x256xf32>
    %30 = tpu.matmul %27, %29, %cst_37 {dimension_numbers = #tpu.dot_dimension_numbers<[1], [0], [0], [1], [0, 0, 1, 1], [], []>} : vector<16x128xf32>, vector<128x256xf32>, vector<16x256xf32> -> vector<16x256xf32>
    %31 = arith.addf %24, %30 : vector<16x256xf32>
    %c0_38 = arith.constant 0 : index
    %c0_39 = arith.constant 0 : index
    %32 = vector.load %arg7[%c0_38, %c0_39] : memref<16x256xf32, #tpu.memory_space<vmem>>, vector<16x256xf32>
    tpu.vector_store %arg7[%c0_38, %c0_39], %31 {strides = array<i32>} : memref<16x256xf32, #tpu.memory_space<vmem>>, vector<16x256xf32>,
    %c3_i32 = arith.constant 3 : i32
    %33 = arith.cmpi eq, %arg2, %c3_i32 : i32
    %34 = arith.extui %33 : i1 to i32
    %c0_i32_40 = arith.constant 0 : i32
    %35 = arith.cmpi ne, %34, %c0_i32_40 : i32
    scf.if %35 {
      %c0_41 = arith.constant 0 : index
      %c0_42 = arith.constant 0 : index
      %36 = vector.load %arg5[%c0_41, %c0_42] : memref<1x256xf32, #tpu.memory_space<vmem>>, vector<1x256xf32>
      %37 = vector.broadcast %36 : vector<1x256xf32> to vector<16x256xf32>
      %38 = arith.addf %31, %37 : vector<16x256xf32>
      %cst_43 = arith.constant dense<0.000000e+00> : vector<256xf32>
      %39 = vector.multi_reduction <add>, %38, %cst_43 [0] : vector<16x256xf32> to vector<256xf32>
      %40 = vector.shape_cast %39 : vector<256xf32> to vector<1x256xf32>
      %cst_44 = arith.constant 1.600000e+01 : f32
      %41 = vector.broadcast %cst_44 : f32 to vector<1x256xf32>
      %42 = arith.divf %40, %41 : vector<1x256xf32>
      %43 = vector.broadcast %42 : vector<1x256xf32> to vector<16x256xf32>
      %44 = arith.subf %38, %43 : vector<16x256xf32>
      %45 = arith.mulf %44, %44 : vector<16x256xf32>
      %cst_45 = arith.constant dense<0.000000e+00> : vector<256xf32>
      %46 = vector.multi_reduction <add>, %45, %cst_45 [0] : vector<16x256xf32> to vector<256xf32>
      %47 = vector.shape_cast %46 : vector<256xf32> to vector<1x256xf32>
      %cst_46 = arith.constant 1.600000e+01 : f32
      %48 = vector.broadcast %cst_46 : f32 to vector<1x256xf32>
      %49 = arith.divf %47, %48 : vector<1x256xf32>
      %cst_47 = arith.constant 9.99999974E-6 : f32
      %50 = vector.broadcast %cst_47 : f32 to vector<1x256xf32>
      %51 = arith.addf %49, %50 : vector<1x256xf32>
      %52 = math.rsqrt %51 : vector<1x256xf32>
      %53 = vector.broadcast %52 : vector<1x256xf32> to vector<16x256xf32>
      %54 = arith.mulf %44, %53 : vector<16x256xf32>
      %cst_48 = arith.constant 0.000000e+00 : f32
      %55 = vector.broadcast %cst_48 : f32 to vector<16x256xf32>
      %56 = arith.cmpf oge, %54, %55 : vector<16x256xf32>
      %cst_49 = arith.constant 2.000000e-01 : f32
      %57 = vector.broadcast %cst_49 : f32 to vector<16x256xf32>
      %58 = arith.mulf %57, %54 : vector<16x256xf32>
      %59 = arith.select %56, %54, %58 : vector<16x256xi1>, vector<16x256xf32>
      %c0_50 = arith.constant 0 : index
      %c0_51 = arith.constant 0 : index
      %c0_52 = arith.constant 0 : index
      %60 = vector.load %arg6[%c0_50, %c0_51, %c0_52] : memref<1x16x256xf32, #tpu.memory_space<vmem>>, vector<1x16x256xf32>
      %61 = vector.shape_cast %60 : vector<1x16x256xf32> to vector<16x256xf32>
      %62 = vector.shape_cast %59 : vector<16x256xf32> to vector<1x16x256xf32>
      tpu.vector_store %arg6[%c0_50, %c0_51, %c0_52], %62 {strides = array<i32>} : memref<1x16x256xf32, #tpu.memory_space<vmem>>, vector<1x16x256xf32>,
    } else {
    }
    return
  }
  func.func @transform_0(%arg0: i32, %arg1: i32, %arg2: i32) -> (i32, i32, i32, i32, i32) {
    %c0_i32 = arith.constant 0 : i32
    %c0_i32_0 = arith.constant 0 : i32
    %c0_i32_1 = arith.constant 0 : i32
    return %arg2, %arg0, %arg1, %c0_i32, %c0_i32_0 : i32, i32, i32, i32, i32
  }
  func.func @transform_1(%arg0: i32, %arg1: i32, %arg2: i32) -> (i32, i32, i32, i32) {
    %c0_i32 = arith.constant 0 : i32
    %c0_i32_0 = arith.constant 0 : i32
    %c0_i32_1 = arith.constant 0 : i32
    %c0_i32_2 = arith.constant 0 : i32
    return %arg2, %c0_i32, %c0_i32_0, %c0_i32_1 : i32, i32, i32, i32
  }
  func.func @transform_2(%arg0: i32, %arg1: i32, %arg2: i32) -> (i32, i32) {
    %c0_i32 = arith.constant 0 : i32
    %c0_i32_0 = arith.constant 0 : i32
    %c0_i32_1 = arith.constant 0 : i32
    return %c0_i32, %c0_i32_0 : i32, i32
  }
  func.func @transform_3(%arg0: i32, %arg1: i32, %arg2: i32) -> (i32, i32, i32) {
    %c0_i32 = arith.constant 0 : i32
    %c0_i32_0 = arith.constant 0 : i32
    return %arg0, %arg1, %c0_i32 : i32, i32, i32
  }
}

module attributes {stable_mosaic.version = 11 : i64} {
  func.func @_conv_tap_kernel(%arg0: i32, %arg1: i32, %arg2: i32, %arg3: memref<1x1x3x6x256xf32, #tpu.memory_space<vmem>>, %arg4: memref<1x4x256x512xf32, #tpu.memory_space<vmem>>, %arg5: memref<1x512xf32, #tpu.memory_space<vmem>>, %arg6: memref<1x9x512xf32, #tpu.memory_space<vmem>>, %arg7: memref<9x512xf32, #tpu.memory_space<vmem>>) attributes {dimension_semantics = [#tpu.dimension_semantics<parallel>, #tpu.dimension_semantics<parallel>, #tpu.dimension_semantics<arbitrary>], iteration_bounds = array<i64: 2, 1, 4>, scalar_prefetch = 0 : i64, scratch_operands = 1 : i64, tpu.core_type = #tpu.core_type<tc>, window_params = [{transform_indices = @transform_0, window_bounds = array<i64: 1, 1, 3, 6, 256>}, {transform_indices = @transform_1, window_bounds = array<i64: 1, 4, 256, 512>}, {pipeline_mode = #tpu.pipeline_mode<synchronous>, transform_indices = @transform_2, window_bounds = array<i64: 1, 512>}, {transform_indices = @transform_3, window_bounds = array<i64: 1, 9, 512>}]} {
    %c0_i32 = arith.constant 0 : i32
    %0 = arith.cmpi eq, %arg2, %c0_i32 : i32
    %1 = arith.extui %0 : i1 to i32
    %c0_i32_0 = arith.constant 0 : i32
    %2 = arith.cmpi ne, %1, %c0_i32_0 : i32
    scf.if %2 {
      %cst_41 = arith.constant 0.000000e+00 : f32
      %36 = vector.broadcast %cst_41 : f32 to vector<9x512xf32>
      %c0_42 = arith.constant 0 : index
      %c0_43 = arith.constant 0 : index
      %37 = vector.load %arg7[%c0_42, %c0_43] : memref<9x512xf32, #tpu.memory_space<vmem>>, vector<9x512xf32>
      tpu.vector_store %arg7[%c0_42, %c0_43], %36 {strides = array<i32>} : memref<9x512xf32, #tpu.memory_space<vmem>>, vector<9x512xf32>,
    } else {
    }
    %c0 = arith.constant 0 : index
    %c0_1 = arith.constant 0 : index
    %3 = vector.load %arg7[%c0, %c0_1] : memref<9x512xf32, #tpu.memory_space<vmem>>, vector<9x512xf32>
    %c0_2 = arith.constant 0 : index
    %c0_3 = arith.constant 0 : index
    %c0_4 = arith.constant 0 : index
    %c0_5 = arith.constant 0 : index
    %c0_6 = arith.constant 0 : index
    %4 = vector.load %arg3[%c0_2, %c0_3, %c0_4, %c0_5, %c0_6] : memref<1x1x3x6x256xf32, #tpu.memory_space<vmem>>, vector<1x1x3x3x256xf32>
    %5 = vector.shape_cast %4 : vector<1x1x3x3x256xf32> to vector<3x3x256xf32>
    %6 = vector.shape_cast %5 : vector<3x3x256xf32> to vector<9x256xf32>
    %c0_7 = arith.constant 0 : index
    %c0_8 = arith.constant 0 : index
    %c0_9 = arith.constant 0 : index
    %c0_10 = arith.constant 0 : index
    %7 = vector.load %arg4[%c0_7, %c0_8, %c0_9, %c0_10] : memref<1x4x256x512xf32, #tpu.memory_space<vmem>>, vector<1x1x256x512xf32>
    %8 = vector.shape_cast %7 : vector<1x1x256x512xf32> to vector<256x512xf32>
    %cst = arith.constant dense<0.000000e+00> : vector<9x512xf32>
    %9 = tpu.matmul %6, %8, %cst {dimension_numbers = #tpu.dot_dimension_numbers<[1], [0], [0], [1], [0, 0, 1, 1], [], []>} : vector<9x256xf32>, vector<256x512xf32>, vector<9x512xf32> -> vector<9x512xf32>
    %10 = arith.addf %3, %9 : vector<9x512xf32>
    %c0_11 = arith.constant 0 : index
    %c0_12 = arith.constant 0 : index
    %c0_13 = arith.constant 0 : index
    %c1 = arith.constant 1 : index
    %c0_14 = arith.constant 0 : index
    %11 = vector.load %arg3[%c0_11, %c0_12, %c0_13, %c1, %c0_14] : memref<1x1x3x6x256xf32, #tpu.memory_space<vmem>>, vector<1x1x3x3x256xf32>
    %12 = vector.shape_cast %11 : vector<1x1x3x3x256xf32> to vector<3x3x256xf32>
    %13 = vector.shape_cast %12 : vector<3x3x256xf32> to vector<9x256xf32>
    %c0_15 = arith.constant 0 : index
    %c1_16 = arith.constant 1 : index
    %c0_17 = arith.constant 0 : index
    %c0_18 = arith.constant 0 : index
    %14 = vector.load %arg4[%c0_15, %c1_16, %c0_17, %c0_18] : memref<1x4x256x512xf32, #tpu.memory_space<vmem>>, vector<1x1x256x512xf32>
    %15 = vector.shape_cast %14 : vector<1x1x256x512xf32> to vector<256x512xf32>
    %cst_19 = arith.constant dense<0.000000e+00> : vector<9x512xf32>
    %16 = tpu.matmul %13, %15, %cst_19 {dimension_numbers = #tpu.dot_dimension_numbers<[1], [0], [0], [1], [0, 0, 1, 1], [], []>} : vector<9x256xf32>, vector<256x512xf32>, vector<9x512xf32> -> vector<9x512xf32>
    %17 = arith.addf %10, %16 : vector<9x512xf32>
    %c0_20 = arith.constant 0 : index
    %c0_21 = arith.constant 0 : index
    %c0_22 = arith.constant 0 : index
    %c2 = arith.constant 2 : index
    %c0_23 = arith.constant 0 : index
    %18 = vector.load %arg3[%c0_20, %c0_21, %c0_22, %c2, %c0_23] : memref<1x1x3x6x256xf32, #tpu.memory_space<vmem>>, vector<1x1x3x3x256xf32>
    %19 = vector.shape_cast %18 : vector<1x1x3x3x256xf32> to vector<3x3x256xf32>
    %20 = vector.shape_cast %19 : vector<3x3x256xf32> to vector<9x256xf32>
    %c0_24 = arith.constant 0 : index
    %c2_25 = arith.constant 2 : index
    %c0_26 = arith.constant 0 : index
    %c0_27 = arith.constant 0 : index
    %21 = vector.load %arg4[%c0_24, %c2_25, %c0_26, %c0_27] : memref<1x4x256x512xf32, #tpu.memory_space<vmem>>, vector<1x1x256x512xf32>
    %22 = vector.shape_cast %21 : vector<1x1x256x512xf32> to vector<256x512xf32>
    %cst_28 = arith.constant dense<0.000000e+00> : vector<9x512xf32>
    %23 = tpu.matmul %20, %22, %cst_28 {dimension_numbers = #tpu.dot_dimension_numbers<[1], [0], [0], [1], [0, 0, 1, 1], [], []>} : vector<9x256xf32>, vector<256x512xf32>, vector<9x512xf32> -> vector<9x512xf32>
    %24 = arith.addf %17, %23 : vector<9x512xf32>
    %c0_29 = arith.constant 0 : index
    %c0_30 = arith.constant 0 : index
    %c0_31 = arith.constant 0 : index
    %c3 = arith.constant 3 : index
    %c0_32 = arith.constant 0 : index
    %25 = vector.load %arg3[%c0_29, %c0_30, %c0_31, %c3, %c0_32] : memref<1x1x3x6x256xf32, #tpu.memory_space<vmem>>, vector<1x1x3x3x256xf32>
    %26 = vector.shape_cast %25 : vector<1x1x3x3x256xf32> to vector<3x3x256xf32>
    %27 = vector.shape_cast %26 : vector<3x3x256xf32> to vector<9x256xf32>
    %c0_33 = arith.constant 0 : index
    %c3_34 = arith.constant 3 : index
    %c0_35 = arith.constant 0 : index
    %c0_36 = arith.constant 0 : index
    %28 = vector.load %arg4[%c0_33, %c3_34, %c0_35, %c0_36] : memref<1x4x256x512xf32, #tpu.memory_space<vmem>>, vector<1x1x256x512xf32>
    %29 = vector.shape_cast %28 : vector<1x1x256x512xf32> to vector<256x512xf32>
    %cst_37 = arith.constant dense<0.000000e+00> : vector<9x512xf32>
    %30 = tpu.matmul %27, %29, %cst_37 {dimension_numbers = #tpu.dot_dimension_numbers<[1], [0], [0], [1], [0, 0, 1, 1], [], []>} : vector<9x256xf32>, vector<256x512xf32>, vector<9x512xf32> -> vector<9x512xf32>
    %31 = arith.addf %24, %30 : vector<9x512xf32>
    %c0_38 = arith.constant 0 : index
    %c0_39 = arith.constant 0 : index
    %32 = vector.load %arg7[%c0_38, %c0_39] : memref<9x512xf32, #tpu.memory_space<vmem>>, vector<9x512xf32>
    tpu.vector_store %arg7[%c0_38, %c0_39], %31 {strides = array<i32>} : memref<9x512xf32, #tpu.memory_space<vmem>>, vector<9x512xf32>,
    %c3_i32 = arith.constant 3 : i32
    %33 = arith.cmpi eq, %arg2, %c3_i32 : i32
    %34 = arith.extui %33 : i1 to i32
    %c0_i32_40 = arith.constant 0 : i32
    %35 = arith.cmpi ne, %34, %c0_i32_40 : i32
    scf.if %35 {
      %c0_41 = arith.constant 0 : index
      %c0_42 = arith.constant 0 : index
      %36 = vector.load %arg5[%c0_41, %c0_42] : memref<1x512xf32, #tpu.memory_space<vmem>>, vector<1x512xf32>
      %37 = vector.broadcast %36 : vector<1x512xf32> to vector<9x512xf32>
      %38 = arith.addf %31, %37 : vector<9x512xf32>
      %cst_43 = arith.constant dense<0.000000e+00> : vector<512xf32>
      %39 = vector.multi_reduction <add>, %38, %cst_43 [0] : vector<9x512xf32> to vector<512xf32>
      %40 = vector.shape_cast %39 : vector<512xf32> to vector<1x512xf32>
      %cst_44 = arith.constant 9.000000e+00 : f32
      %41 = vector.broadcast %cst_44 : f32 to vector<1x512xf32>
      %42 = arith.divf %40, %41 : vector<1x512xf32>
      %43 = vector.broadcast %42 : vector<1x512xf32> to vector<9x512xf32>
      %44 = arith.subf %38, %43 : vector<9x512xf32>
      %45 = arith.mulf %44, %44 : vector<9x512xf32>
      %cst_45 = arith.constant dense<0.000000e+00> : vector<512xf32>
      %46 = vector.multi_reduction <add>, %45, %cst_45 [0] : vector<9x512xf32> to vector<512xf32>
      %47 = vector.shape_cast %46 : vector<512xf32> to vector<1x512xf32>
      %cst_46 = arith.constant 9.000000e+00 : f32
      %48 = vector.broadcast %cst_46 : f32 to vector<1x512xf32>
      %49 = arith.divf %47, %48 : vector<1x512xf32>
      %cst_47 = arith.constant 9.99999974E-6 : f32
      %50 = vector.broadcast %cst_47 : f32 to vector<1x512xf32>
      %51 = arith.addf %49, %50 : vector<1x512xf32>
      %52 = math.rsqrt %51 : vector<1x512xf32>
      %53 = vector.broadcast %52 : vector<1x512xf32> to vector<9x512xf32>
      %54 = arith.mulf %44, %53 : vector<9x512xf32>
      %cst_48 = arith.constant 0.000000e+00 : f32
      %55 = vector.broadcast %cst_48 : f32 to vector<9x512xf32>
      %56 = arith.cmpf oge, %54, %55 : vector<9x512xf32>
      %cst_49 = arith.constant 2.000000e-01 : f32
      %57 = vector.broadcast %cst_49 : f32 to vector<9x512xf32>
      %58 = arith.mulf %57, %54 : vector<9x512xf32>
      %59 = arith.select %56, %54, %58 : vector<9x512xi1>, vector<9x512xf32>
      %c0_50 = arith.constant 0 : index
      %c0_51 = arith.constant 0 : index
      %c0_52 = arith.constant 0 : index
      %60 = vector.load %arg6[%c0_50, %c0_51, %c0_52] : memref<1x9x512xf32, #tpu.memory_space<vmem>>, vector<1x9x512xf32>
      %61 = vector.shape_cast %60 : vector<1x9x512xf32> to vector<9x512xf32>
      %62 = vector.shape_cast %59 : vector<9x512xf32> to vector<1x9x512xf32>
      tpu.vector_store %arg6[%c0_50, %c0_51, %c0_52], %62 {strides = array<i32>} : memref<1x9x512xf32, #tpu.memory_space<vmem>>, vector<1x9x512xf32>,
    } else {
    }
    return
  }
  func.func @transform_0(%arg0: i32, %arg1: i32, %arg2: i32) -> (i32, i32, i32, i32, i32) {
    %c0_i32 = arith.constant 0 : i32
    %c0_i32_0 = arith.constant 0 : i32
    %c0_i32_1 = arith.constant 0 : i32
    return %arg2, %arg0, %arg1, %c0_i32, %c0_i32_0 : i32, i32, i32, i32, i32
  }
  func.func @transform_1(%arg0: i32, %arg1: i32, %arg2: i32) -> (i32, i32, i32, i32) {
    %c0_i32 = arith.constant 0 : i32
    %c0_i32_0 = arith.constant 0 : i32
    %c0_i32_1 = arith.constant 0 : i32
    %c0_i32_2 = arith.constant 0 : i32
    return %arg2, %c0_i32, %c0_i32_0, %c0_i32_1 : i32, i32, i32, i32
  }
  func.func @transform_2(%arg0: i32, %arg1: i32, %arg2: i32) -> (i32, i32) {
    %c0_i32 = arith.constant 0 : i32
    %c0_i32_0 = arith.constant 0 : i32
    %c0_i32_1 = arith.constant 0 : i32
    return %c0_i32, %c0_i32_0 : i32, i32
  }
  func.func @transform_3(%arg0: i32, %arg1: i32, %arg2: i32) -> (i32, i32, i32) {
    %c0_i32 = arith.constant 0 : i32
    %c0_i32_0 = arith.constant 0 : i32
    return %arg0, %arg1, %c0_i32 : i32, i32, i32
  }
}

module attributes {stable_mosaic.version = 11 : i64} {
  func.func @_conv_tap_kernel(%arg0: i32, %arg1: i32, %arg2: i32, %arg3: memref<1x1x2x5x512xf32, #tpu.memory_space<vmem>>, %arg4: memref<1x4x512x128xf32, #tpu.memory_space<vmem>>, %arg5: memref<1x128xf32, #tpu.memory_space<vmem>>, %arg6: memref<1x4x128xf32, #tpu.memory_space<vmem>>, %arg7: memref<4x128xf32, #tpu.memory_space<vmem>>) attributes {dimension_semantics = [#tpu.dimension_semantics<parallel>, #tpu.dimension_semantics<parallel>, #tpu.dimension_semantics<arbitrary>], iteration_bounds = array<i64: 2, 1, 4>, scalar_prefetch = 0 : i64, scratch_operands = 1 : i64, tpu.core_type = #tpu.core_type<tc>, window_params = [{transform_indices = @transform_0, window_bounds = array<i64: 1, 1, 2, 5, 512>}, {transform_indices = @transform_1, window_bounds = array<i64: 1, 4, 512, 128>}, {pipeline_mode = #tpu.pipeline_mode<synchronous>, transform_indices = @transform_2, window_bounds = array<i64: 1, 128>}, {transform_indices = @transform_3, window_bounds = array<i64: 1, 4, 128>}]} {
    %c0_i32 = arith.constant 0 : i32
    %0 = arith.cmpi eq, %arg2, %c0_i32 : i32
    %1 = arith.extui %0 : i1 to i32
    %c0_i32_0 = arith.constant 0 : i32
    %2 = arith.cmpi ne, %1, %c0_i32_0 : i32
    scf.if %2 {
      %cst_41 = arith.constant 0.000000e+00 : f32
      %36 = vector.broadcast %cst_41 : f32 to vector<4x128xf32>
      %c0_42 = arith.constant 0 : index
      %c0_43 = arith.constant 0 : index
      %37 = vector.load %arg7[%c0_42, %c0_43] : memref<4x128xf32, #tpu.memory_space<vmem>>, vector<4x128xf32>
      tpu.vector_store %arg7[%c0_42, %c0_43], %36 {strides = array<i32>} : memref<4x128xf32, #tpu.memory_space<vmem>>, vector<4x128xf32>,
    } else {
    }
    %c0 = arith.constant 0 : index
    %c0_1 = arith.constant 0 : index
    %3 = vector.load %arg7[%c0, %c0_1] : memref<4x128xf32, #tpu.memory_space<vmem>>, vector<4x128xf32>
    %c0_2 = arith.constant 0 : index
    %c0_3 = arith.constant 0 : index
    %c0_4 = arith.constant 0 : index
    %c0_5 = arith.constant 0 : index
    %c0_6 = arith.constant 0 : index
    %4 = vector.load %arg3[%c0_2, %c0_3, %c0_4, %c0_5, %c0_6] : memref<1x1x2x5x512xf32, #tpu.memory_space<vmem>>, vector<1x1x2x2x512xf32>
    %5 = vector.shape_cast %4 : vector<1x1x2x2x512xf32> to vector<2x2x512xf32>
    %6 = vector.shape_cast %5 : vector<2x2x512xf32> to vector<4x512xf32>
    %c0_7 = arith.constant 0 : index
    %c0_8 = arith.constant 0 : index
    %c0_9 = arith.constant 0 : index
    %c0_10 = arith.constant 0 : index
    %7 = vector.load %arg4[%c0_7, %c0_8, %c0_9, %c0_10] : memref<1x4x512x128xf32, #tpu.memory_space<vmem>>, vector<1x1x512x128xf32>
    %8 = vector.shape_cast %7 : vector<1x1x512x128xf32> to vector<512x128xf32>
    %cst = arith.constant dense<0.000000e+00> : vector<4x128xf32>
    %9 = tpu.matmul %6, %8, %cst {dimension_numbers = #tpu.dot_dimension_numbers<[1], [0], [0], [1], [0, 0, 1, 1], [], []>} : vector<4x512xf32>, vector<512x128xf32>, vector<4x128xf32> -> vector<4x128xf32>
    %10 = arith.addf %3, %9 : vector<4x128xf32>
    %c0_11 = arith.constant 0 : index
    %c0_12 = arith.constant 0 : index
    %c0_13 = arith.constant 0 : index
    %c1 = arith.constant 1 : index
    %c0_14 = arith.constant 0 : index
    %11 = vector.load %arg3[%c0_11, %c0_12, %c0_13, %c1, %c0_14] : memref<1x1x2x5x512xf32, #tpu.memory_space<vmem>>, vector<1x1x2x2x512xf32>
    %12 = vector.shape_cast %11 : vector<1x1x2x2x512xf32> to vector<2x2x512xf32>
    %13 = vector.shape_cast %12 : vector<2x2x512xf32> to vector<4x512xf32>
    %c0_15 = arith.constant 0 : index
    %c1_16 = arith.constant 1 : index
    %c0_17 = arith.constant 0 : index
    %c0_18 = arith.constant 0 : index
    %14 = vector.load %arg4[%c0_15, %c1_16, %c0_17, %c0_18] : memref<1x4x512x128xf32, #tpu.memory_space<vmem>>, vector<1x1x512x128xf32>
    %15 = vector.shape_cast %14 : vector<1x1x512x128xf32> to vector<512x128xf32>
    %cst_19 = arith.constant dense<0.000000e+00> : vector<4x128xf32>
    %16 = tpu.matmul %13, %15, %cst_19 {dimension_numbers = #tpu.dot_dimension_numbers<[1], [0], [0], [1], [0, 0, 1, 1], [], []>} : vector<4x512xf32>, vector<512x128xf32>, vector<4x128xf32> -> vector<4x128xf32>
    %17 = arith.addf %10, %16 : vector<4x128xf32>
    %c0_20 = arith.constant 0 : index
    %c0_21 = arith.constant 0 : index
    %c0_22 = arith.constant 0 : index
    %c2 = arith.constant 2 : index
    %c0_23 = arith.constant 0 : index
    %18 = vector.load %arg3[%c0_20, %c0_21, %c0_22, %c2, %c0_23] : memref<1x1x2x5x512xf32, #tpu.memory_space<vmem>>, vector<1x1x2x2x512xf32>
    %19 = vector.shape_cast %18 : vector<1x1x2x2x512xf32> to vector<2x2x512xf32>
    %20 = vector.shape_cast %19 : vector<2x2x512xf32> to vector<4x512xf32>
    %c0_24 = arith.constant 0 : index
    %c2_25 = arith.constant 2 : index
    %c0_26 = arith.constant 0 : index
    %c0_27 = arith.constant 0 : index
    %21 = vector.load %arg4[%c0_24, %c2_25, %c0_26, %c0_27] : memref<1x4x512x128xf32, #tpu.memory_space<vmem>>, vector<1x1x512x128xf32>
    %22 = vector.shape_cast %21 : vector<1x1x512x128xf32> to vector<512x128xf32>
    %cst_28 = arith.constant dense<0.000000e+00> : vector<4x128xf32>
    %23 = tpu.matmul %20, %22, %cst_28 {dimension_numbers = #tpu.dot_dimension_numbers<[1], [0], [0], [1], [0, 0, 1, 1], [], []>} : vector<4x512xf32>, vector<512x128xf32>, vector<4x128xf32> -> vector<4x128xf32>
    %24 = arith.addf %17, %23 : vector<4x128xf32>
    %c0_29 = arith.constant 0 : index
    %c0_30 = arith.constant 0 : index
    %c0_31 = arith.constant 0 : index
    %c3 = arith.constant 3 : index
    %c0_32 = arith.constant 0 : index
    %25 = vector.load %arg3[%c0_29, %c0_30, %c0_31, %c3, %c0_32] : memref<1x1x2x5x512xf32, #tpu.memory_space<vmem>>, vector<1x1x2x2x512xf32>
    %26 = vector.shape_cast %25 : vector<1x1x2x2x512xf32> to vector<2x2x512xf32>
    %27 = vector.shape_cast %26 : vector<2x2x512xf32> to vector<4x512xf32>
    %c0_33 = arith.constant 0 : index
    %c3_34 = arith.constant 3 : index
    %c0_35 = arith.constant 0 : index
    %c0_36 = arith.constant 0 : index
    %28 = vector.load %arg4[%c0_33, %c3_34, %c0_35, %c0_36] : memref<1x4x512x128xf32, #tpu.memory_space<vmem>>, vector<1x1x512x128xf32>
    %29 = vector.shape_cast %28 : vector<1x1x512x128xf32> to vector<512x128xf32>
    %cst_37 = arith.constant dense<0.000000e+00> : vector<4x128xf32>
    %30 = tpu.matmul %27, %29, %cst_37 {dimension_numbers = #tpu.dot_dimension_numbers<[1], [0], [0], [1], [0, 0, 1, 1], [], []>} : vector<4x512xf32>, vector<512x128xf32>, vector<4x128xf32> -> vector<4x128xf32>
    %31 = arith.addf %24, %30 : vector<4x128xf32>
    %c0_38 = arith.constant 0 : index
    %c0_39 = arith.constant 0 : index
    %32 = vector.load %arg7[%c0_38, %c0_39] : memref<4x128xf32, #tpu.memory_space<vmem>>, vector<4x128xf32>
    tpu.vector_store %arg7[%c0_38, %c0_39], %31 {strides = array<i32>} : memref<4x128xf32, #tpu.memory_space<vmem>>, vector<4x128xf32>,
    %c3_i32 = arith.constant 3 : i32
    %33 = arith.cmpi eq, %arg2, %c3_i32 : i32
    %34 = arith.extui %33 : i1 to i32
    %c0_i32_40 = arith.constant 0 : i32
    %35 = arith.cmpi ne, %34, %c0_i32_40 : i32
    scf.if %35 {
      %c0_41 = arith.constant 0 : index
      %c0_42 = arith.constant 0 : index
      %36 = vector.load %arg5[%c0_41, %c0_42] : memref<1x128xf32, #tpu.memory_space<vmem>>, vector<1x128xf32>
      %37 = vector.broadcast %36 : vector<1x128xf32> to vector<4x128xf32>
      %38 = arith.addf %31, %37 : vector<4x128xf32>
      %c0_43 = arith.constant 0 : index
      %c0_44 = arith.constant 0 : index
      %c0_45 = arith.constant 0 : index
      %39 = vector.load %arg6[%c0_43, %c0_44, %c0_45] : memref<1x4x128xf32, #tpu.memory_space<vmem>>, vector<1x4x128xf32>
      %40 = vector.shape_cast %39 : vector<1x4x128xf32> to vector<4x128xf32>
      %41 = vector.shape_cast %38 : vector<4x128xf32> to vector<1x4x128xf32>
      tpu.vector_store %arg6[%c0_43, %c0_44, %c0_45], %41 {strides = array<i32>} : memref<1x4x128xf32, #tpu.memory_space<vmem>>, vector<1x4x128xf32>,
    } else {
    }
    return
  }
  func.func @transform_0(%arg0: i32, %arg1: i32, %arg2: i32) -> (i32, i32, i32, i32, i32) {
    %c0_i32 = arith.constant 0 : i32
    %c0_i32_0 = arith.constant 0 : i32
    %c0_i32_1 = arith.constant 0 : i32
    return %arg2, %arg0, %arg1, %c0_i32, %c0_i32_0 : i32, i32, i32, i32, i32
  }
  func.func @transform_1(%arg0: i32, %arg1: i32, %arg2: i32) -> (i32, i32, i32, i32) {
    %c0_i32 = arith.constant 0 : i32
    %c0_i32_0 = arith.constant 0 : i32
    %c0_i32_1 = arith.constant 0 : i32
    %c0_i32_2 = arith.constant 0 : i32
    return %arg2, %c0_i32, %c0_i32_0, %c0_i32_1 : i32, i32, i32, i32
  }
  func.func @transform_2(%arg0: i32, %arg1: i32, %arg2: i32) -> (i32, i32) {
    %c0_i32 = arith.constant 0 : i32
    %c0_i32_0 = arith.constant 0 : i32
    %c0_i32_1 = arith.constant 0 : i32
    return %c0_i32, %c0_i32_0 : i32, i32
  }
  func.func @transform_3(%arg0: i32, %arg1: i32, %arg2: i32) -> (i32, i32, i32) {
    %c0_i32 = arith.constant 0 : i32
    %c0_i32_0 = arith.constant 0 : i32
    return %arg0, %arg1, %c0_i32 : i32, i32, i32
  }
}

</mosaic_0001>

<llo_original>
// kernel: _lambda_.5
$region0: #{_lambda_.5}
  #allocation0 [shape = 'u32[]', space=smem, size = 0x4, offset = 0x4, fixed_abs, tag = 'smem constant byte address 0x4 - core index']
  #allocation1 [shape = 'u32[144,128]{1,0:T(1,128)}', space=vmem, size = 0x12000, scoped, tag = 'internal scratch']
  #allocation2 [shape = 'f32[256,64]{1,0:T(8,128)}', space=vmem, size = 0x20000, scoped, tag = 'scratch operand']
  %s0 = inlined_call_operand.vmem [shape: f32[4,2,16,34,1], index: 0, kind: input, shape index: {}]
  %s1 = inlined_call_operand.vmem [shape: f32[4,4,1,64], index: 1, kind: input, shape index: {}]
  %s2 = inlined_call_operand.vmem [shape: f32[1,64], index: 2, kind: input, shape index: {}]
  %s3 = inlined_call_operand.vmem [shape: f32[2,256,64], index: 3, kind: output, shape index: {}]
  %s4 = sld [smem:[#allocation0]]
  $region53: #{_lambda_.5} parent=0
    _
  %s6 = ssub.s32 1, %s4
  %s7 = scalar_select 0, %s6, %s4
  loop: start=0, step=1, limit=10
  $region2: #{_lambda_.5} parent=0 // loop_pre_header
    _
  $region3: #{_lambda_.5} parent=0 // loop_header
    %s9 = sphi 0, %s13
    %p10 = scmp.ge.s32.totalorder %s9, 10
    %s16 = sphi 0, %s35
    %s17 = sphi 0, %s31
    %s18 = sphi 0, %s27
    %s19 = sphi 0, %s16
    %s20 = sphi 0, %s17
    %s21 = sphi 0, %s18
    %s22 = sphi 0, %s19
    %s23 = sphi 0, %s20
    %s24 = sphi 0, %s21
    %s42 = sphi 0, %s44
    %s45 = sphi 0, %s42
    %s46 = sphi 0, %s45
    %s62 = sphi 0, %s46
    %s68 = sphi 0, %s70
    %s71 = sphi 0, %s68
    %s72 = sphi 0, %s71
    %s88 = sphi 0, %s72
    %s92 = sphi 0, %s92
    %s94 = sphi 0, %s92
    %s95 = sphi 0, %s94
    %s109 = sphi 0, %s95
    %s117 = sphi 0, %s119
    %s120 = sphi 0, %s117
    %s121 = sphi 0, %s120
    %s137 = sphi 0, %s121
  $region4: #{_lambda_.5} parent=0 // loop_header_branch
    %12 = sbr.rel (%p10) target = $region8
  $region5: #{_lambda_.5} parent=0 // loop_body
    %s14 = ssub.s32 %s9, 1
    %s15 = ssub.s32 %s9, 2
    %s25 = sadd.s32 1, %s18
    %p26 = scmp.ge.s32.totalorder %s25, 4
    %s27 = scalar_select %p26, 0, %s25
    %s28 = sadd.s32 1, %s17
    %s29 = scalar_select %p26, %s28, %s17
    %p30 = scmp.ge.s32.totalorder %s29, 1
    %s31 = scalar_select %p30, 0, %s29
    %s32 = sadd.s32 1, %s16
    %s33 = scalar_select %p30, %s32, %s16
    %p34 = scmp.ge.s32.totalorder %s33, 2
    %s35 = scalar_select %p34, 0, %s33
    %s36 = ssub.s32 %s18, %s27
    %s37 = ssub.s32 %s16, %s35
    %s38 = sor.u32 %s36, %s37
    %s39 = ssub.s32 %s17, %s31
    %s40 = sor.u32 %s38, %s39
    %p41 = scmp.eq.s32.totalorder %s40, 0
    %s43 = sadd.s32 %s42, 1
    %s44 = scalar_select %p41, %s42, %s43
    %p47 = pneg %p41
    %p48 = scmp.eq.s32.totalorder %s9, 7
    %p49 = por %p47, %p48
    %p50 = scmp.ne.s32.totalorder %s42, %s45
    %p51 = scmp.eq.s32.totalorder %s9, 0
    %p52 = por %p50, %p51
    %p53 = scmp.ne.s32.totalorder %s42, %s45
    %p54 = scmp.eq.s32.totalorder %s14, 7
    %p55 = por %p53, %p54
    %p56 = scmp.ne.s32.totalorder %s45, %s46
    %p57 = scmp.eq.s32.totalorder %s14, 0
    %p58 = por %p56, %p57
    %p59 = scmp.ne.s32.totalorder %s45, %s46
    %p60 = scmp.eq.s32.totalorder %s15, 7
    %p61 = por %p59, %p60
    %p63 = scmp.ne.s32.totalorder %s46, %s62
    %p64 = scmp.eq.s32.totalorder %s15, 0
    %p65 = por %p63, %p64
    %s66 = ssub.s32 %s18, %s27
    %p67 = scmp.eq.s32.totalorder %s66, 0
    %s69 = sadd.s32 %s68, 1
    %s70 = scalar_select %p67, %s68, %s69
    %p73 = pneg %p67
    %p74 = scmp.eq.s32.totalorder %s9, 7
    %p75 = por %p73, %p74
    %p76 = scmp.ne.s32.totalorder %s68, %s71
    %p77 = scmp.eq.s32.totalorder %s9, 0
    %p78 = por %p76, %p77
    %p79 = scmp.ne.s32.totalorder %s68, %s71
    %p80 = scmp.eq.s32.totalorder %s14, 7
    %p81 = por %p79, %p80
    %p82 = scmp.ne.s32.totalorder %s71, %s72
    %p83 = scmp.eq.s32.totalorder %s14, 0
    %p84 = por %p82, %p83
    %p85 = scmp.ne.s32.totalorder %s71, %s72
    %p86 = scmp.eq.s32.totalorder %s15, 7
    %p87 = por %p85, %p86
    %p89 = scmp.ne.s32.totalorder %s72, %s88
    %p90 = scmp.eq.s32.totalorder %s15, 0
    %p91 = por %p89, %p90
    %s93 = sadd.s32 %s92, 1
    %p96 = scmp.eq.s32.totalorder %s9, 7
    %p97 = scmp.ne.s32.totalorder %s92, %s94
    %p98 = scmp.eq.s32.totalorder %s9, 0
    %p99 = por %p97, %p98
    %p100 = scmp.ne.s32.totalorder %s92, %s94
    %p101 = scmp.eq.s32.totalorder %s14, 7
    %p102 = por %p100, %p101
    %p103 = scmp.ne.s32.totalorder %s94, %s95
    %p104 = scmp.eq.s32.totalorder %s14, 0
    %p105 = por %p103, %p104
    %p106 = scmp.ne.s32.totalorder %s94, %s95
    %p107 = scmp.eq.s32.totalorder %s15, 7
    %p108 = por %p106, %p107
    %p110 = scmp.ne.s32.totalorder %s95, %s109
    %p111 = scmp.eq.s32.totalorder %s15, 0
    %p112 = por %p110, %p111
    %s113 = ssub.s32 %s16, %s35
    %s114 = ssub.s32 %s17, %s31
    %s115 = sor.u32 %s113, %s114
    %p116 = scmp.eq.s32.totalorder %s115, 0
    %s118 = sadd.s32 %s117, 1
    %s119 = scalar_select %p116, %s117, %s118
    %p122 = pneg %p116
    %p123 = scmp.eq.s32.totalorder %s9, 7
    %p124 = por %p122, %p123
    %p125 = scmp.ne.s32.totalorder %s117, %s120
    %p126 = scmp.eq.s32.totalorder %s9, 0
    %p127 = por %p125, %p126
    %p128 = scmp.ne.s32.totalorder %s117, %s120
    %p129 = scmp.eq.s32.totalorder %s14, 7
    %p130 = por %p128, %p129
    %p131 = scmp.ne.s32.totalorder %s120, %s121
    %p132 = scmp.eq.s32.totalorder %s14, 0
    %p133 = por %p131, %p132
    %p134 = scmp.ne.s32.totalorder %s120, %s121
    %p135 = scmp.eq.s32.totalorder %s15, 7
    %p136 = por %p134, %p135
    %p138 = scmp.ne.s32.totalorder %s121, %s137
    %p139 = scmp.eq.s32.totalorder %s15, 0
    %p140 = por %p138, %p139
    %p141 = scmp.le.s32.totalorder 1, %s9
    %p142 = scmp.lt.s32.totalorder %s9, 9
    %p143 = pnand %p141, %p142
    %p144 = pneg %p143
    // Predicated region
    $region9: #{_lambda_.5} parent=5 // pred_check
      _
    $region10: #{_lambda_.5} parent=5 // pred_check_branch
      %146 = sbr.rel (%p143) target = $region12
    $region11: #{_lambda_.5} parent=5 // pred_region
      %s147 = ssub.s32 %s9, 1
      // Predicated region
      $region13: #{_lambda_.5} parent=11 // pred_check
        %p148 = pneg %p105
      $region14: #{_lambda_.5} parent=11 // pred_check_branch
        %150 = sbr.rel (%p148) target = $region16
      $region15: #{_lambda_.5} parent=11 // pred_region
        _
      $region16: #{_lambda_.5} parent=11 // pred_fallthru
        _
    $region12: #{_lambda_.5} parent=5 // pred_fallthru
      _
    %p151 = scmp.lt.s32.totalorder %s9, 8
    // Predicated region
    $region17: #{_lambda_.5} parent=5 // pred_check
      %p152 = pneg %p151
    $region18: #{_lambda_.5} parent=5 // pred_check_branch
      %154 = sbr.rel (%p152) target = $region20
    $region19: #{_lambda_.5} parent=5 // pred_region
      // Predicated region
      $region21: #{_lambda_.5} parent=19 // pred_check
        %p155 = pneg %p52
      $region22: #{_lambda_.5} parent=19 // pred_check_branch
        %157 = sbr.rel (%p155) target = $region24
      $region23: #{_lambda_.5} parent=19 // pred_region
        %s158 = smul.u32 16, %s17
        %p159 = scmp.lt.s32.totalorder %s18, 3
        %s160 = scalar_select %p159, %s18, 3
        %p161 = scmp.lt.s32.totalorder %s16, 1
        %s162 = scalar_select %p161, %s16, 1
        %p163 = scmp.lt.s32.totalorder %s158, 15
        %s164 = scalar_select %p163, %s158, 15
        %s165 = smul.addr %s164, 5
        %s166 = smul.addr %s162, 80
        %s167 = sadd.s32 %s165, %s166
        %s168 = smul.addr %s160, 160
        %s169 = sadd.s32 %s167, %s168
        %s170 = smul.addr %s169, 8
        %s171 = scalar_lea.vmem %s0, %s170
        %s172 = smul.u32 16, %s17
      $region24: #{_lambda_.5} parent=19 // pred_fallthru
        _
      // Predicated region
      $region25: #{_lambda_.5} parent=19 // pred_check
        %p173 = pneg %p78
      $region26: #{_lambda_.5} parent=19 // pred_check_branch
        %175 = sbr.rel (%p173) target = $region28
      $region27: #{_lambda_.5} parent=19 // pred_region
        %p176 = scmp.lt.s32.totalorder %s18, 3
        %s177 = scalar_select %p176, %s18, 3
        %s178 = smul.addr %s177, 4
        %s179 = scalar_lea.vmem %s1, %s178
      $region28: #{_lambda_.5} parent=19 // pred_fallthru
        _
    $region20: #{_lambda_.5} parent=5 // pred_fallthru
      _
    %p180 = scmp.le.s32.totalorder 1, %s9
    %p181 = scmp.lt.s32.totalorder %s9, 9
    %p182 = pnand %p180, %p181
    %p183 = pneg %p182
    // Predicated region
    $region29: #{_lambda_.5} parent=5 // pred_check
      _
    $region30: #{_lambda_.5} parent=5 // pred_check_branch
      %185 = sbr.rel (%p182) target = $region32
    $region31: #{_lambda_.5} parent=5 // pred_region
      %s186 = ssub.s32 %s9, 1
      %s187 = smul.u32 16, %s20
      %p188 = scmp.lt.s32.totalorder %s21, 3
      %s189 = scalar_select %p188, %s21, 3
      %p190 = scmp.lt.s32.totalorder %s19, 1
      %s191 = scalar_select %p190, %s19, 1
      %p192 = scmp.lt.s32.totalorder %s187, 15
      %s193 = scalar_select %p192, %s187, 15
      %s194 = smul.addr %s193, 5
      %s195 = smul.addr %s191, 80
      %s196 = sadd.s32 %s194, %s195
      %s197 = smul.addr %s189, 160
      %s198 = sadd.s32 %s196, %s197
      %s199 = smul.addr %s198, 8
      %s200 = scalar_lea.vmem %s0, %s199
      %p201 = pneg %p58
      %p202 = pneg %p55
      %p203 = scmp.lt.s32.totalorder %s21, 3
      %s204 = scalar_select %p203, %s21, 3
      %s205 = smul.addr %s204, 4
      %s206 = scalar_lea.vmem %s1, %s205
      %p207 = pneg %p84
      %p208 = pneg %p81
      %p209 = pneg %p105
      %p210 = pneg %p102
      %p211 = pneg %p133
      %p212 = pneg %p130
      %s213 = smul.u32 32, %s20
      %p214 = scmp.lt.s32.totalorder %s19, 1
      %s215 = scalar_select %p214, %s19, 1
      %p216 = scmp.lt.s32.totalorder %s213, 31
      %s217 = scalar_select %p216, %s213, 31
      %s218 = smul.addr %s215, 32
      %s219 = sadd.s32 %s217, %s218
      %s220 = smul.addr %s219, 8
      %s221 = scalar_lea.vmem %s3, %s220
      %s222 = smul.u32 16, %s20
      %p223 = scmp.lt.s32.totalorder %s21, 3
      %s224 = scalar_select %p223, %s21, 3
      %p225 = scmp.lt.s32.totalorder %s19, 1
      %s226 = scalar_select %p225, %s19, 1
      %p227 = scmp.lt.s32.totalorder %s222, 15
      %s228 = scalar_select %p227, %s222, 15
      %s229 = smul.addr %s228, 5
      %s230 = smul.addr %s226, 80
      %s231 = sadd.s32 %s229, %s230
      %s232 = smul.addr %s224, 160
      %s233 = sadd.s32 %s231, %s232
      %s234 = smul.addr %s233, 8
      %s235 = scalar_lea.vmem %s0, %s234
      %s236 = smul.u32 16, %s20
      %p237 = scmp.lt.s32.totalorder %s21, 3
      %s238 = scalar_select %p237, %s21, 3
      %s239 = smul.addr %s238, 4
      %s240 = scalar_lea.vmem %s1, %s239
      %s241 = smul.u32 32, %s20
      %p242 = scmp.lt.s32.totalorder %s19, 1
      %s243 = scalar_select %p242, %s19, 1
      %p244 = scmp.lt.s32.totalorder %s241, 31
      %s245 = scalar_select %p244, %s241, 31
      %s246 = smul.addr %s243, 32
      %s247 = sadd.s32 %s245, %s246
      %s248 = smul.addr %s247, 8
      %s249 = scalar_lea.vmem %s3, %s248
      %s250 = smul.u32 32, %s20
      %p251 = scmp.eq.s32.totalorder %s21, 0
      // Predicated region
      $region33: #{_lambda_.5} parent=31 // pred_check
        %p252 = pneg %p251
      $region34: #{_lambda_.5} parent=31 // pred_check_branch
        %254 = sbr.rel (%p252) target = $region36
      $region35: #{_lambda_.5} parent=31 // pred_region
        %vm255 = vcmask 523264
        %256 = vst.msk [vmem:[#allocation2] sm:$0xff] %vm255, 0.0
        %257 = vst.msk [vmem:[#allocation2 + $0x8] sm:$0xff] %vm255, 0.0
        %258 = vst.msk [vmem:[#allocation2 + $0x10] sm:$0xff] %vm255, 0.0
        %259 = vst.msk [vmem:[#allocation2 + $0x18] sm:$0xff] %vm255, 0.0
        %260 = vst.msk [vmem:[#allocation2 + $0x20] sm:$0xff] %vm255, 0.0
        %261 = vst.msk [vmem:[#allocation2 + $0x28] sm:$0xff] %vm255, 0.0
        %262 = vst.msk [vmem:[#allocation2 + $0x30] sm:$0xff] %vm255, 0.0
        %263 = vst.msk [vmem:[#allocation2 + $0x38] sm:$0xff] %vm255, 0.0
        %264 = vst.msk [vmem:[#allocation2 + $0x40] sm:$0xff] %vm255, 0.0
        %265 = vst.msk [vmem:[#allocation2 + $0x48] sm:$0xff] %vm255, 0.0
        %266 = vst.msk [vmem:[#allocation2 + $0x50] sm:$0xff] %vm255, 0.0
        %267 = vst.msk [vmem:[#allocation2 + $0x58] sm:$0xff] %vm255, 0.0
        %268 = vst.msk [vmem:[#allocation2 + $0x60] sm:$0xff] %vm255, 0.0
        %269 = vst.msk [vmem:[#allocation2 + $0x68] sm:$0xff] %vm255, 0.0
        %270 = vst.msk [vmem:[#allocation2 + $0x70] sm:$0xff] %vm255, 0.0
        %271 = vst.msk [vmem:[#allocation2 + $0x78] sm:$0xff] %vm255, 0.0
        %272 = vst.msk [vmem:[#allocation2 + $0x80] sm:$0xff] %vm255, 0.0
        %273 = vst.msk [vmem:[#allocation2 + $0x88] sm:$0xff] %vm255, 0.0
        %274 = vst.msk [vmem:[#allocation2 + $0x90] sm:$0xff] %vm255, 0.0
        %275 = vst.msk [vmem:[#allocation2 + $0x98] sm:$0xff] %vm255, 0.0
        %276 = vst.msk [vmem:[#allocation2 + $0xa0] sm:$0xff] %vm255, 0.0
        %277 = vst.msk [vmem:[#allocation2 + $0xa8] sm:$0xff] %vm255, 0.0
        %278 = vst.msk [vmem:[#allocation2 + $0xb0] sm:$0xff] %vm255, 0.0
        %279 = vst.msk [vmem:[#allocation2 + $0xb8] sm:$0xff] %vm255, 0.0
        %280 = vst.msk [vmem:[#allocation2 + $0xc0] sm:$0xff] %vm255, 0.0
        %281 = vst.msk [vmem:[#allocation2 + $0xc8] sm:$0xff] %vm255, 0.0
        %282 = vst.msk [vmem:[#allocation2 + $0xd0] sm:$0xff] %vm255, 0.0
        %283 = vst.msk [vmem:[#allocation2 + $0xd8] sm:$0xff] %vm255, 0.0
        %284 = vst.msk [vmem:[#allocation2 + $0xe0] sm:$0xff] %vm255, 0.0
        %285 = vst.msk [vmem:[#allocation2 + $0xe8] sm:$0xff] %vm255, 0.0
        %286 = vst.msk [vmem:[#allocation2 + $0xf0] sm:$0xff] %vm255, 0.0
        %287 = vst.msk [vmem:[#allocation2 + $0xf8] sm:$0xff] %vm255, 0.0
      $region36: #{_lambda_.5} parent=31 // pred_fallthru
        _
      %v288 = vld [vmem:[#allocation2] sm:$0xff]
      %v289 = vld [vmem:[#allocation2 + $0x8] sm:$0xff]
      %v290 = vld [vmem:[#allocation2 + $0x10] sm:$0xff]
      %v291 = vld [vmem:[#allocation2 + $0x18] sm:$0xff]
      %v292 = vld [vmem:[#allocation2 + $0x20] sm:$0xff]
      %v293 = vld [vmem:[#allocation2 + $0x28] sm:$0xff]
      %v294 = vld [vmem:[#allocation2 + $0x30] sm:$0xff]
      %v295 = vld [vmem:[#allocation2 + $0x38] sm:$0xff]
      %v296 = vld [vmem:[#allocation2 + $0x40] sm:$0xff]
      %v297 = vld [vmem:[#allocation2 + $0x48] sm:$0xff]
      %v298 = vld [vmem:[#allocation2 + $0x50] sm:$0xff]
      %v299 = vld [vmem:[#allocation2 + $0x58] sm:$0xff]
      %v300 = vld [vmem:[#allocation2 + $0x60] sm:$0xff]
      %v301 = vld [vmem:[#allocation2 + $0x68] sm:$0xff]
      %v302 = vld [vmem:[#allocation2 + $0x70] sm:$0xff]
      %v303 = vld [vmem:[#allocation2 + $0x78] sm:$0xff]
      %v304 = vld [vmem:[#allocation2 + $0x80] sm:$0xff]
      %v305 = vld [vmem:[#allocation2 + $0x88] sm:$0xff]
      %v306 = vld [vmem:[#allocation2 + $0x90] sm:$0xff]
      %v307 = vld [vmem:[#allocation2 + $0x98] sm:$0xff]
      %v308 = vld [vmem:[#allocation2 + $0xa0] sm:$0xff]
      %v309 = vld [vmem:[#allocation2 + $0xa8] sm:$0xff]
      %v310 = vld [vmem:[#allocation2 + $0xb0] sm:$0xff]
      %v311 = vld [vmem:[#allocation2 + $0xb8] sm:$0xff]
      %v312 = vld [vmem:[#allocation2 + $0xc0] sm:$0xff]
      %v313 = vld [vmem:[#allocation2 + $0xc8] sm:$0xff]
      %v314 = vld [vmem:[#allocation2 + $0xd0] sm:$0xff]
      %v315 = vld [vmem:[#allocation2 + $0xd8] sm:$0xff]
      %v316 = vld [vmem:[#allocation2 + $0xe0] sm:$0xff]
      %v317 = vld [vmem:[#allocation2 + $0xe8] sm:$0xff]
      %v318 = vld [vmem:[#allocation2 + $0xf0] sm:$0xff]
      %v319 = vld [vmem:[#allocation2 + $0xf8] sm:$0xff]
      %v320 = vld [vmem:[%s235] ss:$2 sm:$0xff]
      %s321 = scalar_lea.vmem %s235, 16
      %v322 = vld [vmem:[%s321] ss:$2 sm:$0xff]
      %s323 = scalar_lea.vmem %s235, 40
      %v324 = vld [vmem:[%s323] ss:$2 sm:$0xff]
      %s325 = scalar_lea.vmem %s235, 56
      %v326 = vld [vmem:[%s325] ss:$2 sm:$0xff]
      %s327 = scalar_lea.vmem %s235, 80
      %v328 = vld [vmem:[%s327] ss:$2 sm:$0xff]
      %s329 = scalar_lea.vmem %s235, 96
      %v330 = vld [vmem:[%s329] ss:$2 sm:$0xff]
      %s331 = scalar_lea.vmem %s235, 120
      %v332 = vld [vmem:[%s331] ss:$2 sm:$0xff]
      %s333 = scalar_lea.vmem %s235, 136
      %v334 = vld [vmem:[%s333] ss:$2 sm:$0xff]
      %s335 = scalar_lea.vmem %s235, 160
      %v336 = vld [vmem:[%s335] ss:$2 sm:$0xff]
      %s337 = scalar_lea.vmem %s235, 176
      %v338 = vld [vmem:[%s337] ss:$2 sm:$0xff]
      %s339 = scalar_lea.vmem %s235, 200
      %v340 = vld [vmem:[%s339] ss:$2 sm:$0xff]
      %s341 = scalar_lea.vmem %s235, 216
      %v342 = vld [vmem:[%s341] ss:$2 sm:$0xff]
      %s343 = scalar_lea.vmem %s235, 240
      %v344 = vld [vmem:[%s343] ss:$2 sm:$0xff]
      %s345 = scalar_lea.vmem %s235, 256
      %v346 = vld [vmem:[%s345] ss:$2 sm:$0xff]
      %s347 = scalar_lea.vmem %s235, 280
      %v348 = vld [vmem:[%s347] ss:$2 sm:$0xff]
      %s349 = scalar_lea.vmem %s235, 296
      %v350 = vld [vmem:[%s349] ss:$2 sm:$0xff]
      %s351 = scalar_lea.vmem %s235, 320
      %v352 = vld [vmem:[%s351] ss:$2 sm:$0xff]
      %s353 = scalar_lea.vmem %s235, 336
      %v354 = vld [vmem:[%s353] ss:$2 sm:$0xff]
      %s355 = scalar_lea.vmem %s235, 360
      %v356 = vld [vmem:[%s355] ss:$2 sm:$0xff]
      %s357 = scalar_lea.vmem %s235, 376
      %v358 = vld [vmem:[%s357] ss:$2 sm:$0xff]
      %s359 = scalar_lea.vmem %s235, 400
      %v360 = vld [vmem:[%s359] ss:$2 sm:$0xff]
      %s361 = scalar_lea.vmem %s235, 416
      %v362 = vld [vmem:[%s361] ss:$2 sm:$0xff]
      %s363 = scalar_lea.vmem %s235, 440
      %v364 = vld [vmem:[%s363] ss:$2 sm:$0xff]
      %s365 = scalar_lea.vmem %s235, 456
      %v366 = vld [vmem:[%s365] ss:$2 sm:$0xff]
      %s367 = scalar_lea.vmem %s235, 480
      %v368 = vld [vmem:[%s367] ss:$2 sm:$0xff]
      %s369 = scalar_lea.vmem %s235, 496
      %v370 = vld [vmem:[%s369] ss:$2 sm:$0xff]
      %s371 = scalar_lea.vmem %s235, 520
      %v372 = vld [vmem:[%s371] ss:$2 sm:$0xff]
      %s373 = scalar_lea.vmem %s235, 536
      %v374 = vld [vmem:[%s373] ss:$2 sm:$0xff]
      %s375 = scalar_lea.vmem %s235, 560
      %v376 = vld [vmem:[%s375] ss:$2 sm:$0xff]
      %s377 = scalar_lea.vmem %s235, 576
      %v378 = vld [vmem:[%s377] ss:$2 sm:$0xff]
      %s379 = scalar_lea.vmem %s235, 600
      %v380 = vld [vmem:[%s379] ss:$2 sm:$0xff]
      %s381 = scalar_lea.vmem %s235, 616
      %v382 = vld [vmem:[%s381] ss:$2 sm:$0xff]
      %v383 = vld [vmem:[%s240] sm:$0x1]
      %385 = vset.pattern.permute.xlu0 0
      %386 = vperm.xlu0 %385, %v320
      %v387 = vpop.permute.xlu0 %386
      %390 = vset.pattern.permute.xlu0 0
      %391 = vperm.xlu0 %390, %v322
      %v392 = vpop.permute.xlu0 %391
      %395 = vset.pattern.permute.xlu0 0
      %396 = vperm.xlu0 %395, %v324
      %v397 = vpop.permute.xlu0 %396
      %400 = vset.pattern.permute.xlu0 0
      %401 = vperm.xlu0 %400, %v326
      %v402 = vpop.permute.xlu0 %401
      %405 = vset.pattern.permute.xlu0 0
      %406 = vperm.xlu0 %405, %v328
      %v407 = vpop.permute.xlu0 %406
      %410 = vset.pattern.permute.xlu0 0
      %411 = vperm.xlu0 %410, %v330
      %v412 = vpop.permute.xlu0 %411
      %415 = vset.pattern.permute.xlu0 0
      %416 = vperm.xlu0 %415, %v332
      %v417 = vpop.permute.xlu0 %416
      %420 = vset.pattern.permute.xlu0 0
      %421 = vperm.xlu0 %420, %v334
      %v422 = vpop.permute.xlu0 %421
      %425 = vset.pattern.permute.xlu0 0
      %426 = vperm.xlu0 %425, %v336
      %v427 = vpop.permute.xlu0 %426
      %430 = vset.pattern.permute.xlu0 0
      %431 = vperm.xlu0 %430, %v338
      %v432 = vpop.permute.xlu0 %431
      %435 = vset.pattern.permute.xlu0 0
      %436 = vperm.xlu0 %435, %v340
      %v437 = vpop.permute.xlu0 %436
      %440 = vset.pattern.permute.xlu0 0
      %441 = vperm.xlu0 %440, %v342
      %v442 = vpop.permute.xlu0 %441
      %445 = vset.pattern.permute.xlu0 0
      %446 = vperm.xlu0 %445, %v344
      %v447 = vpop.permute.xlu0 %446
      %450 = vset.pattern.permute.xlu0 0
      %451 = vperm.xlu0 %450, %v346
      %v452 = vpop.permute.xlu0 %451
      %455 = vset.pattern.permute.xlu0 0
      %456 = vperm.xlu0 %455, %v348
      %v457 = vpop.permute.xlu0 %456
      %460 = vset.pattern.permute.xlu0 0
      %461 = vperm.xlu0 %460, %v350
      %v462 = vpop.permute.xlu0 %461
      %465 = vset.pattern.permute.xlu0 0
      %466 = vperm.xlu0 %465, %v352
      %v467 = vpop.permute.xlu0 %466
      %470 = vset.pattern.permute.xlu0 0
      %471 = vperm.xlu0 %470, %v354
      %v472 = vpop.permute.xlu0 %471
      %475 = vset.pattern.permute.xlu0 0
      %476 = vperm.xlu0 %475, %v356
      %v477 = vpop.permute.xlu0 %476
      %480 = vset.pattern.permute.xlu0 0
      %481 = vperm.xlu0 %480, %v358
      %v482 = vpop.permute.xlu0 %481
      %485 = vset.pattern.permute.xlu0 0
      %486 = vperm.xlu0 %485, %v360
      %v487 = vpop.permute.xlu0 %486
      %490 = vset.pattern.permute.xlu0 0
      %491 = vperm.xlu0 %490, %v362
      %v492 = vpop.permute.xlu0 %491
      %495 = vset.pattern.permute.xlu0 0
      %496 = vperm.xlu0 %495, %v364
      %v497 = vpop.permute.xlu0 %496
      %500 = vset.pattern.permute.xlu0 0
      %501 = vperm.xlu0 %500, %v366
      %v502 = vpop.permute.xlu0 %501
      %505 = vset.pattern.permute.xlu0 0
      %506 = vperm.xlu0 %505, %v368
      %v507 = vpop.permute.xlu0 %506
      %510 = vset.pattern.permute.xlu0 0
      %511 = vperm.xlu0 %510, %v370
      %v512 = vpop.permute.xlu0 %511
      %515 = vset.pattern.permute.xlu0 0
      %516 = vperm.xlu0 %515, %v372
      %v517 = vpop.permute.xlu0 %516
      %520 = vset.pattern.permute.xlu0 0
      %521 = vperm.xlu0 %520, %v374
      %v522 = vpop.permute.xlu0 %521
      %525 = vset.pattern.permute.xlu0 0
      %526 = vperm.xlu0 %525, %v376
      %v527 = vpop.permute.xlu0 %526
      %530 = vset.pattern.permute.xlu0 0
      %531 = vperm.xlu0 %530, %v378
      %v532 = vpop.permute.xlu0 %531
      %535 = vset.pattern.permute.xlu0 0
      %536 = vperm.xlu0 %535, %v380
      %v537 = vpop.permute.xlu0 %536
      %540 = vset.pattern.permute.xlu0 0
      %541 = vperm.xlu0 %540, %v382
      %v542 = vpop.permute.xlu0 %541
      %v545 = vlaneseq
      %v546 = vshrl.u32 %v545, 7
      %v547 = vsub.s32 0, %v546
      %v548 = vrot.slane %v383, %v547
      %v550 = vmul.f32 %v387, %v548
      %v551 = vmul.f32 %v392, %v548
      %v552 = vmul.f32 %v397, %v548
      %v553 = vmul.f32 %v402, %v548
      %v554 = vmul.f32 %v407, %v548
      %v555 = vmul.f32 %v412, %v548
      %v556 = vmul.f32 %v417, %v548
      %v557 = vmul.f32 %v422, %v548
      %v558 = vmul.f32 %v427, %v548
      %v559 = vmul.f32 %v432, %v548
      %v560 = vmul.f32 %v437, %v548
      %v561 = vmul.f32 %v442, %v548
      %v562 = vmul.f32 %v447, %v548
      %v563 = vmul.f32 %v452, %v548
      %v564 = vmul.f32 %v457, %v548
      %v565 = vmul.f32 %v462, %v548
      %v566 = vmul.f32 %v467, %v548
      %v567 = vmul.f32 %v472, %v548
      %v568 = vmul.f32 %v477, %v548
      %v569 = vmul.f32 %v482, %v548
      %v570 = vmul.f32 %v487, %v548
      %v571 = vmul.f32 %v492, %v548
      %v572 = vmul.f32 %v497, %v548
      %v573 = vmul.f32 %v502, %v548
      %v574 = vmul.f32 %v507, %v548
      %v575 = vmul.f32 %v512, %v548
      %v576 = vmul.f32 %v517, %v548
      %v577 = vmul.f32 %v522, %v548
      %v578 = vmul.f32 %v527, %v548
      %v579 = vmul.f32 %v532, %v548
      %v580 = vmul.f32 %v537, %v548
      %v581 = vmul.f32 %v542, %v548
      %v582 = vadd.f32 %v288, %v550
      %v583 = vadd.f32 %v289, %v551
      %v584 = vadd.f32 %v290, %v552
      %v585 = vadd.f32 %v291, %v553
      %v586 = vadd.f32 %v292, %v554
      %v587 = vadd.f32 %v293, %v555
      %v588 = vadd.f32 %v294, %v556
      %v589 = vadd.f32 %v295, %v557
      %v590 = vadd.f32 %v296, %v558
      %v591 = vadd.f32 %v297, %v559
      %v592 = vadd.f32 %v298, %v560
      %v593 = vadd.f32 %v299, %v561
      %v594 = vadd.f32 %v300, %v562
      %v595 = vadd.f32 %v301, %v563
      %v596 = vadd.f32 %v302, %v564
      %v597 = vadd.f32 %v303, %v565
      %v598 = vadd.f32 %v304, %v566
      %v599 = vadd.f32 %v305, %v567
      %v600 = vadd.f32 %v306, %v568
      %v601 = vadd.f32 %v307, %v569
      %v602 = vadd.f32 %v308, %v570
      %v603 = vadd.f32 %v309, %v571
      %v604 = vadd.f32 %v310, %v572
      %v605 = vadd.f32 %v311, %v573
      %v606 = vadd.f32 %v312, %v574
      %v607 = vadd.f32 %v313, %v575
      %v608 = vadd.f32 %v314, %v576
      %v609 = vadd.f32 %v315, %v577
      %v610 = vadd.f32 %v316, %v578
      %v611 = vadd.f32 %v317, %v579
      %v612 = vadd.f32 %v318, %v580
      %v613 = vadd.f32 %v319, %v581
      %s614 = scalar_lea.vmem %s235, 1
      %v615 = vld [vmem:[%s614] ss:$2 sm:$0xff]
      %s616 = scalar_lea.vmem %s235, 17
      %v617 = vld [vmem:[%s616] ss:$2 sm:$0xff]
      %s618 = scalar_lea.vmem %s235, 41
      %v619 = vld [vmem:[%s618] ss:$2 sm:$0xff]
      %s620 = scalar_lea.vmem %s235, 57
      %v621 = vld [vmem:[%s620] ss:$2 sm:$0xff]
      %s622 = scalar_lea.vmem %s235, 81
      %v623 = vld [vmem:[%s622] ss:$2 sm:$0xff]
      %s624 = scalar_lea.vmem %s235, 97
      %v625 = vld [vmem:[%s624] ss:$2 sm:$0xff]
      %s626 = scalar_lea.vmem %s235, 121
      %v627 = vld [vmem:[%s626] ss:$2 sm:$0xff]
      %s628 = scalar_lea.vmem %s235, 137
      %v629 = vld [vmem:[%s628] ss:$2 sm:$0xff]
      %s630 = scalar_lea.vmem %s235, 161
      %v631 = vld [vmem:[%s630] ss:$2 sm:$0xff]
      %s632 = scalar_lea.vmem %s235, 177
      %v633 = vld [vmem:[%s632] ss:$2 sm:$0xff]
      %s634 = scalar_lea.vmem %s235, 201
      %v635 = vld [vmem:[%s634] ss:$2 sm:$0xff]
      %s636 = scalar_lea.vmem %s235, 217
      %v637 = vld [vmem:[%s636] ss:$2 sm:$0xff]
      %s638 = scalar_lea.vmem %s235, 241
      %v639 = vld [vmem:[%s638] ss:$2 sm:$0xff]
      %s640 = scalar_lea.vmem %s235, 257
      %v641 = vld [vmem:[%s640] ss:$2 sm:$0xff]
      %s642 = scalar_lea.vmem %s235, 281
      %v643 = vld [vmem:[%s642] ss:$2 sm:$0xff]
      %s644 = scalar_lea.vmem %s235, 297
      %v645 = vld [vmem:[%s644] ss:$2 sm:$0xff]
      %s646 = scalar_lea.vmem %s235, 321
      %v647 = vld [vmem:[%s646] ss:$2 sm:$0xff]
      %s648 = scalar_lea.vmem %s235, 337
      %v649 = vld [vmem:[%s648] ss:$2 sm:$0xff]
      %s650 = scalar_lea.vmem %s235, 361
      %v651 = vld [vmem:[%s650] ss:$2 sm:$0xff]
      %s652 = scalar_lea.vmem %s235, 377
      %v653 = vld [vmem:[%s652] ss:$2 sm:$0xff]
      %s654 = scalar_lea.vmem %s235, 401
      %v655 = vld [vmem:[%s654] ss:$2 sm:$0xff]
      %s656 = scalar_lea.vmem %s235, 417
      %v657 = vld [vmem:[%s656] ss:$2 sm:$0xff]
      %s658 = scalar_lea.vmem %s235, 441
      %v659 = vld [vmem:[%s658] ss:$2 sm:$0xff]
      %s660 = scalar_lea.vmem %s235, 457
      %v661 = vld [vmem:[%s660] ss:$2 sm:$0xff]
      %s662 = scalar_lea.vmem %s235, 481
      %v663 = vld [vmem:[%s662] ss:$2 sm:$0xff]
      %s664 = scalar_lea.vmem %s235, 497
      %v665 = vld [vmem:[%s664] ss:$2 sm:$0xff]
      %s666 = scalar_lea.vmem %s235, 521
      %v667 = vld [vmem:[%s666] ss:$2 sm:$0xff]
      %s668 = scalar_lea.vmem %s235, 537
      %v669 = vld [vmem:[%s668] ss:$2 sm:$0xff]
      %s670 = scalar_lea.vmem %s235, 561
      %v671 = vld [vmem:[%s670] ss:$2 sm:$0xff]
      %s672 = scalar_lea.vmem %s235, 577
      %v673 = vld [vmem:[%s672] ss:$2 sm:$0xff]
      %s674 = scalar_lea.vmem %s235, 601
      %v675 = vld [vmem:[%s674] ss:$2 sm:$0xff]
      %s676 = scalar_lea.vmem %s235, 617
      %v677 = vld [vmem:[%s676] ss:$2 sm:$0xff]
      %s678 = scalar_lea.vmem %s240, 1
      %v679 = vld [vmem:[%s678] sm:$0x1]
      %681 = vset.pattern.permute.xlu0 0
      %682 = vperm.xlu0 %681, %v615
      %v683 = vpop.permute.xlu0 %682
      %686 = vset.pattern.permute.xlu0 0
      %687 = vperm.xlu0 %686, %v617
      %v688 = vpop.permute.xlu0 %687
      %691 = vset.pattern.permute.xlu0 0
      %692 = vperm.xlu0 %691, %v619
      %v693 = vpop.permute.xlu0 %692
      %696 = vset.pattern.permute.xlu0 0
      %697 = vperm.xlu0 %696, %v621
      %v698 = vpop.permute.xlu0 %697
      %701 = vset.pattern.permute.xlu0 0
      %702 = vperm.xlu0 %701, %v623
      %v703 = vpop.permute.xlu0 %702
      %706 = vset.pattern.permute.xlu0 0
      %707 = vperm.xlu0 %706, %v625
      %v708 = vpop.permute.xlu0 %707
      %711 = vset.pattern.permute.xlu0 0
      %712 = vperm.xlu0 %711, %v627
      %v713 = vpop.permute.xlu0 %712
      %716 = vset.pattern.permute.xlu0 0
      %717 = vperm.xlu0 %716, %v629
      %v718 = vpop.permute.xlu0 %717
      %721 = vset.pattern.permute.xlu0 0
      %722 = vperm.xlu0 %721, %v631
      %v723 = vpop.permute.xlu0 %722
      %726 = vset.pattern.permute.xlu0 0
      %727 = vperm.xlu0 %726, %v633
      %v728 = vpop.permute.xlu0 %727
      %731 = vset.pattern.permute.xlu0 0
      %732 = vperm.xlu0 %731, %v635
      %v733 = vpop.permute.xlu0 %732
      %736 = vset.pattern.permute.xlu0 0
      %737 = vperm.xlu0 %736, %v637
      %v738 = vpop.permute.xlu0 %737
      %741 = vset.pattern.permute.xlu0 0
      %742 = vperm.xlu0 %741, %v639
      %v743 = vpop.permute.xlu0 %742
      %746 = vset.pattern.permute.xlu0 0
      %747 = vperm.xlu0 %746, %v641
      %v748 = vpop.permute.xlu0 %747
      %751 = vset.pattern.permute.xlu0 0
      %752 = vperm.xlu0 %751, %v643
      %v753 = vpop.permute.xlu0 %752
      %756 = vset.pattern.permute.xlu0 0
      %757 = vperm.xlu0 %756, %v645
      %v758 = vpop.permute.xlu0 %757
      %761 = vset.pattern.permute.xlu0 0
      %762 = vperm.xlu0 %761, %v647
      %v763 = vpop.permute.xlu0 %762
      %766 = vset.pattern.permute.xlu0 0
      %767 = vperm.xlu0 %766, %v649
      %v768 = vpop.permute.xlu0 %767
      %771 = vset.pattern.permute.xlu0 0
      %772 = vperm.xlu0 %771, %v651
      %v773 = vpop.permute.xlu0 %772
      %776 = vset.pattern.permute.xlu0 0
      %777 = vperm.xlu0 %776, %v653
      %v778 = vpop.permute.xlu0 %777
      %781 = vset.pattern.permute.xlu0 0
      %782 = vperm.xlu0 %781, %v655
      %v783 = vpop.permute.xlu0 %782
      %786 = vset.pattern.permute.xlu0 0
      %787 = vperm.xlu0 %786, %v657
      %v788 = vpop.permute.xlu0 %787
      %791 = vset.pattern.permute.xlu0 0
      %792 = vperm.xlu0 %791, %v659
      %v793 = vpop.permute.xlu0 %792
      %796 = vset.pattern.permute.xlu0 0
      %797 = vperm.xlu0 %796, %v661
      %v798 = vpop.permute.xlu0 %797
      %801 = vset.pattern.permute.xlu0 0
      %802 = vperm.xlu0 %801, %v663
      %v803 = vpop.permute.xlu0 %802
      %806 = vset.pattern.permute.xlu0 0
      %807 = vperm.xlu0 %806, %v665
      %v808 = vpop.permute.xlu0 %807
      %811 = vset.pattern.permute.xlu0 0
      %812 = vperm.xlu0 %811, %v667
      %v813 = vpop.permute.xlu0 %812
      %816 = vset.pattern.permute.xlu0 0
      %817 = vperm.xlu0 %816, %v669
      %v818 = vpop.permute.xlu0 %817
      %821 = vset.pattern.permute.xlu0 0
      %822 = vperm.xlu0 %821, %v671
      %v823 = vpop.permute.xlu0 %822
      %826 = vset.pattern.permute.xlu0 0
      %827 = vperm.xlu0 %826, %v673
      %v828 = vpop.permute.xlu0 %827
      %831 = vset.pattern.permute.xlu0 0
      %832 = vperm.xlu0 %831, %v675
      %v833 = vpop.permute.xlu0 %832
      %836 = vset.pattern.permute.xlu0 0
      %837 = vperm.xlu0 %836, %v677
      %v838 = vpop.permute.xlu0 %837
      %v841 = vlaneseq
      %v842 = vshrl.u32 %v841, 7
      %v843 = vsub.s32 0, %v842
      %v844 = vrot.slane %v679, %v843
      %v846 = vmul.f32 %v683, %v844
      %v847 = vmul.f32 %v688, %v844
      %v848 = vmul.f32 %v693, %v844
      %v849 = vmul.f32 %v698, %v844
      %v850 = vmul.f32 %v703, %v844
      %v851 = vmul.f32 %v708, %v844
      %v852 = vmul.f32 %v713, %v844
      %v853 = vmul.f32 %v718, %v844
      %v854 = vmul.f32 %v723, %v844
      %v855 = vmul.f32 %v728, %v844
      %v856 = vmul.f32 %v733, %v844
      %v857 = vmul.f32 %v738, %v844
      %v858 = vmul.f32 %v743, %v844
      %v859 = vmul.f32 %v748, %v844
      %v860 = vmul.f32 %v753, %v844
      %v861 = vmul.f32 %v758, %v844
      %v862 = vmul.f32 %v763, %v844
      %v863 = vmul.f32 %v768, %v844
      %v864 = vmul.f32 %v773, %v844
      %v865 = vmul.f32 %v778, %v844
      %v866 = vmul.f32 %v783, %v844
      %v867 = vmul.f32 %v788, %v844
      %v868 = vmul.f32 %v793, %v844
      %v869 = vmul.f32 %v798, %v844
      %v870 = vmul.f32 %v803, %v844
      %v871 = vmul.f32 %v808, %v844
      %v872 = vmul.f32 %v813, %v844
      %v873 = vmul.f32 %v818, %v844
      %v874 = vmul.f32 %v823, %v844
      %v875 = vmul.f32 %v828, %v844
      %v876 = vmul.f32 %v833, %v844
      %v877 = vmul.f32 %v838, %v844
      %v878 = vadd.f32 %v582, %v846
      %v879 = vadd.f32 %v583, %v847
      %v880 = vadd.f32 %v584, %v848
      %v881 = vadd.f32 %v585, %v849
      %v882 = vadd.f32 %v586, %v850
      %v883 = vadd.f32 %v587, %v851
      %v884 = vadd.f32 %v588, %v852
      %v885 = vadd.f32 %v589, %v853
      %v886 = vadd.f32 %v590, %v854
      %v887 = vadd.f32 %v591, %v855
      %v888 = vadd.f32 %v592, %v856
      %v889 = vadd.f32 %v593, %v857
      %v890 = vadd.f32 %v594, %v858
      %v891 = vadd.f32 %v595, %v859
      %v892 = vadd.f32 %v596, %v860
      %v893 = vadd.f32 %v597, %v861
      %v894 = vadd.f32 %v598, %v862
      %v895 = vadd.f32 %v599, %v863
      %v896 = vadd.f32 %v600, %v864
      %v897 = vadd.f32 %v601, %v865
      %v898 = vadd.f32 %v602, %v866
      %v899 = vadd.f32 %v603, %v867
      %v900 = vadd.f32 %v604, %v868
      %v901 = vadd.f32 %v605, %v869
      %v902 = vadd.f32 %v606, %v870
      %v903 = vadd.f32 %v607, %v871
      %v904 = vadd.f32 %v608, %v872
      %v905 = vadd.f32 %v609, %v873
      %v906 = vadd.f32 %v610, %v874
      %v907 = vadd.f32 %v611, %v875
      %v908 = vadd.f32 %v612, %v876
      %v909 = vadd.f32 %v613, %v877
      %s910 = scalar_lea.vmem %s235, 2
      %v911 = vld [vmem:[%s910] ss:$2 sm:$0xff]
      %s912 = scalar_lea.vmem %s235, 18
      %v913 = vld [vmem:[%s912] ss:$2 sm:$0xff]
      %s914 = scalar_lea.vmem %s235, 42
      %v915 = vld [vmem:[%s914] ss:$2 sm:$0xff]
      %s916 = scalar_lea.vmem %s235, 58
      %v917 = vld [vmem:[%s916] ss:$2 sm:$0xff]
      %s918 = scalar_lea.vmem %s235, 82
      %v919 = vld [vmem:[%s918] ss:$2 sm:$0xff]
      %s920 = scalar_lea.vmem %s235, 98
      %v921 = vld [vmem:[%s920] ss:$2 sm:$0xff]
      %s922 = scalar_lea.vmem %s235, 122
      %v923 = vld [vmem:[%s922] ss:$2 sm:$0xff]
      %s924 = scalar_lea.vmem %s235, 138
      %v925 = vld [vmem:[%s924] ss:$2 sm:$0xff]
      %s926 = scalar_lea.vmem %s235, 162
      %v927 = vld [vmem:[%s926] ss:$2 sm:$0xff]
      %s928 = scalar_lea.vmem %s235, 178
      %v929 = vld [vmem:[%s928] ss:$2 sm:$0xff]
      %s930 = scalar_lea.vmem %s235, 202
      %v931 = vld [vmem:[%s930] ss:$2 sm:$0xff]
      %s932 = scalar_lea.vmem %s235, 218
      %v933 = vld [vmem:[%s932] ss:$2 sm:$0xff]
      %s934 = scalar_lea.vmem %s235, 242
      %v935 = vld [vmem:[%s934] ss:$2 sm:$0xff]
      %s936 = scalar_lea.vmem %s235, 258
      %v937 = vld [vmem:[%s936] ss:$2 sm:$0xff]
      %s938 = scalar_lea.vmem %s235, 282
      %v939 = vld [vmem:[%s938] ss:$2 sm:$0xff]
      %s940 = scalar_lea.vmem %s235, 298
      %v941 = vld [vmem:[%s940] ss:$2 sm:$0xff]
      %s942 = scalar_lea.vmem %s235, 322
      %v943 = vld [vmem:[%s942] ss:$2 sm:$0xff]
      %s944 = scalar_lea.vmem %s235, 338
      %v945 = vld [vmem:[%s944] ss:$2 sm:$0xff]
      %s946 = scalar_lea.vmem %s235, 362
      %v947 = vld [vmem:[%s946] ss:$2 sm:$0xff]
      %s948 = scalar_lea.vmem %s235, 378
      %v949 = vld [vmem:[%s948] ss:$2 sm:$0xff]
      %s950 = scalar_lea.vmem %s235, 402
      %v951 = vld [vmem:[%s950] ss:$2 sm:$0xff]
      %s952 = scalar_lea.vmem %s235, 418
      %v953 = vld [vmem:[%s952] ss:$2 sm:$0xff]
      %s954 = scalar_lea.vmem %s235, 442
      %v955 = vld [vmem:[%s954] ss:$2 sm:$0xff]
      %s956 = scalar_lea.vmem %s235, 458
      %v957 = vld [vmem:[%s956] ss:$2 sm:$0xff]
      %s958 = scalar_lea.vmem %s235, 482
      %v959 = vld [vmem:[%s958] ss:$2 sm:$0xff]
      %s960 = scalar_lea.vmem %s235, 498
      %v961 = vld [vmem:[%s960] ss:$2 sm:$0xff]
      %s962 = scalar_lea.vmem %s235, 522
      %v963 = vld [vmem:[%s962] ss:$2 sm:$0xff]
      %s964 = scalar_lea.vmem %s235, 538
      %v965 = vld [vmem:[%s964] ss:$2 sm:$0xff]
      %s966 = scalar_lea.vmem %s235, 562
      %v967 = vld [vmem:[%s966] ss:$2 sm:$0xff]
      %s968 = scalar_lea.vmem %s235, 578
      %v969 = vld [vmem:[%s968] ss:$2 sm:$0xff]
      %s970 = scalar_lea.vmem %s235, 602
      %v971 = vld [vmem:[%s970] ss:$2 sm:$0xff]
      %s972 = scalar_lea.vmem %s235, 618
      %v973 = vld [vmem:[%s972] ss:$2 sm:$0xff]
      %s974 = scalar_lea.vmem %s240, 2
      %v975 = vld [vmem:[%s974] sm:$0x1]
      %977 = vset.pattern.permute.xlu0 0
      %978 = vperm.xlu0 %977, %v911
      %v979 = vpop.permute.xlu0 %978
      %982 = vset.pattern.permute.xlu0 0
      %983 = vperm.xlu0 %982, %v913
      %v984 = vpop.permute.xlu0 %983
      %987 = vset.pattern.permute.xlu0 0
      %988 = vperm.xlu0 %987, %v915
      %v989 = vpop.permute.xlu0 %988
      %992 = vset.pattern.permute.xlu0 0
      %993 = vperm.xlu0 %992, %v917
      %v994 = vpop.permute.xlu0 %993
      %997 = vset.pattern.permute.xlu0 0
      %998 = vperm.xlu0 %997, %v919
      %v999 = vpop.permute.xlu0 %998
      %1002 = vset.pattern.permute.xlu0 0
      %1003 = vperm.xlu0 %1002, %v921
      %v1004 = vpop.permute.xlu0 %1003
      %1007 = vset.pattern.permute.xlu0 0
      %1008 = vperm.xlu0 %1007, %v923
      %v1009 = vpop.permute.xlu0 %1008
      %1012 = vset.pattern.permute.xlu0 0
      %1013 = vperm.xlu0 %1012, %v925
      %v1014 = vpop.permute.xlu0 %1013
      %1017 = vset.pattern.permute.xlu0 0
      %1018 = vperm.xlu0 %1017, %v927
      %v1019 = vpop.permute.xlu0 %1018
      %1022 = vset.pattern.permute.xlu0 0
      %1023 = vperm.xlu0 %1022, %v929
      %v1024 = vpop.permute.xlu0 %1023
      %1027 = vset.pattern.permute.xlu0 0
      %1028 = vperm.xlu0 %1027, %v931
      %v1029 = vpop.permute.xlu0 %1028
      %1032 = vset.pattern.permute.xlu0 0
      %1033 = vperm.xlu0 %1032, %v933
      %v1034 = vpop.permute.xlu0 %1033
      %1037 = vset.pattern.permute.xlu0 0
      %1038 = vperm.xlu0 %1037, %v935
      %v1039 = vpop.permute.xlu0 %1038
      %1042 = vset.pattern.permute.xlu0 0
      %1043 = vperm.xlu0 %1042, %v937
      %v1044 = vpop.permute.xlu0 %1043
      %1047 = vset.pattern.permute.xlu0 0
      %1048 = vperm.xlu0 %1047, %v939
      %v1049 = vpop.permute.xlu0 %1048
      %1052 = vset.pattern.permute.xlu0 0
      %1053 = vperm.xlu0 %1052, %v941
      %v1054 = vpop.permute.xlu0 %1053
      %1057 = vset.pattern.permute.xlu0 0
      %1058 = vperm.xlu0 %1057, %v943
      %v1059 = vpop.permute.xlu0 %1058
      %1062 = vset.pattern.permute.xlu0 0
      %1063 = vperm.xlu0 %1062, %v945
      %v1064 = vpop.permute.xlu0 %1063
      %1067 = vset.pattern.permute.xlu0 0
      %1068 = vperm.xlu0 %1067, %v947
      %v1069 = vpop.permute.xlu0 %1068
      %1072 = vset.pattern.permute.xlu0 0
      %1073 = vperm.xlu0 %1072, %v949
      %v1074 = vpop.permute.xlu0 %1073
      %1077 = vset.pattern.permute.xlu0 0
      %1078 = vperm.xlu0 %1077, %v951
      %v1079 = vpop.permute.xlu0 %1078
      %1082 = vset.pattern.permute.xlu0 0
      %1083 = vperm.xlu0 %1082, %v953
      %v1084 = vpop.permute.xlu0 %1083
      %1087 = vset.pattern.permute.xlu0 0
      %1088 = vperm.xlu0 %1087, %v955
      %v1089 = vpop.permute.xlu0 %1088
      %1092 = vset.pattern.permute.xlu0 0
      %1093 = vperm.xlu0 %1092, %v957
      %v1094 = vpop.permute.xlu0 %1093
      %1097 = vset.pattern.permute.xlu0 0
      %1098 = vperm.xlu0 %1097, %v959
      %v1099 = vpop.permute.xlu0 %1098
      %1102 = vset.pattern.permute.xlu0 0
      %1103 = vperm.xlu0 %1102, %v961
      %v1104 = vpop.permute.xlu0 %1103
      %1107 = vset.pattern.permute.xlu0 0
      %1108 = vperm.xlu0 %1107, %v963
      %v1109 = vpop.permute.xlu0 %1108
      %1112 = vset.pattern.permute.xlu0 0
      %1113 = vperm.xlu0 %1112, %v965
      %v1114 = vpop.permute.xlu0 %1113
      %1117 = vset.pattern.permute.xlu0 0
      %1118 = vperm.xlu0 %1117, %v967
      %v1119 = vpop.permute.xlu0 %1118
      %1122 = vset.pattern.permute.xlu0 0
      %1123 = vperm.xlu0 %1122, %v969
      %v1124 = vpop.permute.xlu0 %1123
      %1127 = vset.pattern.permute.xlu0 0
      %1128 = vperm.xlu0 %1127, %v971
      %v1129 = vpop.permute.xlu0 %1128
      %1132 = vset.pattern.permute.xlu0 0
      %1133 = vperm.xlu0 %1132, %v973
      %v1134 = vpop.permute.xlu0 %1133
      %v1137 = vlaneseq
      %v1138 = vshrl.u32 %v1137, 7
      %v1139 = vsub.s32 0, %v1138
      %v1140 = vrot.slane %v975, %v1139
      %v1142 = vmul.f32 %v979, %v1140
      %v1143 = vmul.f32 %v984, %v1140
      %v1144 = vmul.f32 %v989, %v1140
      %v1145 = vmul.f32 %v994, %v1140
      %v1146 = vmul.f32 %v999, %v1140
      %v1147 = vmul.f32 %v1004, %v1140
      %v1148 = vmul.f32 %v1009, %v1140
      %v1149 = vmul.f32 %v1014, %v1140
      %v1150 = vmul.f32 %v1019, %v1140
      %v1151 = vmul.f32 %v1024, %v1140
      %v1152 = vmul.f32 %v1029, %v1140
      %v1153 = vmul.f32 %v1034, %v1140
      %v1154 = vmul.f32 %v1039, %v1140
      %v1155 = vmul.f32 %v1044, %v1140
      %v1156 = vmul.f32 %v1049, %v1140
      %v1157 = vmul.f32 %v1054, %v1140
      %v1158 = vmul.f32 %v1059, %v1140
      %v1159 = vmul.f32 %v1064, %v1140
      %v1160 = vmul.f32 %v1069, %v1140
      %v1161 = vmul.f32 %v1074, %v1140
      %v1162 = vmul.f32 %v1079, %v1140
      %v1163 = vmul.f32 %v1084, %v1140
      %v1164 = vmul.f32 %v1089, %v1140
      %v1165 = vmul.f32 %v1094, %v1140
      %v1166 = vmul.f32 %v1099, %v1140
      %v1167 = vmul.f32 %v1104, %v1140
      %v1168 = vmul.f32 %v1109, %v1140
      %v1169 = vmul.f32 %v1114, %v1140
      %v1170 = vmul.f32 %v1119, %v1140
      %v1171 = vmul.f32 %v1124, %v1140
      %v1172 = vmul.f32 %v1129, %v1140
      %v1173 = vmul.f32 %v1134, %v1140
      %v1174 = vadd.f32 %v878, %v1142
      %v1175 = vadd.f32 %v879, %v1143
      %v1176 = vadd.f32 %v880, %v1144
      %v1177 = vadd.f32 %v881, %v1145
      %v1178 = vadd.f32 %v882, %v1146
      %v1179 = vadd.f32 %v883, %v1147
      %v1180 = vadd.f32 %v884, %v1148
      %v1181 = vadd.f32 %v885, %v1149
      %v1182 = vadd.f32 %v886, %v1150
      %v1183 = vadd.f32 %v887, %v1151
      %v1184 = vadd.f32 %v888, %v1152
      %v1185 = vadd.f32 %v889, %v1153
      %v1186 = vadd.f32 %v890, %v1154
      %v1187 = vadd.f32 %v891, %v1155
      %v1188 = vadd.f32 %v892, %v1156
      %v1189 = vadd.f32 %v893, %v1157
      %v1190 = vadd.f32 %v894, %v1158
      %v1191 = vadd.f32 %v895, %v1159
      %v1192 = vadd.f32 %v896, %v1160
      %v1193 = vadd.f32 %v897, %v1161
      %v1194 = vadd.f32 %v898, %v1162
      %v1195 = vadd.f32 %v899, %v1163
      %v1196 = vadd.f32 %v900, %v1164
      %v1197 = vadd.f32 %v901, %v1165
      %v1198 = vadd.f32 %v902, %v1166
      %v1199 = vadd.f32 %v903, %v1167
      %v1200 = vadd.f32 %v904, %v1168
      %v1201 = vadd.f32 %v905, %v1169
      %v1202 = vadd.f32 %v906, %v1170
      %v1203 = vadd.f32 %v907, %v1171
      %v1204 = vadd.f32 %v908, %v1172
      %v1205 = vadd.f32 %v909, %v1173
      %s1206 = scalar_lea.vmem %s235, 3
      %v1207 = vld [vmem:[%s1206] ss:$2 sm:$0xff]
      %s1208 = scalar_lea.vmem %s235, 19
      %v1209 = vld [vmem:[%s1208] ss:$2 sm:$0xff]
      %s1210 = scalar_lea.vmem %s235, 43
      %v1211 = vld [vmem:[%s1210] ss:$2 sm:$0xff]
      %s1212 = scalar_lea.vmem %s235, 59
      %v1213 = vld [vmem:[%s1212] ss:$2 sm:$0xff]
      %s1214 = scalar_lea.vmem %s235, 83
      %v1215 = vld [vmem:[%s1214] ss:$2 sm:$0xff]
      %s1216 = scalar_lea.vmem %s235, 99
      %v1217 = vld [vmem:[%s1216] ss:$2 sm:$0xff]
      %s1218 = scalar_lea.vmem %s235, 123
      %v1219 = vld [vmem:[%s1218] ss:$2 sm:$0xff]
      %s1220 = scalar_lea.vmem %s235, 139
      %v1221 = vld [vmem:[%s1220] ss:$2 sm:$0xff]
      %s1222 = scalar_lea.vmem %s235, 163
      %v1223 = vld [vmem:[%s1222] ss:$2 sm:$0xff]
      %s1224 = scalar_lea.vmem %s235, 179
      %v1225 = vld [vmem:[%s1224] ss:$2 sm:$0xff]
      %s1226 = scalar_lea.vmem %s235, 203
      %v1227 = vld [vmem:[%s1226] ss:$2 sm:$0xff]
      %s1228 = scalar_lea.vmem %s235, 219
      %v1229 = vld [vmem:[%s1228] ss:$2 sm:$0xff]
      %s1230 = scalar_lea.vmem %s235, 243
      %v1231 = vld [vmem:[%s1230] ss:$2 sm:$0xff]
      %s1232 = scalar_lea.vmem %s235, 259
      %v1233 = vld [vmem:[%s1232] ss:$2 sm:$0xff]
      %s1234 = scalar_lea.vmem %s235, 283
      %v1235 = vld [vmem:[%s1234] ss:$2 sm:$0xff]
      %s1236 = scalar_lea.vmem %s235, 299
      %v1237 = vld [vmem:[%s1236] ss:$2 sm:$0xff]
      %s1238 = scalar_lea.vmem %s235, 323
      %v1239 = vld [vmem:[%s1238] ss:$2 sm:$0xff]
      %s1240 = scalar_lea.vmem %s235, 339
      %v1241 = vld [vmem:[%s1240] ss:$2 sm:$0xff]
      %s1242 = scalar_lea.vmem %s235, 363
      %v1243 = vld [vmem:[%s1242] ss:$2 sm:$0xff]
      %s1244 = scalar_lea.vmem %s235, 379
      %v1245 = vld [vmem:[%s1244] ss:$2 sm:$0xff]
      %s1246 = scalar_lea.vmem %s235, 403
      %v1247 = vld [vmem:[%s1246] ss:$2 sm:$0xff]
      %s1248 = scalar_lea.vmem %s235, 419
      %v1249 = vld [vmem:[%s1248] ss:$2 sm:$0xff]
      %s1250 = scalar_lea.vmem %s235, 443
      %v1251 = vld [vmem:[%s1250] ss:$2 sm:$0xff]
      %s1252 = scalar_lea.vmem %s235, 459
      %v1253 = vld [vmem:[%s1252] ss:$2 sm:$0xff]
      %s1254 = scalar_lea.vmem %s235, 483
      %v1255 = vld [vmem:[%s1254] ss:$2 sm:$0xff]
      %s1256 = scalar_lea.vmem %s235, 499
      %v1257 = vld [vmem:[%s1256] ss:$2 sm:$0xff]
      %s1258 = scalar_lea.vmem %s235, 523
      %v1259 = vld [vmem:[%s1258] ss:$2 sm:$0xff]
      %s1260 = scalar_lea.vmem %s235, 539
      %v1261 = vld [vmem:[%s1260] ss:$2 sm:$0xff]
      %s1262 = scalar_lea.vmem %s235, 563
      %v1263 = vld [vmem:[%s1262] ss:$2 sm:$0xff]
      %s1264 = scalar_lea.vmem %s235, 579
      %v1265 = vld [vmem:[%s1264] ss:$2 sm:$0xff]
      %s1266 = scalar_lea.vmem %s235, 603
      %v1267 = vld [vmem:[%s1266] ss:$2 sm:$0xff]
      %s1268 = scalar_lea.vmem %s235, 619
      %v1269 = vld [vmem:[%s1268] ss:$2 sm:$0xff]
      %s1270 = scalar_lea.vmem %s240, 3
      %v1271 = vld [vmem:[%s1270] sm:$0x1]
      %1273 = vset.pattern.permute.xlu0 0
      %1274 = vperm.xlu0 %1273, %v1207
      %v1275 = vpop.permute.xlu0 %1274
      %1278 = vset.pattern.permute.xlu0 0
      %1279 = vperm.xlu0 %1278, %v1209
      %v1280 = vpop.permute.xlu0 %1279
      %1283 = vset.pattern.permute.xlu0 0
      %1284 = vperm.xlu0 %1283, %v1211
      %v1285 = vpop.permute.xlu0 %1284
      %1288 = vset.pattern.permute.xlu0 0
      %1289 = vperm.xlu0 %1288, %v1213
      %v1290 = vpop.permute.xlu0 %1289
      %1293 = vset.pattern.permute.xlu0 0
      %1294 = vperm.xlu0 %1293, %v1215
      %v1295 = vpop.permute.xlu0 %1294
      %1298 = vset.pattern.permute.xlu0 0
      %1299 = vperm.xlu0 %1298, %v1217
      %v1300 = vpop.permute.xlu0 %1299
      %1303 = vset.pattern.permute.xlu0 0
      %1304 = vperm.xlu0 %1303, %v1219
      %v1305 = vpop.permute.xlu0 %1304
      %1308 = vset.pattern.permute.xlu0 0
      %1309 = vperm.xlu0 %1308, %v1221
      %v1310 = vpop.permute.xlu0 %1309
      %1313 = vset.pattern.permute.xlu0 0
      %1314 = vperm.xlu0 %1313, %v1223
      %v1315 = vpop.permute.xlu0 %1314
      %1318 = vset.pattern.permute.xlu0 0
      %1319 = vperm.xlu0 %1318, %v1225
      %v1320 = vpop.permute.xlu0 %1319
      %1323 = vset.pattern.permute.xlu0 0
      %1324 = vperm.xlu0 %1323, %v1227
      %v1325 = vpop.permute.xlu0 %1324
      %1328 = vset.pattern.permute.xlu0 0
      %1329 = vperm.xlu0 %1328, %v1229
      %v1330 = vpop.permute.xlu0 %1329
      %1333 = vset.pattern.permute.xlu0 0
      %1334 = vperm.xlu0 %1333, %v1231
      %v1335 = vpop.permute.xlu0 %1334
      %1338 = vset.pattern.permute.xlu0 0
      %1339 = vperm.xlu0 %1338, %v1233
      %v1340 = vpop.permute.xlu0 %1339
      %1343 = vset.pattern.permute.xlu0 0
      %1344 = vperm.xlu0 %1343, %v1235
      %v1345 = vpop.permute.xlu0 %1344
      %1348 = vset.pattern.permute.xlu0 0
      %1349 = vperm.xlu0 %1348, %v1237
      %v1350 = vpop.permute.xlu0 %1349
      %1353 = vset.pattern.permute.xlu0 0
      %1354 = vperm.xlu0 %1353, %v1239
      %v1355 = vpop.permute.xlu0 %1354
      %1358 = vset.pattern.permute.xlu0 0
      %1359 = vperm.xlu0 %1358, %v1241
      %v1360 = vpop.permute.xlu0 %1359
      %1363 = vset.pattern.permute.xlu0 0
      %1364 = vperm.xlu0 %1363, %v1243
      %v1365 = vpop.permute.xlu0 %1364
      %1368 = vset.pattern.permute.xlu0 0
      %1369 = vperm.xlu0 %1368, %v1245
      %v1370 = vpop.permute.xlu0 %1369
      %1373 = vset.pattern.permute.xlu0 0
      %1374 = vperm.xlu0 %1373, %v1247
      %v1375 = vpop.permute.xlu0 %1374
      %1378 = vset.pattern.permute.xlu0 0
      %1379 = vperm.xlu0 %1378, %v1249
      %v1380 = vpop.permute.xlu0 %1379
      %1383 = vset.pattern.permute.xlu0 0
      %1384 = vperm.xlu0 %1383, %v1251
      %v1385 = vpop.permute.xlu0 %1384
      %1388 = vset.pattern.permute.xlu0 0
      %1389 = vperm.xlu0 %1388, %v1253
      %v1390 = vpop.permute.xlu0 %1389
      %1393 = vset.pattern.permute.xlu0 0
      %1394 = vperm.xlu0 %1393, %v1255
      %v1395 = vpop.permute.xlu0 %1394
      %1398 = vset.pattern.permute.xlu0 0
      %1399 = vperm.xlu0 %1398, %v1257
      %v1400 = vpop.permute.xlu0 %1399
      %1403 = vset.pattern.permute.xlu0 0
      %1404 = vperm.xlu0 %1403, %v1259
      %v1405 = vpop.permute.xlu0 %1404
      %1408 = vset.pattern.permute.xlu0 0
      %1409 = vperm.xlu0 %1408, %v1261
      %v1410 = vpop.permute.xlu0 %1409
      %1413 = vset.pattern.permute.xlu0 0
      %1414 = vperm.xlu0 %1413, %v1263
      %v1415 = vpop.permute.xlu0 %1414
      %1418 = vset.pattern.permute.xlu0 0
      %1419 = vperm.xlu0 %1418, %v1265
      %v1420 = vpop.permute.xlu0 %1419
      %1423 = vset.pattern.permute.xlu0 0
      %1424 = vperm.xlu0 %1423, %v1267
      %v1425 = vpop.permute.xlu0 %1424
      %1428 = vset.pattern.permute.xlu0 0
      %1429 = vperm.xlu0 %1428, %v1269
      %v1430 = vpop.permute.xlu0 %1429
      %v1433 = vlaneseq
      %v1434 = vshrl.u32 %v1433, 7
      %v1435 = vsub.s32 0, %v1434
      %v1436 = vrot.slane %v1271, %v1435
      %v1438 = vmul.f32 %v1275, %v1436
      %v1439 = vmul.f32 %v1280, %v1436
      %v1440 = vmul.f32 %v1285, %v1436
      %v1441 = vmul.f32 %v1290, %v1436
      %v1442 = vmul.f32 %v1295, %v1436
      %v1443 = vmul.f32 %v1300, %v1436
      %v1444 = vmul.f32 %v1305, %v1436
      %v1445 = vmul.f32 %v1310, %v1436
      %v1446 = vmul.f32 %v1315, %v1436
      %v1447 = vmul.f32 %v1320, %v1436
      %v1448 = vmul.f32 %v1325, %v1436
      %v1449 = vmul.f32 %v1330, %v1436
      %v1450 = vmul.f32 %v1335, %v1436
      %v1451 = vmul.f32 %v1340, %v1436
      %v1452 = vmul.f32 %v1345, %v1436
      %v1453 = vmul.f32 %v1350, %v1436
      %v1454 = vmul.f32 %v1355, %v1436
      %v1455 = vmul.f32 %v1360, %v1436
      %v1456 = vmul.f32 %v1365, %v1436
      %v1457 = vmul.f32 %v1370, %v1436
      %v1458 = vmul.f32 %v1375, %v1436
      %v1459 = vmul.f32 %v1380, %v1436
      %v1460 = vmul.f32 %v1385, %v1436
      %v1461 = vmul.f32 %v1390, %v1436
      %v1462 = vmul.f32 %v1395, %v1436
      %v1463 = vmul.f32 %v1400, %v1436
      %v1464 = vmul.f32 %v1405, %v1436
      %v1465 = vmul.f32 %v1410, %v1436
      %v1466 = vmul.f32 %v1415, %v1436
      %v1467 = vmul.f32 %v1420, %v1436
      %v1468 = vmul.f32 %v1425, %v1436
      %v1469 = vmul.f32 %v1430, %v1436
      %v1470 = vadd.f32 %v1174, %v1438
      %v1471 = vadd.f32 %v1175, %v1439
      %v1472 = vadd.f32 %v1176, %v1440
      %v1473 = vadd.f32 %v1177, %v1441
      %v1474 = vadd.f32 %v1178, %v1442
      %v1475 = vadd.f32 %v1179, %v1443
      %v1476 = vadd.f32 %v1180, %v1444
      %v1477 = vadd.f32 %v1181, %v1445
      %v1478 = vadd.f32 %v1182, %v1446
      %v1479 = vadd.f32 %v1183, %v1447
      %v1480 = vadd.f32 %v1184, %v1448
      %v1481 = vadd.f32 %v1185, %v1449
      %v1482 = vadd.f32 %v1186, %v1450
      %v1483 = vadd.f32 %v1187, %v1451
      %v1484 = vadd.f32 %v1188, %v1452
      %v1485 = vadd.f32 %v1189, %v1453
      %v1486 = vadd.f32 %v1190, %v1454
      %v1487 = vadd.f32 %v1191, %v1455
      %v1488 = vadd.f32 %v1192, %v1456
      %v1489 = vadd.f32 %v1193, %v1457
      %v1490 = vadd.f32 %v1194, %v1458
      %v1491 = vadd.f32 %v1195, %v1459
      %v1492 = vadd.f32 %v1196, %v1460
      %v1493 = vadd.f32 %v1197, %v1461
      %v1494 = vadd.f32 %v1198, %v1462
      %v1495 = vadd.f32 %v1199, %v1463
      %v1496 = vadd.f32 %v1200, %v1464
      %v1497 = vadd.f32 %v1201, %v1465
      %v1498 = vadd.f32 %v1202, %v1466
      %v1499 = vadd.f32 %v1203, %v1467
      %v1500 = vadd.f32 %v1204, %v1468
      %v1501 = vadd.f32 %v1205, %v1469
      %vm1502 = vcmask 523264
      %1503 = vst.msk [vmem:[#allocation2] sm:$0xff] %vm1502, %v1470
      %1504 = vst.msk [vmem:[#allocation2 + $0x8] sm:$0xff] %vm1502, %v1471
      %1505 = vst.msk [vmem:[#allocation2 + $0x10] sm:$0xff] %vm1502, %v1472
      %1506 = vst.msk [vmem:[#allocation2 + $0x18] sm:$0xff] %vm1502, %v1473
      %1507 = vst.msk [vmem:[#allocation2 + $0x20] sm:$0xff] %vm1502, %v1474
      %1508 = vst.msk [vmem:[#allocation2 + $0x28] sm:$0xff] %vm1502, %v1475
      %1509 = vst.msk [vmem:[#allocation2 + $0x30] sm:$0xff] %vm1502, %v1476
      %1510 = vst.msk [vmem:[#allocation2 + $0x38] sm:$0xff] %vm1502, %v1477
      %1511 = vst.msk [vmem:[#allocation2 + $0x40] sm:$0xff] %vm1502, %v1478
      %1512 = vst.msk [vmem:[#allocation2 + $0x48] sm:$0xff] %vm1502, %v1479
      %1513 = vst.msk [vmem:[#allocation2 + $0x50] sm:$0xff] %vm1502, %v1480
      %1514 = vst.msk [vmem:[#allocation2 + $0x58] sm:$0xff] %vm1502, %v1481
      %1515 = vst.msk [vmem:[#allocation2 + $0x60] sm:$0xff] %vm1502, %v1482
      %1516 = vst.msk [vmem:[#allocation2 + $0x68] sm:$0xff] %vm1502, %v1483
      %1517 = vst.msk [vmem:[#allocation2 + $0x70] sm:$0xff] %vm1502, %v1484
      %1518 = vst.msk [vmem:[#allocation2 + $0x78] sm:$0xff] %vm1502, %v1485
      %1519 = vst.msk [vmem:[#allocation2 + $0x80] sm:$0xff] %vm1502, %v1486
      %1520 = vst.msk [vmem:[#allocation2 + $0x88] sm:$0xff] %vm1502, %v1487
      %1521 = vst.msk [vmem:[#allocation2 + $0x90] sm:$0xff] %vm1502, %v1488
      %1522 = vst.msk [vmem:[#allocation2 + $0x98] sm:$0xff] %vm1502, %v1489
      %1523 = vst.msk [vmem:[#allocation2 + $0xa0] sm:$0xff] %vm1502, %v1490
      %1524 = vst.msk [vmem:[#allocation2 + $0xa8] sm:$0xff] %vm1502, %v1491
      %1525 = vst.msk [vmem:[#allocation2 + $0xb0] sm:$0xff] %vm1502, %v1492
      %1526 = vst.msk [vmem:[#allocation2 + $0xb8] sm:$0xff] %vm1502, %v1493
      %1527 = vst.msk [vmem:[#allocation2 + $0xc0] sm:$0xff] %vm1502, %v1494
      %1528 = vst.msk [vmem:[#allocation2 + $0xc8] sm:$0xff] %vm1502, %v1495
      %1529 = vst.msk [vmem:[#allocation2 + $0xd0] sm:$0xff] %vm1502, %v1496
      %1530 = vst.msk [vmem:[#allocation2 + $0xd8] sm:$0xff] %vm1502, %v1497
      %1531 = vst.msk [vmem:[#allocation2 + $0xe0] sm:$0xff] %vm1502, %v1498
      %1532 = vst.msk [vmem:[#allocation2 + $0xe8] sm:$0xff] %vm1502, %v1499
      %1533 = vst.msk [vmem:[#allocation2 + $0xf0] sm:$0xff] %vm1502, %v1500
      %1534 = vst.msk [vmem:[#allocation2 + $0xf8] sm:$0xff] %vm1502, %v1501
      %p1535 = scmp.eq.s32.totalorder %s21, 3
      // Predicated region
      $region37: #{_lambda_.5} parent=31 // pred_check
        %p1536 = pneg %p1535
      $region38: #{_lambda_.5} parent=31 // pred_check_branch
        %1538 = sbr.rel (%p1536) target = $region40
      $region39: #{_lambda_.5} parent=31 // pred_region
        %v1539 = vld [vmem:[%s2] sm:$0x1]
        %v1541 = vlaneseq
        %v1542 = vshrl.u32 %v1541, 7
        %v1543 = vsub.s32 0, %v1542
        %v1544 = vrot.slane %v1539, %v1543
        %v1546 = vadd.f32 %v1470, %v1544
        %v1547 = vadd.f32 %v1471, %v1544
        %v1548 = vadd.f32 %v1472, %v1544
        %v1549 = vadd.f32 %v1473, %v1544
        %v1550 = vadd.f32 %v1474, %v1544
        %v1551 = vadd.f32 %v1475, %v1544
        %v1552 = vadd.f32 %v1476, %v1544
        %v1553 = vadd.f32 %v1477, %v1544
        %v1554 = vadd.f32 %v1478, %v1544
        %v1555 = vadd.f32 %v1479, %v1544
        %v1556 = vadd.f32 %v1480, %v1544
        %v1557 = vadd.f32 %v1481, %v1544
        %v1558 = vadd.f32 %v1482, %v1544
        %v1559 = vadd.f32 %v1483, %v1544
        %v1560 = vadd.f32 %v1484, %v1544
        %v1561 = vadd.f32 %v1485, %v1544
        %v1562 = vadd.f32 %v1486, %v1544
        %v1563 = vadd.f32 %v1487, %v1544
        %v1564 = vadd.f32 %v1488, %v1544
        %v1565 = vadd.f32 %v1489, %v1544
        %v1566 = vadd.f32 %v1490, %v1544
        %v1567 = vadd.f32 %v1491, %v1544
        %v1568 = vadd.f32 %v1492, %v1544
        %v1569 = vadd.f32 %v1493, %v1544
        %v1570 = vadd.f32 %v1494, %v1544
        %v1571 = vadd.f32 %v1495, %v1544
        %v1572 = vadd.f32 %v1496, %v1544
        %v1573 = vadd.f32 %v1497, %v1544
        %v1574 = vadd.f32 %v1498, %v1544
        %v1575 = vadd.f32 %v1499, %v1544
        %v1576 = vadd.f32 %v1500, %v1544
        %v1577 = vadd.f32 %v1501, %v1544
        %vm1578 = vcmp.ge.f32.partialorder %v1546, 0.0
        %vm1579 = vcmp.ge.f32.partialorder %v1547, 0.0
        %vm1580 = vcmp.ge.f32.partialorder %v1548, 0.0
        %vm1581 = vcmp.ge.f32.partialorder %v1549, 0.0
        %vm1582 = vcmp.ge.f32.partialorder %v1550, 0.0
        %vm1583 = vcmp.ge.f32.partialorder %v1551, 0.0
        %vm1584 = vcmp.ge.f32.partialorder %v1552, 0.0
        %vm1585 = vcmp.ge.f32.partialorder %v1553, 0.0
        %vm1586 = vcmp.ge.f32.partialorder %v1554, 0.0
        %vm1587 = vcmp.ge.f32.partialorder %v1555, 0.0
        %vm1588 = vcmp.ge.f32.partialorder %v1556, 0.0
        %vm1589 = vcmp.ge.f32.partialorder %v1557, 0.0
        %vm1590 = vcmp.ge.f32.partialorder %v1558, 0.0
        %vm1591 = vcmp.ge.f32.partialorder %v1559, 0.0
        %vm1592 = vcmp.ge.f32.partialorder %v1560, 0.0
        %vm1593 = vcmp.ge.f32.partialorder %v1561, 0.0
        %vm1594 = vcmp.ge.f32.partialorder %v1562, 0.0
        %vm1595 = vcmp.ge.f32.partialorder %v1563, 0.0
        %vm1596 = vcmp.ge.f32.partialorder %v1564, 0.0
        %vm1597 = vcmp.ge.f32.partialorder %v1565, 0.0
        %vm1598 = vcmp.ge.f32.partialorder %v1566, 0.0
        %vm1599 = vcmp.ge.f32.partialorder %v1567, 0.0
        %vm1600 = vcmp.ge.f32.partialorder %v1568, 0.0
        %vm1601 = vcmp.ge.f32.partialorder %v1569, 0.0
        %vm1602 = vcmp.ge.f32.partialorder %v1570, 0.0
        %vm1603 = vcmp.ge.f32.partialorder %v1571, 0.0
        %vm1604 = vcmp.ge.f32.partialorder %v1572, 0.0
        %vm1605 = vcmp.ge.f32.partialorder %v1573, 0.0
        %vm1606 = vcmp.ge.f32.partialorder %v1574, 0.0
        %vm1607 = vcmp.ge.f32.partialorder %v1575, 0.0
        %vm1608 = vcmp.ge.f32.partialorder %v1576, 0.0
        %vm1609 = vcmp.ge.f32.partialorder %v1577, 0.0
        %v1610 = vmul.f32 %v1546, 0.2
        %v1611 = vmul.f32 %v1547, 0.2
        %v1612 = vmul.f32 %v1548, 0.2
        %v1613 = vmul.f32 %v1549, 0.2
        %v1614 = vmul.f32 %v1550, 0.2
        %v1615 = vmul.f32 %v1551, 0.2
        %v1616 = vmul.f32 %v1552, 0.2
        %v1617 = vmul.f32 %v1553, 0.2
        %v1618 = vmul.f32 %v1554, 0.2
        %v1619 = vmul.f32 %v1555, 0.2
        %v1620 = vmul.f32 %v1556, 0.2
        %v1621 = vmul.f32 %v1557, 0.2
        %v1622 = vmul.f32 %v1558, 0.2
        %v1623 = vmul.f32 %v1559, 0.2
        %v1624 = vmul.f32 %v1560, 0.2
        %v1625 = vmul.f32 %v1561, 0.2
        %v1626 = vmul.f32 %v1562, 0.2
        %v1627 = vmul.f32 %v1563, 0.2
        %v1628 = vmul.f32 %v1564, 0.2
        %v1629 = vmul.f32 %v1565, 0.2
        %v1630 = vmul.f32 %v1566, 0.2
        %v1631 = vmul.f32 %v1567, 0.2
        %v1632 = vmul.f32 %v1568, 0.2
        %v1633 = vmul.f32 %v1569, 0.2
        %v1634 = vmul.f32 %v1570, 0.2
        %v1635 = vmul.f32 %v1571, 0.2
        %v1636 = vmul.f32 %v1572, 0.2
        %v1637 = vmul.f32 %v1573, 0.2
        %v1638 = vmul.f32 %v1574, 0.2
        %v1639 = vmul.f32 %v1575, 0.2
        %v1640 = vmul.f32 %v1576, 0.2
        %v1641 = vmul.f32 %v1577, 0.2
        %v1642 = vsel %vm1578, %v1546, %v1610
        %v1643 = vsel %vm1579, %v1547, %v1611
        %v1644 = vsel %vm1580, %v1548, %v1612
        %v1645 = vsel %vm1581, %v1549, %v1613
        %v1646 = vsel %vm1582, %v1550, %v1614
        %v1647 = vsel %vm1583, %v1551, %v1615
        %v1648 = vsel %vm1584, %v1552, %v1616
        %v1649 = vsel %vm1585, %v1553, %v1617
        %v1650 = vsel %vm1586, %v1554, %v1618
        %v1651 = vsel %vm1587, %v1555, %v1619
        %v1652 = vsel %vm1588, %v1556, %v1620
        %v1653 = vsel %vm1589, %v1557, %v1621
        %v1654 = vsel %vm1590, %v1558, %v1622
        %v1655 = vsel %vm1591, %v1559, %v1623
        %v1656 = vsel %vm1592, %v1560, %v1624
        %v1657 = vsel %vm1593, %v1561, %v1625
        %v1658 = vsel %vm1594, %v1562, %v1626
        %v1659 = vsel %vm1595, %v1563, %v1627
        %v1660 = vsel %vm1596, %v1564, %v1628
        %v1661 = vsel %vm1597, %v1565, %v1629
        %v1662 = vsel %vm1598, %v1566, %v1630
        %v1663 = vsel %vm1599, %v1567, %v1631
        %v1664 = vsel %vm1600, %v1568, %v1632
        %v1665 = vsel %vm1601, %v1569, %v1633
        %v1666 = vsel %vm1602, %v1570, %v1634
        %v1667 = vsel %vm1603, %v1571, %v1635
        %v1668 = vsel %vm1604, %v1572, %v1636
        %v1669 = vsel %vm1605, %v1573, %v1637
        %v1670 = vsel %vm1606, %v1574, %v1638
        %v1671 = vsel %vm1607, %v1575, %v1639
        %v1672 = vsel %vm1608, %v1576, %v1640
        %v1673 = vsel %vm1609, %v1577, %v1641
        %1674 = vst.msk [vmem:[%s249] sm:$0xff] %vm1502, %v1642
        %1675 = vst.msk [vmem:[%s249 + $0x8] sm:$0xff] %vm1502, %v1643
        %1676 = vst.msk [vmem:[%s249 + $0x10] sm:$0xff] %vm1502, %v1644
        %1677 = vst.msk [vmem:[%s249 + $0x18] sm:$0xff] %vm1502, %v1645
        %1678 = vst.msk [vmem:[%s249 + $0x20] sm:$0xff] %vm1502, %v1646
        %1679 = vst.msk [vmem:[%s249 + $0x28] sm:$0xff] %vm1502, %v1647
        %1680 = vst.msk [vmem:[%s249 + $0x30] sm:$0xff] %vm1502, %v1648
        %1681 = vst.msk [vmem:[%s249 + $0x38] sm:$0xff] %vm1502, %v1649
        %1682 = vst.msk [vmem:[%s249 + $0x40] sm:$0xff] %vm1502, %v1650
        %1683 = vst.msk [vmem:[%s249 + $0x48] sm:$0xff] %vm1502, %v1651
        %1684 = vst.msk [vmem:[%s249 + $0x50] sm:$0xff] %vm1502, %v1652
        %1685 = vst.msk [vmem:[%s249 + $0x58] sm:$0xff] %vm1502, %v1653
        %1686 = vst.msk [vmem:[%s249 + $0x60] sm:$0xff] %vm1502, %v1654
        %1687 = vst.msk [vmem:[%s249 + $0x68] sm:$0xff] %vm1502, %v1655
        %1688 = vst.msk [vmem:[%s249 + $0x70] sm:$0xff] %vm1502, %v1656
        %1689 = vst.msk [vmem:[%s249 + $0x78] sm:$0xff] %vm1502, %v1657
        %1690 = vst.msk [vmem:[%s249 + $0x80] sm:$0xff] %vm1502, %v1658
        %1691 = vst.msk [vmem:[%s249 + $0x88] sm:$0xff] %vm1502, %v1659
        %1692 = vst.msk [vmem:[%s249 + $0x90] sm:$0xff] %vm1502, %v1660
        %1693 = vst.msk [vmem:[%s249 + $0x98] sm:$0xff] %vm1502, %v1661
        %1694 = vst.msk [vmem:[%s249 + $0xa0] sm:$0xff] %vm1502, %v1662
        %1695 = vst.msk [vmem:[%s249 + $0xa8] sm:$0xff] %vm1502, %v1663
        %1696 = vst.msk [vmem:[%s249 + $0xb0] sm:$0xff] %vm1502, %v1664
        %1697 = vst.msk [vmem:[%s249 + $0xb8] sm:$0xff] %vm1502, %v1665
        %1698 = vst.msk [vmem:[%s249 + $0xc0] sm:$0xff] %vm1502, %v1666
        %1699 = vst.msk [vmem:[%s249 + $0xc8] sm:$0xff] %vm1502, %v1667
        %1700 = vst.msk [vmem:[%s249 + $0xd0] sm:$0xff] %vm1502, %v1668
        %1701 = vst.msk [vmem:[%s249 + $0xd8] sm:$0xff] %vm1502, %v1669
        %1702 = vst.msk [vmem:[%s249 + $0xe0] sm:$0xff] %vm1502, %v1670
        %1703 = vst.msk [vmem:[%s249 + $0xe8] sm:$0xff] %vm1502, %v1671
        %1704 = vst.msk [vmem:[%s249 + $0xf0] sm:$0xff] %vm1502, %v1672
        %1705 = vst.msk [vmem:[%s249 + $0xf8] sm:$0xff] %vm1502, %v1673
      $region40: #{_lambda_.5} parent=31 // pred_fallthru
        _
      %s1706 = smul.u32 32, %s20
      %p1707 = scmp.lt.s32.totalorder %s19, 1
      %s1708 = scalar_select %p1707, %s19, 1
      %p1709 = scmp.lt.s32.totalorder %s1706, 31
      %s1710 = scalar_select %p1709, %s1706, 31
      %s1711 = smul.addr %s1708, 32
      %s1712 = sadd.s32 %s1710, %s1711
      %s1713 = smul.addr %s1712, 8
      %s1714 = scalar_lea.vmem %s3, %s1713
      // Predicated region
      $region41: #{_lambda_.5} parent=31 // pred_check
        %p1715 = pneg %p130
      $region42: #{_lambda_.5} parent=31 // pred_check_branch
        %1717 = sbr.rel (%p1715) target = $region44
      $region43: #{_lambda_.5} parent=31 // pred_region
        %s1718 = smul.u32 32, %s20
      $region44: #{_lambda_.5} parent=31 // pred_fallthru
        _
    $region32: #{_lambda_.5} parent=5 // pred_fallthru
      _
    %p1719 = scmp.le.s32.totalorder 2, %s9
    // Predicated region
    $region45: #{_lambda_.5} parent=5 // pred_check
      %p1720 = pneg %p1719
    $region46: #{_lambda_.5} parent=5 // pred_check_branch
      %1722 = sbr.rel (%p1720) target = $region48
    $region47: #{_lambda_.5} parent=5 // pred_region
      %s1723 = ssub.s32 %s9, 2
      // Predicated region
      $region49: #{_lambda_.5} parent=47 // pred_check
        %p1724 = pneg %p136
      $region50: #{_lambda_.5} parent=47 // pred_check_branch
        %1726 = sbr.rel (%p1724) target = $region52
      $region51: #{_lambda_.5} parent=47 // pred_region
        %s1727 = smul.u32 32, %s23
        %p1728 = scmp.lt.s32.totalorder %s22, 1
        %s1729 = scalar_select %p1728, %s22, 1
        %p1730 = scmp.lt.s32.totalorder %s1727, 31
        %s1731 = scalar_select %p1730, %s1727, 31
        %s1732 = smul.addr %s1729, 32
        %s1733 = sadd.s32 %s1731, %s1732
        %s1734 = smul.addr %s1733, 8
        %s1735 = scalar_lea.vmem %s3, %s1734
      $region52: #{_lambda_.5} parent=47 // pred_fallthru
        _
    $region48: #{_lambda_.5} parent=5 // pred_fallthru
      _
  $region6: #{_lambda_.5} parent=0 // loop_footer
    %s13 = sadd.s32 1, %s9
  $region7: #{_lambda_.5} parent=0 // loop_footer_branch
    %8 = sbr.rel target = $region3
  $region8: #{_lambda_.5} parent=0 // loop_exit
    _

// kernel: _lambda_.6
$region0: #{_lambda_.6}
  #allocation0 [shape = 'u32[]', space=smem, size = 0x4, offset = 0x4, fixed_abs, tag = 'smem constant byte address 0x4 - core index']
  #allocation1 [shape = 'u32[144,128]{1,0:T(1,128)}', space=vmem, size = 0x12000, scoped, tag = 'internal scratch']
  #allocation2 [shape = 'f32[64,128]{1,0:T(8,128)}', space=vmem, size = 0x8000, scoped, tag = 'scratch operand']
  %s0 = inlined_call_operand.vmem [shape: f32[4,2,8,18,64], index: 0, kind: input, shape index: {}]
  %s1 = inlined_call_operand.vmem [shape: f32[4,4,64,128], index: 1, kind: input, shape index: {}]
  %s2 = inlined_call_operand.vmem [shape: f32[1,128], index: 2, kind: input, shape index: {}]
  %s3 = inlined_call_operand.vmem [shape: f32[2,64,128], index: 3, kind: output, shape index: {}]
  %s4 = sld [smem:[#allocation0]]
  $region53: #{_lambda_.6} parent=0
    _
  %s6 = ssub.s32 1, %s4
  %s7 = scalar_select 0, %s6, %s4
  loop: start=0, step=1, limit=10
  $region2: #{_lambda_.6} parent=0 // loop_pre_header
    _
  $region3: #{_lambda_.6} parent=0 // loop_header
    %s9 = sphi 0, %s13
    %p10 = scmp.ge.s32.totalorder %s9, 10
    %s16 = sphi 0, %s35
    %s17 = sphi 0, %s31
    %s18 = sphi 0, %s27
    %s19 = sphi 0, %s16
    %s20 = sphi 0, %s17
    %s21 = sphi 0, %s18
    %s22 = sphi 0, %s19
    %s23 = sphi 0, %s20
    %s24 = sphi 0, %s21
    %s42 = sphi 0, %s44
    %s45 = sphi 0, %s42
    %s46 = sphi 0, %s45
    %s62 = sphi 0, %s46
    %s68 = sphi 0, %s70
    %s71 = sphi 0, %s68
    %s72 = sphi 0, %s71
    %s88 = sphi 0, %s72
    %s92 = sphi 0, %s92
    %s94 = sphi 0, %s92
    %s95 = sphi 0, %s94
    %s109 = sphi 0, %s95
    %s117 = sphi 0, %s119
    %s120 = sphi 0, %s117
    %s121 = sphi 0, %s120
    %s137 = sphi 0, %s121
  $region4: #{_lambda_.6} parent=0 // loop_header_branch
    %12 = sbr.rel (%p10) target = $region8
  $region5: #{_lambda_.6} parent=0 // loop_body
    %s14 = ssub.s32 %s9, 1
    %s15 = ssub.s32 %s9, 2
    %s25 = sadd.s32 1, %s18
    %p26 = scmp.ge.s32.totalorder %s25, 4
    %s27 = scalar_select %p26, 0, %s25
    %s28 = sadd.s32 1, %s17
    %s29 = scalar_select %p26, %s28, %s17
    %p30 = scmp.ge.s32.totalorder %s29, 1
    %s31 = scalar_select %p30, 0, %s29
    %s32 = sadd.s32 1, %s16
    %s33 = scalar_select %p30, %s32, %s16
    %p34 = scmp.ge.s32.totalorder %s33, 2
    %s35 = scalar_select %p34, 0, %s33
    %s36 = ssub.s32 %s18, %s27
    %s37 = ssub.s32 %s16, %s35
    %s38 = sor.u32 %s36, %s37
    %s39 = ssub.s32 %s17, %s31
    %s40 = sor.u32 %s38, %s39
    %p41 = scmp.eq.s32.totalorder %s40, 0
    %s43 = sadd.s32 %s42, 1
    %s44 = scalar_select %p41, %s42, %s43
    %p47 = pneg %p41
    %p48 = scmp.eq.s32.totalorder %s9, 7
    %p49 = por %p47, %p48
    %p50 = scmp.ne.s32.totalorder %s42, %s45
    %p51 = scmp.eq.s32.totalorder %s9, 0
    %p52 = por %p50, %p51
    %p53 = scmp.ne.s32.totalorder %s42, %s45
    %p54 = scmp.eq.s32.totalorder %s14, 7
    %p55 = por %p53, %p54
    %p56 = scmp.ne.s32.totalorder %s45, %s46
    %p57 = scmp.eq.s32.totalorder %s14, 0
    %p58 = por %p56, %p57
    %p59 = scmp.ne.s32.totalorder %s45, %s46
    %p60 = scmp.eq.s32.totalorder %s15, 7
    %p61 = por %p59, %p60
    %p63 = scmp.ne.s32.totalorder %s46, %s62
    %p64 = scmp.eq.s32.totalorder %s15, 0
    %p65 = por %p63, %p64
    %s66 = ssub.s32 %s18, %s27
    %p67 = scmp.eq.s32.totalorder %s66, 0
    %s69 = sadd.s32 %s68, 1
    %s70 = scalar_select %p67, %s68, %s69
    %p73 = pneg %p67
    %p74 = scmp.eq.s32.totalorder %s9, 7
    %p75 = por %p73, %p74
    %p76 = scmp.ne.s32.totalorder %s68, %s71
    %p77 = scmp.eq.s32.totalorder %s9, 0
    %p78 = por %p76, %p77
    %p79 = scmp.ne.s32.totalorder %s68, %s71
    %p80 = scmp.eq.s32.totalorder %s14, 7
    %p81 = por %p79, %p80
    %p82 = scmp.ne.s32.totalorder %s71, %s72
    %p83 = scmp.eq.s32.totalorder %s14, 0
    %p84 = por %p82, %p83
    %p85 = scmp.ne.s32.totalorder %s71, %s72
    %p86 = scmp.eq.s32.totalorder %s15, 7
    %p87 = por %p85, %p86
    %p89 = scmp.ne.s32.totalorder %s72, %s88
    %p90 = scmp.eq.s32.totalorder %s15, 0
    %p91 = por %p89, %p90
    %s93 = sadd.s32 %s92, 1
    %p96 = scmp.eq.s32.totalorder %s9, 7
    %p97 = scmp.ne.s32.totalorder %s92, %s94
    %p98 = scmp.eq.s32.totalorder %s9, 0
    %p99 = por %p97, %p98
    %p100 = scmp.ne.s32.totalorder %s92, %s94
    %p101 = scmp.eq.s32.totalorder %s14, 7
    %p102 = por %p100, %p101
    %p103 = scmp.ne.s32.totalorder %s94, %s95
    %p104 = scmp.eq.s32.totalorder %s14, 0
    %p105 = por %p103, %p104
    %p106 = scmp.ne.s32.totalorder %s94, %s95
    %p107 = scmp.eq.s32.totalorder %s15, 7
    %p108 = por %p106, %p107
    %p110 = scmp.ne.s32.totalorder %s95, %s109
    %p111 = scmp.eq.s32.totalorder %s15, 0
    %p112 = por %p110, %p111
    %s113 = ssub.s32 %s16, %s35
    %s114 = ssub.s32 %s17, %s31
    %s115 = sor.u32 %s113, %s114
    %p116 = scmp.eq.s32.totalorder %s115, 0
    %s118 = sadd.s32 %s117, 1
    %s119 = scalar_select %p116, %s117, %s118
    %p122 = pneg %p116
    %p123 = scmp.eq.s32.totalorder %s9, 7
    %p124 = por %p122, %p123
    %p125 = scmp.ne.s32.totalorder %s117, %s120
    %p126 = scmp.eq.s32.totalorder %s9, 0
    %p127 = por %p125, %p126
    %p128 = scmp.ne.s32.totalorder %s117, %s120
    %p129 = scmp.eq.s32.totalorder %s14, 7
    %p130 = por %p128, %p129
    %p131 = scmp.ne.s32.totalorder %s120, %s121
    %p132 = scmp.eq.s32.totalorder %s14, 0
    %p133 = por %p131, %p132
    %p134 = scmp.ne.s32.totalorder %s120, %s121
    %p135 = scmp.eq.s32.totalorder %s15, 7
    %p136 = por %p134, %p135
    %p138 = scmp.ne.s32.totalorder %s121, %s137
    %p139 = scmp.eq.s32.totalorder %s15, 0
    %p140 = por %p138, %p139
    %p141 = scmp.le.s32.totalorder 1, %s9
    %p142 = scmp.lt.s32.totalorder %s9, 9
    %p143 = pnand %p141, %p142
    %p144 = pneg %p143
    // Predicated region
    $region9: #{_lambda_.6} parent=5 // pred_check
      _
    $region10: #{_lambda_.6} parent=5 // pred_check_branch
      %146 = sbr.rel (%p143) target = $region12
    $region11: #{_lambda_.6} parent=5 // pred_region
      %s147 = ssub.s32 %s9, 1
      // Predicated region
      $region13: #{_lambda_.6} parent=11 // pred_check
        %p148 = pneg %p105
      $region14: #{_lambda_.6} parent=11 // pred_check_branch
        %150 = sbr.rel (%p148) target = $region16
      $region15: #{_lambda_.6} parent=11 // pred_region
        _
      $region16: #{_lambda_.6} parent=11 // pred_fallthru
        _
    $region12: #{_lambda_.6} parent=5 // pred_fallthru
      _
    %p151 = scmp.lt.s32.totalorder %s9, 8
    // Predicated region
    $region17: #{_lambda_.6} parent=5 // pred_check
      %p152 = pneg %p151
    $region18: #{_lambda_.6} parent=5 // pred_check_branch
      %154 = sbr.rel (%p152) target = $region20
    $region19: #{_lambda_.6} parent=5 // pred_region
      // Predicated region
      $region21: #{_lambda_.6} parent=19 // pred_check
        %p155 = pneg %p52
      $region22: #{_lambda_.6} parent=19 // pred_check_branch
        %157 = sbr.rel (%p155) target = $region24
      $region23: #{_lambda_.6} parent=19 // pred_region
        %s158 = smul.u32 8, %s17
        %p159 = scmp.lt.s32.totalorder %s18, 3
        %s160 = scalar_select %p159, %s18, 3
        %p161 = scmp.lt.s32.totalorder %s16, 1
        %s162 = scalar_select %p161, %s16, 1
        %p163 = scmp.lt.s32.totalorder %s158, 7
        %s164 = scalar_select %p163, %s158, 7
        %s165 = smul.addr %s164, 3
        %s166 = smul.addr %s162, 24
        %s167 = sadd.s32 %s165, %s166
        %s168 = smul.addr %s160, 48
        %s169 = sadd.s32 %s167, %s168
        %s170 = smul.addr %s169, 8
        %s171 = scalar_lea.vmem %s0, %s170
        %s172 = smul.u32 8, %s17
      $region24: #{_lambda_.6} parent=19 // pred_fallthru
        _
      // Predicated region
      $region25: #{_lambda_.6} parent=19 // pred_check
        %p173 = pneg %p78
      $region26: #{_lambda_.6} parent=19 // pred_check_branch
        %175 = sbr.rel (%p173) target = $region28
      $region27: #{_lambda_.6} parent=19 // pred_region
        %p176 = scmp.lt.s32.totalorder %s18, 3
        %s177 = scalar_select %p176, %s18, 3
        %s178 = smul.addr %s177, 32
        %s179 = smul.addr %s178, 8
        %s180 = scalar_lea.vmem %s1, %s179
      $region28: #{_lambda_.6} parent=19 // pred_fallthru
        _
    $region20: #{_lambda_.6} parent=5 // pred_fallthru
      _
    %p181 = scmp.le.s32.totalorder 1, %s9
    %p182 = scmp.lt.s32.totalorder %s9, 9
    %p183 = pnand %p181, %p182
    %p184 = pneg %p183
    // Predicated region
    $region29: #{_lambda_.6} parent=5 // pred_check
      _
    $region30: #{_lambda_.6} parent=5 // pred_check_branch
      %186 = sbr.rel (%p183) target = $region32
    $region31: #{_lambda_.6} parent=5 // pred_region
      %s187 = ssub.s32 %s9, 1
      %s188 = smul.u32 8, %s20
      %p189 = scmp.lt.s32.totalorder %s21, 3
      %s190 = scalar_select %p189, %s21, 3
      %p191 = scmp.lt.s32.totalorder %s19, 1
      %s192 = scalar_select %p191, %s19, 1
      %p193 = scmp.lt.s32.totalorder %s188, 7
      %s194 = scalar_select %p193, %s188, 7
      %s195 = smul.addr %s194, 3
      %s196 = smul.addr %s192, 24
      %s197 = sadd.s32 %s195, %s196
      %s198 = smul.addr %s190, 48
      %s199 = sadd.s32 %s197, %s198
      %s200 = smul.addr %s199, 8
      %s201 = scalar_lea.vmem %s0, %s200
      %p202 = pneg %p58
      %p203 = pneg %p55
      %p204 = scmp.lt.s32.totalorder %s21, 3
      %s205 = scalar_select %p204, %s21, 3
      %s206 = smul.addr %s205, 32
      %s207 = smul.addr %s206, 8
      %s208 = scalar_lea.vmem %s1, %s207
      %p209 = pneg %p84
      %p210 = pneg %p81
      %p211 = pneg %p105
      %p212 = pneg %p102
      %p213 = pneg %p133
      %p214 = pneg %p130
      %s215 = smul.u32 8, %s20
      %p216 = scmp.lt.s32.totalorder %s19, 1
      %s217 = scalar_select %p216, %s19, 1
      %p218 = scmp.lt.s32.totalorder %s215, 7
      %s219 = scalar_select %p218, %s215, 7
      %s220 = smul.addr %s217, 8
      %s221 = sadd.s32 %s219, %s220
      %s222 = smul.addr %s221, 8
      %s223 = scalar_lea.vmem %s3, %s222
      %s224 = smul.u32 8, %s20
      %p225 = scmp.lt.s32.totalorder %s21, 3
      %s226 = scalar_select %p225, %s21, 3
      %p227 = scmp.lt.s32.totalorder %s19, 1
      %s228 = scalar_select %p227, %s19, 1
      %p229 = scmp.lt.s32.totalorder %s224, 7
      %s230 = scalar_select %p229, %s224, 7
      %s231 = smul.addr %s230, 3
      %s232 = smul.addr %s228, 24
      %s233 = sadd.s32 %s231, %s232
      %s234 = smul.addr %s226, 48
      %s235 = sadd.s32 %s233, %s234
      %s236 = smul.addr %s235, 8
      %s237 = scalar_lea.vmem %s0, %s236
      %s238 = smul.u32 8, %s20
      %p239 = scmp.lt.s32.totalorder %s21, 3
      %s240 = scalar_select %p239, %s21, 3
      %s241 = smul.addr %s240, 32
      %s242 = smul.addr %s241, 8
      %s243 = scalar_lea.vmem %s1, %s242
      %s244 = smul.u32 8, %s20
      %p245 = scmp.lt.s32.totalorder %s19, 1
      %s246 = scalar_select %p245, %s19, 1
      %p247 = scmp.lt.s32.totalorder %s244, 7
      %s248 = scalar_select %p247, %s244, 7
      %s249 = smul.addr %s246, 8
      %s250 = sadd.s32 %s248, %s249
      %s251 = smul.addr %s250, 8
      %s252 = scalar_lea.vmem %s3, %s251
      %s253 = smul.u32 8, %s20
      %p254 = scmp.eq.s32.totalorder %s21, 0
      // Predicated region
      $region33: #{_lambda_.6} parent=31 // pred_check
        %p255 = pneg %p254
      $region34: #{_lambda_.6} parent=31 // pred_check_branch
        %257 = sbr.rel (%p255) target = $region36
      $region35: #{_lambda_.6} parent=31 // pred_region
        %258 = vst [vmem:[#allocation2] sm:$0xff] 0.0
        %259 = vst [vmem:[#allocation2 + $0x8] sm:$0xff] 0.0
        %260 = vst [vmem:[#allocation2 + $0x10] sm:$0xff] 0.0
        %261 = vst [vmem:[#allocation2 + $0x18] sm:$0xff] 0.0
        %262 = vst [vmem:[#allocation2 + $0x20] sm:$0xff] 0.0
        %263 = vst [vmem:[#allocation2 + $0x28] sm:$0xff] 0.0
        %264 = vst [vmem:[#allocation2 + $0x30] sm:$0xff] 0.0
        %265 = vst [vmem:[#allocation2 + $0x38] sm:$0xff] 0.0
      $region36: #{_lambda_.6} parent=31 // pred_fallthru
        _
      %v266 = vld [vmem:[#allocation2] sm:$0xff]
      %v267 = vld [vmem:[#allocation2 + $0x8] sm:$0xff]
      %v268 = vld [vmem:[#allocation2 + $0x10] sm:$0xff]
      %v269 = vld [vmem:[#allocation2 + $0x18] sm:$0xff]
      %v270 = vld [vmem:[#allocation2 + $0x20] sm:$0xff]
      %v271 = vld [vmem:[#allocation2 + $0x28] sm:$0xff]
      %v272 = vld [vmem:[#allocation2 + $0x30] sm:$0xff]
      %v273 = vld [vmem:[#allocation2 + $0x38] sm:$0xff]
      %v274 = vld [vmem:[%s237] ss:$2 sm:$0xff]
      %s275 = scalar_lea.vmem %s237, 24
      %v276 = vld [vmem:[%s275] ss:$2 sm:$0xff]
      %s277 = scalar_lea.vmem %s237, 48
      %v278 = vld [vmem:[%s277] ss:$2 sm:$0xff]
      %s279 = scalar_lea.vmem %s237, 72
      %v280 = vld [vmem:[%s279] ss:$2 sm:$0xff]
      %s281 = scalar_lea.vmem %s237, 96
      %v282 = vld [vmem:[%s281] ss:$2 sm:$0xff]
      %s283 = scalar_lea.vmem %s237, 120
      %v284 = vld [vmem:[%s283] ss:$2 sm:$0xff]
      %s285 = scalar_lea.vmem %s237, 144
      %v286 = vld [vmem:[%s285] ss:$2 sm:$0xff]
      %s287 = scalar_lea.vmem %s237, 168
      %v288 = vld [vmem:[%s287] ss:$2 sm:$0xff]
      %v289 = vld [vmem:[%s243] sm:$0xff]
      %v290 = vld [vmem:[%s243 + $0x8] sm:$0xff]
      %v291 = vld [vmem:[%s243 + $0x10] sm:$0xff]
      %v292 = vld [vmem:[%s243 + $0x18] sm:$0xff]
      %v293 = vld [vmem:[%s243 + $0x20] sm:$0xff]
      %v294 = vld [vmem:[%s243 + $0x28] sm:$0xff]
      %v295 = vld [vmem:[%s243 + $0x30] sm:$0xff]
      %v296 = vld [vmem:[%s243 + $0x38] sm:$0xff]
      %vm297 = vcmask 523264
      %v299 = vsel %vm297, %v274, 0
      %v302 = vsel %vm297, %v276, 0
      %v305 = vsel %vm297, %v278, 0
      %v308 = vsel %vm297, %v280, 0
      %v311 = vsel %vm297, %v282, 0
      %v314 = vsel %vm297, %v284, 0
      %v317 = vsel %vm297, %v286, 0
      %v320 = vsel %vm297, %v288, 0
      %322 = vmatprep.subr.mxu0 0.0
      %323 = vmatpush1.msra.mxu0 %v289
      %324 = vmatprep.subr.mxu0 0.0
      %325 = vmatpush1.msra.mxu0 %v290
      %326 = vmatprep.subr.mxu0 0.0
      %327 = vmatpush1.msra.mxu0 %v291
      %328 = vmatprep.subr.mxu0 0.0
      %329 = vmatpush1.msra.mxu0 %v292
      %330 = vmatprep.subr.mxu0 0.0
      %331 = vmatpush1.msra.mxu0 %v293
      %332 = vmatprep.subr.mxu0 0.0
      %333 = vmatpush1.msra.mxu0 %v294
      %334 = vmatprep.subr.mxu0 0.0
      %335 = vmatpush1.msra.mxu0 %v295
      %336 = vmatprep.subr.mxu0 0.0
      %337 = vmatpush1.msra.mxu0 %v296
      %338 = vmatprep.subr.mxu0 0.0
      %339 = vmatpush1.msra.mxu0 0.0
      %340 = vmatprep.subr.mxu0 0.0
      %341 = vmatpush1.msra.mxu0 0.0
      %342 = vmatprep.subr.mxu0 0.0
      %343 = vmatpush1.msra.mxu0 0.0
      %344 = vmatprep.subr.mxu0 0.0
      %345 = vmatpush1.msra.mxu0 0.0
      %346 = vmatprep.subr.mxu0 0.0
      %347 = vmatpush1.msra.mxu0 0.0
      %348 = vmatprep.subr.mxu0 0.0
      %349 = vmatpush1.msra.mxu0 0.0
      %350 = vmatprep.subr.mxu0 0.0
      %351 = vmatpush1.msra.mxu0 0.0
      %352 = vmatprep.subr.mxu0 0.0
      %353 = vmatpush1.msra.mxu0 0.0
      %354 = vmatprep.subr.mxu0 0.0
      %355 = vmatpush1.msra.mxu0 0.0
      %356 = vmatprep.subr.mxu0 0.0
      %357 = vmatpush1.msra.mxu0 0.0
      %358 = vmatprep.subr.mxu0 0.0
      %359 = vmatpush1.msra.mxu0 0.0
      %360 = vmatprep.subr.mxu0 0.0
      %361 = vmatpush1.msra.mxu0 0.0
      %362 = vmatprep.subr.mxu0 0.0
      %363 = vmatpush1.msra.mxu0 0.0
      %364 = vmatprep.subr.mxu0 0.0
      %365 = vmatpush1.msra.mxu0 0.0
      %366 = vmatprep.subr.mxu0 0.0
      %367 = vmatpush1.msra.mxu0 0.0
      %368 = vmatprep.subr.mxu0 0.0
      %369 = vmatpush1.msra.mxu0 0.0
      %370 = vmatprep.subr.mxu0 0.0
      %371 = vmatpush1.msra.mxu0 0.0
      %372 = vmatprep.subr.mxu0 0.0
      %373 = vmatpush1.msra.mxu0 0.0
      %374 = vmatprep.subr.mxu0 0.0
      %375 = vmatpush1.msra.mxu0 0.0
      %376 = vmatprep.subr.mxu0 0.0
      %377 = vmatpush1.msra.mxu0 0.0
      %378 = vmatprep.subr.mxu0 0.0
      %379 = vmatpush1.msra.mxu0 0.0
      %380 = vmatprep.subr.mxu0 0.0
      %381 = vmatpush1.msra.mxu0 0.0
      %382 = vmatprep.subr.mxu0 0.0
      %383 = vmatpush1.msra.mxu0 0.0
      %384 = vmatprep.subr.mxu0 0.0
      %385 = vmatpush1.msra.mxu0 0.0
      %386 = vmatprep.mubr.f32.mxu0 0.0
      %387 = vmatmul.mubr.f32.gmra.mrb[0].mxu0 %v299
      %v388 = vpop.f32.mrb[0].mxu0
      %v389 = vadd.f32 0.0, %v388
      %v390 = vpop.f32.mrb[0].mxu0
      %391 = vmatprep.mubr.f32.mxu0 0.0
      %392 = vmatmul.mubr.f32.gmra.mrb[0].mxu0 %v302
      %v393 = vpop.f32.mrb[0].mxu0
      %v394 = vadd.f32 0.0, %v393
      %v395 = vpop.f32.mrb[0].mxu0
      %396 = vmatprep.mubr.f32.mxu0 0.0
      %397 = vmatmul.mubr.f32.gmra.mrb[0].mxu0 %v305
      %v398 = vpop.f32.mrb[0].mxu0
      %v399 = vadd.f32 0.0, %v398
      %v400 = vpop.f32.mrb[0].mxu0
      %401 = vmatprep.mubr.f32.mxu0 0.0
      %402 = vmatmul.mubr.f32.gmra.mrb[0].mxu0 %v308
      %v403 = vpop.f32.mrb[0].mxu0
      %v404 = vadd.f32 0.0, %v403
      %v405 = vpop.f32.mrb[0].mxu0
      %406 = vmatprep.mubr.f32.mxu0 0.0
      %407 = vmatmul.mubr.f32.gmra.mrb[0].mxu0 %v311
      %v408 = vpop.f32.mrb[0].mxu0
      %v409 = vadd.f32 0.0, %v408
      %v410 = vpop.f32.mrb[0].mxu0
      %411 = vmatprep.mubr.f32.mxu0 0.0
      %412 = vmatmul.mubr.f32.gmra.mrb[0].mxu0 %v314
      %v413 = vpop.f32.mrb[0].mxu0
      %v414 = vadd.f32 0.0, %v413
      %v415 = vpop.f32.mrb[0].mxu0
      %416 = vmatprep.mubr.f32.mxu0 0.0
      %417 = vmatmul.mubr.f32.gmra.mrb[0].mxu0 %v317
      %v418 = vpop.f32.mrb[0].mxu0
      %v419 = vadd.f32 0.0, %v418
      %v420 = vpop.f32.mrb[0].mxu0
      %421 = vmatprep.mubr.f32.mxu0 0.0
      %422 = vmatmul.mubr.f32.gmra.mrb[0].mxu0 %v320
      %v423 = vpop.f32.mrb[0].mxu0
      %v424 = vadd.f32 0.0, %v423
      %v425 = vpop.f32.mrb[0].mxu0
      %426 = vdwg.mxu0
      %v427 = vadd.f32 %v266, %v389
      %v428 = vadd.f32 %v267, %v394
      %v429 = vadd.f32 %v268, %v399
      %v430 = vadd.f32 %v269, %v404
      %v431 = vadd.f32 %v270, %v409
      %v432 = vadd.f32 %v271, %v414
      %v433 = vadd.f32 %v272, %v419
      %v434 = vadd.f32 %v273, %v424
      %s435 = scalar_lea.vmem %s237, 1
      %v436 = vld [vmem:[%s435] ss:$2 sm:$0xff]
      %s437 = scalar_lea.vmem %s237, 25
      %v438 = vld [vmem:[%s437] ss:$2 sm:$0xff]
      %s439 = scalar_lea.vmem %s237, 49
      %v440 = vld [vmem:[%s439] ss:$2 sm:$0xff]
      %s441 = scalar_lea.vmem %s237, 73
      %v442 = vld [vmem:[%s441] ss:$2 sm:$0xff]
      %s443 = scalar_lea.vmem %s237, 97
      %v444 = vld [vmem:[%s443] ss:$2 sm:$0xff]
      %s445 = scalar_lea.vmem %s237, 121
      %v446 = vld [vmem:[%s445] ss:$2 sm:$0xff]
      %s447 = scalar_lea.vmem %s237, 145
      %v448 = vld [vmem:[%s447] ss:$2 sm:$0xff]
      %s449 = scalar_lea.vmem %s237, 169
      %v450 = vld [vmem:[%s449] ss:$2 sm:$0xff]
      %s451 = scalar_lea.vmem %s243, 64
      %v452 = vld [vmem:[%s451] sm:$0xff]
      %v453 = vld [vmem:[%s451 + $0x8] sm:$0xff]
      %v454 = vld [vmem:[%s451 + $0x10] sm:$0xff]
      %v455 = vld [vmem:[%s451 + $0x18] sm:$0xff]
      %v456 = vld [vmem:[%s451 + $0x20] sm:$0xff]
      %v457 = vld [vmem:[%s451 + $0x28] sm:$0xff]
      %v458 = vld [vmem:[%s451 + $0x30] sm:$0xff]
      %v459 = vld [vmem:[%s451 + $0x38] sm:$0xff]
      %v461 = vsel %vm297, %v436, 0
      %v464 = vsel %vm297, %v438, 0
      %v467 = vsel %vm297, %v440, 0
      %v470 = vsel %vm297, %v442, 0
      %v473 = vsel %vm297, %v444, 0
      %v476 = vsel %vm297, %v446, 0
      %v479 = vsel %vm297, %v448, 0
      %v482 = vsel %vm297, %v450, 0
      %484 = vmatprep.subr.mxu0 0.0
      %485 = vmatpush1.msra.mxu0 %v452
      %486 = vmatprep.subr.mxu0 0.0
      %487 = vmatpush1.msra.mxu0 %v453
      %488 = vmatprep.subr.mxu0 0.0
      %489 = vmatpush1.msra.mxu0 %v454
      %490 = vmatprep.subr.mxu0 0.0
      %491 = vmatpush1.msra.mxu0 %v455
      %492 = vmatprep.subr.mxu0 0.0
      %493 = vmatpush1.msra.mxu0 %v456
      %494 = vmatprep.subr.mxu0 0.0
      %495 = vmatpush1.msra.mxu0 %v457
      %496 = vmatprep.subr.mxu0 0.0
      %497 = vmatpush1.msra.mxu0 %v458
      %498 = vmatprep.subr.mxu0 0.0
      %499 = vmatpush1.msra.mxu0 %v459
      %500 = vmatprep.subr.mxu0 0.0
      %501 = vmatpush1.msra.mxu0 0.0
      %502 = vmatprep.subr.mxu0 0.0
      %503 = vmatpush1.msra.mxu0 0.0
      %504 = vmatprep.subr.mxu0 0.0
      %505 = vmatpush1.msra.mxu0 0.0
      %506 = vmatprep.subr.mxu0 0.0
      %507 = vmatpush1.msra.mxu0 0.0
      %508 = vmatprep.subr.mxu0 0.0
      %509 = vmatpush1.msra.mxu0 0.0
      %510 = vmatprep.subr.mxu0 0.0
      %511 = vmatpush1.msra.mxu0 0.0
      %512 = vmatprep.subr.mxu0 0.0
      %513 = vmatpush1.msra.mxu0 0.0
      %514 = vmatprep.subr.mxu0 0.0
      %515 = vmatpush1.msra.mxu0 0.0
      %516 = vmatprep.subr.mxu0 0.0
      %517 = vmatpush1.msra.mxu0 0.0
      %518 = vmatprep.subr.mxu0 0.0
      %519 = vmatpush1.msra.mxu0 0.0
      %520 = vmatprep.subr.mxu0 0.0
      %521 = vmatpush1.msra.mxu0 0.0
      %522 = vmatprep.subr.mxu0 0.0
      %523 = vmatpush1.msra.mxu0 0.0
      %524 = vmatprep.subr.mxu0 0.0
      %525 = vmatpush1.msra.mxu0 0.0
      %526 = vmatprep.subr.mxu0 0.0
      %527 = vmatpush1.msra.mxu0 0.0
      %528 = vmatprep.subr.mxu0 0.0
      %529 = vmatpush1.msra.mxu0 0.0
      %530 = vmatprep.subr.mxu0 0.0
      %531 = vmatpush1.msra.mxu0 0.0
      %532 = vmatprep.subr.mxu0 0.0
      %533 = vmatpush1.msra.mxu0 0.0
      %534 = vmatprep.subr.mxu0 0.0
      %535 = vmatpush1.msra.mxu0 0.0
      %536 = vmatprep.subr.mxu0 0.0
      %537 = vmatpush1.msra.mxu0 0.0
      %538 = vmatprep.subr.mxu0 0.0
      %539 = vmatpush1.msra.mxu0 0.0
      %540 = vmatprep.subr.mxu0 0.0
      %541 = vmatpush1.msra.mxu0 0.0
      %542 = vmatprep.subr.mxu0 0.0
      %543 = vmatpush1.msra.mxu0 0.0
      %544 = vmatprep.subr.mxu0 0.0
      %545 = vmatpush1.msra.mxu0 0.0
      %546 = vmatprep.subr.mxu0 0.0
      %547 = vmatpush1.msra.mxu0 0.0
      %548 = vmatprep.mubr.f32.mxu0 0.0
      %549 = vmatmul.mubr.f32.gmra.mrb[0].mxu0 %v461
      %v550 = vpop.f32.mrb[0].mxu0
      %v551 = vadd.f32 0.0, %v550
      %v552 = vpop.f32.mrb[0].mxu0
      %553 = vmatprep.mubr.f32.mxu0 0.0
      %554 = vmatmul.mubr.f32.gmra.mrb[0].mxu0 %v464
      %v555 = vpop.f32.mrb[0].mxu0
      %v556 = vadd.f32 0.0, %v555
      %v557 = vpop.f32.mrb[0].mxu0
      %558 = vmatprep.mubr.f32.mxu0 0.0
      %559 = vmatmul.mubr.f32.gmra.mrb[0].mxu0 %v467
      %v560 = vpop.f32.mrb[0].mxu0
      %v561 = vadd.f32 0.0, %v560
      %v562 = vpop.f32.mrb[0].mxu0
      %563 = vmatprep.mubr.f32.mxu0 0.0
      %564 = vmatmul.mubr.f32.gmra.mrb[0].mxu0 %v470
      %v565 = vpop.f32.mrb[0].mxu0
      %v566 = vadd.f32 0.0, %v565
      %v567 = vpop.f32.mrb[0].mxu0
      %568 = vmatprep.mubr.f32.mxu0 0.0
      %569 = vmatmul.mubr.f32.gmra.mrb[0].mxu0 %v473
      %v570 = vpop.f32.mrb[0].mxu0
      %v571 = vadd.f32 0.0, %v570
      %v572 = vpop.f32.mrb[0].mxu0
      %573 = vmatprep.mubr.f32.mxu0 0.0
      %574 = vmatmul.mubr.f32.gmra.mrb[0].mxu0 %v476
      %v575 = vpop.f32.mrb[0].mxu0
      %v576 = vadd.f32 0.0, %v575
      %v577 = vpop.f32.mrb[0].mxu0
      %578 = vmatprep.mubr.f32.mxu0 0.0
      %579 = vmatmul.mubr.f32.gmra.mrb[0].mxu0 %v479
      %v580 = vpop.f32.mrb[0].mxu0
      %v581 = vadd.f32 0.0, %v580
      %v582 = vpop.f32.mrb[0].mxu0
      %583 = vmatprep.mubr.f32.mxu0 0.0
      %584 = vmatmul.mubr.f32.gmra.mrb[0].mxu0 %v482
      %v585 = vpop.f32.mrb[0].mxu0
      %v586 = vadd.f32 0.0, %v585
      %v587 = vpop.f32.mrb[0].mxu0
      %588 = vdwg.mxu0
      %v589 = vadd.f32 %v427, %v551
      %v590 = vadd.f32 %v428, %v556
      %v591 = vadd.f32 %v429, %v561
      %v592 = vadd.f32 %v430, %v566
      %v593 = vadd.f32 %v431, %v571
      %v594 = vadd.f32 %v432, %v576
      %v595 = vadd.f32 %v433, %v581
      %v596 = vadd.f32 %v434, %v586
      %s597 = scalar_lea.vmem %s237, 2
      %v598 = vld [vmem:[%s597] ss:$2 sm:$0xff]
      %s599 = scalar_lea.vmem %s237, 26
      %v600 = vld [vmem:[%s599] ss:$2 sm:$0xff]
      %s601 = scalar_lea.vmem %s237, 50
      %v602 = vld [vmem:[%s601] ss:$2 sm:$0xff]
      %s603 = scalar_lea.vmem %s237, 74
      %v604 = vld [vmem:[%s603] ss:$2 sm:$0xff]
      %s605 = scalar_lea.vmem %s237, 98
      %v606 = vld [vmem:[%s605] ss:$2 sm:$0xff]
      %s607 = scalar_lea.vmem %s237, 122
      %v608 = vld [vmem:[%s607] ss:$2 sm:$0xff]
      %s609 = scalar_lea.vmem %s237, 146
      %v610 = vld [vmem:[%s609] ss:$2 sm:$0xff]
      %s611 = scalar_lea.vmem %s237, 170
      %v612 = vld [vmem:[%s611] ss:$2 sm:$0xff]
      %s613 = scalar_lea.vmem %s243, 128
      %v614 = vld [vmem:[%s613] sm:$0xff]
      %v615 = vld [vmem:[%s613 + $0x8] sm:$0xff]
      %v616 = vld [vmem:[%s613 + $0x10] sm:$0xff]
      %v617 = vld [vmem:[%s613 + $0x18] sm:$0xff]
      %v618 = vld [vmem:[%s613 + $0x20] sm:$0xff]
      %v619 = vld [vmem:[%s613 + $0x28] sm:$0xff]
      %v620 = vld [vmem:[%s613 + $0x30] sm:$0xff]
      %v621 = vld [vmem:[%s613 + $0x38] sm:$0xff]
      %v623 = vsel %vm297, %v598, 0
      %v626 = vsel %vm297, %v600, 0
      %v629 = vsel %vm297, %v602, 0
      %v632 = vsel %vm297, %v604, 0
      %v635 = vsel %vm297, %v606, 0
      %v638 = vsel %vm297, %v608, 0
      %v641 = vsel %vm297, %v610, 0
      %v644 = vsel %vm297, %v612, 0
      %646 = vmatprep.subr.mxu0 0.0
      %647 = vmatpush1.msra.mxu0 %v614
      %648 = vmatprep.subr.mxu0 0.0
      %649 = vmatpush1.msra.mxu0 %v615
      %650 = vmatprep.subr.mxu0 0.0
      %651 = vmatpush1.msra.mxu0 %v616
      %652 = vmatprep.subr.mxu0 0.0
      %653 = vmatpush1.msra.mxu0 %v617
      %654 = vmatprep.subr.mxu0 0.0
      %655 = vmatpush1.msra.mxu0 %v618
      %656 = vmatprep.subr.mxu0 0.0
      %657 = vmatpush1.msra.mxu0 %v619
      %658 = vmatprep.subr.mxu0 0.0
      %659 = vmatpush1.msra.mxu0 %v620
      %660 = vmatprep.subr.mxu0 0.0
      %661 = vmatpush1.msra.mxu0 %v621
      %662 = vmatprep.subr.mxu0 0.0
      %663 = vmatpush1.msra.mxu0 0.0
      %664 = vmatprep.subr.mxu0 0.0
      %665 = vmatpush1.msra.mxu0 0.0
      %666 = vmatprep.subr.mxu0 0.0
      %667 = vmatpush1.msra.mxu0 0.0
      %668 = vmatprep.subr.mxu0 0.0
      %669 = vmatpush1.msra.mxu0 0.0
      %670 = vmatprep.subr.mxu0 0.0
      %671 = vmatpush1.msra.mxu0 0.0
      %672 = vmatprep.subr.mxu0 0.0
      %673 = vmatpush1.msra.mxu0 0.0
      %674 = vmatprep.subr.mxu0 0.0
      %675 = vmatpush1.msra.mxu0 0.0
      %676 = vmatprep.subr.mxu0 0.0
      %677 = vmatpush1.msra.mxu0 0.0
      %678 = vmatprep.subr.mxu0 0.0
      %679 = vmatpush1.msra.mxu0 0.0
      %680 = vmatprep.subr.mxu0 0.0
      %681 = vmatpush1.msra.mxu0 0.0
      %682 = vmatprep.subr.mxu0 0.0
      %683 = vmatpush1.msra.mxu0 0.0
      %684 = vmatprep.subr.mxu0 0.0
      %685 = vmatpush1.msra.mxu0 0.0
      %686 = vmatprep.subr.mxu0 0.0
      %687 = vmatpush1.msra.mxu0 0.0
      %688 = vmatprep.subr.mxu0 0.0
      %689 = vmatpush1.msra.mxu0 0.0
      %690 = vmatprep.subr.mxu0 0.0
      %691 = vmatpush1.msra.mxu0 0.0
      %692 = vmatprep.subr.mxu0 0.0
      %693 = vmatpush1.msra.mxu0 0.0
      %694 = vmatprep.subr.mxu0 0.0
      %695 = vmatpush1.msra.mxu0 0.0
      %696 = vmatprep.subr.mxu0 0.0
      %697 = vmatpush1.msra.mxu0 0.0
      %698 = vmatprep.subr.mxu0 0.0
      %699 = vmatpush1.msra.mxu0 0.0
      %700 = vmatprep.subr.mxu0 0.0
      %701 = vmatpush1.msra.mxu0 0.0
      %702 = vmatprep.subr.mxu0 0.0
      %703 = vmatpush1.msra.mxu0 0.0
      %704 = vmatprep.subr.mxu0 0.0
      %705 = vmatpush1.msra.mxu0 0.0
      %706 = vmatprep.subr.mxu0 0.0
      %707 = vmatpush1.msra.mxu0 0.0
      %708 = vmatprep.subr.mxu0 0.0
      %709 = vmatpush1.msra.mxu0 0.0
      %710 = vmatprep.mubr.f32.mxu0 0.0
      %711 = vmatmul.mubr.f32.gmra.mrb[0].mxu0 %v623
      %v712 = vpop.f32.mrb[0].mxu0
      %v713 = vadd.f32 0.0, %v712
      %v714 = vpop.f32.mrb[0].mxu0
      %715 = vmatprep.mubr.f32.mxu0 0.0
      %716 = vmatmul.mubr.f32.gmra.mrb[0].mxu0 %v626
      %v717 = vpop.f32.mrb[0].mxu0
      %v718 = vadd.f32 0.0, %v717
      %v719 = vpop.f32.mrb[0].mxu0
      %720 = vmatprep.mubr.f32.mxu0 0.0
      %721 = vmatmul.mubr.f32.gmra.mrb[0].mxu0 %v629
      %v722 = vpop.f32.mrb[0].mxu0
      %v723 = vadd.f32 0.0, %v722
      %v724 = vpop.f32.mrb[0].mxu0
      %725 = vmatprep.mubr.f32.mxu0 0.0
      %726 = vmatmul.mubr.f32.gmra.mrb[0].mxu0 %v632
      %v727 = vpop.f32.mrb[0].mxu0
      %v728 = vadd.f32 0.0, %v727
      %v729 = vpop.f32.mrb[0].mxu0
      %730 = vmatprep.mubr.f32.mxu0 0.0
      %731 = vmatmul.mubr.f32.gmra.mrb[0].mxu0 %v635
      %v732 = vpop.f32.mrb[0].mxu0
      %v733 = vadd.f32 0.0, %v732
      %v734 = vpop.f32.mrb[0].mxu0
      %735 = vmatprep.mubr.f32.mxu0 0.0
      %736 = vmatmul.mubr.f32.gmra.mrb[0].mxu0 %v638
      %v737 = vpop.f32.mrb[0].mxu0
      %v738 = vadd.f32 0.0, %v737
      %v739 = vpop.f32.mrb[0].mxu0
      %740 = vmatprep.mubr.f32.mxu0 0.0
      %741 = vmatmul.mubr.f32.gmra.mrb[0].mxu0 %v641
      %v742 = vpop.f32.mrb[0].mxu0
      %v743 = vadd.f32 0.0, %v742
      %v744 = vpop.f32.mrb[0].mxu0
      %745 = vmatprep.mubr.f32.mxu0 0.0
      %746 = vmatmul.mubr.f32.gmra.mrb[0].mxu0 %v644
      %v747 = vpop.f32.mrb[0].mxu0
      %v748 = vadd.f32 0.0, %v747
      %v749 = vpop.f32.mrb[0].mxu0
      %750 = vdwg.mxu0
      %v751 = vadd.f32 %v589, %v713
      %v752 = vadd.f32 %v590, %v718
      %v753 = vadd.f32 %v591, %v723
      %v754 = vadd.f32 %v592, %v728
      %v755 = vadd.f32 %v593, %v733
      %v756 = vadd.f32 %v594, %v738
      %v757 = vadd.f32 %v595, %v743
      %v758 = vadd.f32 %v596, %v748
      %s759 = scalar_lea.vmem %s237, 3
      %v760 = vld [vmem:[%s759] ss:$2 sm:$0xff]
      %s761 = scalar_lea.vmem %s237, 27
      %v762 = vld [vmem:[%s761] ss:$2 sm:$0xff]
      %s763 = scalar_lea.vmem %s237, 51
      %v764 = vld [vmem:[%s763] ss:$2 sm:$0xff]
      %s765 = scalar_lea.vmem %s237, 75
      %v766 = vld [vmem:[%s765] ss:$2 sm:$0xff]
      %s767 = scalar_lea.vmem %s237, 99
      %v768 = vld [vmem:[%s767] ss:$2 sm:$0xff]
      %s769 = scalar_lea.vmem %s237, 123
      %v770 = vld [vmem:[%s769] ss:$2 sm:$0xff]
      %s771 = scalar_lea.vmem %s237, 147
      %v772 = vld [vmem:[%s771] ss:$2 sm:$0xff]
      %s773 = scalar_lea.vmem %s237, 171
      %v774 = vld [vmem:[%s773] ss:$2 sm:$0xff]
      %s775 = scalar_lea.vmem %s243, 192
      %v776 = vld [vmem:[%s775] sm:$0xff]
      %v777 = vld [vmem:[%s775 + $0x8] sm:$0xff]
      %v778 = vld [vmem:[%s775 + $0x10] sm:$0xff]
      %v779 = vld [vmem:[%s775 + $0x18] sm:$0xff]
      %v780 = vld [vmem:[%s775 + $0x20] sm:$0xff]
      %v781 = vld [vmem:[%s775 + $0x28] sm:$0xff]
      %v782 = vld [vmem:[%s775 + $0x30] sm:$0xff]
      %v783 = vld [vmem:[%s775 + $0x38] sm:$0xff]
      %v785 = vsel %vm297, %v760, 0
      %v788 = vsel %vm297, %v762, 0
      %v791 = vsel %vm297, %v764, 0
      %v794 = vsel %vm297, %v766, 0
      %v797 = vsel %vm297, %v768, 0
      %v800 = vsel %vm297, %v770, 0
      %v803 = vsel %vm297, %v772, 0
      %v806 = vsel %vm297, %v774, 0
      %808 = vmatprep.subr.mxu0 0.0
      %809 = vmatpush1.msra.mxu0 %v776
      %810 = vmatprep.subr.mxu0 0.0
      %811 = vmatpush1.msra.mxu0 %v777
      %812 = vmatprep.subr.mxu0 0.0
      %813 = vmatpush1.msra.mxu0 %v778
      %814 = vmatprep.subr.mxu0 0.0
      %815 = vmatpush1.msra.mxu0 %v779
      %816 = vmatprep.subr.mxu0 0.0
      %817 = vmatpush1.msra.mxu0 %v780
      %818 = vmatprep.subr.mxu0 0.0
      %819 = vmatpush1.msra.mxu0 %v781
      %820 = vmatprep.subr.mxu0 0.0
      %821 = vmatpush1.msra.mxu0 %v782
      %822 = vmatprep.subr.mxu0 0.0
      %823 = vmatpush1.msra.mxu0 %v783
      %824 = vmatprep.subr.mxu0 0.0
      %825 = vmatpush1.msra.mxu0 0.0
      %826 = vmatprep.subr.mxu0 0.0
      %827 = vmatpush1.msra.mxu0 0.0
      %828 = vmatprep.subr.mxu0 0.0
      %829 = vmatpush1.msra.mxu0 0.0
      %830 = vmatprep.subr.mxu0 0.0
      %831 = vmatpush1.msra.mxu0 0.0
      %832 = vmatprep.subr.mxu0 0.0
      %833 = vmatpush1.msra.mxu0 0.0
      %834 = vmatprep.subr.mxu0 0.0
      %835 = vmatpush1.msra.mxu0 0.0
      %836 = vmatprep.subr.mxu0 0.0
      %837 = vmatpush1.msra.mxu0 0.0
      %838 = vmatprep.subr.mxu0 0.0
      %839 = vmatpush1.msra.mxu0 0.0
      %840 = vmatprep.subr.mxu0 0.0
      %841 = vmatpush1.msra.mxu0 0.0
      %842 = vmatprep.subr.mxu0 0.0
      %843 = vmatpush1.msra.mxu0 0.0
      %844 = vmatprep.subr.mxu0 0.0
      %845 = vmatpush1.msra.mxu0 0.0
      %846 = vmatprep.subr.mxu0 0.0
      %847 = vmatpush1.msra.mxu0 0.0
      %848 = vmatprep.subr.mxu0 0.0
      %849 = vmatpush1.msra.mxu0 0.0
      %850 = vmatprep.subr.mxu0 0.0
      %851 = vmatpush1.msra.mxu0 0.0
      %852 = vmatprep.subr.mxu0 0.0
      %853 = vmatpush1.msra.mxu0 0.0
      %854 = vmatprep.subr.mxu0 0.0
      %855 = vmatpush1.msra.mxu0 0.0
      %856 = vmatprep.subr.mxu0 0.0
      %857 = vmatpush1.msra.mxu0 0.0
      %858 = vmatprep.subr.mxu0 0.0
      %859 = vmatpush1.msra.mxu0 0.0
      %860 = vmatprep.subr.mxu0 0.0
      %861 = vmatpush1.msra.mxu0 0.0
      %862 = vmatprep.subr.mxu0 0.0
      %863 = vmatpush1.msra.mxu0 0.0
      %864 = vmatprep.subr.mxu0 0.0
      %865 = vmatpush1.msra.mxu0 0.0
      %866 = vmatprep.subr.mxu0 0.0
      %867 = vmatpush1.msra.mxu0 0.0
      %868 = vmatprep.subr.mxu0 0.0
      %869 = vmatpush1.msra.mxu0 0.0
      %870 = vmatprep.subr.mxu0 0.0
      %871 = vmatpush1.msra.mxu0 0.0
      %872 = vmatprep.mubr.f32.mxu0 0.0
      %873 = vmatmul.mubr.f32.gmra.mrb[0].mxu0 %v785
      %v874 = vpop.f32.mrb[0].mxu0
      %v875 = vadd.f32 0.0, %v874
      %v876 = vpop.f32.mrb[0].mxu0
      %877 = vmatprep.mubr.f32.mxu0 0.0
      %878 = vmatmul.mubr.f32.gmra.mrb[0].mxu0 %v788
      %v879 = vpop.f32.mrb[0].mxu0
      %v880 = vadd.f32 0.0, %v879
      %v881 = vpop.f32.mrb[0].mxu0
      %882 = vmatprep.mubr.f32.mxu0 0.0
      %883 = vmatmul.mubr.f32.gmra.mrb[0].mxu0 %v791
      %v884 = vpop.f32.mrb[0].mxu0
      %v885 = vadd.f32 0.0, %v884
      %v886 = vpop.f32.mrb[0].mxu0
      %887 = vmatprep.mubr.f32.mxu0 0.0
      %888 = vmatmul.mubr.f32.gmra.mrb[0].mxu0 %v794
      %v889 = vpop.f32.mrb[0].mxu0
      %v890 = vadd.f32 0.0, %v889
      %v891 = vpop.f32.mrb[0].mxu0
      %892 = vmatprep.mubr.f32.mxu0 0.0
      %893 = vmatmul.mubr.f32.gmra.mrb[0].mxu0 %v797
      %v894 = vpop.f32.mrb[0].mxu0
      %v895 = vadd.f32 0.0, %v894
      %v896 = vpop.f32.mrb[0].mxu0
      %897 = vmatprep.mubr.f32.mxu0 0.0
      %898 = vmatmul.mubr.f32.gmra.mrb[0].mxu0 %v800
      %v899 = vpop.f32.mrb[0].mxu0
      %v900 = vadd.f32 0.0, %v899
      %v901 = vpop.f32.mrb[0].mxu0
      %902 = vmatprep.mubr.f32.mxu0 0.0
      %903 = vmatmul.mubr.f32.gmra.mrb[0].mxu0 %v803
      %v904 = vpop.f32.mrb[0].mxu0
      %v905 = vadd.f32 0.0, %v904
      %v906 = vpop.f32.mrb[0].mxu0
      %907 = vmatprep.mubr.f32.mxu0 0.0
      %908 = vmatmul.mubr.f32.gmra.mrb[0].mxu0 %v806
      %v909 = vpop.f32.mrb[0].mxu0
      %v910 = vadd.f32 0.0, %v909
      %v911 = vpop.f32.mrb[0].mxu0
      %912 = vdwg.mxu0
      %v913 = vadd.f32 %v751, %v875
      %v914 = vadd.f32 %v752, %v880
      %v915 = vadd.f32 %v753, %v885
      %v916 = vadd.f32 %v754, %v890
      %v917 = vadd.f32 %v755, %v895
      %v918 = vadd.f32 %v756, %v900
      %v919 = vadd.f32 %v757, %v905
      %v920 = vadd.f32 %v758, %v910
      %921 = vst [vmem:[#allocation2] sm:$0xff] %v913
      %922 = vst [vmem:[#allocation2 + $0x8] sm:$0xff] %v914
      %923 = vst [vmem:[#allocation2 + $0x10] sm:$0xff] %v915
      %924 = vst [vmem:[#allocation2 + $0x18] sm:$0xff] %v916
      %925 = vst [vmem:[#allocation2 + $0x20] sm:$0xff] %v917
      %926 = vst [vmem:[#allocation2 + $0x28] sm:$0xff] %v918
      %927 = vst [vmem:[#allocation2 + $0x30] sm:$0xff] %v919
      %928 = vst [vmem:[#allocation2 + $0x38] sm:$0xff] %v920
      %p929 = scmp.eq.s32.totalorder %s21, 3
      // Predicated region
      $region37: #{_lambda_.6} parent=31 // pred_check
        %p930 = pneg %p929
      $region38: #{_lambda_.6} parent=31 // pred_check_branch
        %932 = sbr.rel (%p930) target = $region40
      $region39: #{_lambda_.6} parent=31 // pred_region
        %v933 = vld [vmem:[%s2] sm:$0x1]
        %v935 = vlaneseq
        %v936 = vshrl.u32 %v935, 7
        %v937 = vsub.s32 0, %v936
        %v938 = vrot.slane %v933, %v937
        %v940 = vadd.f32 %v913, %v938
        %v941 = vadd.f32 %v914, %v938
        %v942 = vadd.f32 %v915, %v938
        %v943 = vadd.f32 %v916, %v938
        %v944 = vadd.f32 %v917, %v938
        %v945 = vadd.f32 %v918, %v938
        %v946 = vadd.f32 %v919, %v938
        %v947 = vadd.f32 %v920, %v938
        %v948 = vadd.f32 %v940, %v941
        %v949 = vadd.f32 %v948, %v942
        %v950 = vadd.f32 %v949, %v943
        %v951 = vadd.f32 %v950, %v944
        %v952 = vadd.f32 %v951, %v945
        %v953 = vadd.f32 %v952, %v946
        %v954 = vadd.f32 %v953, %v947
        %v955 = vrot.slane %v954, 4
        %v956 = vadd.f32 %v954, %v955
        %v957 = vrot.slane %v956, 2
        %v958 = vadd.f32 %v956, %v957
        %v959 = vrot.slane %v958, 1
        %v960 = vadd.f32 %v958, %v959
        %v961 = vrcp.pop 64.0
        %v962 = vmul.f32 %v960, %v961
        %v963 = vsub.f32 %v940, %v962
        %v964 = vsub.f32 %v941, %v962
        %v965 = vsub.f32 %v942, %v962
        %v966 = vsub.f32 %v943, %v962
        %v967 = vsub.f32 %v944, %v962
        %v968 = vsub.f32 %v945, %v962
        %v969 = vsub.f32 %v946, %v962
        %v970 = vsub.f32 %v947, %v962
        %v971 = vmul.f32 %v963, %v963
        %v972 = vmul.f32 %v964, %v964
        %v973 = vmul.f32 %v965, %v965
        %v974 = vmul.f32 %v966, %v966
        %v975 = vmul.f32 %v967, %v967
        %v976 = vmul.f32 %v968, %v968
        %v977 = vmul.f32 %v969, %v969
        %v978 = vmul.f32 %v970, %v970
        %v979 = vadd.f32 %v971, %v972
        %v980 = vadd.f32 %v979, %v973
        %v981 = vadd.f32 %v980, %v974
        %v982 = vadd.f32 %v981, %v975
        %v983 = vadd.f32 %v982, %v976
        %v984 = vadd.f32 %v983, %v977
        %v985 = vadd.f32 %v984, %v978
        %v986 = vrot.slane %v985, 4
        %v987 = vadd.f32 %v985, %v986
        %v988 = vrot.slane %v987, 2
        %v989 = vadd.f32 %v987, %v988
        %v990 = vrot.slane %v989, 1
        %v991 = vadd.f32 %v989, %v990
        %v992 = vmul.f32 %v991, %v961
        %v993 = vadd.f32 %v992, 1e-05
        %v994 = vrsqrt.pop %v993
        %v995 = vmul.f32 %v963, %v994
        %v996 = vmul.f32 %v964, %v994
        %v997 = vmul.f32 %v965, %v994
        %v998 = vmul.f32 %v966, %v994
        %v999 = vmul.f32 %v967, %v994
        %v1000 = vmul.f32 %v968, %v994
        %v1001 = vmul.f32 %v969, %v994
        %v1002 = vmul.f32 %v970, %v994
        %vm1003 = vcmp.ge.f32.partialorder %v995, 0.0
        %vm1004 = vcmp.ge.f32.partialorder %v996, 0.0
        %vm1005 = vcmp.ge.f32.partialorder %v997, 0.0
        %vm1006 = vcmp.ge.f32.partialorder %v998, 0.0
        %vm1007 = vcmp.ge.f32.partialorder %v999, 0.0
        %vm1008 = vcmp.ge.f32.partialorder %v1000, 0.0
        %vm1009 = vcmp.ge.f32.partialorder %v1001, 0.0
        %vm1010 = vcmp.ge.f32.partialorder %v1002, 0.0
        %v1011 = vmul.f32 %v995, 0.2
        %v1012 = vmul.f32 %v996, 0.2
        %v1013 = vmul.f32 %v997, 0.2
        %v1014 = vmul.f32 %v998, 0.2
        %v1015 = vmul.f32 %v999, 0.2
        %v1016 = vmul.f32 %v1000, 0.2
        %v1017 = vmul.f32 %v1001, 0.2
        %v1018 = vmul.f32 %v1002, 0.2
        %v1019 = vsel %vm1003, %v995, %v1011
        %v1020 = vsel %vm1004, %v996, %v1012
        %v1021 = vsel %vm1005, %v997, %v1013
        %v1022 = vsel %vm1006, %v998, %v1014
        %v1023 = vsel %vm1007, %v999, %v1015
        %v1024 = vsel %vm1008, %v1000, %v1016
        %v1025 = vsel %vm1009, %v1001, %v1017
        %v1026 = vsel %vm1010, %v1002, %v1018
        %1027 = vst [vmem:[%s252] sm:$0xff] %v1019
        %1028 = vst [vmem:[%s252 + $0x8] sm:$0xff] %v1020
        %1029 = vst [vmem:[%s252 + $0x10] sm:$0xff] %v1021
        %1030 = vst [vmem:[%s252 + $0x18] sm:$0xff] %v1022
        %1031 = vst [vmem:[%s252 + $0x20] sm:$0xff] %v1023
        %1032 = vst [vmem:[%s252 + $0x28] sm:$0xff] %v1024
        %1033 = vst [vmem:[%s252 + $0x30] sm:$0xff] %v1025
        %1034 = vst [vmem:[%s252 + $0x38] sm:$0xff] %v1026
      $region40: #{_lambda_.6} parent=31 // pred_fallthru
        _
      %s1035 = smul.u32 8, %s20
      %p1036 = scmp.lt.s32.totalorder %s19, 1
      %s1037 = scalar_select %p1036, %s19, 1
      %p1038 = scmp.lt.s32.totalorder %s1035, 7
      %s1039 = scalar_select %p1038, %s1035, 7
      %s1040 = smul.addr %s1037, 8
      %s1041 = sadd.s32 %s1039, %s1040
      %s1042 = smul.addr %s1041, 8
      %s1043 = scalar_lea.vmem %s3, %s1042
      // Predicated region
      $region41: #{_lambda_.6} parent=31 // pred_check
        %p1044 = pneg %p130
      $region42: #{_lambda_.6} parent=31 // pred_check_branch
        %1046 = sbr.rel (%p1044) target = $region44
      $region43: #{_lambda_.6} parent=31 // pred_region
        %s1047 = smul.u32 8, %s20
      $region44: #{_lambda_.6} parent=31 // pred_fallthru
        _
    $region32: #{_lambda_.6} parent=5 // pred_fallthru
      _
    %p1048 = scmp.le.s32.totalorder 2, %s9
    // Predicated region
    $region45: #{_lambda_.6} parent=5 // pred_check
      %p1049 = pneg %p1048
    $region46: #{_lambda_.6} parent=5 // pred_check_branch
      %1051 = sbr.rel (%p1049) target = $region48
    $region47: #{_lambda_.6} parent=5 // pred_region
      %s1052 = ssub.s32 %s9, 2
      // Predicated region
      $region49: #{_lambda_.6} parent=47 // pred_check
        %p1053 = pneg %p136
      $region50: #{_lambda_.6} parent=47 // pred_check_branch
        %1055 = sbr.rel (%p1053) target = $region52
      $region51: #{_lambda_.6} parent=47 // pred_region
        %s1056 = smul.u32 8, %s23
        %p1057 = scmp.lt.s32.totalorder %s22, 1
        %s1058 = scalar_select %p1057, %s22, 1
        %p1059 = scmp.lt.s32.totalorder %s1056, 7
        %s1060 = scalar_select %p1059, %s1056, 7
        %s1061 = smul.addr %s1058, 8
        %s1062 = sadd.s32 %s1060, %s1061
        %s1063 = smul.addr %s1062, 8
        %s1064 = scalar_lea.vmem %s3, %s1063
      $region52: #{_lambda_.6} parent=47 // pred_fallthru
        _
    $region48: #{_lambda_.6} parent=5 // pred_fallthru
      _
  $region6: #{_lambda_.6} parent=0 // loop_footer
    %s13 = sadd.s32 1, %s9
  $region7: #{_lambda_.6} parent=0 // loop_footer_branch
    %8 = sbr.rel target = $region3
  $region8: #{_lambda_.6} parent=0 // loop_exit
    _

// kernel: _lambda_.7
$region0: #{_lambda_.7}
  #allocation0 [shape = 'u32[]', space=smem, size = 0x4, offset = 0x4, fixed_abs, tag = 'smem constant byte address 0x4 - core index']
  #allocation1 [shape = 'u32[144,128]{1,0:T(1,128)}', space=vmem, size = 0x12000, scoped, tag = 'internal scratch']
  #allocation2 [shape = 'f32[16,256]{1,0:T(8,128)}', space=vmem, size = 0x4000, scoped, tag = 'scratch operand']
  %s0 = inlined_call_operand.vmem [shape: f32[4,2,4,10,128], index: 0, kind: input, shape index: {}]
  %s1 = inlined_call_operand.vmem [shape: f32[4,4,128,256], index: 1, kind: input, shape index: {}]
  %s2 = inlined_call_operand.vmem [shape: f32[1,256], index: 2, kind: input, shape index: {}]
  %s3 = inlined_call_operand.vmem [shape: f32[2,16,256], index: 3, kind: output, shape index: {}]
  %s4 = sld [smem:[#allocation0]]
  $region53: #{_lambda_.7} parent=0
    _
  %s6 = ssub.s32 1, %s4
  %s7 = scalar_select 0, %s6, %s4
  loop: start=0, step=1, limit=10
  $region2: #{_lambda_.7} parent=0 // loop_pre_header
    _
  $region3: #{_lambda_.7} parent=0 // loop_header
    %s9 = sphi 0, %s13
    %p10 = scmp.ge.s32.totalorder %s9, 10
    %s16 = sphi 0, %s35
    %s17 = sphi 0, %s31
    %s18 = sphi 0, %s27
    %s19 = sphi 0, %s16
    %s20 = sphi 0, %s17
    %s21 = sphi 0, %s18
    %s22 = sphi 0, %s19
    %s23 = sphi 0, %s20
    %s24 = sphi 0, %s21
    %s42 = sphi 0, %s44
    %s45 = sphi 0, %s42
    %s46 = sphi 0, %s45
    %s62 = sphi 0, %s46
    %s68 = sphi 0, %s70
    %s71 = sphi 0, %s68
    %s72 = sphi 0, %s71
    %s88 = sphi 0, %s72
    %s92 = sphi 0, %s92
    %s94 = sphi 0, %s92
    %s95 = sphi 0, %s94
    %s109 = sphi 0, %s95
    %s117 = sphi 0, %s119
    %s120 = sphi 0, %s117
    %s121 = sphi 0, %s120
    %s137 = sphi 0, %s121
  $region4: #{_lambda_.7} parent=0 // loop_header_branch
    %12 = sbr.rel (%p10) target = $region8
  $region5: #{_lambda_.7} parent=0 // loop_body
    %s14 = ssub.s32 %s9, 1
    %s15 = ssub.s32 %s9, 2
    %s25 = sadd.s32 1, %s18
    %p26 = scmp.ge.s32.totalorder %s25, 4
    %s27 = scalar_select %p26, 0, %s25
    %s28 = sadd.s32 1, %s17
    %s29 = scalar_select %p26, %s28, %s17
    %p30 = scmp.ge.s32.totalorder %s29, 1
    %s31 = scalar_select %p30, 0, %s29
    %s32 = sadd.s32 1, %s16
    %s33 = scalar_select %p30, %s32, %s16
    %p34 = scmp.ge.s32.totalorder %s33, 2
    %s35 = scalar_select %p34, 0, %s33
    %s36 = ssub.s32 %s18, %s27
    %s37 = ssub.s32 %s16, %s35
    %s38 = sor.u32 %s36, %s37
    %s39 = ssub.s32 %s17, %s31
    %s40 = sor.u32 %s38, %s39
    %p41 = scmp.eq.s32.totalorder %s40, 0
    %s43 = sadd.s32 %s42, 1
    %s44 = scalar_select %p41, %s42, %s43
    %p47 = pneg %p41
    %p48 = scmp.eq.s32.totalorder %s9, 7
    %p49 = por %p47, %p48
    %p50 = scmp.ne.s32.totalorder %s42, %s45
    %p51 = scmp.eq.s32.totalorder %s9, 0
    %p52 = por %p50, %p51
    %p53 = scmp.ne.s32.totalorder %s42, %s45
    %p54 = scmp.eq.s32.totalorder %s14, 7
    %p55 = por %p53, %p54
    %p56 = scmp.ne.s32.totalorder %s45, %s46
    %p57 = scmp.eq.s32.totalorder %s14, 0
    %p58 = por %p56, %p57
    %p59 = scmp.ne.s32.totalorder %s45, %s46
    %p60 = scmp.eq.s32.totalorder %s15, 7
    %p61 = por %p59, %p60
    %p63 = scmp.ne.s32.totalorder %s46, %s62
    %p64 = scmp.eq.s32.totalorder %s15, 0
    %p65 = por %p63, %p64
    %s66 = ssub.s32 %s18, %s27
    %p67 = scmp.eq.s32.totalorder %s66, 0
    %s69 = sadd.s32 %s68, 1
    %s70 = scalar_select %p67, %s68, %s69
    %p73 = pneg %p67
    %p74 = scmp.eq.s32.totalorder %s9, 7
    %p75 = por %p73, %p74
    %p76 = scmp.ne.s32.totalorder %s68, %s71
    %p77 = scmp.eq.s32.totalorder %s9, 0
    %p78 = por %p76, %p77
    %p79 = scmp.ne.s32.totalorder %s68, %s71
    %p80 = scmp.eq.s32.totalorder %s14, 7
    %p81 = por %p79, %p80
    %p82 = scmp.ne.s32.totalorder %s71, %s72
    %p83 = scmp.eq.s32.totalorder %s14, 0
    %p84 = por %p82, %p83
    %p85 = scmp.ne.s32.totalorder %s71, %s72
    %p86 = scmp.eq.s32.totalorder %s15, 7
    %p87 = por %p85, %p86
    %p89 = scmp.ne.s32.totalorder %s72, %s88
    %p90 = scmp.eq.s32.totalorder %s15, 0
    %p91 = por %p89, %p90
    %s93 = sadd.s32 %s92, 1
    %p96 = scmp.eq.s32.totalorder %s9, 7
    %p97 = scmp.ne.s32.totalorder %s92, %s94
    %p98 = scmp.eq.s32.totalorder %s9, 0
    %p99 = por %p97, %p98
    %p100 = scmp.ne.s32.totalorder %s92, %s94
    %p101 = scmp.eq.s32.totalorder %s14, 7
    %p102 = por %p100, %p101
    %p103 = scmp.ne.s32.totalorder %s94, %s95
    %p104 = scmp.eq.s32.totalorder %s14, 0
    %p105 = por %p103, %p104
    %p106 = scmp.ne.s32.totalorder %s94, %s95
    %p107 = scmp.eq.s32.totalorder %s15, 7
    %p108 = por %p106, %p107
    %p110 = scmp.ne.s32.totalorder %s95, %s109
    %p111 = scmp.eq.s32.totalorder %s15, 0
    %p112 = por %p110, %p111
    %s113 = ssub.s32 %s16, %s35
    %s114 = ssub.s32 %s17, %s31
    %s115 = sor.u32 %s113, %s114
    %p116 = scmp.eq.s32.totalorder %s115, 0
    %s118 = sadd.s32 %s117, 1
    %s119 = scalar_select %p116, %s117, %s118
    %p122 = pneg %p116
    %p123 = scmp.eq.s32.totalorder %s9, 7
    %p124 = por %p122, %p123
    %p125 = scmp.ne.s32.totalorder %s117, %s120
    %p126 = scmp.eq.s32.totalorder %s9, 0
    %p127 = por %p125, %p126
    %p128 = scmp.ne.s32.totalorder %s117, %s120
    %p129 = scmp.eq.s32.totalorder %s14, 7
    %p130 = por %p128, %p129
    %p131 = scmp.ne.s32.totalorder %s120, %s121
    %p132 = scmp.eq.s32.totalorder %s14, 0
    %p133 = por %p131, %p132
    %p134 = scmp.ne.s32.totalorder %s120, %s121
    %p135 = scmp.eq.s32.totalorder %s15, 7
    %p136 = por %p134, %p135
    %p138 = scmp.ne.s32.totalorder %s121, %s137
    %p139 = scmp.eq.s32.totalorder %s15, 0
    %p140 = por %p138, %p139
    %p141 = scmp.le.s32.totalorder 1, %s9
    %p142 = scmp.lt.s32.totalorder %s9, 9
    %p143 = pnand %p141, %p142
    %p144 = pneg %p143
    // Predicated region
    $region9: #{_lambda_.7} parent=5 // pred_check
      _
    $region10: #{_lambda_.7} parent=5 // pred_check_branch
      %146 = sbr.rel (%p143) target = $region12
    $region11: #{_lambda_.7} parent=5 // pred_region
      %s147 = ssub.s32 %s9, 1
      // Predicated region
      $region13: #{_lambda_.7} parent=11 // pred_check
        %p148 = pneg %p105
      $region14: #{_lambda_.7} parent=11 // pred_check_branch
        %150 = sbr.rel (%p148) target = $region16
      $region15: #{_lambda_.7} parent=11 // pred_region
        _
      $region16: #{_lambda_.7} parent=11 // pred_fallthru
        _
    $region12: #{_lambda_.7} parent=5 // pred_fallthru
      _
    %p151 = scmp.lt.s32.totalorder %s9, 8
    // Predicated region
    $region17: #{_lambda_.7} parent=5 // pred_check
      %p152 = pneg %p151
    $region18: #{_lambda_.7} parent=5 // pred_check_branch
      %154 = sbr.rel (%p152) target = $region20
    $region19: #{_lambda_.7} parent=5 // pred_region
      // Predicated region
      $region21: #{_lambda_.7} parent=19 // pred_check
        %p155 = pneg %p52
      $region22: #{_lambda_.7} parent=19 // pred_check_branch
        %157 = sbr.rel (%p155) target = $region24
      $region23: #{_lambda_.7} parent=19 // pred_region
        %s158 = smul.u32 4, %s17
        %p159 = scmp.lt.s32.totalorder %s18, 3
        %s160 = scalar_select %p159, %s18, 3
        %p161 = scmp.lt.s32.totalorder %s16, 1
        %s162 = scalar_select %p161, %s16, 1
        %p163 = scmp.lt.s32.totalorder %s158, 3
        %s164 = scalar_select %p163, %s158, 3
        %s165 = smul.addr %s164, 2
        %s166 = smul.addr %s162, 8
        %s167 = sadd.s32 %s165, %s166
        %s168 = smul.addr %s160, 16
        %s169 = sadd.s32 %s167, %s168
        %s170 = smul.addr %s169, 8
        %s171 = scalar_lea.vmem %s0, %s170
        %s172 = smul.u32 4, %s17
      $region24: #{_lambda_.7} parent=19 // pred_fallthru
        _
      // Predicated region
      $region25: #{_lambda_.7} parent=19 // pred_check
        %p173 = pneg %p78
      $region26: #{_lambda_.7} parent=19 // pred_check_branch
        %175 = sbr.rel (%p173) target = $region28
      $region27: #{_lambda_.7} parent=19 // pred_region
        %p176 = scmp.lt.s32.totalorder %s18, 3
        %s177 = scalar_select %p176, %s18, 3
        %s178 = smul.addr %s177, 128
        %s179 = smul.addr %s178, 8
        %s180 = scalar_lea.vmem %s1, %s179
      $region28: #{_lambda_.7} parent=19 // pred_fallthru
        _
    $region20: #{_lambda_.7} parent=5 // pred_fallthru
      _
    %p181 = scmp.le.s32.totalorder 1, %s9
    %p182 = scmp.lt.s32.totalorder %s9, 9
    %p183 = pnand %p181, %p182
    %p184 = pneg %p183
    // Predicated region
    $region29: #{_lambda_.7} parent=5 // pred_check
      _
    $region30: #{_lambda_.7} parent=5 // pred_check_branch
      %186 = sbr.rel (%p183) target = $region32
    $region31: #{_lambda_.7} parent=5 // pred_region
      %s187 = ssub.s32 %s9, 1
      %s188 = smul.u32 4, %s20
      %p189 = scmp.lt.s32.totalorder %s21, 3
      %s190 = scalar_select %p189, %s21, 3
      %p191 = scmp.lt.s32.totalorder %s19, 1
      %s192 = scalar_select %p191, %s19, 1
      %p193 = scmp.lt.s32.totalorder %s188, 3
      %s194 = scalar_select %p193, %s188, 3
      %s195 = smul.addr %s194, 2
      %s196 = smul.addr %s192, 8
      %s197 = sadd.s32 %s195, %s196
      %s198 = smul.addr %s190, 16
      %s199 = sadd.s32 %s197, %s198
      %s200 = smul.addr %s199, 8
      %s201 = scalar_lea.vmem %s0, %s200
      %p202 = pneg %p58
      %p203 = pneg %p55
      %p204 = scmp.lt.s32.totalorder %s21, 3
      %s205 = scalar_select %p204, %s21, 3
      %s206 = smul.addr %s205, 128
      %s207 = smul.addr %s206, 8
      %s208 = scalar_lea.vmem %s1, %s207
      %p209 = pneg %p84
      %p210 = pneg %p81
      %p211 = pneg %p105
      %p212 = pneg %p102
      %p213 = pneg %p133
      %p214 = pneg %p130
      %s215 = smul.u32 2, %s20
      %p216 = scmp.lt.s32.totalorder %s19, 1
      %s217 = scalar_select %p216, %s19, 1
      %p218 = scmp.lt.s32.totalorder %s215, 1
      %s219 = scalar_select %p218, %s215, 1
      %s220 = smul.addr %s219, 2
      %s221 = smul.addr %s217, 4
      %s222 = sadd.s32 %s220, %s221
      %s223 = smul.addr %s222, 8
      %s224 = scalar_lea.vmem %s3, %s223
      %s225 = smul.u32 4, %s20
      %p226 = scmp.lt.s32.totalorder %s21, 3
      %s227 = scalar_select %p226, %s21, 3
      %p228 = scmp.lt.s32.totalorder %s19, 1
      %s229 = scalar_select %p228, %s19, 1
      %p230 = scmp.lt.s32.totalorder %s225, 3
      %s231 = scalar_select %p230, %s225, 3
      %s232 = smul.addr %s231, 2
      %s233 = smul.addr %s229, 8
      %s234 = sadd.s32 %s232, %s233
      %s235 = smul.addr %s227, 16
      %s236 = sadd.s32 %s234, %s235
      %s237 = smul.addr %s236, 8
      %s238 = scalar_lea.vmem %s0, %s237
      %s239 = smul.u32 4, %s20
      %p240 = scmp.lt.s32.totalorder %s21, 3
      %s241 = scalar_select %p240, %s21, 3
      %s242 = smul.addr %s241, 128
      %s243 = smul.addr %s242, 8
      %s244 = scalar_lea.vmem %s1, %s243
      %s245 = smul.u32 2, %s20
      %p246 = scmp.lt.s32.totalorder %s19, 1
      %s247 = scalar_select %p246, %s19, 1
      %p248 = scmp.lt.s32.totalorder %s245, 1
      %s249 = scalar_select %p248, %s245, 1
      %s250 = smul.addr %s249, 2
      %s251 = smul.addr %s247, 4
      %s252 = sadd.s32 %s250, %s251
      %s253 = smul.addr %s252, 8
      %s254 = scalar_lea.vmem %s3, %s253
      %s255 = smul.u32 2, %s20
      %p256 = scmp.eq.s32.totalorder %s21, 0
      // Predicated region
      $region33: #{_lambda_.7} parent=31 // pred_check
        %p257 = pneg %p256
      $region34: #{_lambda_.7} parent=31 // pred_check_branch
        %259 = sbr.rel (%p257) target = $region36
      $region35: #{_lambda_.7} parent=31 // pred_region
        %260 = vst [vmem:[#allocation2] sm:$0xff] 0.0
        %261 = vst [vmem:[#allocation2 + $0x8] sm:$0xff] 0.0
        %262 = vst [vmem:[#allocation2 + $0x10] sm:$0xff] 0.0
        %263 = vst [vmem:[#allocation2 + $0x18] sm:$0xff] 0.0
      $region36: #{_lambda_.7} parent=31 // pred_fallthru
        _
      %v264 = vld [vmem:[#allocation2] sm:$0xff]
      %v265 = vld [vmem:[#allocation2 + $0x8] sm:$0xff]
      %v266 = vld [vmem:[#allocation2 + $0x10] sm:$0xff]
      %v267 = vld [vmem:[#allocation2 + $0x18] sm:$0xff]
      %v268 = vld [vmem:[%s238] ss:$2 sm:$0xf]
      %s269 = scalar_lea.vmem %s238, 16
      %v270 = vld [vmem:[%s269] ss:$2 sm:$0xf]
      %s271 = scalar_lea.vmem %s238, 32
      %v272 = vld [vmem:[%s271] ss:$2 sm:$0xf]
      %s273 = scalar_lea.vmem %s238, 48
      %v274 = vld [vmem:[%s273] ss:$2 sm:$0xf]
      %v275 = vld [vmem:[%s244] sm:$0xff]
      %v276 = vld [vmem:[%s244 + $0x8] sm:$0xff]
      %v277 = vld [vmem:[%s244 + $0x10] sm:$0xff]
      %v278 = vld [vmem:[%s244 + $0x18] sm:$0xff]
      %v279 = vld [vmem:[%s244 + $0x20] sm:$0xff]
      %v280 = vld [vmem:[%s244 + $0x28] sm:$0xff]
      %v281 = vld [vmem:[%s244 + $0x30] sm:$0xff]
      %v282 = vld [vmem:[%s244 + $0x38] sm:$0xff]
      %v283 = vld [vmem:[%s244 + $0x40] sm:$0xff]
      %v284 = vld [vmem:[%s244 + $0x48] sm:$0xff]
      %v285 = vld [vmem:[%s244 + $0x50] sm:$0xff]
      %v286 = vld [vmem:[%s244 + $0x58] sm:$0xff]
      %v287 = vld [vmem:[%s244 + $0x60] sm:$0xff]
      %v288 = vld [vmem:[%s244 + $0x68] sm:$0xff]
      %v289 = vld [vmem:[%s244 + $0x70] sm:$0xff]
      %v290 = vld [vmem:[%s244 + $0x78] sm:$0xff]
      %v291 = vld [vmem:[%s244 + $0x80] sm:$0xff]
      %v292 = vld [vmem:[%s244 + $0x88] sm:$0xff]
      %v293 = vld [vmem:[%s244 + $0x90] sm:$0xff]
      %v294 = vld [vmem:[%s244 + $0x98] sm:$0xff]
      %v295 = vld [vmem:[%s244 + $0xa0] sm:$0xff]
      %v296 = vld [vmem:[%s244 + $0xa8] sm:$0xff]
      %v297 = vld [vmem:[%s244 + $0xb0] sm:$0xff]
      %v298 = vld [vmem:[%s244 + $0xb8] sm:$0xff]
      %v299 = vld [vmem:[%s244 + $0xc0] sm:$0xff]
      %v300 = vld [vmem:[%s244 + $0xc8] sm:$0xff]
      %v301 = vld [vmem:[%s244 + $0xd0] sm:$0xff]
      %v302 = vld [vmem:[%s244 + $0xd8] sm:$0xff]
      %v303 = vld [vmem:[%s244 + $0xe0] sm:$0xff]
      %v304 = vld [vmem:[%s244 + $0xe8] sm:$0xff]
      %v305 = vld [vmem:[%s244 + $0xf0] sm:$0xff]
      %v306 = vld [vmem:[%s244 + $0xf8] sm:$0xff]
      %v311 = vcombine.low %v268, %v270
      %v312 = vcombine.low %v272, %v274
      %315 = vmatprep.subr.mxu0 %v276
      %316 = vmatpush1.msra.mxu0 %v275
      %317 = vmatprep.subr.mxu0 %v278
      %318 = vmatpush1.msra.mxu0 %v277
      %319 = vmatprep.subr.mxu0 %v280
      %320 = vmatpush1.msra.mxu0 %v279
      %321 = vmatprep.subr.mxu0 %v282
      %322 = vmatpush1.msra.mxu0 %v281
      %323 = vmatprep.subr.mxu0 %v284
      %324 = vmatpush1.msra.mxu0 %v283
      %325 = vmatprep.subr.mxu0 %v286
      %326 = vmatpush1.msra.mxu0 %v285
      %327 = vmatprep.subr.mxu0 %v288
      %328 = vmatpush1.msra.mxu0 %v287
      %329 = vmatprep.subr.mxu0 %v290
      %330 = vmatpush1.msra.mxu0 %v289
      %331 = vmatprep.subr.mxu0 %v292
      %332 = vmatpush1.msra.mxu0 %v291
      %333 = vmatprep.subr.mxu0 %v294
      %334 = vmatpush1.msra.mxu0 %v293
      %335 = vmatprep.subr.mxu0 %v296
      %336 = vmatpush1.msra.mxu0 %v295
      %337 = vmatprep.subr.mxu0 %v298
      %338 = vmatpush1.msra.mxu0 %v297
      %339 = vmatprep.subr.mxu0 %v300
      %340 = vmatpush1.msra.mxu0 %v299
      %341 = vmatprep.subr.mxu0 %v302
      %342 = vmatpush1.msra.mxu0 %v301
      %343 = vmatprep.subr.mxu0 %v304
      %344 = vmatpush1.msra.mxu0 %v303
      %345 = vmatprep.subr.mxu0 %v306
      %346 = vmatpush1.msra.mxu0 %v305
      %347 = vmatprep.subr.mxu0 0.0
      %348 = vmatpush1.msra.mxu0 0.0
      %349 = vmatprep.subr.mxu0 0.0
      %350 = vmatpush1.msra.mxu0 0.0
      %351 = vmatprep.subr.mxu0 0.0
      %352 = vmatpush1.msra.mxu0 0.0
      %353 = vmatprep.subr.mxu0 0.0
      %354 = vmatpush1.msra.mxu0 0.0
      %355 = vmatprep.subr.mxu0 0.0
      %356 = vmatpush1.msra.mxu0 0.0
      %357 = vmatprep.subr.mxu0 0.0
      %358 = vmatpush1.msra.mxu0 0.0
      %359 = vmatprep.subr.mxu0 0.0
      %360 = vmatpush1.msra.mxu0 0.0
      %361 = vmatprep.subr.mxu0 0.0
      %362 = vmatpush1.msra.mxu0 0.0
      %363 = vmatprep.subr.mxu0 0.0
      %364 = vmatpush1.msra.mxu0 0.0
      %365 = vmatprep.subr.mxu0 0.0
      %366 = vmatpush1.msra.mxu0 0.0
      %367 = vmatprep.subr.mxu0 0.0
      %368 = vmatpush1.msra.mxu0 0.0
      %369 = vmatprep.subr.mxu0 0.0
      %370 = vmatpush1.msra.mxu0 0.0
      %371 = vmatprep.subr.mxu0 0.0
      %372 = vmatpush1.msra.mxu0 0.0
      %373 = vmatprep.subr.mxu0 0.0
      %374 = vmatpush1.msra.mxu0 0.0
      %375 = vmatprep.subr.mxu0 0.0
      %376 = vmatpush1.msra.mxu0 0.0
      %377 = vmatprep.subr.mxu0 0.0
      %378 = vmatpush1.msra.mxu0 0.0
      %379 = vmatprep.mubr.f32.mxu0 0.0
      %380 = vmatmul.mubr.f32.gmra.mrb[0].mxu0 %v311
      %v381 = vpop.f32.mrb[0].mxu0
      %v382 = vadd.f32 0.0, %v381
      %v383 = vpop.f32.mrb[0].mxu0
      %v384 = vadd.f32 0.0, %v383
      %385 = vmatprep.mubr.f32.mxu0 0.0
      %386 = vmatmul.mubr.f32.gmra.mrb[0].mxu0 %v312
      %v387 = vpop.f32.mrb[0].mxu0
      %v388 = vadd.f32 0.0, %v387
      %v389 = vpop.f32.mrb[0].mxu0
      %v390 = vadd.f32 0.0, %v389
      %391 = vdwg.mxu0
      %v392 = vadd.f32 %v264, %v382
      %v393 = vadd.f32 %v265, %v384
      %v394 = vadd.f32 %v266, %v388
      %v395 = vadd.f32 %v267, %v390
      %s396 = scalar_lea.vmem %s238, 1
      %v397 = vld [vmem:[%s396] ss:$2 sm:$0xf]
      %s398 = scalar_lea.vmem %s238, 17
      %v399 = vld [vmem:[%s398] ss:$2 sm:$0xf]
      %s400 = scalar_lea.vmem %s238, 33
      %v401 = vld [vmem:[%s400] ss:$2 sm:$0xf]
      %s402 = scalar_lea.vmem %s238, 49
      %v403 = vld [vmem:[%s402] ss:$2 sm:$0xf]
      %s404 = scalar_lea.vmem %s244, 256
      %v405 = vld [vmem:[%s404] sm:$0xff]
      %v406 = vld [vmem:[%s404 + $0x8] sm:$0xff]
      %v407 = vld [vmem:[%s404 + $0x10] sm:$0xff]
      %v408 = vld [vmem:[%s404 + $0x18] sm:$0xff]
      %v409 = vld [vmem:[%s404 + $0x20] sm:$0xff]
      %v410 = vld [vmem:[%s404 + $0x28] sm:$0xff]
      %v411 = vld [vmem:[%s404 + $0x30] sm:$0xff]
      %v412 = vld [vmem:[%s404 + $0x38] sm:$0xff]
      %v413 = vld [vmem:[%s404 + $0x40] sm:$0xff]
      %v414 = vld [vmem:[%s404 + $0x48] sm:$0xff]
      %v415 = vld [vmem:[%s404 + $0x50] sm:$0xff]
      %v416 = vld [vmem:[%s404 + $0x58] sm:$0xff]
      %v417 = vld [vmem:[%s404 + $0x60] sm:$0xff]
      %v418 = vld [vmem:[%s404 + $0x68] sm:$0xff]
      %v419 = vld [vmem:[%s404 + $0x70] sm:$0xff]
      %v420 = vld [vmem:[%s404 + $0x78] sm:$0xff]
      %v421 = vld [vmem:[%s404 + $0x80] sm:$0xff]
      %v422 = vld [vmem:[%s404 + $0x88] sm:$0xff]
      %v423 = vld [vmem:[%s404 + $0x90] sm:$0xff]
      %v424 = vld [vmem:[%s404 + $0x98] sm:$0xff]
      %v425 = vld [vmem:[%s404 + $0xa0] sm:$0xff]
      %v426 = vld [vmem:[%s404 + $0xa8] sm:$0xff]
      %v427 = vld [vmem:[%s404 + $0xb0] sm:$0xff]
      %v428 = vld [vmem:[%s404 + $0xb8] sm:$0xff]
      %v429 = vld [vmem:[%s404 + $0xc0] sm:$0xff]
      %v430 = vld [vmem:[%s404 + $0xc8] sm:$0xff]
      %v431 = vld [vmem:[%s404 + $0xd0] sm:$0xff]
      %v432 = vld [vmem:[%s404 + $0xd8] sm:$0xff]
      %v433 = vld [vmem:[%s404 + $0xe0] sm:$0xff]
      %v434 = vld [vmem:[%s404 + $0xe8] sm:$0xff]
      %v435 = vld [vmem:[%s404 + $0xf0] sm:$0xff]
      %v436 = vld [vmem:[%s404 + $0xf8] sm:$0xff]
      %v441 = vcombine.low %v397, %v399
      %v442 = vcombine.low %v401, %v403
      %445 = vmatprep.subr.mxu0 %v406
      %446 = vmatpush1.msra.mxu0 %v405
      %447 = vmatprep.subr.mxu0 %v408
      %448 = vmatpush1.msra.mxu0 %v407
      %449 = vmatprep.subr.mxu0 %v410
      %450 = vmatpush1.msra.mxu0 %v409
      %451 = vmatprep.subr.mxu0 %v412
      %452 = vmatpush1.msra.mxu0 %v411
      %453 = vmatprep.subr.mxu0 %v414
      %454 = vmatpush1.msra.mxu0 %v413
      %455 = vmatprep.subr.mxu0 %v416
      %456 = vmatpush1.msra.mxu0 %v415
      %457 = vmatprep.subr.mxu0 %v418
      %458 = vmatpush1.msra.mxu0 %v417
      %459 = vmatprep.subr.mxu0 %v420
      %460 = vmatpush1.msra.mxu0 %v419
      %461 = vmatprep.subr.mxu0 %v422
      %462 = vmatpush1.msra.mxu0 %v421
      %463 = vmatprep.subr.mxu0 %v424
      %464 = vmatpush1.msra.mxu0 %v423
      %465 = vmatprep.subr.mxu0 %v426
      %466 = vmatpush1.msra.mxu0 %v425
      %467 = vmatprep.subr.mxu0 %v428
      %468 = vmatpush1.msra.mxu0 %v427
      %469 = vmatprep.subr.mxu0 %v430
      %470 = vmatpush1.msra.mxu0 %v429
      %471 = vmatprep.subr.mxu0 %v432
      %472 = vmatpush1.msra.mxu0 %v431
      %473 = vmatprep.subr.mxu0 %v434
      %474 = vmatpush1.msra.mxu0 %v433
      %475 = vmatprep.subr.mxu0 %v436
      %476 = vmatpush1.msra.mxu0 %v435
      %477 = vmatprep.subr.mxu0 0.0
      %478 = vmatpush1.msra.mxu0 0.0
      %479 = vmatprep.subr.mxu0 0.0
      %480 = vmatpush1.msra.mxu0 0.0
      %481 = vmatprep.subr.mxu0 0.0
      %482 = vmatpush1.msra.mxu0 0.0
      %483 = vmatprep.subr.mxu0 0.0
      %484 = vmatpush1.msra.mxu0 0.0
      %485 = vmatprep.subr.mxu0 0.0
      %486 = vmatpush1.msra.mxu0 0.0
      %487 = vmatprep.subr.mxu0 0.0
      %488 = vmatpush1.msra.mxu0 0.0
      %489 = vmatprep.subr.mxu0 0.0
      %490 = vmatpush1.msra.mxu0 0.0
      %491 = vmatprep.subr.mxu0 0.0
      %492 = vmatpush1.msra.mxu0 0.0
      %493 = vmatprep.subr.mxu0 0.0
      %494 = vmatpush1.msra.mxu0 0.0
      %495 = vmatprep.subr.mxu0 0.0
      %496 = vmatpush1.msra.mxu0 0.0
      %497 = vmatprep.subr.mxu0 0.0
      %498 = vmatpush1.msra.mxu0 0.0
      %499 = vmatprep.subr.mxu0 0.0
      %500 = vmatpush1.msra.mxu0 0.0
      %501 = vmatprep.subr.mxu0 0.0
      %502 = vmatpush1.msra.mxu0 0.0
      %503 = vmatprep.subr.mxu0 0.0
      %504 = vmatpush1.msra.mxu0 0.0
      %505 = vmatprep.subr.mxu0 0.0
      %506 = vmatpush1.msra.mxu0 0.0
      %507 = vmatprep.subr.mxu0 0.0
      %508 = vmatpush1.msra.mxu0 0.0
      %509 = vmatprep.mubr.f32.mxu0 0.0
      %510 = vmatmul.mubr.f32.gmra.mrb[0].mxu0 %v441
      %v511 = vpop.f32.mrb[0].mxu0
      %v512 = vadd.f32 0.0, %v511
      %v513 = vpop.f32.mrb[0].mxu0
      %v514 = vadd.f32 0.0, %v513
      %515 = vmatprep.mubr.f32.mxu0 0.0
      %516 = vmatmul.mubr.f32.gmra.mrb[0].mxu0 %v442
      %v517 = vpop.f32.mrb[0].mxu0
      %v518 = vadd.f32 0.0, %v517
      %v519 = vpop.f32.mrb[0].mxu0
      %v520 = vadd.f32 0.0, %v519
      %521 = vdwg.mxu0
      %v522 = vadd.f32 %v392, %v512
      %v523 = vadd.f32 %v393, %v514
      %v524 = vadd.f32 %v394, %v518
      %v525 = vadd.f32 %v395, %v520
      %s526 = scalar_lea.vmem %s238, 2
      %v527 = vld [vmem:[%s526] ss:$2 sm:$0xf]
      %s528 = scalar_lea.vmem %s238, 18
      %v529 = vld [vmem:[%s528] ss:$2 sm:$0xf]
      %s530 = scalar_lea.vmem %s238, 34
      %v531 = vld [vmem:[%s530] ss:$2 sm:$0xf]
      %s532 = scalar_lea.vmem %s238, 50
      %v533 = vld [vmem:[%s532] ss:$2 sm:$0xf]
      %s534 = scalar_lea.vmem %s244, 512
      %v535 = vld [vmem:[%s534] sm:$0xff]
      %v536 = vld [vmem:[%s534 + $0x8] sm:$0xff]
      %v537 = vld [vmem:[%s534 + $0x10] sm:$0xff]
      %v538 = vld [vmem:[%s534 + $0x18] sm:$0xff]
      %v539 = vld [vmem:[%s534 + $0x20] sm:$0xff]
      %v540 = vld [vmem:[%s534 + $0x28] sm:$0xff]
      %v541 = vld [vmem:[%s534 + $0x30] sm:$0xff]
      %v542 = vld [vmem:[%s534 + $0x38] sm:$0xff]
      %v543 = vld [vmem:[%s534 + $0x40] sm:$0xff]
      %v544 = vld [vmem:[%s534 + $0x48] sm:$0xff]
      %v545 = vld [vmem:[%s534 + $0x50] sm:$0xff]
      %v546 = vld [vmem:[%s534 + $0x58] sm:$0xff]
      %v547 = vld [vmem:[%s534 + $0x60] sm:$0xff]
      %v548 = vld [vmem:[%s534 + $0x68] sm:$0xff]
      %v549 = vld [vmem:[%s534 + $0x70] sm:$0xff]
      %v550 = vld [vmem:[%s534 + $0x78] sm:$0xff]
      %v551 = vld [vmem:[%s534 + $0x80] sm:$0xff]
      %v552 = vld [vmem:[%s534 + $0x88] sm:$0xff]
      %v553 = vld [vmem:[%s534 + $0x90] sm:$0xff]
      %v554 = vld [vmem:[%s534 + $0x98] sm:$0xff]
      %v555 = vld [vmem:[%s534 + $0xa0] sm:$0xff]
      %v556 = vld [vmem:[%s534 + $0xa8] sm:$0xff]
      %v557 = vld [vmem:[%s534 + $0xb0] sm:$0xff]
      %v558 = vld [vmem:[%s534 + $0xb8] sm:$0xff]
      %v559 = vld [vmem:[%s534 + $0xc0] sm:$0xff]
      %v560 = vld [vmem:[%s534 + $0xc8] sm:$0xff]
      %v561 = vld [vmem:[%s534 + $0xd0] sm:$0xff]
      %v562 = vld [vmem:[%s534 + $0xd8] sm:$0xff]
      %v563 = vld [vmem:[%s534 + $0xe0] sm:$0xff]
      %v564 = vld [vmem:[%s534 + $0xe8] sm:$0xff]
      %v565 = vld [vmem:[%s534 + $0xf0] sm:$0xff]
      %v566 = vld [vmem:[%s534 + $0xf8] sm:$0xff]
      %v571 = vcombine.low %v527, %v529
      %v572 = vcombine.low %v531, %v533
      %575 = vmatprep.subr.mxu0 %v536
      %576 = vmatpush1.msra.mxu0 %v535
      %577 = vmatprep.subr.mxu0 %v538
      %578 = vmatpush1.msra.mxu0 %v537
      %579 = vmatprep.subr.mxu0 %v540
      %580 = vmatpush1.msra.mxu0 %v539
      %581 = vmatprep.subr.mxu0 %v542
      %582 = vmatpush1.msra.mxu0 %v541
      %583 = vmatprep.subr.mxu0 %v544
      %584 = vmatpush1.msra.mxu0 %v543
      %585 = vmatprep.subr.mxu0 %v546
      %586 = vmatpush1.msra.mxu0 %v545
      %587 = vmatprep.subr.mxu0 %v548
      %588 = vmatpush1.msra.mxu0 %v547
      %589 = vmatprep.subr.mxu0 %v550
      %590 = vmatpush1.msra.mxu0 %v549
      %591 = vmatprep.subr.mxu0 %v552
      %592 = vmatpush1.msra.mxu0 %v551
      %593 = vmatprep.subr.mxu0 %v554
      %594 = vmatpush1.msra.mxu0 %v553
      %595 = vmatprep.subr.mxu0 %v556
      %596 = vmatpush1.msra.mxu0 %v555
      %597 = vmatprep.subr.mxu0 %v558
      %598 = vmatpush1.msra.mxu0 %v557
      %599 = vmatprep.subr.mxu0 %v560
      %600 = vmatpush1.msra.mxu0 %v559
      %601 = vmatprep.subr.mxu0 %v562
      %602 = vmatpush1.msra.mxu0 %v561
      %603 = vmatprep.subr.mxu0 %v564
      %604 = vmatpush1.msra.mxu0 %v563
      %605 = vmatprep.subr.mxu0 %v566
      %606 = vmatpush1.msra.mxu0 %v565
      %607 = vmatprep.subr.mxu0 0.0
      %608 = vmatpush1.msra.mxu0 0.0
      %609 = vmatprep.subr.mxu0 0.0
      %610 = vmatpush1.msra.mxu0 0.0
      %611 = vmatprep.subr.mxu0 0.0
      %612 = vmatpush1.msra.mxu0 0.0
      %613 = vmatprep.subr.mxu0 0.0
      %614 = vmatpush1.msra.mxu0 0.0
      %615 = vmatprep.subr.mxu0 0.0
      %616 = vmatpush1.msra.mxu0 0.0
      %617 = vmatprep.subr.mxu0 0.0
      %618 = vmatpush1.msra.mxu0 0.0
      %619 = vmatprep.subr.mxu0 0.0
      %620 = vmatpush1.msra.mxu0 0.0
      %621 = vmatprep.subr.mxu0 0.0
      %622 = vmatpush1.msra.mxu0 0.0
      %623 = vmatprep.subr.mxu0 0.0
      %624 = vmatpush1.msra.mxu0 0.0
      %625 = vmatprep.subr.mxu0 0.0
      %626 = vmatpush1.msra.mxu0 0.0
      %627 = vmatprep.subr.mxu0 0.0
      %628 = vmatpush1.msra.mxu0 0.0
      %629 = vmatprep.subr.mxu0 0.0
      %630 = vmatpush1.msra.mxu0 0.0
      %631 = vmatprep.subr.mxu0 0.0
      %632 = vmatpush1.msra.mxu0 0.0
      %633 = vmatprep.subr.mxu0 0.0
      %634 = vmatpush1.msra.mxu0 0.0
      %635 = vmatprep.subr.mxu0 0.0
      %636 = vmatpush1.msra.mxu0 0.0
      %637 = vmatprep.subr.mxu0 0.0
      %638 = vmatpush1.msra.mxu0 0.0
      %639 = vmatprep.mubr.f32.mxu0 0.0
      %640 = vmatmul.mubr.f32.gmra.mrb[0].mxu0 %v571
      %v641 = vpop.f32.mrb[0].mxu0
      %v642 = vadd.f32 0.0, %v641
      %v643 = vpop.f32.mrb[0].mxu0
      %v644 = vadd.f32 0.0, %v643
      %645 = vmatprep.mubr.f32.mxu0 0.0
      %646 = vmatmul.mubr.f32.gmra.mrb[0].mxu0 %v572
      %v647 = vpop.f32.mrb[0].mxu0
      %v648 = vadd.f32 0.0, %v647
      %v649 = vpop.f32.mrb[0].mxu0
      %v650 = vadd.f32 0.0, %v649
      %651 = vdwg.mxu0
      %v652 = vadd.f32 %v522, %v642
      %v653 = vadd.f32 %v523, %v644
      %v654 = vadd.f32 %v524, %v648
      %v655 = vadd.f32 %v525, %v650
      %s656 = scalar_lea.vmem %s238, 3
      %v657 = vld [vmem:[%s656] ss:$2 sm:$0xf]
      %s658 = scalar_lea.vmem %s238, 19
      %v659 = vld [vmem:[%s658] ss:$2 sm:$0xf]
      %s660 = scalar_lea.vmem %s238, 35
      %v661 = vld [vmem:[%s660] ss:$2 sm:$0xf]
      %s662 = scalar_lea.vmem %s238, 51
      %v663 = vld [vmem:[%s662] ss:$2 sm:$0xf]
      %s664 = scalar_lea.vmem %s244, 768
      %v665 = vld [vmem:[%s664] sm:$0xff]
      %v666 = vld [vmem:[%s664 + $0x8] sm:$0xff]
      %v667 = vld [vmem:[%s664 + $0x10] sm:$0xff]
      %v668 = vld [vmem:[%s664 + $0x18] sm:$0xff]
      %v669 = vld [vmem:[%s664 + $0x20] sm:$0xff]
      %v670 = vld [vmem:[%s664 + $0x28] sm:$0xff]
      %v671 = vld [vmem:[%s664 + $0x30] sm:$0xff]
      %v672 = vld [vmem:[%s664 + $0x38] sm:$0xff]
      %v673 = vld [vmem:[%s664 + $0x40] sm:$0xff]
      %v674 = vld [vmem:[%s664 + $0x48] sm:$0xff]
      %v675 = vld [vmem:[%s664 + $0x50] sm:$0xff]
      %v676 = vld [vmem:[%s664 + $0x58] sm:$0xff]
      %v677 = vld [vmem:[%s664 + $0x60] sm:$0xff]
      %v678 = vld [vmem:[%s664 + $0x68] sm:$0xff]
      %v679 = vld [vmem:[%s664 + $0x70] sm:$0xff]
      %v680 = vld [vmem:[%s664 + $0x78] sm:$0xff]
      %v681 = vld [vmem:[%s664 + $0x80] sm:$0xff]
      %v682 = vld [vmem:[%s664 + $0x88] sm:$0xff]
      %v683 = vld [vmem:[%s664 + $0x90] sm:$0xff]
      %v684 = vld [vmem:[%s664 + $0x98] sm:$0xff]
      %v685 = vld [vmem:[%s664 + $0xa0] sm:$0xff]
      %v686 = vld [vmem:[%s664 + $0xa8] sm:$0xff]
      %v687 = vld [vmem:[%s664 + $0xb0] sm:$0xff]
      %v688 = vld [vmem:[%s664 + $0xb8] sm:$0xff]
      %v689 = vld [vmem:[%s664 + $0xc0] sm:$0xff]
      %v690 = vld [vmem:[%s664 + $0xc8] sm:$0xff]
      %v691 = vld [vmem:[%s664 + $0xd0] sm:$0xff]
      %v692 = vld [vmem:[%s664 + $0xd8] sm:$0xff]
      %v693 = vld [vmem:[%s664 + $0xe0] sm:$0xff]
      %v694 = vld [vmem:[%s664 + $0xe8] sm:$0xff]
      %v695 = vld [vmem:[%s664 + $0xf0] sm:$0xff]
      %v696 = vld [vmem:[%s664 + $0xf8] sm:$0xff]
      %v701 = vcombine.low %v657, %v659
      %v702 = vcombine.low %v661, %v663
      %705 = vmatprep.subr.mxu0 %v666
      %706 = vmatpush1.msra.mxu0 %v665
      %707 = vmatprep.subr.mxu0 %v668
      %708 = vmatpush1.msra.mxu0 %v667
      %709 = vmatprep.subr.mxu0 %v670
      %710 = vmatpush1.msra.mxu0 %v669
      %711 = vmatprep.subr.mxu0 %v672
      %712 = vmatpush1.msra.mxu0 %v671
      %713 = vmatprep.subr.mxu0 %v674
      %714 = vmatpush1.msra.mxu0 %v673
      %715 = vmatprep.subr.mxu0 %v676
      %716 = vmatpush1.msra.mxu0 %v675
      %717 = vmatprep.subr.mxu0 %v678
      %718 = vmatpush1.msra.mxu0 %v677
      %719 = vmatprep.subr.mxu0 %v680
      %720 = vmatpush1.msra.mxu0 %v679
      %721 = vmatprep.subr.mxu0 %v682
      %722 = vmatpush1.msra.mxu0 %v681
      %723 = vmatprep.subr.mxu0 %v684
      %724 = vmatpush1.msra.mxu0 %v683
      %725 = vmatprep.subr.mxu0 %v686
      %726 = vmatpush1.msra.mxu0 %v685
      %727 = vmatprep.subr.mxu0 %v688
      %728 = vmatpush1.msra.mxu0 %v687
      %729 = vmatprep.subr.mxu0 %v690
      %730 = vmatpush1.msra.mxu0 %v689
      %731 = vmatprep.subr.mxu0 %v692
      %732 = vmatpush1.msra.mxu0 %v691
      %733 = vmatprep.subr.mxu0 %v694
      %734 = vmatpush1.msra.mxu0 %v693
      %735 = vmatprep.subr.mxu0 %v696
      %736 = vmatpush1.msra.mxu0 %v695
      %737 = vmatprep.subr.mxu0 0.0
      %738 = vmatpush1.msra.mxu0 0.0
      %739 = vmatprep.subr.mxu0 0.0
      %740 = vmatpush1.msra.mxu0 0.0
      %741 = vmatprep.subr.mxu0 0.0
      %742 = vmatpush1.msra.mxu0 0.0
      %743 = vmatprep.subr.mxu0 0.0
      %744 = vmatpush1.msra.mxu0 0.0
      %745 = vmatprep.subr.mxu0 0.0
      %746 = vmatpush1.msra.mxu0 0.0
      %747 = vmatprep.subr.mxu0 0.0
      %748 = vmatpush1.msra.mxu0 0.0
      %749 = vmatprep.subr.mxu0 0.0
      %750 = vmatpush1.msra.mxu0 0.0
      %751 = vmatprep.subr.mxu0 0.0
      %752 = vmatpush1.msra.mxu0 0.0
      %753 = vmatprep.subr.mxu0 0.0
      %754 = vmatpush1.msra.mxu0 0.0
      %755 = vmatprep.subr.mxu0 0.0
      %756 = vmatpush1.msra.mxu0 0.0
      %757 = vmatprep.subr.mxu0 0.0
      %758 = vmatpush1.msra.mxu0 0.0
      %759 = vmatprep.subr.mxu0 0.0
      %760 = vmatpush1.msra.mxu0 0.0
      %761 = vmatprep.subr.mxu0 0.0
      %762 = vmatpush1.msra.mxu0 0.0
      %763 = vmatprep.subr.mxu0 0.0
      %764 = vmatpush1.msra.mxu0 0.0
      %765 = vmatprep.subr.mxu0 0.0
      %766 = vmatpush1.msra.mxu0 0.0
      %767 = vmatprep.subr.mxu0 0.0
      %768 = vmatpush1.msra.mxu0 0.0
      %769 = vmatprep.mubr.f32.mxu0 0.0
      %770 = vmatmul.mubr.f32.gmra.mrb[0].mxu0 %v701
      %v771 = vpop.f32.mrb[0].mxu0
      %v772 = vadd.f32 0.0, %v771
      %v773 = vpop.f32.mrb[0].mxu0
      %v774 = vadd.f32 0.0, %v773
      %775 = vmatprep.mubr.f32.mxu0 0.0
      %776 = vmatmul.mubr.f32.gmra.mrb[0].mxu0 %v702
      %v777 = vpop.f32.mrb[0].mxu0
      %v778 = vadd.f32 0.0, %v777
      %v779 = vpop.f32.mrb[0].mxu0
      %v780 = vadd.f32 0.0, %v779
      %781 = vdwg.mxu0
      %v782 = vadd.f32 %v652, %v772
      %v783 = vadd.f32 %v653, %v774
      %v784 = vadd.f32 %v654, %v778
      %v785 = vadd.f32 %v655, %v780
      %786 = vst [vmem:[#allocation2] sm:$0xff] %v782
      %787 = vst [vmem:[#allocation2 + $0x8] sm:$0xff] %v783
      %788 = vst [vmem:[#allocation2 + $0x10] sm:$0xff] %v784
      %789 = vst [vmem:[#allocation2 + $0x18] sm:$0xff] %v785
      %p790 = scmp.eq.s32.totalorder %s21, 3
      // Predicated region
      $region37: #{_lambda_.7} parent=31 // pred_check
        %p791 = pneg %p790
      $region38: #{_lambda_.7} parent=31 // pred_check_branch
        %793 = sbr.rel (%p791) target = $region40
      $region39: #{_lambda_.7} parent=31 // pred_region
        %v794 = vld [vmem:[%s2] sm:$0x3]
        %v796 = vlaneseq
        %v797 = vshrl.u32 %v796, 7
        %v798 = vsub.s32 0, %v797
        %v799 = vrot.slane %v794, %v798
        %v800 = vlaneseq
        %v801 = vshrl.u32 %v800, 7
        %v802 = vsub.s32 1, %v801
        %v803 = vrot.slane %v794, %v802
        %v806 = vadd.f32 %v782, %v799
        %v807 = vadd.f32 %v783, %v803
        %v808 = vadd.f32 %v784, %v799
        %v809 = vadd.f32 %v785, %v803
        %v810 = vadd.f32 %v806, %v808
        %v811 = vrot.slane %v810, 4
        %v812 = vadd.f32 %v810, %v811
        %v813 = vrot.slane %v812, 2
        %v814 = vadd.f32 %v812, %v813
        %v815 = vrot.slane %v814, 1
        %v816 = vadd.f32 %v814, %v815
        %v817 = vadd.f32 %v807, %v809
        %v818 = vrot.slane %v817, 4
        %v819 = vadd.f32 %v817, %v818
        %v820 = vrot.slane %v819, 2
        %v821 = vadd.f32 %v819, %v820
        %v822 = vrot.slane %v821, 1
        %v823 = vadd.f32 %v821, %v822
        %v824 = vrcp.pop 16.0
        %v825 = vmul.f32 %v816, %v824
        %v826 = vmul.f32 %v823, %v824
        %v827 = vsub.f32 %v806, %v825
        %v828 = vsub.f32 %v807, %v826
        %v829 = vsub.f32 %v808, %v825
        %v830 = vsub.f32 %v809, %v826
        %v831 = vmul.f32 %v827, %v827
        %v832 = vmul.f32 %v828, %v828
        %v833 = vmul.f32 %v829, %v829
        %v834 = vmul.f32 %v830, %v830
        %v835 = vadd.f32 %v831, %v833
        %v836 = vrot.slane %v835, 4
        %v837 = vadd.f32 %v835, %v836
        %v838 = vrot.slane %v837, 2
        %v839 = vadd.f32 %v837, %v838
        %v840 = vrot.slane %v839, 1
        %v841 = vadd.f32 %v839, %v840
        %v842 = vadd.f32 %v832, %v834
        %v843 = vrot.slane %v842, 4
        %v844 = vadd.f32 %v842, %v843
        %v845 = vrot.slane %v844, 2
        %v846 = vadd.f32 %v844, %v845
        %v847 = vrot.slane %v846, 1
        %v848 = vadd.f32 %v846, %v847
        %v849 = vmul.f32 %v841, %v824
        %v850 = vmul.f32 %v848, %v824
        %v851 = vadd.f32 %v849, 1e-05
        %v852 = vadd.f32 %v850, 1e-05
        %v853 = vrsqrt.pop %v851
        %v854 = vrsqrt.pop %v852
        %v855 = vmul.f32 %v827, %v853
        %v856 = vmul.f32 %v828, %v854
        %v857 = vmul.f32 %v829, %v853
        %v858 = vmul.f32 %v830, %v854
        %vm859 = vcmp.ge.f32.partialorder %v855, 0.0
        %vm860 = vcmp.ge.f32.partialorder %v856, 0.0
        %vm861 = vcmp.ge.f32.partialorder %v857, 0.0
        %vm862 = vcmp.ge.f32.partialorder %v858, 0.0
        %v863 = vmul.f32 %v855, 0.2
        %v864 = vmul.f32 %v856, 0.2
        %v865 = vmul.f32 %v857, 0.2
        %v866 = vmul.f32 %v858, 0.2
        %v867 = vsel %vm859, %v855, %v863
        %v868 = vsel %vm860, %v856, %v864
        %v869 = vsel %vm861, %v857, %v865
        %v870 = vsel %vm862, %v858, %v866
        %871 = vst [vmem:[%s254] sm:$0xff] %v867
        %872 = vst [vmem:[%s254 + $0x8] sm:$0xff] %v868
        %873 = vst [vmem:[%s254 + $0x10] sm:$0xff] %v869
        %874 = vst [vmem:[%s254 + $0x18] sm:$0xff] %v870
      $region40: #{_lambda_.7} parent=31 // pred_fallthru
        _
      %s875 = smul.u32 2, %s20
      %p876 = scmp.lt.s32.totalorder %s19, 1
      %s877 = scalar_select %p876, %s19, 1
      %p878 = scmp.lt.s32.totalorder %s875, 1
      %s879 = scalar_select %p878, %s875, 1
      %s880 = smul.addr %s879, 2
      %s881 = smul.addr %s877, 4
      %s882 = sadd.s32 %s880, %s881
      %s883 = smul.addr %s882, 8
      %s884 = scalar_lea.vmem %s3, %s883
      // Predicated region
      $region41: #{_lambda_.7} parent=31 // pred_check
        %p885 = pneg %p130
      $region42: #{_lambda_.7} parent=31 // pred_check_branch
        %887 = sbr.rel (%p885) target = $region44
      $region43: #{_lambda_.7} parent=31 // pred_region
        %s888 = smul.u32 2, %s20
      $region44: #{_lambda_.7} parent=31 // pred_fallthru
        _
    $region32: #{_lambda_.7} parent=5 // pred_fallthru
      _
    %p889 = scmp.le.s32.totalorder 2, %s9
    // Predicated region
    $region45: #{_lambda_.7} parent=5 // pred_check
      %p890 = pneg %p889
    $region46: #{_lambda_.7} parent=5 // pred_check_branch
      %892 = sbr.rel (%p890) target = $region48
    $region47: #{_lambda_.7} parent=5 // pred_region
      %s893 = ssub.s32 %s9, 2
      // Predicated region
      $region49: #{_lambda_.7} parent=47 // pred_check
        %p894 = pneg %p136
      $region50: #{_lambda_.7} parent=47 // pred_check_branch
        %896 = sbr.rel (%p894) target = $region52
      $region51: #{_lambda_.7} parent=47 // pred_region
        %s897 = smul.u32 2, %s23
        %p898 = scmp.lt.s32.totalorder %s22, 1
        %s899 = scalar_select %p898, %s22, 1
        %p900 = scmp.lt.s32.totalorder %s897, 1
        %s901 = scalar_select %p900, %s897, 1
        %s902 = smul.addr %s901, 2
        %s903 = smul.addr %s899, 4
        %s904 = sadd.s32 %s902, %s903
        %s905 = smul.addr %s904, 8
        %s906 = scalar_lea.vmem %s3, %s905
      $region52: #{_lambda_.7} parent=47 // pred_fallthru
        _
    $region48: #{_lambda_.7} parent=5 // pred_fallthru
      _
  $region6: #{_lambda_.7} parent=0 // loop_footer
    %s13 = sadd.s32 1, %s9
  $region7: #{_lambda_.7} parent=0 // loop_footer_branch
    %8 = sbr.rel target = $region3
  $region8: #{_lambda_.7} parent=0 // loop_exit
    _

// kernel: _lambda_.9
$region0: #{_lambda_.9}
  #allocation0 [shape = 'u32[]', space=smem, size = 0x4, offset = 0x4, fixed_abs, tag = 'smem constant byte address 0x4 - core index']
  #allocation1 [shape = 'u32[144,128]{1,0:T(1,128)}', space=vmem, size = 0x12000, scoped, tag = 'internal scratch']
  #allocation2 [shape = 'f32[4,128]{1,0:T(4,128)}', space=vmem, size = 0x800, scoped, tag = 'scratch operand']
  %s0 = inlined_call_operand.vmem [shape: f32[4,2,2,5,512], index: 0, kind: input, shape index: {}]
  %s1 = inlined_call_operand.vmem [shape: f32[4,4,512,128], index: 1, kind: input, shape index: {}]
  %s2 = inlined_call_operand.vmem [shape: f32[1,128], index: 2, kind: input, shape index: {}]
  %s3 = inlined_call_operand.vmem [shape: f32[2,4,128], index: 3, kind: output, shape index: {}]
  %s4 = sld [smem:[#allocation0]]
  $region53: #{_lambda_.9} parent=0
    _
  %s6 = ssub.s32 1, %s4
  %s7 = scalar_select 0, %s6, %s4
  loop: start=0, step=1, limit=10
  $region2: #{_lambda_.9} parent=0 // loop_pre_header
    _
  $region3: #{_lambda_.9} parent=0 // loop_header
    %s9 = sphi 0, %s13
    %p10 = scmp.ge.s32.totalorder %s9, 10
    %s16 = sphi 0, %s35
    %s17 = sphi 0, %s31
    %s18 = sphi 0, %s27
    %s19 = sphi 0, %s16
    %s20 = sphi 0, %s17
    %s21 = sphi 0, %s18
    %s22 = sphi 0, %s19
    %s23 = sphi 0, %s20
    %s24 = sphi 0, %s21
    %s42 = sphi 0, %s44
    %s45 = sphi 0, %s42
    %s46 = sphi 0, %s45
    %s62 = sphi 0, %s46
    %s68 = sphi 0, %s70
    %s71 = sphi 0, %s68
    %s72 = sphi 0, %s71
    %s88 = sphi 0, %s72
    %s92 = sphi 0, %s92
    %s94 = sphi 0, %s92
    %s95 = sphi 0, %s94
    %s109 = sphi 0, %s95
    %s117 = sphi 0, %s119
    %s120 = sphi 0, %s117
    %s121 = sphi 0, %s120
    %s137 = sphi 0, %s121
  $region4: #{_lambda_.9} parent=0 // loop_header_branch
    %12 = sbr.rel (%p10) target = $region8
  $region5: #{_lambda_.9} parent=0 // loop_body
    %s14 = ssub.s32 %s9, 1
    %s15 = ssub.s32 %s9, 2
    %s25 = sadd.s32 1, %s18
    %p26 = scmp.ge.s32.totalorder %s25, 4
    %s27 = scalar_select %p26, 0, %s25
    %s28 = sadd.s32 1, %s17
    %s29 = scalar_select %p26, %s28, %s17
    %p30 = scmp.ge.s32.totalorder %s29, 1
    %s31 = scalar_select %p30, 0, %s29
    %s32 = sadd.s32 1, %s16
    %s33 = scalar_select %p30, %s32, %s16
    %p34 = scmp.ge.s32.totalorder %s33, 2
    %s35 = scalar_select %p34, 0, %s33
    %s36 = ssub.s32 %s18, %s27
    %s37 = ssub.s32 %s16, %s35
    %s38 = sor.u32 %s36, %s37
    %s39 = ssub.s32 %s17, %s31
    %s40 = sor.u32 %s38, %s39
    %p41 = scmp.eq.s32.totalorder %s40, 0
    %s43 = sadd.s32 %s42, 1
    %s44 = scalar_select %p41, %s42, %s43
    %p47 = pneg %p41
    %p48 = scmp.eq.s32.totalorder %s9, 7
    %p49 = por %p47, %p48
    %p50 = scmp.ne.s32.totalorder %s42, %s45
    %p51 = scmp.eq.s32.totalorder %s9, 0
    %p52 = por %p50, %p51
    %p53 = scmp.ne.s32.totalorder %s42, %s45
    %p54 = scmp.eq.s32.totalorder %s14, 7
    %p55 = por %p53, %p54
    %p56 = scmp.ne.s32.totalorder %s45, %s46
    %p57 = scmp.eq.s32.totalorder %s14, 0
    %p58 = por %p56, %p57
    %p59 = scmp.ne.s32.totalorder %s45, %s46
    %p60 = scmp.eq.s32.totalorder %s15, 7
    %p61 = por %p59, %p60
    %p63 = scmp.ne.s32.totalorder %s46, %s62
    %p64 = scmp.eq.s32.totalorder %s15, 0
    %p65 = por %p63, %p64
    %s66 = ssub.s32 %s18, %s27
    %p67 = scmp.eq.s32.totalorder %s66, 0
    %s69 = sadd.s32 %s68, 1
    %s70 = scalar_select %p67, %s68, %s69
    %p73 = pneg %p67
    %p74 = scmp.eq.s32.totalorder %s9, 7
    %p75 = por %p73, %p74
    %p76 = scmp.ne.s32.totalorder %s68, %s71
    %p77 = scmp.eq.s32.totalorder %s9, 0
    %p78 = por %p76, %p77
    %p79 = scmp.ne.s32.totalorder %s68, %s71
    %p80 = scmp.eq.s32.totalorder %s14, 7
    %p81 = por %p79, %p80
    %p82 = scmp.ne.s32.totalorder %s71, %s72
    %p83 = scmp.eq.s32.totalorder %s14, 0
    %p84 = por %p82, %p83
    %p85 = scmp.ne.s32.totalorder %s71, %s72
    %p86 = scmp.eq.s32.totalorder %s15, 7
    %p87 = por %p85, %p86
    %p89 = scmp.ne.s32.totalorder %s72, %s88
    %p90 = scmp.eq.s32.totalorder %s15, 0
    %p91 = por %p89, %p90
    %s93 = sadd.s32 %s92, 1
    %p96 = scmp.eq.s32.totalorder %s9, 7
    %p97 = scmp.ne.s32.totalorder %s92, %s94
    %p98 = scmp.eq.s32.totalorder %s9, 0
    %p99 = por %p97, %p98
    %p100 = scmp.ne.s32.totalorder %s92, %s94
    %p101 = scmp.eq.s32.totalorder %s14, 7
    %p102 = por %p100, %p101
    %p103 = scmp.ne.s32.totalorder %s94, %s95
    %p104 = scmp.eq.s32.totalorder %s14, 0
    %p105 = por %p103, %p104
    %p106 = scmp.ne.s32.totalorder %s94, %s95
    %p107 = scmp.eq.s32.totalorder %s15, 7
    %p108 = por %p106, %p107
    %p110 = scmp.ne.s32.totalorder %s95, %s109
    %p111 = scmp.eq.s32.totalorder %s15, 0
    %p112 = por %p110, %p111
    %s113 = ssub.s32 %s16, %s35
    %s114 = ssub.s32 %s17, %s31
    %s115 = sor.u32 %s113, %s114
    %p116 = scmp.eq.s32.totalorder %s115, 0
    %s118 = sadd.s32 %s117, 1
    %s119 = scalar_select %p116, %s117, %s118
    %p122 = pneg %p116
    %p123 = scmp.eq.s32.totalorder %s9, 7
    %p124 = por %p122, %p123
    %p125 = scmp.ne.s32.totalorder %s117, %s120
    %p126 = scmp.eq.s32.totalorder %s9, 0
    %p127 = por %p125, %p126
    %p128 = scmp.ne.s32.totalorder %s117, %s120
    %p129 = scmp.eq.s32.totalorder %s14, 7
    %p130 = por %p128, %p129
    %p131 = scmp.ne.s32.totalorder %s120, %s121
    %p132 = scmp.eq.s32.totalorder %s14, 0
    %p133 = por %p131, %p132
    %p134 = scmp.ne.s32.totalorder %s120, %s121
    %p135 = scmp.eq.s32.totalorder %s15, 7
    %p136 = por %p134, %p135
    %p138 = scmp.ne.s32.totalorder %s121, %s137
    %p139 = scmp.eq.s32.totalorder %s15, 0
    %p140 = por %p138, %p139
    %p141 = scmp.le.s32.totalorder 1, %s9
    %p142 = scmp.lt.s32.totalorder %s9, 9
    %p143 = pnand %p141, %p142
    %p144 = pneg %p143
    // Predicated region
    $region9: #{_lambda_.9} parent=5 // pred_check
      _
    $region10: #{_lambda_.9} parent=5 // pred_check_branch
      %146 = sbr.rel (%p143) target = $region12
    $region11: #{_lambda_.9} parent=5 // pred_region
      %s147 = ssub.s32 %s9, 1
      // Predicated region
      $region13: #{_lambda_.9} parent=11 // pred_check
        %p148 = pneg %p105
      $region14: #{_lambda_.9} parent=11 // pred_check_branch
        %150 = sbr.rel (%p148) target = $region16
      $region15: #{_lambda_.9} parent=11 // pred_region
        _
      $region16: #{_lambda_.9} parent=11 // pred_fallthru
        _
    $region12: #{_lambda_.9} parent=5 // pred_fallthru
      _
    %p151 = scmp.lt.s32.totalorder %s9, 8
    // Predicated region
    $region17: #{_lambda_.9} parent=5 // pred_check
      %p152 = pneg %p151
    $region18: #{_lambda_.9} parent=5 // pred_check_branch
      %154 = sbr.rel (%p152) target = $region20
    $region19: #{_lambda_.9} parent=5 // pred_region
      // Predicated region
      $region21: #{_lambda_.9} parent=19 // pred_check
        %p155 = pneg %p52
      $region22: #{_lambda_.9} parent=19 // pred_check_branch
        %157 = sbr.rel (%p155) target = $region24
      $region23: #{_lambda_.9} parent=19 // pred_region
        %s158 = smul.u32 2, %s17
        %p159 = scmp.lt.s32.totalorder %s18, 3
        %s160 = scalar_select %p159, %s18, 3
        %p161 = scmp.lt.s32.totalorder %s16, 1
        %s162 = scalar_select %p161, %s16, 1
        %p163 = scmp.lt.s32.totalorder %s158, 1
        %s164 = scalar_select %p163, %s158, 1
        %s165 = smul.addr %s164, 4
        %s166 = smul.addr %s162, 8
        %s167 = sadd.s32 %s165, %s166
        %s168 = smul.addr %s160, 16
        %s169 = sadd.s32 %s167, %s168
        %s170 = smul.addr %s169, 8
        %s171 = scalar_lea.vmem %s0, %s170
        %s172 = smul.u32 2, %s17
      $region24: #{_lambda_.9} parent=19 // pred_fallthru
        _
      // Predicated region
      $region25: #{_lambda_.9} parent=19 // pred_check
        %p173 = pneg %p78
      $region26: #{_lambda_.9} parent=19 // pred_check_branch
        %175 = sbr.rel (%p173) target = $region28
      $region27: #{_lambda_.9} parent=19 // pred_region
        %p176 = scmp.lt.s32.totalorder %s18, 3
        %s177 = scalar_select %p176, %s18, 3
        %s178 = smul.addr %s177, 256
        %s179 = smul.addr %s178, 8
        %s180 = scalar_lea.vmem %s1, %s179
      $region28: #{_lambda_.9} parent=19 // pred_fallthru
        _
    $region20: #{_lambda_.9} parent=5 // pred_fallthru
      _
    %p181 = scmp.le.s32.totalorder 1, %s9
    %p182 = scmp.lt.s32.totalorder %s9, 9
    %p183 = pnand %p181, %p182
    %p184 = pneg %p183
    // Predicated region
    $region29: #{_lambda_.9} parent=5 // pred_check
      _
    $region30: #{_lambda_.9} parent=5 // pred_check_branch
      %186 = sbr.rel (%p183) target = $region32
    $region31: #{_lambda_.9} parent=5 // pred_region
      %s187 = ssub.s32 %s9, 1
      %s188 = smul.u32 2, %s20
      %p189 = scmp.lt.s32.totalorder %s21, 3
      %s190 = scalar_select %p189, %s21, 3
      %p191 = scmp.lt.s32.totalorder %s19, 1
      %s192 = scalar_select %p191, %s19, 1
      %p193 = scmp.lt.s32.totalorder %s188, 1
      %s194 = scalar_select %p193, %s188, 1
      %s195 = smul.addr %s194, 4
      %s196 = smul.addr %s192, 8
      %s197 = sadd.s32 %s195, %s196
      %s198 = smul.addr %s190, 16
      %s199 = sadd.s32 %s197, %s198
      %s200 = smul.addr %s199, 8
      %s201 = scalar_lea.vmem %s0, %s200
      %p202 = pneg %p58
      %p203 = pneg %p55
      %p204 = scmp.lt.s32.totalorder %s21, 3
      %s205 = scalar_select %p204, %s21, 3
      %s206 = smul.addr %s205, 256
      %s207 = smul.addr %s206, 8
      %s208 = scalar_lea.vmem %s1, %s207
      %p209 = pneg %p84
      %p210 = pneg %p81
      %p211 = pneg %p105
      %p212 = pneg %p102
      %p213 = pneg %p133
      %p214 = pneg %p130
      %p215 = scmp.lt.s32.totalorder %s19, 1
      %s216 = scalar_select %p215, %s19, 1
      %p217 = scmp.lt.s32.totalorder %s20, 0
      %s218 = scalar_select %p217, %s20, 0
      %s219 = sadd.s32 %s218, %s216
      %s220 = smul.addr %s219, 4
      %s221 = scalar_lea.vmem %s3, %s220
      %s222 = smul.u32 2, %s20
      %p223 = scmp.lt.s32.totalorder %s21, 3
      %s224 = scalar_select %p223, %s21, 3
      %p225 = scmp.lt.s32.totalorder %s19, 1
      %s226 = scalar_select %p225, %s19, 1
      %p227 = scmp.lt.s32.totalorder %s222, 1
      %s228 = scalar_select %p227, %s222, 1
      %s229 = smul.addr %s228, 4
      %s230 = smul.addr %s226, 8
      %s231 = sadd.s32 %s229, %s230
      %s232 = smul.addr %s224, 16
      %s233 = sadd.s32 %s231, %s232
      %s234 = smul.addr %s233, 8
      %s235 = scalar_lea.vmem %s0, %s234
      %s236 = smul.u32 2, %s20
      %p237 = scmp.lt.s32.totalorder %s21, 3
      %s238 = scalar_select %p237, %s21, 3
      %s239 = smul.addr %s238, 256
      %s240 = smul.addr %s239, 8
      %s241 = scalar_lea.vmem %s1, %s240
      %p242 = scmp.lt.s32.totalorder %s19, 1
      %s243 = scalar_select %p242, %s19, 1
      %p244 = scmp.lt.s32.totalorder %s20, 0
      %s245 = scalar_select %p244, %s20, 0
      %s246 = sadd.s32 %s245, %s243
      %s247 = smul.addr %s246, 4
      %s248 = scalar_lea.vmem %s3, %s247
      %p249 = scmp.eq.s32.totalorder %s21, 0
      // Predicated region
      $region33: #{_lambda_.9} parent=31 // pred_check
        %p250 = pneg %p249
      $region34: #{_lambda_.9} parent=31 // pred_check_branch
        %252 = sbr.rel (%p250) target = $region36
      $region35: #{_lambda_.9} parent=31 // pred_region
        %253 = vst [vmem:[#allocation2] sm:$0xf] 0.0
      $region36: #{_lambda_.9} parent=31 // pred_fallthru
        _
      %v254 = vld [vmem:[#allocation2] sm:$0xf]
      %v255 = vld [vmem:[%s235] sm:$0x3]
      %v256 = vld [vmem:[%s235 + $0x8] sm:$0x3]
      %v257 = vld [vmem:[%s235 + $0x10] sm:$0x3]
      %v258 = vld [vmem:[%s235 + $0x18] sm:$0x3]
      %v259 = vld [vmem:[%s235 + $0x20] sm:$0x3]
      %v260 = vld [vmem:[%s235 + $0x28] sm:$0x3]
      %v261 = vld [vmem:[%s235 + $0x30] sm:$0x3]
      %v262 = vld [vmem:[%s235 + $0x38] sm:$0x3]
      %v271 = vcombine.low %v255, %v256
      %v272 = vcombine.low %v257, %v258
      %v274 = vunpack.c.l.s4 1983009808
      %v275 = vunpack.c.0.s8 %v274
      %v276 = vlaneseq
      %v277 = vshrl.u32 %v276, 7
      %v278 = vsub.s32 %v275, %v277
      %v279 = vrot.slane %v271, %v278
      %v281 = vunpack.c.l.s4 1983009808
      %v282 = vunpack.c.0.s8 %v281
      %v283 = vlaneseq
      %v284 = vshrl.u32 %v283, 7
      %v285 = vsub.s32 %v282, %v284
      %v286 = vrot.slane %v272, %v285
      %v287 = vcombine.low %v279, %v286
      %v288 = vcombine.low %v259, %v260
      %v289 = vcombine.low %v261, %v262
      %v291 = vunpack.c.l.s4 1983009808
      %v292 = vunpack.c.0.s8 %v291
      %v293 = vlaneseq
      %v294 = vshrl.u32 %v293, 7
      %v295 = vsub.s32 %v292, %v294
      %v296 = vrot.slane %v288, %v295
      %v298 = vunpack.c.l.s4 1983009808
      %v299 = vunpack.c.0.s8 %v298
      %v300 = vlaneseq
      %v301 = vshrl.u32 %v300, 7
      %v302 = vsub.s32 %v299, %v301
      %v303 = vrot.slane %v289, %v302
      %v304 = vcombine.low %v296, %v303
      %v305 = vld [vmem:[%s241] sm:$0xff]
      %v306 = vld [vmem:[%s241 + $0x8] sm:$0xff]
      %v307 = vld [vmem:[%s241 + $0x10] sm:$0xff]
      %v308 = vld [vmem:[%s241 + $0x18] sm:$0xff]
      %v309 = vld [vmem:[%s241 + $0x20] sm:$0xff]
      %v310 = vld [vmem:[%s241 + $0x28] sm:$0xff]
      %v311 = vld [vmem:[%s241 + $0x30] sm:$0xff]
      %v312 = vld [vmem:[%s241 + $0x38] sm:$0xff]
      %v313 = vld [vmem:[%s241 + $0x40] sm:$0xff]
      %v314 = vld [vmem:[%s241 + $0x48] sm:$0xff]
      %v315 = vld [vmem:[%s241 + $0x50] sm:$0xff]
      %v316 = vld [vmem:[%s241 + $0x58] sm:$0xff]
      %v317 = vld [vmem:[%s241 + $0x60] sm:$0xff]
      %v318 = vld [vmem:[%s241 + $0x68] sm:$0xff]
      %v319 = vld [vmem:[%s241 + $0x70] sm:$0xff]
      %v320 = vld [vmem:[%s241 + $0x78] sm:$0xff]
      %v321 = vld [vmem:[%s241 + $0x80] sm:$0xff]
      %v322 = vld [vmem:[%s241 + $0x88] sm:$0xff]
      %v323 = vld [vmem:[%s241 + $0x90] sm:$0xff]
      %v324 = vld [vmem:[%s241 + $0x98] sm:$0xff]
      %v325 = vld [vmem:[%s241 + $0xa0] sm:$0xff]
      %v326 = vld [vmem:[%s241 + $0xa8] sm:$0xff]
      %v327 = vld [vmem:[%s241 + $0xb0] sm:$0xff]
      %v328 = vld [vmem:[%s241 + $0xb8] sm:$0xff]
      %v329 = vld [vmem:[%s241 + $0xc0] sm:$0xff]
      %v330 = vld [vmem:[%s241 + $0xc8] sm:$0xff]
      %v331 = vld [vmem:[%s241 + $0xd0] sm:$0xff]
      %v332 = vld [vmem:[%s241 + $0xd8] sm:$0xff]
      %v333 = vld [vmem:[%s241 + $0xe0] sm:$0xff]
      %v334 = vld [vmem:[%s241 + $0xe8] sm:$0xff]
      %v335 = vld [vmem:[%s241 + $0xf0] sm:$0xff]
      %v336 = vld [vmem:[%s241 + $0xf8] sm:$0xff]
      %v337 = vld [vmem:[%s241 + $0x100] sm:$0xff]
      %v338 = vld [vmem:[%s241 + $0x108] sm:$0xff]
      %v339 = vld [vmem:[%s241 + $0x110] sm:$0xff]
      %v340 = vld [vmem:[%s241 + $0x118] sm:$0xff]
      %v341 = vld [vmem:[%s241 + $0x120] sm:$0xff]
      %v342 = vld [vmem:[%s241 + $0x128] sm:$0xff]
      %v343 = vld [vmem:[%s241 + $0x130] sm:$0xff]
      %v344 = vld [vmem:[%s241 + $0x138] sm:$0xff]
      %v345 = vld [vmem:[%s241 + $0x140] sm:$0xff]
      %v346 = vld [vmem:[%s241 + $0x148] sm:$0xff]
      %v347 = vld [vmem:[%s241 + $0x150] sm:$0xff]
      %v348 = vld [vmem:[%s241 + $0x158] sm:$0xff]
      %v349 = vld [vmem:[%s241 + $0x160] sm:$0xff]
      %v350 = vld [vmem:[%s241 + $0x168] sm:$0xff]
      %v351 = vld [vmem:[%s241 + $0x170] sm:$0xff]
      %v352 = vld [vmem:[%s241 + $0x178] sm:$0xff]
      %v353 = vld [vmem:[%s241 + $0x180] sm:$0xff]
      %v354 = vld [vmem:[%s241 + $0x188] sm:$0xff]
      %v355 = vld [vmem:[%s241 + $0x190] sm:$0xff]
      %v356 = vld [vmem:[%s241 + $0x198] sm:$0xff]
      %v357 = vld [vmem:[%s241 + $0x1a0] sm:$0xff]
      %v358 = vld [vmem:[%s241 + $0x1a8] sm:$0xff]
      %v359 = vld [vmem:[%s241 + $0x1b0] sm:$0xff]
      %v360 = vld [vmem:[%s241 + $0x1b8] sm:$0xff]
      %v361 = vld [vmem:[%s241 + $0x1c0] sm:$0xff]
      %v362 = vld [vmem:[%s241 + $0x1c8] sm:$0xff]
      %v363 = vld [vmem:[%s241 + $0x1d0] sm:$0xff]
      %v364 = vld [vmem:[%s241 + $0x1d8] sm:$0xff]
      %v365 = vld [vmem:[%s241 + $0x1e0] sm:$0xff]
      %v366 = vld [vmem:[%s241 + $0x1e8] sm:$0xff]
      %v367 = vld [vmem:[%s241 + $0x1f0] sm:$0xff]
      %v368 = vld [vmem:[%s241 + $0x1f8] sm:$0xff]
      %v369 = vcombine.low %v287, %v304
      %v370 = vcombine.high %v287, %v304
      %v372 = vunpack.c.l.s4 1983009808
      %v373 = vunpack.c.0.s8 %v372
      %v374 = vlaneseq
      %v375 = vshrl.u32 %v374, 7
      %v376 = vsub.s32 %v373, %v375
      %v377 = vrot.slane %v369, %v376
      %v379 = vunpack.c.l.s4 1983009808
      %v380 = vunpack.c.0.s8 %v379
      %v381 = vlaneseq
      %v382 = vshrl.u32 %v381, 7
      %v383 = vsub.s32 %v380, %v382
      %v384 = vrot.slane %v370, %v383
      %v385 = vcombine.high %v377, %v377
      %v386 = vcombine.high %v384, %v384
      %391 = vmatprep.subr.mxu0 0.0
      %392 = vmatpush1.msra.mxu0 %v305
      %393 = vmatprep.subr.mxu0 0.0
      %394 = vmatpush1.msra.mxu0 %v306
      %395 = vmatprep.subr.mxu0 0.0
      %396 = vmatpush1.msra.mxu0 %v307
      %397 = vmatprep.subr.mxu0 0.0
      %398 = vmatpush1.msra.mxu0 %v308
      %399 = vmatprep.subr.mxu0 0.0
      %400 = vmatpush1.msra.mxu0 %v309
      %401 = vmatprep.subr.mxu0 0.0
      %402 = vmatpush1.msra.mxu0 %v310
      %403 = vmatprep.subr.mxu0 0.0
      %404 = vmatpush1.msra.mxu0 %v311
      %405 = vmatprep.subr.mxu0 0.0
      %406 = vmatpush1.msra.mxu0 %v312
      %407 = vmatprep.subr.mxu0 0.0
      %408 = vmatpush1.msra.mxu0 %v313
      %409 = vmatprep.subr.mxu0 0.0
      %410 = vmatpush1.msra.mxu0 %v314
      %411 = vmatprep.subr.mxu0 0.0
      %412 = vmatpush1.msra.mxu0 %v315
      %413 = vmatprep.subr.mxu0 0.0
      %414 = vmatpush1.msra.mxu0 %v316
      %415 = vmatprep.subr.mxu0 0.0
      %416 = vmatpush1.msra.mxu0 %v317
      %417 = vmatprep.subr.mxu0 0.0
      %418 = vmatpush1.msra.mxu0 %v318
      %419 = vmatprep.subr.mxu0 0.0
      %420 = vmatpush1.msra.mxu0 %v319
      %421 = vmatprep.subr.mxu0 0.0
      %422 = vmatpush1.msra.mxu0 %v320
      %423 = vmatprep.subr.mxu0 0.0
      %424 = vmatpush1.msra.mxu0 %v321
      %425 = vmatprep.subr.mxu0 0.0
      %426 = vmatpush1.msra.mxu0 %v322
      %427 = vmatprep.subr.mxu0 0.0
      %428 = vmatpush1.msra.mxu0 %v323
      %429 = vmatprep.subr.mxu0 0.0
      %430 = vmatpush1.msra.mxu0 %v324
      %431 = vmatprep.subr.mxu0 0.0
      %432 = vmatpush1.msra.mxu0 %v325
      %433 = vmatprep.subr.mxu0 0.0
      %434 = vmatpush1.msra.mxu0 %v326
      %435 = vmatprep.subr.mxu0 0.0
      %436 = vmatpush1.msra.mxu0 %v327
      %437 = vmatprep.subr.mxu0 0.0
      %438 = vmatpush1.msra.mxu0 %v328
      %439 = vmatprep.subr.mxu0 0.0
      %440 = vmatpush1.msra.mxu0 %v329
      %441 = vmatprep.subr.mxu0 0.0
      %442 = vmatpush1.msra.mxu0 %v330
      %443 = vmatprep.subr.mxu0 0.0
      %444 = vmatpush1.msra.mxu0 %v331
      %445 = vmatprep.subr.mxu0 0.0
      %446 = vmatpush1.msra.mxu0 %v332
      %447 = vmatprep.subr.mxu0 0.0
      %448 = vmatpush1.msra.mxu0 %v333
      %449 = vmatprep.subr.mxu0 0.0
      %450 = vmatpush1.msra.mxu0 %v334
      %451 = vmatprep.subr.mxu0 0.0
      %452 = vmatpush1.msra.mxu0 %v335
      %453 = vmatprep.subr.mxu0 0.0
      %454 = vmatpush1.msra.mxu0 %v336
      %455 = vmatprep.mubr.f32.mxu0 %v385
      %456 = vmatmul.mubr.f32.gmra.mrb[0].mxu0 %v377
      %v457 = vpop.f32.mrb[0].mxu0
      %v458 = vadd.f32 0.0, %v457
      %v459 = vpop.f32.mrb[0].mxu0
      %460 = vdwg.mxu0
      %461 = vmatprep.subr.mxu0 0.0
      %462 = vmatpush1.msra.mxu0 %v337
      %463 = vmatprep.subr.mxu0 0.0
      %464 = vmatpush1.msra.mxu0 %v338
      %465 = vmatprep.subr.mxu0 0.0
      %466 = vmatpush1.msra.mxu0 %v339
      %467 = vmatprep.subr.mxu0 0.0
      %468 = vmatpush1.msra.mxu0 %v340
      %469 = vmatprep.subr.mxu0 0.0
      %470 = vmatpush1.msra.mxu0 %v341
      %471 = vmatprep.subr.mxu0 0.0
      %472 = vmatpush1.msra.mxu0 %v342
      %473 = vmatprep.subr.mxu0 0.0
      %474 = vmatpush1.msra.mxu0 %v343
      %475 = vmatprep.subr.mxu0 0.0
      %476 = vmatpush1.msra.mxu0 %v344
      %477 = vmatprep.subr.mxu0 0.0
      %478 = vmatpush1.msra.mxu0 %v345
      %479 = vmatprep.subr.mxu0 0.0
      %480 = vmatpush1.msra.mxu0 %v346
      %481 = vmatprep.subr.mxu0 0.0
      %482 = vmatpush1.msra.mxu0 %v347
      %483 = vmatprep.subr.mxu0 0.0
      %484 = vmatpush1.msra.mxu0 %v348
      %485 = vmatprep.subr.mxu0 0.0
      %486 = vmatpush1.msra.mxu0 %v349
      %487 = vmatprep.subr.mxu0 0.0
      %488 = vmatpush1.msra.mxu0 %v350
      %489 = vmatprep.subr.mxu0 0.0
      %490 = vmatpush1.msra.mxu0 %v351
      %491 = vmatprep.subr.mxu0 0.0
      %492 = vmatpush1.msra.mxu0 %v352
      %493 = vmatprep.subr.mxu0 0.0
      %494 = vmatpush1.msra.mxu0 %v353
      %495 = vmatprep.subr.mxu0 0.0
      %496 = vmatpush1.msra.mxu0 %v354
      %497 = vmatprep.subr.mxu0 0.0
      %498 = vmatpush1.msra.mxu0 %v355
      %499 = vmatprep.subr.mxu0 0.0
      %500 = vmatpush1.msra.mxu0 %v356
      %501 = vmatprep.subr.mxu0 0.0
      %502 = vmatpush1.msra.mxu0 %v357
      %503 = vmatprep.subr.mxu0 0.0
      %504 = vmatpush1.msra.mxu0 %v358
      %505 = vmatprep.subr.mxu0 0.0
      %506 = vmatpush1.msra.mxu0 %v359
      %507 = vmatprep.subr.mxu0 0.0
      %508 = vmatpush1.msra.mxu0 %v360
      %509 = vmatprep.subr.mxu0 0.0
      %510 = vmatpush1.msra.mxu0 %v361
      %511 = vmatprep.subr.mxu0 0.0
      %512 = vmatpush1.msra.mxu0 %v362
      %513 = vmatprep.subr.mxu0 0.0
      %514 = vmatpush1.msra.mxu0 %v363
      %515 = vmatprep.subr.mxu0 0.0
      %516 = vmatpush1.msra.mxu0 %v364
      %517 = vmatprep.subr.mxu0 0.0
      %518 = vmatpush1.msra.mxu0 %v365
      %519 = vmatprep.subr.mxu0 0.0
      %520 = vmatpush1.msra.mxu0 %v366
      %521 = vmatprep.subr.mxu0 0.0
      %522 = vmatpush1.msra.mxu0 %v367
      %523 = vmatprep.subr.mxu0 0.0
      %524 = vmatpush1.msra.mxu0 %v368
      %525 = vmatprep.mubr.f32.mxu0 %v386
      %526 = vmatmul.mubr.f32.gmra.mrb[0].mxu0 %v384
      %v527 = vpop.f32.mrb[0].mxu0
      %v528 = vadd.f32 %v458, %v527
      %v529 = vpop.f32.mrb[0].mxu0
      %530 = vdwg.mxu0
      %v531 = vadd.f32 %v254, %v528
      %v532 = vld [vmem:[%s235] sm:$0x6]
      %v533 = vld [vmem:[%s235 + $0x8] sm:$0x6]
      %v534 = vld [vmem:[%s235 + $0x10] sm:$0x6]
      %v535 = vld [vmem:[%s235 + $0x18] sm:$0x6]
      %v536 = vld [vmem:[%s235 + $0x20] sm:$0x6]
      %v537 = vld [vmem:[%s235 + $0x28] sm:$0x6]
      %v538 = vld [vmem:[%s235 + $0x30] sm:$0x6]
      %v539 = vld [vmem:[%s235 + $0x38] sm:$0x6]
      %v548 = vcombine.low %v532, %v533
      %v549 = vcombine.low %v534, %v535
      %v551 = vunpack.c.l.s4 1983009808
      %v552 = vunpack.c.0.s8 %v551
      %v553 = vlaneseq
      %v554 = vshrl.u32 %v553, 7
      %v555 = vsub.s32 %v552, %v554
      %v556 = vrot.slane %v548, %v555
      %v558 = vunpack.c.l.s4 1983009808
      %v559 = vunpack.c.0.s8 %v558
      %v560 = vlaneseq
      %v561 = vshrl.u32 %v560, 7
      %v562 = vsub.s32 %v559, %v561
      %v563 = vrot.slane %v549, %v562
      %v564 = vcombine.low %v556, %v563
      %v565 = vcombine.high %v556, %v563
      %v566 = vcombine.low %v536, %v537
      %v567 = vcombine.low %v538, %v539
      %v569 = vunpack.c.l.s4 1983009808
      %v570 = vunpack.c.0.s8 %v569
      %v571 = vlaneseq
      %v572 = vshrl.u32 %v571, 7
      %v573 = vsub.s32 %v570, %v572
      %v574 = vrot.slane %v566, %v573
      %v576 = vunpack.c.l.s4 1983009808
      %v577 = vunpack.c.0.s8 %v576
      %v578 = vlaneseq
      %v579 = vshrl.u32 %v578, 7
      %v580 = vsub.s32 %v577, %v579
      %v581 = vrot.slane %v567, %v580
      %v582 = vcombine.low %v574, %v581
      %v583 = vcombine.high %v574, %v581
      %vm584 = vcmask 1040384
      %vm585 = vcmask 1042434
      %vm586 = vmor %vm584, %vm585
      %vm587 = vcmask 1044484
      %vm588 = vmor %vm586, %vm587
      %vm589 = vcmask 1046534
      %vm590 = vmor %vm588, %vm589
      %v591 = vrot.slane %v564, 7
      %v592 = vrot.slane %v591, 2
      %v593 = vrot.slane %v565, 7
      %v594 = vsel %vm590, %v592, %v593
      %v595 = vrot.slane %v582, 7
      %v596 = vrot.slane %v595, 2
      %v597 = vrot.slane %v583, 7
      %v598 = vsel %vm590, %v596, %v597
      %s599 = scalar_lea.vmem %s241, 512
      %v600 = vld [vmem:[%s599] sm:$0xff]
      %v601 = vld [vmem:[%s599 + $0x8] sm:$0xff]
      %v602 = vld [vmem:[%s599 + $0x10] sm:$0xff]
      %v603 = vld [vmem:[%s599 + $0x18] sm:$0xff]
      %v604 = vld [vmem:[%s599 + $0x20] sm:$0xff]
      %v605 = vld [vmem:[%s599 + $0x28] sm:$0xff]
      %v606 = vld [vmem:[%s599 + $0x30] sm:$0xff]
      %v607 = vld [vmem:[%s599 + $0x38] sm:$0xff]
      %v608 = vld [vmem:[%s599 + $0x40] sm:$0xff]
      %v609 = vld [vmem:[%s599 + $0x48] sm:$0xff]
      %v610 = vld [vmem:[%s599 + $0x50] sm:$0xff]
      %v611 = vld [vmem:[%s599 + $0x58] sm:$0xff]
      %v612 = vld [vmem:[%s599 + $0x60] sm:$0xff]
      %v613 = vld [vmem:[%s599 + $0x68] sm:$0xff]
      %v614 = vld [vmem:[%s599 + $0x70] sm:$0xff]
      %v615 = vld [vmem:[%s599 + $0x78] sm:$0xff]
      %v616 = vld [vmem:[%s599 + $0x80] sm:$0xff]
      %v617 = vld [vmem:[%s599 + $0x88] sm:$0xff]
      %v618 = vld [vmem:[%s599 + $0x90] sm:$0xff]
      %v619 = vld [vmem:[%s599 + $0x98] sm:$0xff]
      %v620 = vld [vmem:[%s599 + $0xa0] sm:$0xff]
      %v621 = vld [vmem:[%s599 + $0xa8] sm:$0xff]
      %v622 = vld [vmem:[%s599 + $0xb0] sm:$0xff]
      %v623 = vld [vmem:[%s599 + $0xb8] sm:$0xff]
      %v624 = vld [vmem:[%s599 + $0xc0] sm:$0xff]
      %v625 = vld [vmem:[%s599 + $0xc8] sm:$0xff]
      %v626 = vld [vmem:[%s599 + $0xd0] sm:$0xff]
      %v627 = vld [vmem:[%s599 + $0xd8] sm:$0xff]
      %v628 = vld [vmem:[%s599 + $0xe0] sm:$0xff]
      %v629 = vld [vmem:[%s599 + $0xe8] sm:$0xff]
      %v630 = vld [vmem:[%s599 + $0xf0] sm:$0xff]
      %v631 = vld [vmem:[%s599 + $0xf8] sm:$0xff]
      %v632 = vld [vmem:[%s599 + $0x100] sm:$0xff]
      %v633 = vld [vmem:[%s599 + $0x108] sm:$0xff]
      %v634 = vld [vmem:[%s599 + $0x110] sm:$0xff]
      %v635 = vld [vmem:[%s599 + $0x118] sm:$0xff]
      %v636 = vld [vmem:[%s599 + $0x120] sm:$0xff]
      %v637 = vld [vmem:[%s599 + $0x128] sm:$0xff]
      %v638 = vld [vmem:[%s599 + $0x130] sm:$0xff]
      %v639 = vld [vmem:[%s599 + $0x138] sm:$0xff]
      %v640 = vld [vmem:[%s599 + $0x140] sm:$0xff]
      %v641 = vld [vmem:[%s599 + $0x148] sm:$0xff]
      %v642 = vld [vmem:[%s599 + $0x150] sm:$0xff]
      %v643 = vld [vmem:[%s599 + $0x158] sm:$0xff]
      %v644 = vld [vmem:[%s599 + $0x160] sm:$0xff]
      %v645 = vld [vmem:[%s599 + $0x168] sm:$0xff]
      %v646 = vld [vmem:[%s599 + $0x170] sm:$0xff]
      %v647 = vld [vmem:[%s599 + $0x178] sm:$0xff]
      %v648 = vld [vmem:[%s599 + $0x180] sm:$0xff]
      %v649 = vld [vmem:[%s599 + $0x188] sm:$0xff]
      %v650 = vld [vmem:[%s599 + $0x190] sm:$0xff]
      %v651 = vld [vmem:[%s599 + $0x198] sm:$0xff]
      %v652 = vld [vmem:[%s599 + $0x1a0] sm:$0xff]
      %v653 = vld [vmem:[%s599 + $0x1a8] sm:$0xff]
      %v654 = vld [vmem:[%s599 + $0x1b0] sm:$0xff]
      %v655 = vld [vmem:[%s599 + $0x1b8] sm:$0xff]
      %v656 = vld [vmem:[%s599 + $0x1c0] sm:$0xff]
      %v657 = vld [vmem:[%s599 + $0x1c8] sm:$0xff]
      %v658 = vld [vmem:[%s599 + $0x1d0] sm:$0xff]
      %v659 = vld [vmem:[%s599 + $0x1d8] sm:$0xff]
      %v660 = vld [vmem:[%s599 + $0x1e0] sm:$0xff]
      %v661 = vld [vmem:[%s599 + $0x1e8] sm:$0xff]
      %v662 = vld [vmem:[%s599 + $0x1f0] sm:$0xff]
      %v663 = vld [vmem:[%s599 + $0x1f8] sm:$0xff]
      %v664 = vcombine.low %v594, %v598
      %v665 = vcombine.high %v594, %v598
      %v667 = vunpack.c.l.s4 1983009808
      %v668 = vunpack.c.0.s8 %v667
      %v669 = vlaneseq
      %v670 = vshrl.u32 %v669, 7
      %v671 = vsub.s32 %v668, %v670
      %v672 = vrot.slane %v664, %v671
      %v674 = vunpack.c.l.s4 1983009808
      %v675 = vunpack.c.0.s8 %v674
      %v676 = vlaneseq
      %v677 = vshrl.u32 %v676, 7
      %v678 = vsub.s32 %v675, %v677
      %v679 = vrot.slane %v665, %v678
      %v680 = vcombine.high %v672, %v672
      %v681 = vcombine.high %v679, %v679
      %686 = vmatprep.subr.mxu0 0.0
      %687 = vmatpush1.msra.mxu0 %v600
      %688 = vmatprep.subr.mxu0 0.0
      %689 = vmatpush1.msra.mxu0 %v601
      %690 = vmatprep.subr.mxu0 0.0
      %691 = vmatpush1.msra.mxu0 %v602
      %692 = vmatprep.subr.mxu0 0.0
      %693 = vmatpush1.msra.mxu0 %v603
      %694 = vmatprep.subr.mxu0 0.0
      %695 = vmatpush1.msra.mxu0 %v604
      %696 = vmatprep.subr.mxu0 0.0
      %697 = vmatpush1.msra.mxu0 %v605
      %698 = vmatprep.subr.mxu0 0.0
      %699 = vmatpush1.msra.mxu0 %v606
      %700 = vmatprep.subr.mxu0 0.0
      %701 = vmatpush1.msra.mxu0 %v607
      %702 = vmatprep.subr.mxu0 0.0
      %703 = vmatpush1.msra.mxu0 %v608
      %704 = vmatprep.subr.mxu0 0.0
      %705 = vmatpush1.msra.mxu0 %v609
      %706 = vmatprep.subr.mxu0 0.0
      %707 = vmatpush1.msra.mxu0 %v610
      %708 = vmatprep.subr.mxu0 0.0
      %709 = vmatpush1.msra.mxu0 %v611
      %710 = vmatprep.subr.mxu0 0.0
      %711 = vmatpush1.msra.mxu0 %v612
      %712 = vmatprep.subr.mxu0 0.0
      %713 = vmatpush1.msra.mxu0 %v613
      %714 = vmatprep.subr.mxu0 0.0
      %715 = vmatpush1.msra.mxu0 %v614
      %716 = vmatprep.subr.mxu0 0.0
      %717 = vmatpush1.msra.mxu0 %v615
      %718 = vmatprep.subr.mxu0 0.0
      %719 = vmatpush1.msra.mxu0 %v616
      %720 = vmatprep.subr.mxu0 0.0
      %721 = vmatpush1.msra.mxu0 %v617
      %722 = vmatprep.subr.mxu0 0.0
      %723 = vmatpush1.msra.mxu0 %v618
      %724 = vmatprep.subr.mxu0 0.0
      %725 = vmatpush1.msra.mxu0 %v619
      %726 = vmatprep.subr.mxu0 0.0
      %727 = vmatpush1.msra.mxu0 %v620
      %728 = vmatprep.subr.mxu0 0.0
      %729 = vmatpush1.msra.mxu0 %v621
      %730 = vmatprep.subr.mxu0 0.0
      %731 = vmatpush1.msra.mxu0 %v622
      %732 = vmatprep.subr.mxu0 0.0
      %733 = vmatpush1.msra.mxu0 %v623
      %734 = vmatprep.subr.mxu0 0.0
      %735 = vmatpush1.msra.mxu0 %v624
      %736 = vmatprep.subr.mxu0 0.0
      %737 = vmatpush1.msra.mxu0 %v625
      %738 = vmatprep.subr.mxu0 0.0
      %739 = vmatpush1.msra.mxu0 %v626
      %740 = vmatprep.subr.mxu0 0.0
      %741 = vmatpush1.msra.mxu0 %v627
      %742 = vmatprep.subr.mxu0 0.0
      %743 = vmatpush1.msra.mxu0 %v628
      %744 = vmatprep.subr.mxu0 0.0
      %745 = vmatpush1.msra.mxu0 %v629
      %746 = vmatprep.subr.mxu0 0.0
      %747 = vmatpush1.msra.mxu0 %v630
      %748 = vmatprep.subr.mxu0 0.0
      %749 = vmatpush1.msra.mxu0 %v631
      %750 = vmatprep.mubr.f32.mxu0 %v680
      %751 = vmatmul.mubr.f32.gmra.mrb[0].mxu0 %v672
      %v752 = vpop.f32.mrb[0].mxu0
      %v753 = vadd.f32 0.0, %v752
      %v754 = vpop.f32.mrb[0].mxu0
      %755 = vdwg.mxu0
      %756 = vmatprep.subr.mxu0 0.0
      %757 = vmatpush1.msra.mxu0 %v632
      %758 = vmatprep.subr.mxu0 0.0
      %759 = vmatpush1.msra.mxu0 %v633
      %760 = vmatprep.subr.mxu0 0.0
      %761 = vmatpush1.msra.mxu0 %v634
      %762 = vmatprep.subr.mxu0 0.0
      %763 = vmatpush1.msra.mxu0 %v635
      %764 = vmatprep.subr.mxu0 0.0
      %765 = vmatpush1.msra.mxu0 %v636
      %766 = vmatprep.subr.mxu0 0.0
      %767 = vmatpush1.msra.mxu0 %v637
      %768 = vmatprep.subr.mxu0 0.0
      %769 = vmatpush1.msra.mxu0 %v638
      %770 = vmatprep.subr.mxu0 0.0
      %771 = vmatpush1.msra.mxu0 %v639
      %772 = vmatprep.subr.mxu0 0.0
      %773 = vmatpush1.msra.mxu0 %v640
      %774 = vmatprep.subr.mxu0 0.0
      %775 = vmatpush1.msra.mxu0 %v641
      %776 = vmatprep.subr.mxu0 0.0
      %777 = vmatpush1.msra.mxu0 %v642
      %778 = vmatprep.subr.mxu0 0.0
      %779 = vmatpush1.msra.mxu0 %v643
      %780 = vmatprep.subr.mxu0 0.0
      %781 = vmatpush1.msra.mxu0 %v644
      %782 = vmatprep.subr.mxu0 0.0
      %783 = vmatpush1.msra.mxu0 %v645
      %784 = vmatprep.subr.mxu0 0.0
      %785 = vmatpush1.msra.mxu0 %v646
      %786 = vmatprep.subr.mxu0 0.0
      %787 = vmatpush1.msra.mxu0 %v647
      %788 = vmatprep.subr.mxu0 0.0
      %789 = vmatpush1.msra.mxu0 %v648
      %790 = vmatprep.subr.mxu0 0.0
      %791 = vmatpush1.msra.mxu0 %v649
      %792 = vmatprep.subr.mxu0 0.0
      %793 = vmatpush1.msra.mxu0 %v650
      %794 = vmatprep.subr.mxu0 0.0
      %795 = vmatpush1.msra.mxu0 %v651
      %796 = vmatprep.subr.mxu0 0.0
      %797 = vmatpush1.msra.mxu0 %v652
      %798 = vmatprep.subr.mxu0 0.0
      %799 = vmatpush1.msra.mxu0 %v653
      %800 = vmatprep.subr.mxu0 0.0
      %801 = vmatpush1.msra.mxu0 %v654
      %802 = vmatprep.subr.mxu0 0.0
      %803 = vmatpush1.msra.mxu0 %v655
      %804 = vmatprep.subr.mxu0 0.0
      %805 = vmatpush1.msra.mxu0 %v656
      %806 = vmatprep.subr.mxu0 0.0
      %807 = vmatpush1.msra.mxu0 %v657
      %808 = vmatprep.subr.mxu0 0.0
      %809 = vmatpush1.msra.mxu0 %v658
      %810 = vmatprep.subr.mxu0 0.0
      %811 = vmatpush1.msra.mxu0 %v659
      %812 = vmatprep.subr.mxu0 0.0
      %813 = vmatpush1.msra.mxu0 %v660
      %814 = vmatprep.subr.mxu0 0.0
      %815 = vmatpush1.msra.mxu0 %v661
      %816 = vmatprep.subr.mxu0 0.0
      %817 = vmatpush1.msra.mxu0 %v662
      %818 = vmatprep.subr.mxu0 0.0
      %819 = vmatpush1.msra.mxu0 %v663
      %820 = vmatprep.mubr.f32.mxu0 %v681
      %821 = vmatmul.mubr.f32.gmra.mrb[0].mxu0 %v679
      %v822 = vpop.f32.mrb[0].mxu0
      %v823 = vadd.f32 %v753, %v822
      %v824 = vpop.f32.mrb[0].mxu0
      %825 = vdwg.mxu0
      %v826 = vadd.f32 %v531, %v823
      %v827 = vld [vmem:[%s235] sm:$0xc]
      %v828 = vld [vmem:[%s235 + $0x8] sm:$0xc]
      %v829 = vld [vmem:[%s235 + $0x10] sm:$0xc]
      %v830 = vld [vmem:[%s235 + $0x18] sm:$0xc]
      %v831 = vld [vmem:[%s235 + $0x20] sm:$0xc]
      %v832 = vld [vmem:[%s235 + $0x28] sm:$0xc]
      %v833 = vld [vmem:[%s235 + $0x30] sm:$0xc]
      %v834 = vld [vmem:[%s235 + $0x38] sm:$0xc]
      %v843 = vcombine.low %v827, %v828
      %v844 = vcombine.low %v829, %v830
      %v846 = vunpack.c.l.s4 1983009808
      %v847 = vunpack.c.0.s8 %v846
      %v848 = vlaneseq
      %v849 = vshrl.u32 %v848, 7
      %v850 = vsub.s32 %v847, %v849
      %v851 = vrot.slane %v843, %v850
      %v853 = vunpack.c.l.s4 1983009808
      %v854 = vunpack.c.0.s8 %v853
      %v855 = vlaneseq
      %v856 = vshrl.u32 %v855, 7
      %v857 = vsub.s32 %v854, %v856
      %v858 = vrot.slane %v844, %v857
      %v859 = vcombine.high %v851, %v858
      %v860 = vcombine.low %v831, %v832
      %v861 = vcombine.low %v833, %v834
      %v863 = vunpack.c.l.s4 1983009808
      %v864 = vunpack.c.0.s8 %v863
      %v865 = vlaneseq
      %v866 = vshrl.u32 %v865, 7
      %v867 = vsub.s32 %v864, %v866
      %v868 = vrot.slane %v860, %v867
      %v870 = vunpack.c.l.s4 1983009808
      %v871 = vunpack.c.0.s8 %v870
      %v872 = vlaneseq
      %v873 = vshrl.u32 %v872, 7
      %v874 = vsub.s32 %v871, %v873
      %v875 = vrot.slane %v861, %v874
      %v876 = vcombine.high %v868, %v875
      %s877 = scalar_lea.vmem %s241, 1024
      %v878 = vld [vmem:[%s877] sm:$0xff]
      %v879 = vld [vmem:[%s877 + $0x8] sm:$0xff]
      %v880 = vld [vmem:[%s877 + $0x10] sm:$0xff]
      %v881 = vld [vmem:[%s877 + $0x18] sm:$0xff]
      %v882 = vld [vmem:[%s877 + $0x20] sm:$0xff]
      %v883 = vld [vmem:[%s877 + $0x28] sm:$0xff]
      %v884 = vld [vmem:[%s877 + $0x30] sm:$0xff]
      %v885 = vld [vmem:[%s877 + $0x38] sm:$0xff]
      %v886 = vld [vmem:[%s877 + $0x40] sm:$0xff]
      %v887 = vld [vmem:[%s877 + $0x48] sm:$0xff]
      %v888 = vld [vmem:[%s877 + $0x50] sm:$0xff]
      %v889 = vld [vmem:[%s877 + $0x58] sm:$0xff]
      %v890 = vld [vmem:[%s877 + $0x60] sm:$0xff]
      %v891 = vld [vmem:[%s877 + $0x68] sm:$0xff]
      %v892 = vld [vmem:[%s877 + $0x70] sm:$0xff]
      %v893 = vld [vmem:[%s877 + $0x78] sm:$0xff]
      %v894 = vld [vmem:[%s877 + $0x80] sm:$0xff]
      %v895 = vld [vmem:[%s877 + $0x88] sm:$0xff]
      %v896 = vld [vmem:[%s877 + $0x90] sm:$0xff]
      %v897 = vld [vmem:[%s877 + $0x98] sm:$0xff]
      %v898 = vld [vmem:[%s877 + $0xa0] sm:$0xff]
      %v899 = vld [vmem:[%s877 + $0xa8] sm:$0xff]
      %v900 = vld [vmem:[%s877 + $0xb0] sm:$0xff]
      %v901 = vld [vmem:[%s877 + $0xb8] sm:$0xff]
      %v902 = vld [vmem:[%s877 + $0xc0] sm:$0xff]
      %v903 = vld [vmem:[%s877 + $0xc8] sm:$0xff]
      %v904 = vld [vmem:[%s877 + $0xd0] sm:$0xff]
      %v905 = vld [vmem:[%s877 + $0xd8] sm:$0xff]
      %v906 = vld [vmem:[%s877 + $0xe0] sm:$0xff]
      %v907 = vld [vmem:[%s877 + $0xe8] sm:$0xff]
      %v908 = vld [vmem:[%s877 + $0xf0] sm:$0xff]
      %v909 = vld [vmem:[%s877 + $0xf8] sm:$0xff]
      %v910 = vld [vmem:[%s877 + $0x100] sm:$0xff]
      %v911 = vld [vmem:[%s877 + $0x108] sm:$0xff]
      %v912 = vld [vmem:[%s877 + $0x110] sm:$0xff]
      %v913 = vld [vmem:[%s877 + $0x118] sm:$0xff]
      %v914 = vld [vmem:[%s877 + $0x120] sm:$0xff]
      %v915 = vld [vmem:[%s877 + $0x128] sm:$0xff]
      %v916 = vld [vmem:[%s877 + $0x130] sm:$0xff]
      %v917 = vld [vmem:[%s877 + $0x138] sm:$0xff]
      %v918 = vld [vmem:[%s877 + $0x140] sm:$0xff]
      %v919 = vld [vmem:[%s877 + $0x148] sm:$0xff]
      %v920 = vld [vmem:[%s877 + $0x150] sm:$0xff]
      %v921 = vld [vmem:[%s877 + $0x158] sm:$0xff]
      %v922 = vld [vmem:[%s877 + $0x160] sm:$0xff]
      %v923 = vld [vmem:[%s877 + $0x168] sm:$0xff]
      %v924 = vld [vmem:[%s877 + $0x170] sm:$0xff]
      %v925 = vld [vmem:[%s877 + $0x178] sm:$0xff]
      %v926 = vld [vmem:[%s877 + $0x180] sm:$0xff]
      %v927 = vld [vmem:[%s877 + $0x188] sm:$0xff]
      %v928 = vld [vmem:[%s877 + $0x190] sm:$0xff]
      %v929 = vld [vmem:[%s877 + $0x198] sm:$0xff]
      %v930 = vld [vmem:[%s877 + $0x1a0] sm:$0xff]
      %v931 = vld [vmem:[%s877 + $0x1a8] sm:$0xff]
      %v932 = vld [vmem:[%s877 + $0x1b0] sm:$0xff]
      %v933 = vld [vmem:[%s877 + $0x1b8] sm:$0xff]
      %v934 = vld [vmem:[%s877 + $0x1c0] sm:$0xff]
      %v935 = vld [vmem:[%s877 + $0x1c8] sm:$0xff]
      %v936 = vld [vmem:[%s877 + $0x1d0] sm:$0xff]
      %v937 = vld [vmem:[%s877 + $0x1d8] sm:$0xff]
      %v938 = vld [vmem:[%s877 + $0x1e0] sm:$0xff]
      %v939 = vld [vmem:[%s877 + $0x1e8] sm:$0xff]
      %v940 = vld [vmem:[%s877 + $0x1f0] sm:$0xff]
      %v941 = vld [vmem:[%s877 + $0x1f8] sm:$0xff]
      %v942 = vcombine.low %v859, %v876
      %v943 = vcombine.high %v859, %v876
      %v945 = vunpack.c.l.s4 1983009808
      %v946 = vunpack.c.0.s8 %v945
      %v947 = vlaneseq
      %v948 = vshrl.u32 %v947, 7
      %v949 = vsub.s32 %v946, %v948
      %v950 = vrot.slane %v942, %v949
      %v952 = vunpack.c.l.s4 1983009808
      %v953 = vunpack.c.0.s8 %v952
      %v954 = vlaneseq
      %v955 = vshrl.u32 %v954, 7
      %v956 = vsub.s32 %v953, %v955
      %v957 = vrot.slane %v943, %v956
      %v958 = vcombine.high %v950, %v950
      %v959 = vcombine.high %v957, %v957
      %964 = vmatprep.subr.mxu0 0.0
      %965 = vmatpush1.msra.mxu0 %v878
      %966 = vmatprep.subr.mxu0 0.0
      %967 = vmatpush1.msra.mxu0 %v879
      %968 = vmatprep.subr.mxu0 0.0
      %969 = vmatpush1.msra.mxu0 %v880
      %970 = vmatprep.subr.mxu0 0.0
      %971 = vmatpush1.msra.mxu0 %v881
      %972 = vmatprep.subr.mxu0 0.0
      %973 = vmatpush1.msra.mxu0 %v882
      %974 = vmatprep.subr.mxu0 0.0
      %975 = vmatpush1.msra.mxu0 %v883
      %976 = vmatprep.subr.mxu0 0.0
      %977 = vmatpush1.msra.mxu0 %v884
      %978 = vmatprep.subr.mxu0 0.0
      %979 = vmatpush1.msra.mxu0 %v885
      %980 = vmatprep.subr.mxu0 0.0
      %981 = vmatpush1.msra.mxu0 %v886
      %982 = vmatprep.subr.mxu0 0.0
      %983 = vmatpush1.msra.mxu0 %v887
      %984 = vmatprep.subr.mxu0 0.0
      %985 = vmatpush1.msra.mxu0 %v888
      %986 = vmatprep.subr.mxu0 0.0
      %987 = vmatpush1.msra.mxu0 %v889
      %988 = vmatprep.subr.mxu0 0.0
      %989 = vmatpush1.msra.mxu0 %v890
      %990 = vmatprep.subr.mxu0 0.0
      %991 = vmatpush1.msra.mxu0 %v891
      %992 = vmatprep.subr.mxu0 0.0
      %993 = vmatpush1.msra.mxu0 %v892
      %994 = vmatprep.subr.mxu0 0.0
      %995 = vmatpush1.msra.mxu0 %v893
      %996 = vmatprep.subr.mxu0 0.0
      %997 = vmatpush1.msra.mxu0 %v894
      %998 = vmatprep.subr.mxu0 0.0
      %999 = vmatpush1.msra.mxu0 %v895
      %1000 = vmatprep.subr.mxu0 0.0
      %1001 = vmatpush1.msra.mxu0 %v896
      %1002 = vmatprep.subr.mxu0 0.0
      %1003 = vmatpush1.msra.mxu0 %v897
      %1004 = vmatprep.subr.mxu0 0.0
      %1005 = vmatpush1.msra.mxu0 %v898
      %1006 = vmatprep.subr.mxu0 0.0
      %1007 = vmatpush1.msra.mxu0 %v899
      %1008 = vmatprep.subr.mxu0 0.0
      %1009 = vmatpush1.msra.mxu0 %v900
      %1010 = vmatprep.subr.mxu0 0.0
      %1011 = vmatpush1.msra.mxu0 %v901
      %1012 = vmatprep.subr.mxu0 0.0
      %1013 = vmatpush1.msra.mxu0 %v902
      %1014 = vmatprep.subr.mxu0 0.0
      %1015 = vmatpush1.msra.mxu0 %v903
      %1016 = vmatprep.subr.mxu0 0.0
      %1017 = vmatpush1.msra.mxu0 %v904
      %1018 = vmatprep.subr.mxu0 0.0
      %1019 = vmatpush1.msra.mxu0 %v905
      %1020 = vmatprep.subr.mxu0 0.0
      %1021 = vmatpush1.msra.mxu0 %v906
      %1022 = vmatprep.subr.mxu0 0.0
      %1023 = vmatpush1.msra.mxu0 %v907
      %1024 = vmatprep.subr.mxu0 0.0
      %1025 = vmatpush1.msra.mxu0 %v908
      %1026 = vmatprep.subr.mxu0 0.0
      %1027 = vmatpush1.msra.mxu0 %v909
      %1028 = vmatprep.mubr.f32.mxu0 %v958
      %1029 = vmatmul.mubr.f32.gmra.mrb[0].mxu0 %v950
      %v1030 = vpop.f32.mrb[0].mxu0
      %v1031 = vadd.f32 0.0, %v1030
      %v1032 = vpop.f32.mrb[0].mxu0
      %1033 = vdwg.mxu0
      %1034 = vmatprep.subr.mxu0 0.0
      %1035 = vmatpush1.msra.mxu0 %v910
      %1036 = vmatprep.subr.mxu0 0.0
      %1037 = vmatpush1.msra.mxu0 %v911
      %1038 = vmatprep.subr.mxu0 0.0
      %1039 = vmatpush1.msra.mxu0 %v912
      %1040 = vmatprep.subr.mxu0 0.0
      %1041 = vmatpush1.msra.mxu0 %v913
      %1042 = vmatprep.subr.mxu0 0.0
      %1043 = vmatpush1.msra.mxu0 %v914
      %1044 = vmatprep.subr.mxu0 0.0
      %1045 = vmatpush1.msra.mxu0 %v915
      %1046 = vmatprep.subr.mxu0 0.0
      %1047 = vmatpush1.msra.mxu0 %v916
      %1048 = vmatprep.subr.mxu0 0.0
      %1049 = vmatpush1.msra.mxu0 %v917
      %1050 = vmatprep.subr.mxu0 0.0
      %1051 = vmatpush1.msra.mxu0 %v918
      %1052 = vmatprep.subr.mxu0 0.0
      %1053 = vmatpush1.msra.mxu0 %v919
      %1054 = vmatprep.subr.mxu0 0.0
      %1055 = vmatpush1.msra.mxu0 %v920
      %1056 = vmatprep.subr.mxu0 0.0
      %1057 = vmatpush1.msra.mxu0 %v921
      %1058 = vmatprep.subr.mxu0 0.0
      %1059 = vmatpush1.msra.mxu0 %v922
      %1060 = vmatprep.subr.mxu0 0.0
      %1061 = vmatpush1.msra.mxu0 %v923
      %1062 = vmatprep.subr.mxu0 0.0
      %1063 = vmatpush1.msra.mxu0 %v924
      %1064 = vmatprep.subr.mxu0 0.0
      %1065 = vmatpush1.msra.mxu0 %v925
      %1066 = vmatprep.subr.mxu0 0.0
      %1067 = vmatpush1.msra.mxu0 %v926
      %1068 = vmatprep.subr.mxu0 0.0
      %1069 = vmatpush1.msra.mxu0 %v927
      %1070 = vmatprep.subr.mxu0 0.0
      %1071 = vmatpush1.msra.mxu0 %v928
      %1072 = vmatprep.subr.mxu0 0.0
      %1073 = vmatpush1.msra.mxu0 %v929
      %1074 = vmatprep.subr.mxu0 0.0
      %1075 = vmatpush1.msra.mxu0 %v930
      %1076 = vmatprep.subr.mxu0 0.0
      %1077 = vmatpush1.msra.mxu0 %v931
      %1078 = vmatprep.subr.mxu0 0.0
      %1079 = vmatpush1.msra.mxu0 %v932
      %1080 = vmatprep.subr.mxu0 0.0
      %1081 = vmatpush1.msra.mxu0 %v933
      %1082 = vmatprep.subr.mxu0 0.0
      %1083 = vmatpush1.msra.mxu0 %v934
      %1084 = vmatprep.subr.mxu0 0.0
      %1085 = vmatpush1.msra.mxu0 %v935
      %1086 = vmatprep.subr.mxu0 0.0
      %1087 = vmatpush1.msra.mxu0 %v936
      %1088 = vmatprep.subr.mxu0 0.0
      %1089 = vmatpush1.msra.mxu0 %v937
      %1090 = vmatprep.subr.mxu0 0.0
      %1091 = vmatpush1.msra.mxu0 %v938
      %1092 = vmatprep.subr.mxu0 0.0
      %1093 = vmatpush1.msra.mxu0 %v939
      %1094 = vmatprep.subr.mxu0 0.0
      %1095 = vmatpush1.msra.mxu0 %v940
      %1096 = vmatprep.subr.mxu0 0.0
      %1097 = vmatpush1.msra.mxu0 %v941
      %1098 = vmatprep.mubr.f32.mxu0 %v959
      %1099 = vmatmul.mubr.f32.gmra.mrb[0].mxu0 %v957
      %v1100 = vpop.f32.mrb[0].mxu0
      %v1101 = vadd.f32 %v1031, %v1100
      %v1102 = vpop.f32.mrb[0].mxu0
      %1103 = vdwg.mxu0
      %v1104 = vadd.f32 %v826, %v1101
      %v1105 = vld [vmem:[%s235] sm:$0x18]
      %v1106 = vld [vmem:[%s235 + $0x8] sm:$0x18]
      %v1107 = vld [vmem:[%s235 + $0x10] sm:$0x18]
      %v1108 = vld [vmem:[%s235 + $0x18] sm:$0x18]
      %v1109 = vld [vmem:[%s235 + $0x20] sm:$0x18]
      %v1110 = vld [vmem:[%s235 + $0x28] sm:$0x18]
      %v1111 = vld [vmem:[%s235 + $0x30] sm:$0x18]
      %v1112 = vld [vmem:[%s235 + $0x38] sm:$0x18]
      %v1121 = vcombine.low %v1105, %v1106
      %v1122 = vcombine.high %v1105, %v1106
      %v1123 = vcombine.low %v1107, %v1108
      %v1124 = vcombine.high %v1107, %v1108
      %v1126 = vunpack.c.l.s4 1983009808
      %v1127 = vunpack.c.0.s8 %v1126
      %v1128 = vlaneseq
      %v1129 = vshrl.u32 %v1128, 7
      %v1130 = vsub.s32 %v1127, %v1129
      %v1131 = vrot.slane %v1121, %v1130
      %v1133 = vunpack.c.l.s4 1983009808
      %v1134 = vunpack.c.0.s8 %v1133
      %v1135 = vlaneseq
      %v1136 = vshrl.u32 %v1135, 7
      %v1137 = vsub.s32 %v1134, %v1136
      %v1138 = vrot.slane %v1122, %v1137
      %v1140 = vunpack.c.l.s4 1983009808
      %v1141 = vunpack.c.0.s8 %v1140
      %v1142 = vlaneseq
      %v1143 = vshrl.u32 %v1142, 7
      %v1144 = vsub.s32 %v1141, %v1143
      %v1145 = vrot.slane %v1123, %v1144
      %v1147 = vunpack.c.l.s4 1983009808
      %v1148 = vunpack.c.0.s8 %v1147
      %v1149 = vlaneseq
      %v1150 = vshrl.u32 %v1149, 7
      %v1151 = vsub.s32 %v1148, %v1150
      %v1152 = vrot.slane %v1124, %v1151
      %v1153 = vcombine.high %v1131, %v1145
      %v1154 = vcombine.low %v1138, %v1152
      %v1155 = vcombine.low %v1109, %v1110
      %v1156 = vcombine.high %v1109, %v1110
      %v1157 = vcombine.low %v1111, %v1112
      %v1158 = vcombine.high %v1111, %v1112
      %v1160 = vunpack.c.l.s4 1983009808
      %v1161 = vunpack.c.0.s8 %v1160
      %v1162 = vlaneseq
      %v1163 = vshrl.u32 %v1162, 7
      %v1164 = vsub.s32 %v1161, %v1163
      %v1165 = vrot.slane %v1155, %v1164
      %v1167 = vunpack.c.l.s4 1983009808
      %v1168 = vunpack.c.0.s8 %v1167
      %v1169 = vlaneseq
      %v1170 = vshrl.u32 %v1169, 7
      %v1171 = vsub.s32 %v1168, %v1170
      %v1172 = vrot.slane %v1156, %v1171
      %v1174 = vunpack.c.l.s4 1983009808
      %v1175 = vunpack.c.0.s8 %v1174
      %v1176 = vlaneseq
      %v1177 = vshrl.u32 %v1176, 7
      %v1178 = vsub.s32 %v1175, %v1177
      %v1179 = vrot.slane %v1157, %v1178
      %v1181 = vunpack.c.l.s4 1983009808
      %v1182 = vunpack.c.0.s8 %v1181
      %v1183 = vlaneseq
      %v1184 = vshrl.u32 %v1183, 7
      %v1185 = vsub.s32 %v1182, %v1184
      %v1186 = vrot.slane %v1158, %v1185
      %v1187 = vcombine.high %v1165, %v1179
      %v1188 = vcombine.low %v1172, %v1186
      %v1189 = vrot.slane %v1153, 7
      %v1190 = vrot.slane %v1189, 2
      %v1191 = vrot.slane %v1154, 7
      %v1192 = vsel %vm590, %v1190, %v1191
      %v1193 = vrot.slane %v1187, 7
      %v1194 = vrot.slane %v1193, 2
      %v1195 = vrot.slane %v1188, 7
      %v1196 = vsel %vm590, %v1194, %v1195
      %s1197 = scalar_lea.vmem %s241, 1536
      %v1198 = vld [vmem:[%s1197] sm:$0xff]
      %v1199 = vld [vmem:[%s1197 + $0x8] sm:$0xff]
      %v1200 = vld [vmem:[%s1197 + $0x10] sm:$0xff]
      %v1201 = vld [vmem:[%s1197 + $0x18] sm:$0xff]
      %v1202 = vld [vmem:[%s1197 + $0x20] sm:$0xff]
      %v1203 = vld [vmem:[%s1197 + $0x28] sm:$0xff]
      %v1204 = vld [vmem:[%s1197 + $0x30] sm:$0xff]
      %v1205 = vld [vmem:[%s1197 + $0x38] sm:$0xff]
      %v1206 = vld [vmem:[%s1197 + $0x40] sm:$0xff]
      %v1207 = vld [vmem:[%s1197 + $0x48] sm:$0xff]
      %v1208 = vld [vmem:[%s1197 + $0x50] sm:$0xff]
      %v1209 = vld [vmem:[%s1197 + $0x58] sm:$0xff]
      %v1210 = vld [vmem:[%s1197 + $0x60] sm:$0xff]
      %v1211 = vld [vmem:[%s1197 + $0x68] sm:$0xff]
      %v1212 = vld [vmem:[%s1197 + $0x70] sm:$0xff]
      %v1213 = vld [vmem:[%s1197 + $0x78] sm:$0xff]
      %v1214 = vld [vmem:[%s1197 + $0x80] sm:$0xff]
      %v1215 = vld [vmem:[%s1197 + $0x88] sm:$0xff]
      %v1216 = vld [vmem:[%s1197 + $0x90] sm:$0xff]
      %v1217 = vld [vmem:[%s1197 + $0x98] sm:$0xff]
      %v1218 = vld [vmem:[%s1197 + $0xa0] sm:$0xff]
      %v1219 = vld [vmem:[%s1197 + $0xa8] sm:$0xff]
      %v1220 = vld [vmem:[%s1197 + $0xb0] sm:$0xff]
      %v1221 = vld [vmem:[%s1197 + $0xb8] sm:$0xff]
      %v1222 = vld [vmem:[%s1197 + $0xc0] sm:$0xff]
      %v1223 = vld [vmem:[%s1197 + $0xc8] sm:$0xff]
      %v1224 = vld [vmem:[%s1197 + $0xd0] sm:$0xff]
      %v1225 = vld [vmem:[%s1197 + $0xd8] sm:$0xff]
      %v1226 = vld [vmem:[%s1197 + $0xe0] sm:$0xff]
      %v1227 = vld [vmem:[%s1197 + $0xe8] sm:$0xff]
      %v1228 = vld [vmem:[%s1197 + $0xf0] sm:$0xff]
      %v1229 = vld [vmem:[%s1197 + $0xf8] sm:$0xff]
      %v1230 = vld [vmem:[%s1197 + $0x100] sm:$0xff]
      %v1231 = vld [vmem:[%s1197 + $0x108] sm:$0xff]
      %v1232 = vld [vmem:[%s1197 + $0x110] sm:$0xff]
      %v1233 = vld [vmem:[%s1197 + $0x118] sm:$0xff]
      %v1234 = vld [vmem:[%s1197 + $0x120] sm:$0xff]
      %v1235 = vld [vmem:[%s1197 + $0x128] sm:$0xff]
      %v1236 = vld [vmem:[%s1197 + $0x130] sm:$0xff]
      %v1237 = vld [vmem:[%s1197 + $0x138] sm:$0xff]
      %v1238 = vld [vmem:[%s1197 + $0x140] sm:$0xff]
      %v1239 = vld [vmem:[%s1197 + $0x148] sm:$0xff]
      %v1240 = vld [vmem:[%s1197 + $0x150] sm:$0xff]
      %v1241 = vld [vmem:[%s1197 + $0x158] sm:$0xff]
      %v1242 = vld [vmem:[%s1197 + $0x160] sm:$0xff]
      %v1243 = vld [vmem:[%s1197 + $0x168] sm:$0xff]
      %v1244 = vld [vmem:[%s1197 + $0x170] sm:$0xff]
      %v1245 = vld [vmem:[%s1197 + $0x178] sm:$0xff]
      %v1246 = vld [vmem:[%s1197 + $0x180] sm:$0xff]
      %v1247 = vld [vmem:[%s1197 + $0x188] sm:$0xff]
      %v1248 = vld [vmem:[%s1197 + $0x190] sm:$0xff]
      %v1249 = vld [vmem:[%s1197 + $0x198] sm:$0xff]
      %v1250 = vld [vmem:[%s1197 + $0x1a0] sm:$0xff]
      %v1251 = vld [vmem:[%s1197 + $0x1a8] sm:$0xff]
      %v1252 = vld [vmem:[%s1197 + $0x1b0] sm:$0xff]
      %v1253 = vld [vmem:[%s1197 + $0x1b8] sm:$0xff]
      %v1254 = vld [vmem:[%s1197 + $0x1c0] sm:$0xff]
      %v1255 = vld [vmem:[%s1197 + $0x1c8] sm:$0xff]
      %v1256 = vld [vmem:[%s1197 + $0x1d0] sm:$0xff]
      %v1257 = vld [vmem:[%s1197 + $0x1d8] sm:$0xff]
      %v1258 = vld [vmem:[%s1197 + $0x1e0] sm:$0xff]
      %v1259 = vld [vmem:[%s1197 + $0x1e8] sm:$0xff]
      %v1260 = vld [vmem:[%s1197 + $0x1f0] sm:$0xff]
      %v1261 = vld [vmem:[%s1197 + $0x1f8] sm:$0xff]
      %v1262 = vcombine.low %v1192, %v1196
      %v1263 = vcombine.high %v1192, %v1196
      %v1265 = vunpack.c.l.s4 1983009808
      %v1266 = vunpack.c.0.s8 %v1265
      %v1267 = vlaneseq
      %v1268 = vshrl.u32 %v1267, 7
      %v1269 = vsub.s32 %v1266, %v1268
      %v1270 = vrot.slane %v1262, %v1269
      %v1272 = vunpack.c.l.s4 1983009808
      %v1273 = vunpack.c.0.s8 %v1272
      %v1274 = vlaneseq
      %v1275 = vshrl.u32 %v1274, 7
      %v1276 = vsub.s32 %v1273, %v1275
      %v1277 = vrot.slane %v1263, %v1276
      %v1278 = vcombine.high %v1270, %v1270
      %v1279 = vcombine.high %v1277, %v1277
      %1284 = vmatprep.subr.mxu0 0.0
      %1285 = vmatpush1.msra.mxu0 %v1198
      %1286 = vmatprep.subr.mxu0 0.0
      %1287 = vmatpush1.msra.mxu0 %v1199
      %1288 = vmatprep.subr.mxu0 0.0
      %1289 = vmatpush1.msra.mxu0 %v1200
      %1290 = vmatprep.subr.mxu0 0.0
      %1291 = vmatpush1.msra.mxu0 %v1201
      %1292 = vmatprep.subr.mxu0 0.0
      %1293 = vmatpush1.msra.mxu0 %v1202
      %1294 = vmatprep.subr.mxu0 0.0
      %1295 = vmatpush1.msra.mxu0 %v1203
      %1296 = vmatprep.subr.mxu0 0.0
      %1297 = vmatpush1.msra.mxu0 %v1204
      %1298 = vmatprep.subr.mxu0 0.0
      %1299 = vmatpush1.msra.mxu0 %v1205
      %1300 = vmatprep.subr.mxu0 0.0
      %1301 = vmatpush1.msra.mxu0 %v1206
      %1302 = vmatprep.subr.mxu0 0.0
      %1303 = vmatpush1.msra.mxu0 %v1207
      %1304 = vmatprep.subr.mxu0 0.0
      %1305 = vmatpush1.msra.mxu0 %v1208
      %1306 = vmatprep.subr.mxu0 0.0
      %1307 = vmatpush1.msra.mxu0 %v1209
      %1308 = vmatprep.subr.mxu0 0.0
      %1309 = vmatpush1.msra.mxu0 %v1210
      %1310 = vmatprep.subr.mxu0 0.0
      %1311 = vmatpush1.msra.mxu0 %v1211
      %1312 = vmatprep.subr.mxu0 0.0
      %1313 = vmatpush1.msra.mxu0 %v1212
      %1314 = vmatprep.subr.mxu0 0.0
      %1315 = vmatpush1.msra.mxu0 %v1213
      %1316 = vmatprep.subr.mxu0 0.0
      %1317 = vmatpush1.msra.mxu0 %v1214
      %1318 = vmatprep.subr.mxu0 0.0
      %1319 = vmatpush1.msra.mxu0 %v1215
      %1320 = vmatprep.subr.mxu0 0.0
      %1321 = vmatpush1.msra.mxu0 %v1216
      %1322 = vmatprep.subr.mxu0 0.0
      %1323 = vmatpush1.msra.mxu0 %v1217
      %1324 = vmatprep.subr.mxu0 0.0
      %1325 = vmatpush1.msra.mxu0 %v1218
      %1326 = vmatprep.subr.mxu0 0.0
      %1327 = vmatpush1.msra.mxu0 %v1219
      %1328 = vmatprep.subr.mxu0 0.0
      %1329 = vmatpush1.msra.mxu0 %v1220
      %1330 = vmatprep.subr.mxu0 0.0
      %1331 = vmatpush1.msra.mxu0 %v1221
      %1332 = vmatprep.subr.mxu0 0.0
      %1333 = vmatpush1.msra.mxu0 %v1222
      %1334 = vmatprep.subr.mxu0 0.0
      %1335 = vmatpush1.msra.mxu0 %v1223
      %1336 = vmatprep.subr.mxu0 0.0
      %1337 = vmatpush1.msra.mxu0 %v1224
      %1338 = vmatprep.subr.mxu0 0.0
      %1339 = vmatpush1.msra.mxu0 %v1225
      %1340 = vmatprep.subr.mxu0 0.0
      %1341 = vmatpush1.msra.mxu0 %v1226
      %1342 = vmatprep.subr.mxu0 0.0
      %1343 = vmatpush1.msra.mxu0 %v1227
      %1344 = vmatprep.subr.mxu0 0.0
      %1345 = vmatpush1.msra.mxu0 %v1228
      %1346 = vmatprep.subr.mxu0 0.0
      %1347 = vmatpush1.msra.mxu0 %v1229
      %1348 = vmatprep.mubr.f32.mxu0 %v1278
      %1349 = vmatmul.mubr.f32.gmra.mrb[0].mxu0 %v1270
      %v1350 = vpop.f32.mrb[0].mxu0
      %v1351 = vadd.f32 0.0, %v1350
      %v1352 = vpop.f32.mrb[0].mxu0
      %1353 = vdwg.mxu0
      %1354 = vmatprep.subr.mxu0 0.0
      %1355 = vmatpush1.msra.mxu0 %v1230
      %1356 = vmatprep.subr.mxu0 0.0
      %1357 = vmatpush1.msra.mxu0 %v1231
      %1358 = vmatprep.subr.mxu0 0.0
      %1359 = vmatpush1.msra.mxu0 %v1232
      %1360 = vmatprep.subr.mxu0 0.0
      %1361 = vmatpush1.msra.mxu0 %v1233
      %1362 = vmatprep.subr.mxu0 0.0
      %1363 = vmatpush1.msra.mxu0 %v1234
      %1364 = vmatprep.subr.mxu0 0.0
      %1365 = vmatpush1.msra.mxu0 %v1235
      %1366 = vmatprep.subr.mxu0 0.0
      %1367 = vmatpush1.msra.mxu0 %v1236
      %1368 = vmatprep.subr.mxu0 0.0
      %1369 = vmatpush1.msra.mxu0 %v1237
      %1370 = vmatprep.subr.mxu0 0.0
      %1371 = vmatpush1.msra.mxu0 %v1238
      %1372 = vmatprep.subr.mxu0 0.0
      %1373 = vmatpush1.msra.mxu0 %v1239
      %1374 = vmatprep.subr.mxu0 0.0
      %1375 = vmatpush1.msra.mxu0 %v1240
      %1376 = vmatprep.subr.mxu0 0.0
      %1377 = vmatpush1.msra.mxu0 %v1241
      %1378 = vmatprep.subr.mxu0 0.0
      %1379 = vmatpush1.msra.mxu0 %v1242
      %1380 = vmatprep.subr.mxu0 0.0
      %1381 = vmatpush1.msra.mxu0 %v1243
      %1382 = vmatprep.subr.mxu0 0.0
      %1383 = vmatpush1.msra.mxu0 %v1244
      %1384 = vmatprep.subr.mxu0 0.0
      %1385 = vmatpush1.msra.mxu0 %v1245
      %1386 = vmatprep.subr.mxu0 0.0
      %1387 = vmatpush1.msra.mxu0 %v1246
      %1388 = vmatprep.subr.mxu0 0.0
      %1389 = vmatpush1.msra.mxu0 %v1247
      %1390 = vmatprep.subr.mxu0 0.0
      %1391 = vmatpush1.msra.mxu0 %v1248
      %1392 = vmatprep.subr.mxu0 0.0
      %1393 = vmatpush1.msra.mxu0 %v1249
      %1394 = vmatprep.subr.mxu0 0.0
      %1395 = vmatpush1.msra.mxu0 %v1250
      %1396 = vmatprep.subr.mxu0 0.0
      %1397 = vmatpush1.msra.mxu0 %v1251
      %1398 = vmatprep.subr.mxu0 0.0
      %1399 = vmatpush1.msra.mxu0 %v1252
      %1400 = vmatprep.subr.mxu0 0.0
      %1401 = vmatpush1.msra.mxu0 %v1253
      %1402 = vmatprep.subr.mxu0 0.0
      %1403 = vmatpush1.msra.mxu0 %v1254
      %1404 = vmatprep.subr.mxu0 0.0
      %1405 = vmatpush1.msra.mxu0 %v1255
      %1406 = vmatprep.subr.mxu0 0.0
      %1407 = vmatpush1.msra.mxu0 %v1256
      %1408 = vmatprep.subr.mxu0 0.0
      %1409 = vmatpush1.msra.mxu0 %v1257
      %1410 = vmatprep.subr.mxu0 0.0
      %1411 = vmatpush1.msra.mxu0 %v1258
      %1412 = vmatprep.subr.mxu0 0.0
      %1413 = vmatpush1.msra.mxu0 %v1259
      %1414 = vmatprep.subr.mxu0 0.0
      %1415 = vmatpush1.msra.mxu0 %v1260
      %1416 = vmatprep.subr.mxu0 0.0
      %1417 = vmatpush1.msra.mxu0 %v1261
      %1418 = vmatprep.mubr.f32.mxu0 %v1279
      %1419 = vmatmul.mubr.f32.gmra.mrb[0].mxu0 %v1277
      %v1420 = vpop.f32.mrb[0].mxu0
      %v1421 = vadd.f32 %v1351, %v1420
      %v1422 = vpop.f32.mrb[0].mxu0
      %1423 = vdwg.mxu0
      %v1424 = vadd.f32 %v1104, %v1421
      %1425 = vst [vmem:[#allocation2] sm:$0xf] %v1424
      %p1426 = scmp.eq.s32.totalorder %s21, 3
      // Predicated region
      $region37: #{_lambda_.9} parent=31 // pred_check
        %p1427 = pneg %p1426
      $region38: #{_lambda_.9} parent=31 // pred_check_branch
        %1429 = sbr.rel (%p1427) target = $region40
      $region39: #{_lambda_.9} parent=31 // pred_region
        %v1430 = vld [vmem:[%s2] sm:$0x1]
        %v1432 = vlaneseq
        %v1433 = vshrl.u32 %v1432, 7
        %v1434 = vsub.s32 0, %v1433
        %v1435 = vrot.slane %v1430, %v1434
        %v1437 = vadd.f32 %v1424, %v1435
        %1438 = vst [vmem:[%s248] sm:$0xf] %v1437
      $region40: #{_lambda_.9} parent=31 // pred_fallthru
        _
      %p1439 = scmp.lt.s32.totalorder %s19, 1
      %s1440 = scalar_select %p1439, %s19, 1
      %p1441 = scmp.lt.s32.totalorder %s20, 0
      %s1442 = scalar_select %p1441, %s20, 0
      %s1443 = sadd.s32 %s1442, %s1440
      %s1444 = smul.addr %s1443, 4
      %s1445 = scalar_lea.vmem %s3, %s1444
      // Predicated region
      $region41: #{_lambda_.9} parent=31 // pred_check
        %p1446 = pneg %p130
      $region42: #{_lambda_.9} parent=31 // pred_check_branch
        %1448 = sbr.rel (%p1446) target = $region44
      $region43: #{_lambda_.9} parent=31 // pred_region
        _
      $region44: #{_lambda_.9} parent=31 // pred_fallthru
        _
    $region32: #{_lambda_.9} parent=5 // pred_fallthru
      _
    %p1449 = scmp.le.s32.totalorder 2, %s9
    // Predicated region
    $region45: #{_lambda_.9} parent=5 // pred_check
      %p1450 = pneg %p1449
    $region46: #{_lambda_.9} parent=5 // pred_check_branch
      %1452 = sbr.rel (%p1450) target = $region48
    $region47: #{_lambda_.9} parent=5 // pred_region
      %s1453 = ssub.s32 %s9, 2
      // Predicated region
      $region49: #{_lambda_.9} parent=47 // pred_check
        %p1454 = pneg %p136
      $region50: #{_lambda_.9} parent=47 // pred_check_branch
        %1456 = sbr.rel (%p1454) target = $region52
      $region51: #{_lambda_.9} parent=47 // pred_region
        %p1457 = scmp.lt.s32.totalorder %s22, 1
        %s1458 = scalar_select %p1457, %s22, 1
        %p1459 = scmp.lt.s32.totalorder %s23, 0
        %s1460 = scalar_select %p1459, %s23, 0
        %s1461 = sadd.s32 %s1460, %s1458
        %s1462 = smul.addr %s1461, 4
        %s1463 = scalar_lea.vmem %s3, %s1462
      $region52: #{_lambda_.9} parent=47 // pred_fallthru
        _
    $region48: #{_lambda_.9} parent=5 // pred_fallthru
      _
  $region6: #{_lambda_.9} parent=0 // loop_footer
    %s13 = sadd.s32 1, %s9
  $region7: #{_lambda_.9} parent=0 // loop_footer_branch
    %8 = sbr.rel target = $region3
  $region8: #{_lambda_.9} parent=0 // loop_exit
    _

// kernel: _lambda_.8
$region0: #{_lambda_.8}
  #allocation0 [shape = 'u32[]', space=smem, size = 0x4, offset = 0x4, fixed_abs, tag = 'smem constant byte address 0x4 - core index']
  #allocation1 [shape = 'u32[144,128]{1,0:T(1,128)}', space=vmem, size = 0x12000, scoped, tag = 'internal scratch']
  #allocation2 [shape = 'f32[9,512]{1,0:T(8,128)}', space=vmem, size = 0x8000, scoped, tag = 'scratch operand']
  %s0 = inlined_call_operand.vmem [shape: f32[4,2,3,6,256], index: 0, kind: input, shape index: {}]
  %s1 = inlined_call_operand.vmem [shape: f32[4,4,256,512], index: 1, kind: input, shape index: {}]
  %s2 = inlined_call_operand.vmem [shape: f32[1,512], index: 2, kind: input, shape index: {}]
  %s3 = inlined_call_operand.vmem [shape: f32[2,9,512], index: 3, kind: output, shape index: {}]
  %s4 = sld [smem:[#allocation0]]
  $region53: #{_lambda_.8} parent=0
    _
  %s6 = ssub.s32 1, %s4
  %s7 = scalar_select 0, %s6, %s4
  loop: start=0, step=1, limit=10
  $region2: #{_lambda_.8} parent=0 // loop_pre_header
    _
  $region3: #{_lambda_.8} parent=0 // loop_header
    %s9 = sphi 0, %s13
    %p10 = scmp.ge.s32.totalorder %s9, 10
    %s16 = sphi 0, %s35
    %s17 = sphi 0, %s31
    %s18 = sphi 0, %s27
    %s19 = sphi 0, %s16
    %s20 = sphi 0, %s17
    %s21 = sphi 0, %s18
    %s22 = sphi 0, %s19
    %s23 = sphi 0, %s20
    %s24 = sphi 0, %s21
    %s42 = sphi 0, %s44
    %s45 = sphi 0, %s42
    %s46 = sphi 0, %s45
    %s62 = sphi 0, %s46
    %s68 = sphi 0, %s70
    %s71 = sphi 0, %s68
    %s72 = sphi 0, %s71
    %s88 = sphi 0, %s72
    %s92 = sphi 0, %s92
    %s94 = sphi 0, %s92
    %s95 = sphi 0, %s94
    %s109 = sphi 0, %s95
    %s117 = sphi 0, %s119
    %s120 = sphi 0, %s117
    %s121 = sphi 0, %s120
    %s137 = sphi 0, %s121
  $region4: #{_lambda_.8} parent=0 // loop_header_branch
    %12 = sbr.rel (%p10) target = $region8
  $region5: #{_lambda_.8} parent=0 // loop_body
    %s14 = ssub.s32 %s9, 1
    %s15 = ssub.s32 %s9, 2
    %s25 = sadd.s32 1, %s18
    %p26 = scmp.ge.s32.totalorder %s25, 4
    %s27 = scalar_select %p26, 0, %s25
    %s28 = sadd.s32 1, %s17
    %s29 = scalar_select %p26, %s28, %s17
    %p30 = scmp.ge.s32.totalorder %s29, 1
    %s31 = scalar_select %p30, 0, %s29
    %s32 = sadd.s32 1, %s16
    %s33 = scalar_select %p30, %s32, %s16
    %p34 = scmp.ge.s32.totalorder %s33, 2
    %s35 = scalar_select %p34, 0, %s33
    %s36 = ssub.s32 %s18, %s27
    %s37 = ssub.s32 %s16, %s35
    %s38 = sor.u32 %s36, %s37
    %s39 = ssub.s32 %s17, %s31
    %s40 = sor.u32 %s38, %s39
    %p41 = scmp.eq.s32.totalorder %s40, 0
    %s43 = sadd.s32 %s42, 1
    %s44 = scalar_select %p41, %s42, %s43
    %p47 = pneg %p41
    %p48 = scmp.eq.s32.totalorder %s9, 7
    %p49 = por %p47, %p48
    %p50 = scmp.ne.s32.totalorder %s42, %s45
    %p51 = scmp.eq.s32.totalorder %s9, 0
    %p52 = por %p50, %p51
    %p53 = scmp.ne.s32.totalorder %s42, %s45
    %p54 = scmp.eq.s32.totalorder %s14, 7
    %p55 = por %p53, %p54
    %p56 = scmp.ne.s32.totalorder %s45, %s46
    %p57 = scmp.eq.s32.totalorder %s14, 0
    %p58 = por %p56, %p57
    %p59 = scmp.ne.s32.totalorder %s45, %s46
    %p60 = scmp.eq.s32.totalorder %s15, 7
    %p61 = por %p59, %p60
    %p63 = scmp.ne.s32.totalorder %s46, %s62
    %p64 = scmp.eq.s32.totalorder %s15, 0
    %p65 = por %p63, %p64
    %s66 = ssub.s32 %s18, %s27
    %p67 = scmp.eq.s32.totalorder %s66, 0
    %s69 = sadd.s32 %s68, 1
    %s70 = scalar_select %p67, %s68, %s69
    %p73 = pneg %p67
    %p74 = scmp.eq.s32.totalorder %s9, 7
    %p75 = por %p73, %p74
    %p76 = scmp.ne.s32.totalorder %s68, %s71
    %p77 = scmp.eq.s32.totalorder %s9, 0
    %p78 = por %p76, %p77
    %p79 = scmp.ne.s32.totalorder %s68, %s71
    %p80 = scmp.eq.s32.totalorder %s14, 7
    %p81 = por %p79, %p80
    %p82 = scmp.ne.s32.totalorder %s71, %s72
    %p83 = scmp.eq.s32.totalorder %s14, 0
    %p84 = por %p82, %p83
    %p85 = scmp.ne.s32.totalorder %s71, %s72
    %p86 = scmp.eq.s32.totalorder %s15, 7
    %p87 = por %p85, %p86
    %p89 = scmp.ne.s32.totalorder %s72, %s88
    %p90 = scmp.eq.s32.totalorder %s15, 0
    %p91 = por %p89, %p90
    %s93 = sadd.s32 %s92, 1
    %p96 = scmp.eq.s32.totalorder %s9, 7
    %p97 = scmp.ne.s32.totalorder %s92, %s94
    %p98 = scmp.eq.s32.totalorder %s9, 0
    %p99 = por %p97, %p98
    %p100 = scmp.ne.s32.totalorder %s92, %s94
    %p101 = scmp.eq.s32.totalorder %s14, 7
    %p102 = por %p100, %p101
    %p103 = scmp.ne.s32.totalorder %s94, %s95
    %p104 = scmp.eq.s32.totalorder %s14, 0
    %p105 = por %p103, %p104
    %p106 = scmp.ne.s32.totalorder %s94, %s95
    %p107 = scmp.eq.s32.totalorder %s15, 7
    %p108 = por %p106, %p107
    %p110 = scmp.ne.s32.totalorder %s95, %s109
    %p111 = scmp.eq.s32.totalorder %s15, 0
    %p112 = por %p110, %p111
    %s113 = ssub.s32 %s16, %s35
    %s114 = ssub.s32 %s17, %s31
    %s115 = sor.u32 %s113, %s114
    %p116 = scmp.eq.s32.totalorder %s115, 0
    %s118 = sadd.s32 %s117, 1
    %s119 = scalar_select %p116, %s117, %s118
    %p122 = pneg %p116
    %p123 = scmp.eq.s32.totalorder %s9, 7
    %p124 = por %p122, %p123
    %p125 = scmp.ne.s32.totalorder %s117, %s120
    %p126 = scmp.eq.s32.totalorder %s9, 0
    %p127 = por %p125, %p126
    %p128 = scmp.ne.s32.totalorder %s117, %s120
    %p129 = scmp.eq.s32.totalorder %s14, 7
    %p130 = por %p128, %p129
    %p131 = scmp.ne.s32.totalorder %s120, %s121
    %p132 = scmp.eq.s32.totalorder %s14, 0
    %p133 = por %p131, %p132
    %p134 = scmp.ne.s32.totalorder %s120, %s121
    %p135 = scmp.eq.s32.totalorder %s15, 7
    %p136 = por %p134, %p135
    %p138 = scmp.ne.s32.totalorder %s121, %s137
    %p139 = scmp.eq.s32.totalorder %s15, 0
    %p140 = por %p138, %p139
    %p141 = scmp.le.s32.totalorder 1, %s9
    %p142 = scmp.lt.s32.totalorder %s9, 9
    %p143 = pnand %p141, %p142
    %p144 = pneg %p143
    // Predicated region
    $region9: #{_lambda_.8} parent=5 // pred_check
      _
    $region10: #{_lambda_.8} parent=5 // pred_check_branch
      %146 = sbr.rel (%p143) target = $region12
    $region11: #{_lambda_.8} parent=5 // pred_region
      %s147 = ssub.s32 %s9, 1
      // Predicated region
      $region13: #{_lambda_.8} parent=11 // pred_check
        %p148 = pneg %p105
      $region14: #{_lambda_.8} parent=11 // pred_check_branch
        %150 = sbr.rel (%p148) target = $region16
      $region15: #{_lambda_.8} parent=11 // pred_region
        _
      $region16: #{_lambda_.8} parent=11 // pred_fallthru
        _
    $region12: #{_lambda_.8} parent=5 // pred_fallthru
      _
    %p151 = scmp.lt.s32.totalorder %s9, 8
    // Predicated region
    $region17: #{_lambda_.8} parent=5 // pred_check
      %p152 = pneg %p151
    $region18: #{_lambda_.8} parent=5 // pred_check_branch
      %154 = sbr.rel (%p152) target = $region20
    $region19: #{_lambda_.8} parent=5 // pred_region
      // Predicated region
      $region21: #{_lambda_.8} parent=19 // pred_check
        %p155 = pneg %p52
      $region22: #{_lambda_.8} parent=19 // pred_check_branch
        %157 = sbr.rel (%p155) target = $region24
      $region23: #{_lambda_.8} parent=19 // pred_region
        %s158 = smul.u32 3, %s17
        %p159 = scmp.lt.s32.totalorder %s18, 3
        %s160 = scalar_select %p159, %s18, 3
        %p161 = scmp.lt.s32.totalorder %s16, 1
        %s162 = scalar_select %p161, %s16, 1
        %p163 = scmp.lt.s32.totalorder %s158, 2
        %s164 = scalar_select %p163, %s158, 2
        %s165 = smul.addr %s164, 2
        %s166 = smul.addr %s162, 6
        %s167 = sadd.s32 %s165, %s166
        %s168 = smul.addr %s160, 12
        %s169 = sadd.s32 %s167, %s168
        %s170 = smul.addr %s169, 8
        %s171 = scalar_lea.vmem %s0, %s170
        %s172 = smul.u32 3, %s17
      $region24: #{_lambda_.8} parent=19 // pred_fallthru
        _
      // Predicated region
      $region25: #{_lambda_.8} parent=19 // pred_check
        %p173 = pneg %p78
      $region26: #{_lambda_.8} parent=19 // pred_check_branch
        %175 = sbr.rel (%p173) target = $region28
      $region27: #{_lambda_.8} parent=19 // pred_region
        %p176 = scmp.lt.s32.totalorder %s18, 3
        %s177 = scalar_select %p176, %s18, 3
        %s178 = smul.addr %s177, 512
        %s179 = smul.addr %s178, 8
        %s180 = scalar_lea.vmem %s1, %s179
      $region28: #{_lambda_.8} parent=19 // pred_fallthru
        _
    $region20: #{_lambda_.8} parent=5 // pred_fallthru
      _
    %p181 = scmp.le.s32.totalorder 1, %s9
    %p182 = scmp.lt.s32.totalorder %s9, 9
    %p183 = pnand %p181, %p182
    %p184 = pneg %p183
    // Predicated region
    $region29: #{_lambda_.8} parent=5 // pred_check
      _
    $region30: #{_lambda_.8} parent=5 // pred_check_branch
      %186 = sbr.rel (%p183) target = $region32
    $region31: #{_lambda_.8} parent=5 // pred_region
      %s187 = ssub.s32 %s9, 1
      %s188 = smul.u32 3, %s20
      %p189 = scmp.lt.s32.totalorder %s21, 3
      %s190 = scalar_select %p189, %s21, 3
      %p191 = scmp.lt.s32.totalorder %s19, 1
      %s192 = scalar_select %p191, %s19, 1
      %p193 = scmp.lt.s32.totalorder %s188, 2
      %s194 = scalar_select %p193, %s188, 2
      %s195 = smul.addr %s194, 2
      %s196 = smul.addr %s192, 6
      %s197 = sadd.s32 %s195, %s196
      %s198 = smul.addr %s190, 12
      %s199 = sadd.s32 %s197, %s198
      %s200 = smul.addr %s199, 8
      %s201 = scalar_lea.vmem %s0, %s200
      %p202 = pneg %p58
      %p203 = pneg %p55
      %p204 = scmp.lt.s32.totalorder %s21, 3
      %s205 = scalar_select %p204, %s21, 3
      %s206 = smul.addr %s205, 512
      %s207 = smul.addr %s206, 8
      %s208 = scalar_lea.vmem %s1, %s207
      %p209 = pneg %p84
      %p210 = pneg %p81
      %p211 = pneg %p105
      %p212 = pneg %p102
      %p213 = pneg %p133
      %p214 = pneg %p130
      %s215 = smul.u32 2, %s20
      %p216 = scmp.lt.s32.totalorder %s19, 1
      %s217 = scalar_select %p216, %s19, 1
      %p218 = scmp.lt.s32.totalorder %s215, 1
      %s219 = scalar_select %p218, %s215, 1
      %s220 = smul.addr %s219, 4
      %s221 = smul.addr %s217, 8
      %s222 = sadd.s32 %s220, %s221
      %s223 = smul.addr %s222, 8
      %s224 = scalar_lea.vmem %s3, %s223
      %s225 = smul.u32 3, %s20
      %p226 = scmp.lt.s32.totalorder %s21, 3
      %s227 = scalar_select %p226, %s21, 3
      %p228 = scmp.lt.s32.totalorder %s19, 1
      %s229 = scalar_select %p228, %s19, 1
      %p230 = scmp.lt.s32.totalorder %s225, 2
      %s231 = scalar_select %p230, %s225, 2
      %s232 = smul.addr %s231, 2
      %s233 = smul.addr %s229, 6
      %s234 = sadd.s32 %s232, %s233
      %s235 = smul.addr %s227, 12
      %s236 = sadd.s32 %s234, %s235
      %s237 = smul.addr %s236, 8
      %s238 = scalar_lea.vmem %s0, %s237
      %s239 = smul.u32 3, %s20
      %p240 = scmp.lt.s32.totalorder %s21, 3
      %s241 = scalar_select %p240, %s21, 3
      %s242 = smul.addr %s241, 512
      %s243 = smul.addr %s242, 8
      %s244 = scalar_lea.vmem %s1, %s243
      %s245 = smul.u32 2, %s20
      %p246 = scmp.lt.s32.totalorder %s19, 1
      %s247 = scalar_select %p246, %s19, 1
      %p248 = scmp.lt.s32.totalorder %s245, 1
      %s249 = scalar_select %p248, %s245, 1
      %s250 = smul.addr %s249, 4
      %s251 = smul.addr %s247, 8
      %s252 = sadd.s32 %s250, %s251
      %s253 = smul.addr %s252, 8
      %s254 = scalar_lea.vmem %s3, %s253
      %s255 = smul.u32 2, %s20
      %p256 = scmp.eq.s32.totalorder %s21, 0
      // Predicated region
      $region33: #{_lambda_.8} parent=31 // pred_check
        %p257 = pneg %p256
      $region34: #{_lambda_.8} parent=31 // pred_check_branch
        %259 = sbr.rel (%p257) target = $region36
      $region35: #{_lambda_.8} parent=31 // pred_region
        %260 = vst [vmem:[#allocation2] sm:$0xff] 0.0
        %261 = vst [vmem:[#allocation2 + $0x8] sm:$0xff] 0.0
        %262 = vst [vmem:[#allocation2 + $0x10] sm:$0xff] 0.0
        %263 = vst [vmem:[#allocation2 + $0x18] sm:$0xff] 0.0
        %264 = vst [vmem:[#allocation2 + $0x20] sm:$0x1] 0.0
        %265 = vst [vmem:[#allocation2 + $0x28] sm:$0x1] 0.0
        %266 = vst [vmem:[#allocation2 + $0x30] sm:$0x1] 0.0
        %267 = vst [vmem:[#allocation2 + $0x38] sm:$0x1] 0.0
      $region36: #{_lambda_.8} parent=31 // pred_fallthru
        _
      %v268 = vld [vmem:[#allocation2] sm:$0xff]
      %v269 = vld [vmem:[#allocation2 + $0x8] sm:$0xff]
      %v270 = vld [vmem:[#allocation2 + $0x10] sm:$0xff]
      %v271 = vld [vmem:[#allocation2 + $0x18] sm:$0xff]
      %v272 = vld [vmem:[#allocation2 + $0x20] sm:$0x1]
      %v273 = vld [vmem:[#allocation2 + $0x28] sm:$0x1]
      %v274 = vld [vmem:[#allocation2 + $0x30] sm:$0x1]
      %v275 = vld [vmem:[#allocation2 + $0x38] sm:$0x1]
      %v276 = vld [vmem:[%s238] sm:$0x7]
      %v277 = vld [vmem:[%s238 + $0x8] sm:$0x7]
      %v278 = vld [vmem:[%s238 + $0x10] sm:$0x7]
      %v279 = vld [vmem:[%s238 + $0x18] sm:$0x7]
      %v280 = vld [vmem:[%s238 + $0x20] sm:$0x7]
      %v281 = vld [vmem:[%s238 + $0x28] sm:$0x7]
      %v288 = vcombine.low %v276, %v277
      %v290 = vunpack.c.l.s4 1966171168
      %v291 = vunpack.c.0.s8 %v290
      %v292 = vlaneseq
      %v293 = vshrl.u32 %v292, 7
      %v294 = vsub.s32 %v291, %v293
      %v295 = vrot.slane %v288, %v294
      %v296 = vcombine.high %v295, %v295
      %v298 = vunpack.c.l.s4 1966171168
      %v299 = vunpack.c.0.s8 %v298
      %v300 = vlaneseq
      %v301 = vshrl.u32 %v300, 7
      %v302 = vsub.s32 %v299, %v301
      %v303 = vrot.slane %v295, %v302
      %v305 = vunpack.c.l.s4 1966171168
      %v306 = vunpack.c.0.s8 %v305
      %v307 = vlaneseq
      %v308 = vshrl.u32 %v307, 7
      %v309 = vsub.s32 %v306, %v308
      %v310 = vrot.slane %v296, %v309
      %v311 = vcombine.high %v303, %v303
      %v312 = vcombine.low %v278, %v279
      %v314 = vunpack.c.l.s4 1966171168
      %v315 = vunpack.c.0.s8 %v314
      %v316 = vlaneseq
      %v317 = vshrl.u32 %v316, 7
      %v318 = vsub.s32 %v315, %v317
      %v319 = vrot.slane %v312, %v318
      %v320 = vcombine.high %v319, %v319
      %v322 = vunpack.c.l.s4 1966171168
      %v323 = vunpack.c.0.s8 %v322
      %v324 = vlaneseq
      %v325 = vshrl.u32 %v324, 7
      %v326 = vsub.s32 %v323, %v325
      %v327 = vrot.slane %v319, %v326
      %v329 = vunpack.c.l.s4 1966171168
      %v330 = vunpack.c.0.s8 %v329
      %v331 = vlaneseq
      %v332 = vshrl.u32 %v331, 7
      %v333 = vsub.s32 %v330, %v332
      %v334 = vrot.slane %v320, %v333
      %v335 = vcombine.high %v327, %v327
      %v336 = vcombine.low %v280, %v281
      %v338 = vunpack.c.l.s4 1966171168
      %v339 = vunpack.c.0.s8 %v338
      %v340 = vlaneseq
      %v341 = vshrl.u32 %v340, 7
      %v342 = vsub.s32 %v339, %v341
      %v343 = vrot.slane %v336, %v342
      %v344 = vcombine.high %v343, %v343
      %v346 = vunpack.c.l.s4 1966171168
      %v347 = vunpack.c.0.s8 %v346
      %v348 = vlaneseq
      %v349 = vshrl.u32 %v348, 7
      %v350 = vsub.s32 %v347, %v349
      %v351 = vrot.slane %v343, %v350
      %v353 = vunpack.c.l.s4 1966171168
      %v354 = vunpack.c.0.s8 %v353
      %v355 = vlaneseq
      %v356 = vshrl.u32 %v355, 7
      %v357 = vsub.s32 %v354, %v356
      %v358 = vrot.slane %v344, %v357
      %v359 = vcombine.high %v351, %v351
      %v360 = vld [vmem:[%s244] sm:$0xff]
      %v361 = vld [vmem:[%s244 + $0x8] sm:$0xff]
      %v362 = vld [vmem:[%s244 + $0x10] sm:$0xff]
      %v363 = vld [vmem:[%s244 + $0x18] sm:$0xff]
      %v364 = vld [vmem:[%s244 + $0x20] sm:$0xff]
      %v365 = vld [vmem:[%s244 + $0x28] sm:$0xff]
      %v366 = vld [vmem:[%s244 + $0x30] sm:$0xff]
      %v367 = vld [vmem:[%s244 + $0x38] sm:$0xff]
      %v368 = vld [vmem:[%s244 + $0x40] sm:$0xff]
      %v369 = vld [vmem:[%s244 + $0x48] sm:$0xff]
      %v370 = vld [vmem:[%s244 + $0x50] sm:$0xff]
      %v371 = vld [vmem:[%s244 + $0x58] sm:$0xff]
      %v372 = vld [vmem:[%s244 + $0x60] sm:$0xff]
      %v373 = vld [vmem:[%s244 + $0x68] sm:$0xff]
      %v374 = vld [vmem:[%s244 + $0x70] sm:$0xff]
      %v375 = vld [vmem:[%s244 + $0x78] sm:$0xff]
      %v376 = vld [vmem:[%s244 + $0x80] sm:$0xff]
      %v377 = vld [vmem:[%s244 + $0x88] sm:$0xff]
      %v378 = vld [vmem:[%s244 + $0x90] sm:$0xff]
      %v379 = vld [vmem:[%s244 + $0x98] sm:$0xff]
      %v380 = vld [vmem:[%s244 + $0xa0] sm:$0xff]
      %v381 = vld [vmem:[%s244 + $0xa8] sm:$0xff]
      %v382 = vld [vmem:[%s244 + $0xb0] sm:$0xff]
      %v383 = vld [vmem:[%s244 + $0xb8] sm:$0xff]
      %v384 = vld [vmem:[%s244 + $0xc0] sm:$0xff]
      %v385 = vld [vmem:[%s244 + $0xc8] sm:$0xff]
      %v386 = vld [vmem:[%s244 + $0xd0] sm:$0xff]
      %v387 = vld [vmem:[%s244 + $0xd8] sm:$0xff]
      %v388 = vld [vmem:[%s244 + $0xe0] sm:$0xff]
      %v389 = vld [vmem:[%s244 + $0xe8] sm:$0xff]
      %v390 = vld [vmem:[%s244 + $0xf0] sm:$0xff]
      %v391 = vld [vmem:[%s244 + $0xf8] sm:$0xff]
      %v392 = vld [vmem:[%s244 + $0x100] sm:$0xff]
      %v393 = vld [vmem:[%s244 + $0x108] sm:$0xff]
      %v394 = vld [vmem:[%s244 + $0x110] sm:$0xff]
      %v395 = vld [vmem:[%s244 + $0x118] sm:$0xff]
      %v396 = vld [vmem:[%s244 + $0x120] sm:$0xff]
      %v397 = vld [vmem:[%s244 + $0x128] sm:$0xff]
      %v398 = vld [vmem:[%s244 + $0x130] sm:$0xff]
      %v399 = vld [vmem:[%s244 + $0x138] sm:$0xff]
      %v400 = vld [vmem:[%s244 + $0x140] sm:$0xff]
      %v401 = vld [vmem:[%s244 + $0x148] sm:$0xff]
      %v402 = vld [vmem:[%s244 + $0x150] sm:$0xff]
      %v403 = vld [vmem:[%s244 + $0x158] sm:$0xff]
      %v404 = vld [vmem:[%s244 + $0x160] sm:$0xff]
      %v405 = vld [vmem:[%s244 + $0x168] sm:$0xff]
      %v406 = vld [vmem:[%s244 + $0x170] sm:$0xff]
      %v407 = vld [vmem:[%s244 + $0x178] sm:$0xff]
      %v408 = vld [vmem:[%s244 + $0x180] sm:$0xff]
      %v409 = vld [vmem:[%s244 + $0x188] sm:$0xff]
      %v410 = vld [vmem:[%s244 + $0x190] sm:$0xff]
      %v411 = vld [vmem:[%s244 + $0x198] sm:$0xff]
      %v412 = vld [vmem:[%s244 + $0x1a0] sm:$0xff]
      %v413 = vld [vmem:[%s244 + $0x1a8] sm:$0xff]
      %v414 = vld [vmem:[%s244 + $0x1b0] sm:$0xff]
      %v415 = vld [vmem:[%s244 + $0x1b8] sm:$0xff]
      %v416 = vld [vmem:[%s244 + $0x1c0] sm:$0xff]
      %v417 = vld [vmem:[%s244 + $0x1c8] sm:$0xff]
      %v418 = vld [vmem:[%s244 + $0x1d0] sm:$0xff]
      %v419 = vld [vmem:[%s244 + $0x1d8] sm:$0xff]
      %v420 = vld [vmem:[%s244 + $0x1e0] sm:$0xff]
      %v421 = vld [vmem:[%s244 + $0x1e8] sm:$0xff]
      %v422 = vld [vmem:[%s244 + $0x1f0] sm:$0xff]
      %v423 = vld [vmem:[%s244 + $0x1f8] sm:$0xff]
      %v424 = vld [vmem:[%s244 + $0x200] sm:$0xff]
      %v425 = vld [vmem:[%s244 + $0x208] sm:$0xff]
      %v426 = vld [vmem:[%s244 + $0x210] sm:$0xff]
      %v427 = vld [vmem:[%s244 + $0x218] sm:$0xff]
      %v428 = vld [vmem:[%s244 + $0x220] sm:$0xff]
      %v429 = vld [vmem:[%s244 + $0x228] sm:$0xff]
      %v430 = vld [vmem:[%s244 + $0x230] sm:$0xff]
      %v431 = vld [vmem:[%s244 + $0x238] sm:$0xff]
      %v432 = vld [vmem:[%s244 + $0x240] sm:$0xff]
      %v433 = vld [vmem:[%s244 + $0x248] sm:$0xff]
      %v434 = vld [vmem:[%s244 + $0x250] sm:$0xff]
      %v435 = vld [vmem:[%s244 + $0x258] sm:$0xff]
      %v436 = vld [vmem:[%s244 + $0x260] sm:$0xff]
      %v437 = vld [vmem:[%s244 + $0x268] sm:$0xff]
      %v438 = vld [vmem:[%s244 + $0x270] sm:$0xff]
      %v439 = vld [vmem:[%s244 + $0x278] sm:$0xff]
      %v440 = vld [vmem:[%s244 + $0x280] sm:$0xff]
      %v441 = vld [vmem:[%s244 + $0x288] sm:$0xff]
      %v442 = vld [vmem:[%s244 + $0x290] sm:$0xff]
      %v443 = vld [vmem:[%s244 + $0x298] sm:$0xff]
      %v444 = vld [vmem:[%s244 + $0x2a0] sm:$0xff]
      %v445 = vld [vmem:[%s244 + $0x2a8] sm:$0xff]
      %v446 = vld [vmem:[%s244 + $0x2b0] sm:$0xff]
      %v447 = vld [vmem:[%s244 + $0x2b8] sm:$0xff]
      %v448 = vld [vmem:[%s244 + $0x2c0] sm:$0xff]
      %v449 = vld [vmem:[%s244 + $0x2c8] sm:$0xff]
      %v450 = vld [vmem:[%s244 + $0x2d0] sm:$0xff]
      %v451 = vld [vmem:[%s244 + $0x2d8] sm:$0xff]
      %v452 = vld [vmem:[%s244 + $0x2e0] sm:$0xff]
      %v453 = vld [vmem:[%s244 + $0x2e8] sm:$0xff]
      %v454 = vld [vmem:[%s244 + $0x2f0] sm:$0xff]
      %v455 = vld [vmem:[%s244 + $0x2f8] sm:$0xff]
      %v456 = vld [vmem:[%s244 + $0x300] sm:$0xff]
      %v457 = vld [vmem:[%s244 + $0x308] sm:$0xff]
      %v458 = vld [vmem:[%s244 + $0x310] sm:$0xff]
      %v459 = vld [vmem:[%s244 + $0x318] sm:$0xff]
      %v460 = vld [vmem:[%s244 + $0x320] sm:$0xff]
      %v461 = vld [vmem:[%s244 + $0x328] sm:$0xff]
      %v462 = vld [vmem:[%s244 + $0x330] sm:$0xff]
      %v463 = vld [vmem:[%s244 + $0x338] sm:$0xff]
      %v464 = vld [vmem:[%s244 + $0x340] sm:$0xff]
      %v465 = vld [vmem:[%s244 + $0x348] sm:$0xff]
      %v466 = vld [vmem:[%s244 + $0x350] sm:$0xff]
      %v467 = vld [vmem:[%s244 + $0x358] sm:$0xff]
      %v468 = vld [vmem:[%s244 + $0x360] sm:$0xff]
      %v469 = vld [vmem:[%s244 + $0x368] sm:$0xff]
      %v470 = vld [vmem:[%s244 + $0x370] sm:$0xff]
      %v471 = vld [vmem:[%s244 + $0x378] sm:$0xff]
      %v472 = vld [vmem:[%s244 + $0x380] sm:$0xff]
      %v473 = vld [vmem:[%s244 + $0x388] sm:$0xff]
      %v474 = vld [vmem:[%s244 + $0x390] sm:$0xff]
      %v475 = vld [vmem:[%s244 + $0x398] sm:$0xff]
      %v476 = vld [vmem:[%s244 + $0x3a0] sm:$0xff]
      %v477 = vld [vmem:[%s244 + $0x3a8] sm:$0xff]
      %v478 = vld [vmem:[%s244 + $0x3b0] sm:$0xff]
      %v479 = vld [vmem:[%s244 + $0x3b8] sm:$0xff]
      %v480 = vld [vmem:[%s244 + $0x3c0] sm:$0xff]
      %v481 = vld [vmem:[%s244 + $0x3c8] sm:$0xff]
      %v482 = vld [vmem:[%s244 + $0x3d0] sm:$0xff]
      %v483 = vld [vmem:[%s244 + $0x3d8] sm:$0xff]
      %v484 = vld [vmem:[%s244 + $0x3e0] sm:$0xff]
      %v485 = vld [vmem:[%s244 + $0x3e8] sm:$0xff]
      %v486 = vld [vmem:[%s244 + $0x3f0] sm:$0xff]
      %v487 = vld [vmem:[%s244 + $0x3f8] sm:$0xff]
      %v488 = vcombine.low %v303, %v310
      %v489 = vcombine.low %v311, %v327
      %v490 = vcombine.low %v334, %v335
      %v491 = vcombine.low %v351, %v358
      %v493 = vunpack.c.l.s4 1966171168
      %v494 = vunpack.c.0.s8 %v493
      %v495 = vlaneseq
      %v496 = vshrl.u32 %v495, 7
      %v497 = vsub.s32 %v494, %v496
      %v498 = vrot.slane %v488, %v497
      %v500 = vunpack.c.l.s4 1966171168
      %v501 = vunpack.c.0.s8 %v500
      %v502 = vlaneseq
      %v503 = vshrl.u32 %v502, 7
      %v504 = vsub.s32 %v501, %v503
      %v505 = vrot.slane %v489, %v504
      %v507 = vunpack.c.l.s4 1966171168
      %v508 = vunpack.c.0.s8 %v507
      %v509 = vlaneseq
      %v510 = vshrl.u32 %v509, 7
      %v511 = vsub.s32 %v508, %v510
      %v512 = vrot.slane %v490, %v511
      %v514 = vunpack.c.l.s4 1966171168
      %v515 = vunpack.c.0.s8 %v514
      %v516 = vlaneseq
      %v517 = vshrl.u32 %v516, 7
      %v518 = vsub.s32 %v515, %v517
      %v519 = vrot.slane %v491, %v518
      %v520 = vcombine.low %v498, %v505
      %v521 = vcombine.high %v498, %v505
      %v522 = vcombine.low %v512, %v519
      %v523 = vcombine.high %v512, %v519
      %v525 = vunpack.c.l.s4 1966171168
      %v526 = vunpack.c.0.s8 %v525
      %v527 = vlaneseq
      %v528 = vshrl.u32 %v527, 7
      %v529 = vsub.s32 %v526, %v528
      %v530 = vrot.slane %v520, %v529
      %v532 = vunpack.c.l.s4 1966171168
      %v533 = vunpack.c.0.s8 %v532
      %v534 = vlaneseq
      %v535 = vshrl.u32 %v534, 7
      %v536 = vsub.s32 %v533, %v535
      %v537 = vrot.slane %v521, %v536
      %v539 = vunpack.c.l.s4 1966171168
      %v540 = vunpack.c.0.s8 %v539
      %v541 = vlaneseq
      %v542 = vshrl.u32 %v541, 7
      %v543 = vsub.s32 %v540, %v542
      %v544 = vrot.slane %v522, %v543
      %v546 = vunpack.c.l.s4 1966171168
      %v547 = vunpack.c.0.s8 %v546
      %v548 = vlaneseq
      %v549 = vshrl.u32 %v548, 7
      %v550 = vsub.s32 %v547, %v549
      %v551 = vrot.slane %v523, %v550
      %v552 = vcombine.low %v530, %v544
      %v553 = vcombine.low %v537, %v551
      %v555 = vunpack.c.l.s4 1966171168
      %v556 = vunpack.c.0.s8 %v555
      %v557 = vlaneseq
      %v558 = vshrl.u32 %v557, 7
      %v559 = vsub.s32 %v556, %v558
      %v560 = vrot.slane %v359, %v559
      %v561 = vcombine.high %v560, %v560
      %v563 = vunpack.c.l.s4 1966171168
      %v564 = vunpack.c.0.s8 %v563
      %v565 = vlaneseq
      %v566 = vshrl.u32 %v565, 7
      %v567 = vsub.s32 %v564, %v566
      %v568 = vrot.slane %v560, %v567
      %v570 = vunpack.c.l.s4 1966171168
      %v571 = vunpack.c.0.s8 %v570
      %v572 = vlaneseq
      %v573 = vshrl.u32 %v572, 7
      %v574 = vsub.s32 %v571, %v573
      %v575 = vrot.slane %v561, %v574
      %580 = vmatprep.subr.mxu0 %v361
      %581 = vmatpush1.msra.mxu0 %v360
      %582 = vmatprep.subr.mxu0 %v365
      %583 = vmatpush1.msra.mxu0 %v364
      %584 = vmatprep.subr.mxu0 %v369
      %585 = vmatpush1.msra.mxu0 %v368
      %586 = vmatprep.subr.mxu0 %v373
      %587 = vmatpush1.msra.mxu0 %v372
      %588 = vmatprep.subr.mxu0 %v377
      %589 = vmatpush1.msra.mxu0 %v376
      %590 = vmatprep.subr.mxu0 %v381
      %591 = vmatpush1.msra.mxu0 %v380
      %592 = vmatprep.subr.mxu0 %v385
      %593 = vmatpush1.msra.mxu0 %v384
      %594 = vmatprep.subr.mxu0 %v389
      %595 = vmatpush1.msra.mxu0 %v388
      %596 = vmatprep.subr.mxu0 %v393
      %597 = vmatpush1.msra.mxu0 %v392
      %598 = vmatprep.subr.mxu0 %v397
      %599 = vmatpush1.msra.mxu0 %v396
      %600 = vmatprep.subr.mxu0 %v401
      %601 = vmatpush1.msra.mxu0 %v400
      %602 = vmatprep.subr.mxu0 %v405
      %603 = vmatpush1.msra.mxu0 %v404
      %604 = vmatprep.subr.mxu0 %v409
      %605 = vmatpush1.msra.mxu0 %v408
      %606 = vmatprep.subr.mxu0 %v413
      %607 = vmatpush1.msra.mxu0 %v412
      %608 = vmatprep.subr.mxu0 %v417
      %609 = vmatpush1.msra.mxu0 %v416
      %610 = vmatprep.subr.mxu0 %v421
      %611 = vmatpush1.msra.mxu0 %v420
      %612 = vmatprep.subr.mxu0 %v425
      %613 = vmatpush1.msra.mxu0 %v424
      %614 = vmatprep.subr.mxu0 %v429
      %615 = vmatpush1.msra.mxu0 %v428
      %616 = vmatprep.subr.mxu0 %v433
      %617 = vmatpush1.msra.mxu0 %v432
      %618 = vmatprep.subr.mxu0 %v437
      %619 = vmatpush1.msra.mxu0 %v436
      %620 = vmatprep.subr.mxu0 %v441
      %621 = vmatpush1.msra.mxu0 %v440
      %622 = vmatprep.subr.mxu0 %v445
      %623 = vmatpush1.msra.mxu0 %v444
      %624 = vmatprep.subr.mxu0 %v449
      %625 = vmatpush1.msra.mxu0 %v448
      %626 = vmatprep.subr.mxu0 %v453
      %627 = vmatpush1.msra.mxu0 %v452
      %628 = vmatprep.subr.mxu0 %v457
      %629 = vmatpush1.msra.mxu0 %v456
      %630 = vmatprep.subr.mxu0 %v461
      %631 = vmatpush1.msra.mxu0 %v460
      %632 = vmatprep.subr.mxu0 %v465
      %633 = vmatpush1.msra.mxu0 %v464
      %634 = vmatprep.subr.mxu0 %v469
      %635 = vmatpush1.msra.mxu0 %v468
      %636 = vmatprep.subr.mxu0 %v473
      %637 = vmatpush1.msra.mxu0 %v472
      %638 = vmatprep.subr.mxu0 %v477
      %639 = vmatpush1.msra.mxu0 %v476
      %640 = vmatprep.subr.mxu0 %v481
      %641 = vmatpush1.msra.mxu0 %v480
      %642 = vmatprep.subr.mxu0 %v485
      %643 = vmatpush1.msra.mxu0 %v484
      %644 = vmatprep.mubr.f32.mxu0 %v553
      %645 = vmatmul.mubr.f32.gmra.mrb[0].mxu0 %v552
      %v646 = vpop.f32.mrb[0].mxu0
      %v647 = vadd.f32 0.0, %v646
      %v648 = vpop.f32.mrb[0].mxu0
      %v649 = vadd.f32 0.0, %v648
      %650 = vmatprep.mubr.f32.mxu0 %v575
      %651 = vmatmul.mubr.f32.gmra.mrb[0].mxu0 %v568
      %v652 = vpop.f32.mrb[0].mxu0
      %v653 = vadd.f32 0.0, %v652
      %v654 = vpop.f32.mrb[0].mxu0
      %v655 = vadd.f32 0.0, %v654
      %656 = vdwg.mxu0
      %657 = vmatprep.subr.mxu0 %v363
      %658 = vmatpush1.msra.mxu0 %v362
      %659 = vmatprep.subr.mxu0 %v367
      %660 = vmatpush1.msra.mxu0 %v366
      %661 = vmatprep.subr.mxu0 %v371
      %662 = vmatpush1.msra.mxu0 %v370
      %663 = vmatprep.subr.mxu0 %v375
      %664 = vmatpush1.msra.mxu0 %v374
      %665 = vmatprep.subr.mxu0 %v379
      %666 = vmatpush1.msra.mxu0 %v378
      %667 = vmatprep.subr.mxu0 %v383
      %668 = vmatpush1.msra.mxu0 %v382
      %669 = vmatprep.subr.mxu0 %v387
      %670 = vmatpush1.msra.mxu0 %v386
      %671 = vmatprep.subr.mxu0 %v391
      %672 = vmatpush1.msra.mxu0 %v390
      %673 = vmatprep.subr.mxu0 %v395
      %674 = vmatpush1.msra.mxu0 %v394
      %675 = vmatprep.subr.mxu0 %v399
      %676 = vmatpush1.msra.mxu0 %v398
      %677 = vmatprep.subr.mxu0 %v403
      %678 = vmatpush1.msra.mxu0 %v402
      %679 = vmatprep.subr.mxu0 %v407
      %680 = vmatpush1.msra.mxu0 %v406
      %681 = vmatprep.subr.mxu0 %v411
      %682 = vmatpush1.msra.mxu0 %v410
      %683 = vmatprep.subr.mxu0 %v415
      %684 = vmatpush1.msra.mxu0 %v414
      %685 = vmatprep.subr.mxu0 %v419
      %686 = vmatpush1.msra.mxu0 %v418
      %687 = vmatprep.subr.mxu0 %v423
      %688 = vmatpush1.msra.mxu0 %v422
      %689 = vmatprep.subr.mxu0 %v427
      %690 = vmatpush1.msra.mxu0 %v426
      %691 = vmatprep.subr.mxu0 %v431
      %692 = vmatpush1.msra.mxu0 %v430
      %693 = vmatprep.subr.mxu0 %v435
      %694 = vmatpush1.msra.mxu0 %v434
      %695 = vmatprep.subr.mxu0 %v439
      %696 = vmatpush1.msra.mxu0 %v438
      %697 = vmatprep.subr.mxu0 %v443
      %698 = vmatpush1.msra.mxu0 %v442
      %699 = vmatprep.subr.mxu0 %v447
      %700 = vmatpush1.msra.mxu0 %v446
      %701 = vmatprep.subr.mxu0 %v451
      %702 = vmatpush1.msra.mxu0 %v450
      %703 = vmatprep.subr.mxu0 %v455
      %704 = vmatpush1.msra.mxu0 %v454
      %705 = vmatprep.subr.mxu0 %v459
      %706 = vmatpush1.msra.mxu0 %v458
      %707 = vmatprep.subr.mxu0 %v463
      %708 = vmatpush1.msra.mxu0 %v462
      %709 = vmatprep.subr.mxu0 %v467
      %710 = vmatpush1.msra.mxu0 %v466
      %711 = vmatprep.subr.mxu0 %v471
      %712 = vmatpush1.msra.mxu0 %v470
      %713 = vmatprep.subr.mxu0 %v475
      %714 = vmatpush1.msra.mxu0 %v474
      %715 = vmatprep.subr.mxu0 %v479
      %716 = vmatpush1.msra.mxu0 %v478
      %717 = vmatprep.subr.mxu0 %v483
      %718 = vmatpush1.msra.mxu0 %v482
      %719 = vmatprep.subr.mxu0 %v487
      %720 = vmatpush1.msra.mxu0 %v486
      %721 = vmatprep.mubr.f32.mxu0 %v553
      %722 = vmatmul.mubr.f32.gmra.mrb[0].mxu0 %v552
      %v723 = vpop.f32.mrb[0].mxu0
      %v724 = vadd.f32 0.0, %v723
      %v725 = vpop.f32.mrb[0].mxu0
      %v726 = vadd.f32 0.0, %v725
      %727 = vmatprep.mubr.f32.mxu0 %v575
      %728 = vmatmul.mubr.f32.gmra.mrb[0].mxu0 %v568
      %v729 = vpop.f32.mrb[0].mxu0
      %v730 = vadd.f32 0.0, %v729
      %v731 = vpop.f32.mrb[0].mxu0
      %v732 = vadd.f32 0.0, %v731
      %733 = vdwg.mxu0
      %v734 = vadd.f32 %v268, %v647
      %v735 = vadd.f32 %v269, %v649
      %v736 = vadd.f32 %v270, %v724
      %v737 = vadd.f32 %v271, %v726
      %v738 = vadd.f32 %v272, %v653
      %v739 = vadd.f32 %v273, %v655
      %v740 = vadd.f32 %v274, %v730
      %v741 = vadd.f32 %v275, %v732
      %v742 = vld [vmem:[%s238] sm:$0xe]
      %v743 = vld [vmem:[%s238 + $0x8] sm:$0xe]
      %v744 = vld [vmem:[%s238 + $0x10] sm:$0xe]
      %v745 = vld [vmem:[%s238 + $0x18] sm:$0xe]
      %v746 = vld [vmem:[%s238 + $0x20] sm:$0xe]
      %v747 = vld [vmem:[%s238 + $0x28] sm:$0xe]
      %v754 = vcombine.low %v742, %v743
      %v756 = vunpack.c.l.s4 1966171168
      %v757 = vunpack.c.0.s8 %v756
      %v758 = vlaneseq
      %v759 = vshrl.u32 %v758, 7
      %v760 = vsub.s32 %v757, %v759
      %v761 = vrot.slane %v754, %v760
      %v762 = vcombine.high %v761, %v761
      %v764 = vunpack.c.l.s4 1966171168
      %v765 = vunpack.c.0.s8 %v764
      %v766 = vlaneseq
      %v767 = vshrl.u32 %v766, 7
      %v768 = vsub.s32 %v765, %v767
      %v769 = vrot.slane %v761, %v768
      %v771 = vunpack.c.l.s4 1966171168
      %v772 = vunpack.c.0.s8 %v771
      %v773 = vlaneseq
      %v774 = vshrl.u32 %v773, 7
      %v775 = vsub.s32 %v772, %v774
      %v776 = vrot.slane %v762, %v775
      %v777 = vcombine.high %v769, %v769
      %v778 = vcombine.high %v776, %v776
      %v779 = vcombine.low %v744, %v745
      %v781 = vunpack.c.l.s4 1966171168
      %v782 = vunpack.c.0.s8 %v781
      %v783 = vlaneseq
      %v784 = vshrl.u32 %v783, 7
      %v785 = vsub.s32 %v782, %v784
      %v786 = vrot.slane %v779, %v785
      %v787 = vcombine.high %v786, %v786
      %v789 = vunpack.c.l.s4 1966171168
      %v790 = vunpack.c.0.s8 %v789
      %v791 = vlaneseq
      %v792 = vshrl.u32 %v791, 7
      %v793 = vsub.s32 %v790, %v792
      %v794 = vrot.slane %v786, %v793
      %v796 = vunpack.c.l.s4 1966171168
      %v797 = vunpack.c.0.s8 %v796
      %v798 = vlaneseq
      %v799 = vshrl.u32 %v798, 7
      %v800 = vsub.s32 %v797, %v799
      %v801 = vrot.slane %v787, %v800
      %v802 = vcombine.high %v794, %v794
      %v803 = vcombine.high %v801, %v801
      %v804 = vcombine.low %v746, %v747
      %v806 = vunpack.c.l.s4 1966171168
      %v807 = vunpack.c.0.s8 %v806
      %v808 = vlaneseq
      %v809 = vshrl.u32 %v808, 7
      %v810 = vsub.s32 %v807, %v809
      %v811 = vrot.slane %v804, %v810
      %v812 = vcombine.high %v811, %v811
      %v814 = vunpack.c.l.s4 1966171168
      %v815 = vunpack.c.0.s8 %v814
      %v816 = vlaneseq
      %v817 = vshrl.u32 %v816, 7
      %v818 = vsub.s32 %v815, %v817
      %v819 = vrot.slane %v811, %v818
      %v821 = vunpack.c.l.s4 1966171168
      %v822 = vunpack.c.0.s8 %v821
      %v823 = vlaneseq
      %v824 = vshrl.u32 %v823, 7
      %v825 = vsub.s32 %v822, %v824
      %v826 = vrot.slane %v812, %v825
      %v827 = vcombine.high %v819, %v819
      %v828 = vcombine.high %v826, %v826
      %s829 = scalar_lea.vmem %s244, 1024
      %v830 = vld [vmem:[%s829] sm:$0xff]
      %v831 = vld [vmem:[%s829 + $0x8] sm:$0xff]
      %v832 = vld [vmem:[%s829 + $0x10] sm:$0xff]
      %v833 = vld [vmem:[%s829 + $0x18] sm:$0xff]
      %v834 = vld [vmem:[%s829 + $0x20] sm:$0xff]
      %v835 = vld [vmem:[%s829 + $0x28] sm:$0xff]
      %v836 = vld [vmem:[%s829 + $0x30] sm:$0xff]
      %v837 = vld [vmem:[%s829 + $0x38] sm:$0xff]
      %v838 = vld [vmem:[%s829 + $0x40] sm:$0xff]
      %v839 = vld [vmem:[%s829 + $0x48] sm:$0xff]
      %v840 = vld [vmem:[%s829 + $0x50] sm:$0xff]
      %v841 = vld [vmem:[%s829 + $0x58] sm:$0xff]
      %v842 = vld [vmem:[%s829 + $0x60] sm:$0xff]
      %v843 = vld [vmem:[%s829 + $0x68] sm:$0xff]
      %v844 = vld [vmem:[%s829 + $0x70] sm:$0xff]
      %v845 = vld [vmem:[%s829 + $0x78] sm:$0xff]
      %v846 = vld [vmem:[%s829 + $0x80] sm:$0xff]
      %v847 = vld [vmem:[%s829 + $0x88] sm:$0xff]
      %v848 = vld [vmem:[%s829 + $0x90] sm:$0xff]
      %v849 = vld [vmem:[%s829 + $0x98] sm:$0xff]
      %v850 = vld [vmem:[%s829 + $0xa0] sm:$0xff]
      %v851 = vld [vmem:[%s829 + $0xa8] sm:$0xff]
      %v852 = vld [vmem:[%s829 + $0xb0] sm:$0xff]
      %v853 = vld [vmem:[%s829 + $0xb8] sm:$0xff]
      %v854 = vld [vmem:[%s829 + $0xc0] sm:$0xff]
      %v855 = vld [vmem:[%s829 + $0xc8] sm:$0xff]
      %v856 = vld [vmem:[%s829 + $0xd0] sm:$0xff]
      %v857 = vld [vmem:[%s829 + $0xd8] sm:$0xff]
      %v858 = vld [vmem:[%s829 + $0xe0] sm:$0xff]
      %v859 = vld [vmem:[%s829 + $0xe8] sm:$0xff]
      %v860 = vld [vmem:[%s829 + $0xf0] sm:$0xff]
      %v861 = vld [vmem:[%s829 + $0xf8] sm:$0xff]
      %v862 = vld [vmem:[%s829 + $0x100] sm:$0xff]
      %v863 = vld [vmem:[%s829 + $0x108] sm:$0xff]
      %v864 = vld [vmem:[%s829 + $0x110] sm:$0xff]
      %v865 = vld [vmem:[%s829 + $0x118] sm:$0xff]
      %v866 = vld [vmem:[%s829 + $0x120] sm:$0xff]
      %v867 = vld [vmem:[%s829 + $0x128] sm:$0xff]
      %v868 = vld [vmem:[%s829 + $0x130] sm:$0xff]
      %v869 = vld [vmem:[%s829 + $0x138] sm:$0xff]
      %v870 = vld [vmem:[%s829 + $0x140] sm:$0xff]
      %v871 = vld [vmem:[%s829 + $0x148] sm:$0xff]
      %v872 = vld [vmem:[%s829 + $0x150] sm:$0xff]
      %v873 = vld [vmem:[%s829 + $0x158] sm:$0xff]
      %v874 = vld [vmem:[%s829 + $0x160] sm:$0xff]
      %v875 = vld [vmem:[%s829 + $0x168] sm:$0xff]
      %v876 = vld [vmem:[%s829 + $0x170] sm:$0xff]
      %v877 = vld [vmem:[%s829 + $0x178] sm:$0xff]
      %v878 = vld [vmem:[%s829 + $0x180] sm:$0xff]
      %v879 = vld [vmem:[%s829 + $0x188] sm:$0xff]
      %v880 = vld [vmem:[%s829 + $0x190] sm:$0xff]
      %v881 = vld [vmem:[%s829 + $0x198] sm:$0xff]
      %v882 = vld [vmem:[%s829 + $0x1a0] sm:$0xff]
      %v883 = vld [vmem:[%s829 + $0x1a8] sm:$0xff]
      %v884 = vld [vmem:[%s829 + $0x1b0] sm:$0xff]
      %v885 = vld [vmem:[%s829 + $0x1b8] sm:$0xff]
      %v886 = vld [vmem:[%s829 + $0x1c0] sm:$0xff]
      %v887 = vld [vmem:[%s829 + $0x1c8] sm:$0xff]
      %v888 = vld [vmem:[%s829 + $0x1d0] sm:$0xff]
      %v889 = vld [vmem:[%s829 + $0x1d8] sm:$0xff]
      %v890 = vld [vmem:[%s829 + $0x1e0] sm:$0xff]
      %v891 = vld [vmem:[%s829 + $0x1e8] sm:$0xff]
      %v892 = vld [vmem:[%s829 + $0x1f0] sm:$0xff]
      %v893 = vld [vmem:[%s829 + $0x1f8] sm:$0xff]
      %v894 = vld [vmem:[%s829 + $0x200] sm:$0xff]
      %v895 = vld [vmem:[%s829 + $0x208] sm:$0xff]
      %v896 = vld [vmem:[%s829 + $0x210] sm:$0xff]
      %v897 = vld [vmem:[%s829 + $0x218] sm:$0xff]
      %v898 = vld [vmem:[%s829 + $0x220] sm:$0xff]
      %v899 = vld [vmem:[%s829 + $0x228] sm:$0xff]
      %v900 = vld [vmem:[%s829 + $0x230] sm:$0xff]
      %v901 = vld [vmem:[%s829 + $0x238] sm:$0xff]
      %v902 = vld [vmem:[%s829 + $0x240] sm:$0xff]
      %v903 = vld [vmem:[%s829 + $0x248] sm:$0xff]
      %v904 = vld [vmem:[%s829 + $0x250] sm:$0xff]
      %v905 = vld [vmem:[%s829 + $0x258] sm:$0xff]
      %v906 = vld [vmem:[%s829 + $0x260] sm:$0xff]
      %v907 = vld [vmem:[%s829 + $0x268] sm:$0xff]
      %v908 = vld [vmem:[%s829 + $0x270] sm:$0xff]
      %v909 = vld [vmem:[%s829 + $0x278] sm:$0xff]
      %v910 = vld [vmem:[%s829 + $0x280] sm:$0xff]
      %v911 = vld [vmem:[%s829 + $0x288] sm:$0xff]
      %v912 = vld [vmem:[%s829 + $0x290] sm:$0xff]
      %v913 = vld [vmem:[%s829 + $0x298] sm:$0xff]
      %v914 = vld [vmem:[%s829 + $0x2a0] sm:$0xff]
      %v915 = vld [vmem:[%s829 + $0x2a8] sm:$0xff]
      %v916 = vld [vmem:[%s829 + $0x2b0] sm:$0xff]
      %v917 = vld [vmem:[%s829 + $0x2b8] sm:$0xff]
      %v918 = vld [vmem:[%s829 + $0x2c0] sm:$0xff]
      %v919 = vld [vmem:[%s829 + $0x2c8] sm:$0xff]
      %v920 = vld [vmem:[%s829 + $0x2d0] sm:$0xff]
      %v921 = vld [vmem:[%s829 + $0x2d8] sm:$0xff]
      %v922 = vld [vmem:[%s829 + $0x2e0] sm:$0xff]
      %v923 = vld [vmem:[%s829 + $0x2e8] sm:$0xff]
      %v924 = vld [vmem:[%s829 + $0x2f0] sm:$0xff]
      %v925 = vld [vmem:[%s829 + $0x2f8] sm:$0xff]
      %v926 = vld [vmem:[%s829 + $0x300] sm:$0xff]
      %v927 = vld [vmem:[%s829 + $0x308] sm:$0xff]
      %v928 = vld [vmem:[%s829 + $0x310] sm:$0xff]
      %v929 = vld [vmem:[%s829 + $0x318] sm:$0xff]
      %v930 = vld [vmem:[%s829 + $0x320] sm:$0xff]
      %v931 = vld [vmem:[%s829 + $0x328] sm:$0xff]
      %v932 = vld [vmem:[%s829 + $0x330] sm:$0xff]
      %v933 = vld [vmem:[%s829 + $0x338] sm:$0xff]
      %v934 = vld [vmem:[%s829 + $0x340] sm:$0xff]
      %v935 = vld [vmem:[%s829 + $0x348] sm:$0xff]
      %v936 = vld [vmem:[%s829 + $0x350] sm:$0xff]
      %v937 = vld [vmem:[%s829 + $0x358] sm:$0xff]
      %v938 = vld [vmem:[%s829 + $0x360] sm:$0xff]
      %v939 = vld [vmem:[%s829 + $0x368] sm:$0xff]
      %v940 = vld [vmem:[%s829 + $0x370] sm:$0xff]
      %v941 = vld [vmem:[%s829 + $0x378] sm:$0xff]
      %v942 = vld [vmem:[%s829 + $0x380] sm:$0xff]
      %v943 = vld [vmem:[%s829 + $0x388] sm:$0xff]
      %v944 = vld [vmem:[%s829 + $0x390] sm:$0xff]
      %v945 = vld [vmem:[%s829 + $0x398] sm:$0xff]
      %v946 = vld [vmem:[%s829 + $0x3a0] sm:$0xff]
      %v947 = vld [vmem:[%s829 + $0x3a8] sm:$0xff]
      %v948 = vld [vmem:[%s829 + $0x3b0] sm:$0xff]
      %v949 = vld [vmem:[%s829 + $0x3b8] sm:$0xff]
      %v950 = vld [vmem:[%s829 + $0x3c0] sm:$0xff]
      %v951 = vld [vmem:[%s829 + $0x3c8] sm:$0xff]
      %v952 = vld [vmem:[%s829 + $0x3d0] sm:$0xff]
      %v953 = vld [vmem:[%s829 + $0x3d8] sm:$0xff]
      %v954 = vld [vmem:[%s829 + $0x3e0] sm:$0xff]
      %v955 = vld [vmem:[%s829 + $0x3e8] sm:$0xff]
      %v956 = vld [vmem:[%s829 + $0x3f0] sm:$0xff]
      %v957 = vld [vmem:[%s829 + $0x3f8] sm:$0xff]
      %v958 = vcombine.low %v776, %v777
      %v959 = vcombine.low %v778, %v801
      %v960 = vcombine.low %v802, %v803
      %v961 = vcombine.low %v826, %v827
      %v963 = vunpack.c.l.s4 1966171168
      %v964 = vunpack.c.0.s8 %v963
      %v965 = vlaneseq
      %v966 = vshrl.u32 %v965, 7
      %v967 = vsub.s32 %v964, %v966
      %v968 = vrot.slane %v958, %v967
      %v970 = vunpack.c.l.s4 1966171168
      %v971 = vunpack.c.0.s8 %v970
      %v972 = vlaneseq
      %v973 = vshrl.u32 %v972, 7
      %v974 = vsub.s32 %v971, %v973
      %v975 = vrot.slane %v959, %v974
      %v977 = vunpack.c.l.s4 1966171168
      %v978 = vunpack.c.0.s8 %v977
      %v979 = vlaneseq
      %v980 = vshrl.u32 %v979, 7
      %v981 = vsub.s32 %v978, %v980
      %v982 = vrot.slane %v960, %v981
      %v984 = vunpack.c.l.s4 1966171168
      %v985 = vunpack.c.0.s8 %v984
      %v986 = vlaneseq
      %v987 = vshrl.u32 %v986, 7
      %v988 = vsub.s32 %v985, %v987
      %v989 = vrot.slane %v961, %v988
      %v990 = vcombine.low %v968, %v975
      %v991 = vcombine.high %v968, %v975
      %v992 = vcombine.low %v982, %v989
      %v993 = vcombine.high %v982, %v989
      %v995 = vunpack.c.l.s4 1966171168
      %v996 = vunpack.c.0.s8 %v995
      %v997 = vlaneseq
      %v998 = vshrl.u32 %v997, 7
      %v999 = vsub.s32 %v996, %v998
      %v1000 = vrot.slane %v990, %v999
      %v1002 = vunpack.c.l.s4 1966171168
      %v1003 = vunpack.c.0.s8 %v1002
      %v1004 = vlaneseq
      %v1005 = vshrl.u32 %v1004, 7
      %v1006 = vsub.s32 %v1003, %v1005
      %v1007 = vrot.slane %v991, %v1006
      %v1009 = vunpack.c.l.s4 1966171168
      %v1010 = vunpack.c.0.s8 %v1009
      %v1011 = vlaneseq
      %v1012 = vshrl.u32 %v1011, 7
      %v1013 = vsub.s32 %v1010, %v1012
      %v1014 = vrot.slane %v992, %v1013
      %v1016 = vunpack.c.l.s4 1966171168
      %v1017 = vunpack.c.0.s8 %v1016
      %v1018 = vlaneseq
      %v1019 = vshrl.u32 %v1018, 7
      %v1020 = vsub.s32 %v1017, %v1019
      %v1021 = vrot.slane %v993, %v1020
      %v1022 = vcombine.low %v1000, %v1014
      %v1023 = vcombine.low %v1007, %v1021
      %v1025 = vunpack.c.l.s4 1966171168
      %v1026 = vunpack.c.0.s8 %v1025
      %v1027 = vlaneseq
      %v1028 = vshrl.u32 %v1027, 7
      %v1029 = vsub.s32 %v1026, %v1028
      %v1030 = vrot.slane %v828, %v1029
      %v1031 = vcombine.high %v1030, %v1030
      %v1033 = vunpack.c.l.s4 1966171168
      %v1034 = vunpack.c.0.s8 %v1033
      %v1035 = vlaneseq
      %v1036 = vshrl.u32 %v1035, 7
      %v1037 = vsub.s32 %v1034, %v1036
      %v1038 = vrot.slane %v1030, %v1037
      %v1040 = vunpack.c.l.s4 1966171168
      %v1041 = vunpack.c.0.s8 %v1040
      %v1042 = vlaneseq
      %v1043 = vshrl.u32 %v1042, 7
      %v1044 = vsub.s32 %v1041, %v1043
      %v1045 = vrot.slane %v1031, %v1044
      %1050 = vmatprep.subr.mxu0 %v831
      %1051 = vmatpush1.msra.mxu0 %v830
      %1052 = vmatprep.subr.mxu0 %v835
      %1053 = vmatpush1.msra.mxu0 %v834
      %1054 = vmatprep.subr.mxu0 %v839
      %1055 = vmatpush1.msra.mxu0 %v838
      %1056 = vmatprep.subr.mxu0 %v843
      %1057 = vmatpush1.msra.mxu0 %v842
      %1058 = vmatprep.subr.mxu0 %v847
      %1059 = vmatpush1.msra.mxu0 %v846
      %1060 = vmatprep.subr.mxu0 %v851
      %1061 = vmatpush1.msra.mxu0 %v850
      %1062 = vmatprep.subr.mxu0 %v855
      %1063 = vmatpush1.msra.mxu0 %v854
      %1064 = vmatprep.subr.mxu0 %v859
      %1065 = vmatpush1.msra.mxu0 %v858
      %1066 = vmatprep.subr.mxu0 %v863
      %1067 = vmatpush1.msra.mxu0 %v862
      %1068 = vmatprep.subr.mxu0 %v867
      %1069 = vmatpush1.msra.mxu0 %v866
      %1070 = vmatprep.subr.mxu0 %v871
      %1071 = vmatpush1.msra.mxu0 %v870
      %1072 = vmatprep.subr.mxu0 %v875
      %1073 = vmatpush1.msra.mxu0 %v874
      %1074 = vmatprep.subr.mxu0 %v879
      %1075 = vmatpush1.msra.mxu0 %v878
      %1076 = vmatprep.subr.mxu0 %v883
      %1077 = vmatpush1.msra.mxu0 %v882
      %1078 = vmatprep.subr.mxu0 %v887
      %1079 = vmatpush1.msra.mxu0 %v886
      %1080 = vmatprep.subr.mxu0 %v891
      %1081 = vmatpush1.msra.mxu0 %v890
      %1082 = vmatprep.subr.mxu0 %v895
      %1083 = vmatpush1.msra.mxu0 %v894
      %1084 = vmatprep.subr.mxu0 %v899
      %1085 = vmatpush1.msra.mxu0 %v898
      %1086 = vmatprep.subr.mxu0 %v903
      %1087 = vmatpush1.msra.mxu0 %v902
      %1088 = vmatprep.subr.mxu0 %v907
      %1089 = vmatpush1.msra.mxu0 %v906
      %1090 = vmatprep.subr.mxu0 %v911
      %1091 = vmatpush1.msra.mxu0 %v910
      %1092 = vmatprep.subr.mxu0 %v915
      %1093 = vmatpush1.msra.mxu0 %v914
      %1094 = vmatprep.subr.mxu0 %v919
      %1095 = vmatpush1.msra.mxu0 %v918
      %1096 = vmatprep.subr.mxu0 %v923
      %1097 = vmatpush1.msra.mxu0 %v922
      %1098 = vmatprep.subr.mxu0 %v927
      %1099 = vmatpush1.msra.mxu0 %v926
      %1100 = vmatprep.subr.mxu0 %v931
      %1101 = vmatpush1.msra.mxu0 %v930
      %1102 = vmatprep.subr.mxu0 %v935
      %1103 = vmatpush1.msra.mxu0 %v934
      %1104 = vmatprep.subr.mxu0 %v939
      %1105 = vmatpush1.msra.mxu0 %v938
      %1106 = vmatprep.subr.mxu0 %v943
      %1107 = vmatpush1.msra.mxu0 %v942
      %1108 = vmatprep.subr.mxu0 %v947
      %1109 = vmatpush1.msra.mxu0 %v946
      %1110 = vmatprep.subr.mxu0 %v951
      %1111 = vmatpush1.msra.mxu0 %v950
      %1112 = vmatprep.subr.mxu0 %v955
      %1113 = vmatpush1.msra.mxu0 %v954
      %1114 = vmatprep.mubr.f32.mxu0 %v1023
      %1115 = vmatmul.mubr.f32.gmra.mrb[0].mxu0 %v1022
      %v1116 = vpop.f32.mrb[0].mxu0
      %v1117 = vadd.f32 0.0, %v1116
      %v1118 = vpop.f32.mrb[0].mxu0
      %v1119 = vadd.f32 0.0, %v1118
      %1120 = vmatprep.mubr.f32.mxu0 %v1045
      %1121 = vmatmul.mubr.f32.gmra.mrb[0].mxu0 %v1038
      %v1122 = vpop.f32.mrb[0].mxu0
      %v1123 = vadd.f32 0.0, %v1122
      %v1124 = vpop.f32.mrb[0].mxu0
      %v1125 = vadd.f32 0.0, %v1124
      %1126 = vdwg.mxu0
      %1127 = vmatprep.subr.mxu0 %v833
      %1128 = vmatpush1.msra.mxu0 %v832
      %1129 = vmatprep.subr.mxu0 %v837
      %1130 = vmatpush1.msra.mxu0 %v836
      %1131 = vmatprep.subr.mxu0 %v841
      %1132 = vmatpush1.msra.mxu0 %v840
      %1133 = vmatprep.subr.mxu0 %v845
      %1134 = vmatpush1.msra.mxu0 %v844
      %1135 = vmatprep.subr.mxu0 %v849
      %1136 = vmatpush1.msra.mxu0 %v848
      %1137 = vmatprep.subr.mxu0 %v853
      %1138 = vmatpush1.msra.mxu0 %v852
      %1139 = vmatprep.subr.mxu0 %v857
      %1140 = vmatpush1.msra.mxu0 %v856
      %1141 = vmatprep.subr.mxu0 %v861
      %1142 = vmatpush1.msra.mxu0 %v860
      %1143 = vmatprep.subr.mxu0 %v865
      %1144 = vmatpush1.msra.mxu0 %v864
      %1145 = vmatprep.subr.mxu0 %v869
      %1146 = vmatpush1.msra.mxu0 %v868
      %1147 = vmatprep.subr.mxu0 %v873
      %1148 = vmatpush1.msra.mxu0 %v872
      %1149 = vmatprep.subr.mxu0 %v877
      %1150 = vmatpush1.msra.mxu0 %v876
      %1151 = vmatprep.subr.mxu0 %v881
      %1152 = vmatpush1.msra.mxu0 %v880
      %1153 = vmatprep.subr.mxu0 %v885
      %1154 = vmatpush1.msra.mxu0 %v884
      %1155 = vmatprep.subr.mxu0 %v889
      %1156 = vmatpush1.msra.mxu0 %v888
      %1157 = vmatprep.subr.mxu0 %v893
      %1158 = vmatpush1.msra.mxu0 %v892
      %1159 = vmatprep.subr.mxu0 %v897
      %1160 = vmatpush1.msra.mxu0 %v896
      %1161 = vmatprep.subr.mxu0 %v901
      %1162 = vmatpush1.msra.mxu0 %v900
      %1163 = vmatprep.subr.mxu0 %v905
      %1164 = vmatpush1.msra.mxu0 %v904
      %1165 = vmatprep.subr.mxu0 %v909
      %1166 = vmatpush1.msra.mxu0 %v908
      %1167 = vmatprep.subr.mxu0 %v913
      %1168 = vmatpush1.msra.mxu0 %v912
      %1169 = vmatprep.subr.mxu0 %v917
      %1170 = vmatpush1.msra.mxu0 %v916
      %1171 = vmatprep.subr.mxu0 %v921
      %1172 = vmatpush1.msra.mxu0 %v920
      %1173 = vmatprep.subr.mxu0 %v925
      %1174 = vmatpush1.msra.mxu0 %v924
      %1175 = vmatprep.subr.mxu0 %v929
      %1176 = vmatpush1.msra.mxu0 %v928
      %1177 = vmatprep.subr.mxu0 %v933
      %1178 = vmatpush1.msra.mxu0 %v932
      %1179 = vmatprep.subr.mxu0 %v937
      %1180 = vmatpush1.msra.mxu0 %v936
      %1181 = vmatprep.subr.mxu0 %v941
      %1182 = vmatpush1.msra.mxu0 %v940
      %1183 = vmatprep.subr.mxu0 %v945
      %1184 = vmatpush1.msra.mxu0 %v944
      %1185 = vmatprep.subr.mxu0 %v949
      %1186 = vmatpush1.msra.mxu0 %v948
      %1187 = vmatprep.subr.mxu0 %v953
      %1188 = vmatpush1.msra.mxu0 %v952
      %1189 = vmatprep.subr.mxu0 %v957
      %1190 = vmatpush1.msra.mxu0 %v956
      %1191 = vmatprep.mubr.f32.mxu0 %v1023
      %1192 = vmatmul.mubr.f32.gmra.mrb[0].mxu0 %v1022
      %v1193 = vpop.f32.mrb[0].mxu0
      %v1194 = vadd.f32 0.0, %v1193
      %v1195 = vpop.f32.mrb[0].mxu0
      %v1196 = vadd.f32 0.0, %v1195
      %1197 = vmatprep.mubr.f32.mxu0 %v1045
      %1198 = vmatmul.mubr.f32.gmra.mrb[0].mxu0 %v1038
      %v1199 = vpop.f32.mrb[0].mxu0
      %v1200 = vadd.f32 0.0, %v1199
      %v1201 = vpop.f32.mrb[0].mxu0
      %v1202 = vadd.f32 0.0, %v1201
      %1203 = vdwg.mxu0
      %v1204 = vadd.f32 %v734, %v1117
      %v1205 = vadd.f32 %v735, %v1119
      %v1206 = vadd.f32 %v736, %v1194
      %v1207 = vadd.f32 %v737, %v1196
      %v1208 = vadd.f32 %v738, %v1123
      %v1209 = vadd.f32 %v739, %v1125
      %v1210 = vadd.f32 %v740, %v1200
      %v1211 = vadd.f32 %v741, %v1202
      %v1212 = vld [vmem:[%s238] sm:$0x1c]
      %v1213 = vld [vmem:[%s238 + $0x8] sm:$0x1c]
      %v1214 = vld [vmem:[%s238 + $0x10] sm:$0x1c]
      %v1215 = vld [vmem:[%s238 + $0x18] sm:$0x1c]
      %v1216 = vld [vmem:[%s238 + $0x20] sm:$0x1c]
      %v1217 = vld [vmem:[%s238 + $0x28] sm:$0x1c]
      %v1224 = vcombine.low %v1212, %v1213
      %v1225 = vcombine.high %v1212, %v1213
      %v1227 = vunpack.c.l.s4 1966171168
      %v1228 = vunpack.c.0.s8 %v1227
      %v1229 = vlaneseq
      %v1230 = vshrl.u32 %v1229, 7
      %v1231 = vsub.s32 %v1228, %v1230
      %v1232 = vrot.slane %v1224, %v1231
      %v1234 = vunpack.c.l.s4 1966171168
      %v1235 = vunpack.c.0.s8 %v1234
      %v1236 = vlaneseq
      %v1237 = vshrl.u32 %v1236, 7
      %v1238 = vsub.s32 %v1235, %v1237
      %v1239 = vrot.slane %v1225, %v1238
      %v1240 = vcombine.high %v1232, %v1232
      %v1242 = vunpack.c.l.s4 1966171168
      %v1243 = vunpack.c.0.s8 %v1242
      %v1244 = vlaneseq
      %v1245 = vshrl.u32 %v1244, 7
      %v1246 = vsub.s32 %v1243, %v1245
      %v1247 = vrot.slane %v1232, %v1246
      %v1249 = vunpack.c.l.s4 1966171168
      %v1250 = vunpack.c.0.s8 %v1249
      %v1251 = vlaneseq
      %v1252 = vshrl.u32 %v1251, 7
      %v1253 = vsub.s32 %v1250, %v1252
      %v1254 = vrot.slane %v1239, %v1253
      %v1256 = vunpack.c.l.s4 1966171168
      %v1257 = vunpack.c.0.s8 %v1256
      %v1258 = vlaneseq
      %v1259 = vshrl.u32 %v1258, 7
      %v1260 = vsub.s32 %v1257, %v1259
      %v1261 = vrot.slane %v1240, %v1260
      %v1262 = vcombine.high %v1247, %v1247
      %v1263 = vcombine.high %v1261, %v1261
      %v1264 = vcombine.low %v1214, %v1215
      %v1265 = vcombine.high %v1214, %v1215
      %v1267 = vunpack.c.l.s4 1966171168
      %v1268 = vunpack.c.0.s8 %v1267
      %v1269 = vlaneseq
      %v1270 = vshrl.u32 %v1269, 7
      %v1271 = vsub.s32 %v1268, %v1270
      %v1272 = vrot.slane %v1264, %v1271
      %v1274 = vunpack.c.l.s4 1966171168
      %v1275 = vunpack.c.0.s8 %v1274
      %v1276 = vlaneseq
      %v1277 = vshrl.u32 %v1276, 7
      %v1278 = vsub.s32 %v1275, %v1277
      %v1279 = vrot.slane %v1265, %v1278
      %v1280 = vcombine.high %v1272, %v1272
      %v1282 = vunpack.c.l.s4 1966171168
      %v1283 = vunpack.c.0.s8 %v1282
      %v1284 = vlaneseq
      %v1285 = vshrl.u32 %v1284, 7
      %v1286 = vsub.s32 %v1283, %v1285
      %v1287 = vrot.slane %v1272, %v1286
      %v1289 = vunpack.c.l.s4 1966171168
      %v1290 = vunpack.c.0.s8 %v1289
      %v1291 = vlaneseq
      %v1292 = vshrl.u32 %v1291, 7
      %v1293 = vsub.s32 %v1290, %v1292
      %v1294 = vrot.slane %v1279, %v1293
      %v1296 = vunpack.c.l.s4 1966171168
      %v1297 = vunpack.c.0.s8 %v1296
      %v1298 = vlaneseq
      %v1299 = vshrl.u32 %v1298, 7
      %v1300 = vsub.s32 %v1297, %v1299
      %v1301 = vrot.slane %v1280, %v1300
      %v1302 = vcombine.high %v1287, %v1287
      %v1303 = vcombine.high %v1301, %v1301
      %v1304 = vcombine.low %v1216, %v1217
      %v1305 = vcombine.high %v1216, %v1217
      %v1307 = vunpack.c.l.s4 1966171168
      %v1308 = vunpack.c.0.s8 %v1307
      %v1309 = vlaneseq
      %v1310 = vshrl.u32 %v1309, 7
      %v1311 = vsub.s32 %v1308, %v1310
      %v1312 = vrot.slane %v1304, %v1311
      %v1314 = vunpack.c.l.s4 1966171168
      %v1315 = vunpack.c.0.s8 %v1314
      %v1316 = vlaneseq
      %v1317 = vshrl.u32 %v1316, 7
      %v1318 = vsub.s32 %v1315, %v1317
      %v1319 = vrot.slane %v1305, %v1318
      %v1320 = vcombine.high %v1312, %v1312
      %v1322 = vunpack.c.l.s4 1966171168
      %v1323 = vunpack.c.0.s8 %v1322
      %v1324 = vlaneseq
      %v1325 = vshrl.u32 %v1324, 7
      %v1326 = vsub.s32 %v1323, %v1325
      %v1327 = vrot.slane %v1312, %v1326
      %v1329 = vunpack.c.l.s4 1966171168
      %v1330 = vunpack.c.0.s8 %v1329
      %v1331 = vlaneseq
      %v1332 = vshrl.u32 %v1331, 7
      %v1333 = vsub.s32 %v1330, %v1332
      %v1334 = vrot.slane %v1319, %v1333
      %v1336 = vunpack.c.l.s4 1966171168
      %v1337 = vunpack.c.0.s8 %v1336
      %v1338 = vlaneseq
      %v1339 = vshrl.u32 %v1338, 7
      %v1340 = vsub.s32 %v1337, %v1339
      %v1341 = vrot.slane %v1320, %v1340
      %v1342 = vcombine.high %v1327, %v1327
      %v1343 = vcombine.high %v1341, %v1341
      %s1344 = scalar_lea.vmem %s244, 2048
      %v1345 = vld [vmem:[%s1344] sm:$0xff]
      %v1346 = vld [vmem:[%s1344 + $0x8] sm:$0xff]
      %v1347 = vld [vmem:[%s1344 + $0x10] sm:$0xff]
      %v1348 = vld [vmem:[%s1344 + $0x18] sm:$0xff]
      %v1349 = vld [vmem:[%s1344 + $0x20] sm:$0xff]
      %v1350 = vld [vmem:[%s1344 + $0x28] sm:$0xff]
      %v1351 = vld [vmem:[%s1344 + $0x30] sm:$0xff]
      %v1352 = vld [vmem:[%s1344 + $0x38] sm:$0xff]
      %v1353 = vld [vmem:[%s1344 + $0x40] sm:$0xff]
      %v1354 = vld [vmem:[%s1344 + $0x48] sm:$0xff]
      %v1355 = vld [vmem:[%s1344 + $0x50] sm:$0xff]
      %v1356 = vld [vmem:[%s1344 + $0x58] sm:$0xff]
      %v1357 = vld [vmem:[%s1344 + $0x60] sm:$0xff]
      %v1358 = vld [vmem:[%s1344 + $0x68] sm:$0xff]
      %v1359 = vld [vmem:[%s1344 + $0x70] sm:$0xff]
      %v1360 = vld [vmem:[%s1344 + $0x78] sm:$0xff]
      %v1361 = vld [vmem:[%s1344 + $0x80] sm:$0xff]
      %v1362 = vld [vmem:[%s1344 + $0x88] sm:$0xff]
      %v1363 = vld [vmem:[%s1344 + $0x90] sm:$0xff]
      %v1364 = vld [vmem:[%s1344 + $0x98] sm:$0xff]
      %v1365 = vld [vmem:[%s1344 + $0xa0] sm:$0xff]
      %v1366 = vld [vmem:[%s1344 + $0xa8] sm:$0xff]
      %v1367 = vld [vmem:[%s1344 + $0xb0] sm:$0xff]
      %v1368 = vld [vmem:[%s1344 + $0xb8] sm:$0xff]
      %v1369 = vld [vmem:[%s1344 + $0xc0] sm:$0xff]
      %v1370 = vld [vmem:[%s1344 + $0xc8] sm:$0xff]
      %v1371 = vld [vmem:[%s1344 + $0xd0] sm:$0xff]
      %v1372 = vld [vmem:[%s1344 + $0xd8] sm:$0xff]
      %v1373 = vld [vmem:[%s1344 + $0xe0] sm:$0xff]
      %v1374 = vld [vmem:[%s1344 + $0xe8] sm:$0xff]
      %v1375 = vld [vmem:[%s1344 + $0xf0] sm:$0xff]
      %v1376 = vld [vmem:[%s1344 + $0xf8] sm:$0xff]
      %v1377 = vld [vmem:[%s1344 + $0x100] sm:$0xff]
      %v1378 = vld [vmem:[%s1344 + $0x108] sm:$0xff]
      %v1379 = vld [vmem:[%s1344 + $0x110] sm:$0xff]
      %v1380 = vld [vmem:[%s1344 + $0x118] sm:$0xff]
      %v1381 = vld [vmem:[%s1344 + $0x120] sm:$0xff]
      %v1382 = vld [vmem:[%s1344 + $0x128] sm:$0xff]
      %v1383 = vld [vmem:[%s1344 + $0x130] sm:$0xff]
      %v1384 = vld [vmem:[%s1344 + $0x138] sm:$0xff]
      %v1385 = vld [vmem:[%s1344 + $0x140] sm:$0xff]
      %v1386 = vld [vmem:[%s1344 + $0x148] sm:$0xff]
      %v1387 = vld [vmem:[%s1344 + $0x150] sm:$0xff]
      %v1388 = vld [vmem:[%s1344 + $0x158] sm:$0xff]
      %v1389 = vld [vmem:[%s1344 + $0x160] sm:$0xff]
      %v1390 = vld [vmem:[%s1344 + $0x168] sm:$0xff]
      %v1391 = vld [vmem:[%s1344 + $0x170] sm:$0xff]
      %v1392 = vld [vmem:[%s1344 + $0x178] sm:$0xff]
      %v1393 = vld [vmem:[%s1344 + $0x180] sm:$0xff]
      %v1394 = vld [vmem:[%s1344 + $0x188] sm:$0xff]
      %v1395 = vld [vmem:[%s1344 + $0x190] sm:$0xff]
      %v1396 = vld [vmem:[%s1344 + $0x198] sm:$0xff]
      %v1397 = vld [vmem:[%s1344 + $0x1a0] sm:$0xff]
      %v1398 = vld [vmem:[%s1344 + $0x1a8] sm:$0xff]
      %v1399 = vld [vmem:[%s1344 + $0x1b0] sm:$0xff]
      %v1400 = vld [vmem:[%s1344 + $0x1b8] sm:$0xff]
      %v1401 = vld [vmem:[%s1344 + $0x1c0] sm:$0xff]
      %v1402 = vld [vmem:[%s1344 + $0x1c8] sm:$0xff]
      %v1403 = vld [vmem:[%s1344 + $0x1d0] sm:$0xff]
      %v1404 = vld [vmem:[%s1344 + $0x1d8] sm:$0xff]
      %v1405 = vld [vmem:[%s1344 + $0x1e0] sm:$0xff]
      %v1406 = vld [vmem:[%s1344 + $0x1e8] sm:$0xff]
      %v1407 = vld [vmem:[%s1344 + $0x1f0] sm:$0xff]
      %v1408 = vld [vmem:[%s1344 + $0x1f8] sm:$0xff]
      %v1409 = vld [vmem:[%s1344 + $0x200] sm:$0xff]
      %v1410 = vld [vmem:[%s1344 + $0x208] sm:$0xff]
      %v1411 = vld [vmem:[%s1344 + $0x210] sm:$0xff]
      %v1412 = vld [vmem:[%s1344 + $0x218] sm:$0xff]
      %v1413 = vld [vmem:[%s1344 + $0x220] sm:$0xff]
      %v1414 = vld [vmem:[%s1344 + $0x228] sm:$0xff]
      %v1415 = vld [vmem:[%s1344 + $0x230] sm:$0xff]
      %v1416 = vld [vmem:[%s1344 + $0x238] sm:$0xff]
      %v1417 = vld [vmem:[%s1344 + $0x240] sm:$0xff]
      %v1418 = vld [vmem:[%s1344 + $0x248] sm:$0xff]
      %v1419 = vld [vmem:[%s1344 + $0x250] sm:$0xff]
      %v1420 = vld [vmem:[%s1344 + $0x258] sm:$0xff]
      %v1421 = vld [vmem:[%s1344 + $0x260] sm:$0xff]
      %v1422 = vld [vmem:[%s1344 + $0x268] sm:$0xff]
      %v1423 = vld [vmem:[%s1344 + $0x270] sm:$0xff]
      %v1424 = vld [vmem:[%s1344 + $0x278] sm:$0xff]
      %v1425 = vld [vmem:[%s1344 + $0x280] sm:$0xff]
      %v1426 = vld [vmem:[%s1344 + $0x288] sm:$0xff]
      %v1427 = vld [vmem:[%s1344 + $0x290] sm:$0xff]
      %v1428 = vld [vmem:[%s1344 + $0x298] sm:$0xff]
      %v1429 = vld [vmem:[%s1344 + $0x2a0] sm:$0xff]
      %v1430 = vld [vmem:[%s1344 + $0x2a8] sm:$0xff]
      %v1431 = vld [vmem:[%s1344 + $0x2b0] sm:$0xff]
      %v1432 = vld [vmem:[%s1344 + $0x2b8] sm:$0xff]
      %v1433 = vld [vmem:[%s1344 + $0x2c0] sm:$0xff]
      %v1434 = vld [vmem:[%s1344 + $0x2c8] sm:$0xff]
      %v1435 = vld [vmem:[%s1344 + $0x2d0] sm:$0xff]
      %v1436 = vld [vmem:[%s1344 + $0x2d8] sm:$0xff]
      %v1437 = vld [vmem:[%s1344 + $0x2e0] sm:$0xff]
      %v1438 = vld [vmem:[%s1344 + $0x2e8] sm:$0xff]
      %v1439 = vld [vmem:[%s1344 + $0x2f0] sm:$0xff]
      %v1440 = vld [vmem:[%s1344 + $0x2f8] sm:$0xff]
      %v1441 = vld [vmem:[%s1344 + $0x300] sm:$0xff]
      %v1442 = vld [vmem:[%s1344 + $0x308] sm:$0xff]
      %v1443 = vld [vmem:[%s1344 + $0x310] sm:$0xff]
      %v1444 = vld [vmem:[%s1344 + $0x318] sm:$0xff]
      %v1445 = vld [vmem:[%s1344 + $0x320] sm:$0xff]
      %v1446 = vld [vmem:[%s1344 + $0x328] sm:$0xff]
      %v1447 = vld [vmem:[%s1344 + $0x330] sm:$0xff]
      %v1448 = vld [vmem:[%s1344 + $0x338] sm:$0xff]
      %v1449 = vld [vmem:[%s1344 + $0x340] sm:$0xff]
      %v1450 = vld [vmem:[%s1344 + $0x348] sm:$0xff]
      %v1451 = vld [vmem:[%s1344 + $0x350] sm:$0xff]
      %v1452 = vld [vmem:[%s1344 + $0x358] sm:$0xff]
      %v1453 = vld [vmem:[%s1344 + $0x360] sm:$0xff]
      %v1454 = vld [vmem:[%s1344 + $0x368] sm:$0xff]
      %v1455 = vld [vmem:[%s1344 + $0x370] sm:$0xff]
      %v1456 = vld [vmem:[%s1344 + $0x378] sm:$0xff]
      %v1457 = vld [vmem:[%s1344 + $0x380] sm:$0xff]
      %v1458 = vld [vmem:[%s1344 + $0x388] sm:$0xff]
      %v1459 = vld [vmem:[%s1344 + $0x390] sm:$0xff]
      %v1460 = vld [vmem:[%s1344 + $0x398] sm:$0xff]
      %v1461 = vld [vmem:[%s1344 + $0x3a0] sm:$0xff]
      %v1462 = vld [vmem:[%s1344 + $0x3a8] sm:$0xff]
      %v1463 = vld [vmem:[%s1344 + $0x3b0] sm:$0xff]
      %v1464 = vld [vmem:[%s1344 + $0x3b8] sm:$0xff]
      %v1465 = vld [vmem:[%s1344 + $0x3c0] sm:$0xff]
      %v1466 = vld [vmem:[%s1344 + $0x3c8] sm:$0xff]
      %v1467 = vld [vmem:[%s1344 + $0x3d0] sm:$0xff]
      %v1468 = vld [vmem:[%s1344 + $0x3d8] sm:$0xff]
      %v1469 = vld [vmem:[%s1344 + $0x3e0] sm:$0xff]
      %v1470 = vld [vmem:[%s1344 + $0x3e8] sm:$0xff]
      %v1471 = vld [vmem:[%s1344 + $0x3f0] sm:$0xff]
      %v1472 = vld [vmem:[%s1344 + $0x3f8] sm:$0xff]
      %v1473 = vcombine.low %v1262, %v1263
      %v1474 = vcombine.low %v1254, %v1302
      %v1475 = vcombine.low %v1303, %v1294
      %v1476 = vcombine.low %v1342, %v1343
      %v1478 = vunpack.c.l.s4 1966171168
      %v1479 = vunpack.c.0.s8 %v1478
      %v1480 = vlaneseq
      %v1481 = vshrl.u32 %v1480, 7
      %v1482 = vsub.s32 %v1479, %v1481
      %v1483 = vrot.slane %v1473, %v1482
      %v1485 = vunpack.c.l.s4 1966171168
      %v1486 = vunpack.c.0.s8 %v1485
      %v1487 = vlaneseq
      %v1488 = vshrl.u32 %v1487, 7
      %v1489 = vsub.s32 %v1486, %v1488
      %v1490 = vrot.slane %v1474, %v1489
      %v1492 = vunpack.c.l.s4 1966171168
      %v1493 = vunpack.c.0.s8 %v1492
      %v1494 = vlaneseq
      %v1495 = vshrl.u32 %v1494, 7
      %v1496 = vsub.s32 %v1493, %v1495
      %v1497 = vrot.slane %v1475, %v1496
      %v1499 = vunpack.c.l.s4 1966171168
      %v1500 = vunpack.c.0.s8 %v1499
      %v1501 = vlaneseq
      %v1502 = vshrl.u32 %v1501, 7
      %v1503 = vsub.s32 %v1500, %v1502
      %v1504 = vrot.slane %v1476, %v1503
      %v1505 = vcombine.low %v1483, %v1490
      %v1506 = vcombine.high %v1483, %v1490
      %v1507 = vcombine.low %v1497, %v1504
      %v1508 = vcombine.high %v1497, %v1504
      %v1510 = vunpack.c.l.s4 1966171168
      %v1511 = vunpack.c.0.s8 %v1510
      %v1512 = vlaneseq
      %v1513 = vshrl.u32 %v1512, 7
      %v1514 = vsub.s32 %v1511, %v1513
      %v1515 = vrot.slane %v1505, %v1514
      %v1517 = vunpack.c.l.s4 1966171168
      %v1518 = vunpack.c.0.s8 %v1517
      %v1519 = vlaneseq
      %v1520 = vshrl.u32 %v1519, 7
      %v1521 = vsub.s32 %v1518, %v1520
      %v1522 = vrot.slane %v1506, %v1521
      %v1524 = vunpack.c.l.s4 1966171168
      %v1525 = vunpack.c.0.s8 %v1524
      %v1526 = vlaneseq
      %v1527 = vshrl.u32 %v1526, 7
      %v1528 = vsub.s32 %v1525, %v1527
      %v1529 = vrot.slane %v1507, %v1528
      %v1531 = vunpack.c.l.s4 1966171168
      %v1532 = vunpack.c.0.s8 %v1531
      %v1533 = vlaneseq
      %v1534 = vshrl.u32 %v1533, 7
      %v1535 = vsub.s32 %v1532, %v1534
      %v1536 = vrot.slane %v1508, %v1535
      %v1537 = vcombine.low %v1515, %v1529
      %v1538 = vcombine.low %v1522, %v1536
      %v1540 = vunpack.c.l.s4 1966171168
      %v1541 = vunpack.c.0.s8 %v1540
      %v1542 = vlaneseq
      %v1543 = vshrl.u32 %v1542, 7
      %v1544 = vsub.s32 %v1541, %v1543
      %v1545 = vrot.slane %v1334, %v1544
      %v1546 = vcombine.high %v1545, %v1545
      %v1548 = vunpack.c.l.s4 1966171168
      %v1549 = vunpack.c.0.s8 %v1548
      %v1550 = vlaneseq
      %v1551 = vshrl.u32 %v1550, 7
      %v1552 = vsub.s32 %v1549, %v1551
      %v1553 = vrot.slane %v1545, %v1552
      %v1555 = vunpack.c.l.s4 1966171168
      %v1556 = vunpack.c.0.s8 %v1555
      %v1557 = vlaneseq
      %v1558 = vshrl.u32 %v1557, 7
      %v1559 = vsub.s32 %v1556, %v1558
      %v1560 = vrot.slane %v1546, %v1559
      %1565 = vmatprep.subr.mxu0 %v1346
      %1566 = vmatpush1.msra.mxu0 %v1345
      %1567 = vmatprep.subr.mxu0 %v1350
      %1568 = vmatpush1.msra.mxu0 %v1349
      %1569 = vmatprep.subr.mxu0 %v1354
      %1570 = vmatpush1.msra.mxu0 %v1353
      %1571 = vmatprep.subr.mxu0 %v1358
      %1572 = vmatpush1.msra.mxu0 %v1357
      %1573 = vmatprep.subr.mxu0 %v1362
      %1574 = vmatpush1.msra.mxu0 %v1361
      %1575 = vmatprep.subr.mxu0 %v1366
      %1576 = vmatpush1.msra.mxu0 %v1365
      %1577 = vmatprep.subr.mxu0 %v1370
      %1578 = vmatpush1.msra.mxu0 %v1369
      %1579 = vmatprep.subr.mxu0 %v1374
      %1580 = vmatpush1.msra.mxu0 %v1373
      %1581 = vmatprep.subr.mxu0 %v1378
      %1582 = vmatpush1.msra.mxu0 %v1377
      %1583 = vmatprep.subr.mxu0 %v1382
      %1584 = vmatpush1.msra.mxu0 %v1381
      %1585 = vmatprep.subr.mxu0 %v1386
      %1586 = vmatpush1.msra.mxu0 %v1385
      %1587 = vmatprep.subr.mxu0 %v1390
      %1588 = vmatpush1.msra.mxu0 %v1389
      %1589 = vmatprep.subr.mxu0 %v1394
      %1590 = vmatpush1.msra.mxu0 %v1393
      %1591 = vmatprep.subr.mxu0 %v1398
      %1592 = vmatpush1.msra.mxu0 %v1397
      %1593 = vmatprep.subr.mxu0 %v1402
      %1594 = vmatpush1.msra.mxu0 %v1401
      %1595 = vmatprep.subr.mxu0 %v1406
      %1596 = vmatpush1.msra.mxu0 %v1405
      %1597 = vmatprep.subr.mxu0 %v1410
      %1598 = vmatpush1.msra.mxu0 %v1409
      %1599 = vmatprep.subr.mxu0 %v1414
      %1600 = vmatpush1.msra.mxu0 %v1413
      %1601 = vmatprep.subr.mxu0 %v1418
      %1602 = vmatpush1.msra.mxu0 %v1417
      %1603 = vmatprep.subr.mxu0 %v1422
      %1604 = vmatpush1.msra.mxu0 %v1421
      %1605 = vmatprep.subr.mxu0 %v1426
      %1606 = vmatpush1.msra.mxu0 %v1425
      %1607 = vmatprep.subr.mxu0 %v1430
      %1608 = vmatpush1.msra.mxu0 %v1429
      %1609 = vmatprep.subr.mxu0 %v1434
      %1610 = vmatpush1.msra.mxu0 %v1433
      %1611 = vmatprep.subr.mxu0 %v1438
      %1612 = vmatpush1.msra.mxu0 %v1437
      %1613 = vmatprep.subr.mxu0 %v1442
      %1614 = vmatpush1.msra.mxu0 %v1441
      %1615 = vmatprep.subr.mxu0 %v1446
      %1616 = vmatpush1.msra.mxu0 %v1445
      %1617 = vmatprep.subr.mxu0 %v1450
      %1618 = vmatpush1.msra.mxu0 %v1449
      %1619 = vmatprep.subr.mxu0 %v1454
      %1620 = vmatpush1.msra.mxu0 %v1453
      %1621 = vmatprep.subr.mxu0 %v1458
      %1622 = vmatpush1.msra.mxu0 %v1457
      %1623 = vmatprep.subr.mxu0 %v1462
      %1624 = vmatpush1.msra.mxu0 %v1461
      %1625 = vmatprep.subr.mxu0 %v1466
      %1626 = vmatpush1.msra.mxu0 %v1465
      %1627 = vmatprep.subr.mxu0 %v1470
      %1628 = vmatpush1.msra.mxu0 %v1469
      %1629 = vmatprep.mubr.f32.mxu0 %v1538
      %1630 = vmatmul.mubr.f32.gmra.mrb[0].mxu0 %v1537
      %v1631 = vpop.f32.mrb[0].mxu0
      %v1632 = vadd.f32 0.0, %v1631
      %v1633 = vpop.f32.mrb[0].mxu0
      %v1634 = vadd.f32 0.0, %v1633
      %1635 = vmatprep.mubr.f32.mxu0 %v1560
      %1636 = vmatmul.mubr.f32.gmra.mrb[0].mxu0 %v1553
      %v1637 = vpop.f32.mrb[0].mxu0
      %v1638 = vadd.f32 0.0, %v1637
      %v1639 = vpop.f32.mrb[0].mxu0
      %v1640 = vadd.f32 0.0, %v1639
      %1641 = vdwg.mxu0
      %1642 = vmatprep.subr.mxu0 %v1348
      %1643 = vmatpush1.msra.mxu0 %v1347
      %1644 = vmatprep.subr.mxu0 %v1352
      %1645 = vmatpush1.msra.mxu0 %v1351
      %1646 = vmatprep.subr.mxu0 %v1356
      %1647 = vmatpush1.msra.mxu0 %v1355
      %1648 = vmatprep.subr.mxu0 %v1360
      %1649 = vmatpush1.msra.mxu0 %v1359
      %1650 = vmatprep.subr.mxu0 %v1364
      %1651 = vmatpush1.msra.mxu0 %v1363
      %1652 = vmatprep.subr.mxu0 %v1368
      %1653 = vmatpush1.msra.mxu0 %v1367
      %1654 = vmatprep.subr.mxu0 %v1372
      %1655 = vmatpush1.msra.mxu0 %v1371
      %1656 = vmatprep.subr.mxu0 %v1376
      %1657 = vmatpush1.msra.mxu0 %v1375
      %1658 = vmatprep.subr.mxu0 %v1380
      %1659 = vmatpush1.msra.mxu0 %v1379
      %1660 = vmatprep.subr.mxu0 %v1384
      %1661 = vmatpush1.msra.mxu0 %v1383
      %1662 = vmatprep.subr.mxu0 %v1388
      %1663 = vmatpush1.msra.mxu0 %v1387
      %1664 = vmatprep.subr.mxu0 %v1392
      %1665 = vmatpush1.msra.mxu0 %v1391
      %1666 = vmatprep.subr.mxu0 %v1396
      %1667 = vmatpush1.msra.mxu0 %v1395
      %1668 = vmatprep.subr.mxu0 %v1400
      %1669 = vmatpush1.msra.mxu0 %v1399
      %1670 = vmatprep.subr.mxu0 %v1404
      %1671 = vmatpush1.msra.mxu0 %v1403
      %1672 = vmatprep.subr.mxu0 %v1408
      %1673 = vmatpush1.msra.mxu0 %v1407
      %1674 = vmatprep.subr.mxu0 %v1412
      %1675 = vmatpush1.msra.mxu0 %v1411
      %1676 = vmatprep.subr.mxu0 %v1416
      %1677 = vmatpush1.msra.mxu0 %v1415
      %1678 = vmatprep.subr.mxu0 %v1420
      %1679 = vmatpush1.msra.mxu0 %v1419
      %1680 = vmatprep.subr.mxu0 %v1424
      %1681 = vmatpush1.msra.mxu0 %v1423
      %1682 = vmatprep.subr.mxu0 %v1428
      %1683 = vmatpush1.msra.mxu0 %v1427
      %1684 = vmatprep.subr.mxu0 %v1432
      %1685 = vmatpush1.msra.mxu0 %v1431
      %1686 = vmatprep.subr.mxu0 %v1436
      %1687 = vmatpush1.msra.mxu0 %v1435
      %1688 = vmatprep.subr.mxu0 %v1440
      %1689 = vmatpush1.msra.mxu0 %v1439
      %1690 = vmatprep.subr.mxu0 %v1444
      %1691 = vmatpush1.msra.mxu0 %v1443
      %1692 = vmatprep.subr.mxu0 %v1448
      %1693 = vmatpush1.msra.mxu0 %v1447
      %1694 = vmatprep.subr.mxu0 %v1452
      %1695 = vmatpush1.msra.mxu0 %v1451
      %1696 = vmatprep.subr.mxu0 %v1456
      %1697 = vmatpush1.msra.mxu0 %v1455
      %1698 = vmatprep.subr.mxu0 %v1460
      %1699 = vmatpush1.msra.mxu0 %v1459
      %1700 = vmatprep.subr.mxu0 %v1464
      %1701 = vmatpush1.msra.mxu0 %v1463
      %1702 = vmatprep.subr.mxu0 %v1468
      %1703 = vmatpush1.msra.mxu0 %v1467
      %1704 = vmatprep.subr.mxu0 %v1472
      %1705 = vmatpush1.msra.mxu0 %v1471
      %1706 = vmatprep.mubr.f32.mxu0 %v1538
      %1707 = vmatmul.mubr.f32.gmra.mrb[0].mxu0 %v1537
      %v1708 = vpop.f32.mrb[0].mxu0
      %v1709 = vadd.f32 0.0, %v1708
      %v1710 = vpop.f32.mrb[0].mxu0
      %v1711 = vadd.f32 0.0, %v1710
      %1712 = vmatprep.mubr.f32.mxu0 %v1560
      %1713 = vmatmul.mubr.f32.gmra.mrb[0].mxu0 %v1553
      %v1714 = vpop.f32.mrb[0].mxu0
      %v1715 = vadd.f32 0.0, %v1714
      %v1716 = vpop.f32.mrb[0].mxu0
      %v1717 = vadd.f32 0.0, %v1716
      %1718 = vdwg.mxu0
      %v1719 = vadd.f32 %v1204, %v1632
      %v1720 = vadd.f32 %v1205, %v1634
      %v1721 = vadd.f32 %v1206, %v1709
      %v1722 = vadd.f32 %v1207, %v1711
      %v1723 = vadd.f32 %v1208, %v1638
      %v1724 = vadd.f32 %v1209, %v1640
      %v1725 = vadd.f32 %v1210, %v1715
      %v1726 = vadd.f32 %v1211, %v1717
      %v1727 = vld [vmem:[%s238] sm:$0x38]
      %v1728 = vld [vmem:[%s238 + $0x8] sm:$0x38]
      %v1729 = vld [vmem:[%s238 + $0x10] sm:$0x38]
      %v1730 = vld [vmem:[%s238 + $0x18] sm:$0x38]
      %v1731 = vld [vmem:[%s238 + $0x20] sm:$0x38]
      %v1732 = vld [vmem:[%s238 + $0x28] sm:$0x38]
      %v1739 = vcombine.low %v1727, %v1728
      %v1740 = vcombine.high %v1727, %v1728
      %v1742 = vunpack.c.l.s4 1966171168
      %v1743 = vunpack.c.0.s8 %v1742
      %v1744 = vlaneseq
      %v1745 = vshrl.u32 %v1744, 7
      %v1746 = vsub.s32 %v1743, %v1745
      %v1747 = vrot.slane %v1739, %v1746
      %v1749 = vunpack.c.l.s4 1966171168
      %v1750 = vunpack.c.0.s8 %v1749
      %v1751 = vlaneseq
      %v1752 = vshrl.u32 %v1751, 7
      %v1753 = vsub.s32 %v1750, %v1752
      %v1754 = vrot.slane %v1740, %v1753
      %v1755 = vcombine.high %v1747, %v1747
      %v1756 = vcombine.high %v1754, %v1754
      %v1758 = vunpack.c.l.s4 1966171168
      %v1759 = vunpack.c.0.s8 %v1758
      %v1760 = vlaneseq
      %v1761 = vshrl.u32 %v1760, 7
      %v1762 = vsub.s32 %v1759, %v1761
      %v1763 = vrot.slane %v1754, %v1762
      %v1765 = vunpack.c.l.s4 1966171168
      %v1766 = vunpack.c.0.s8 %v1765
      %v1767 = vlaneseq
      %v1768 = vshrl.u32 %v1767, 7
      %v1769 = vsub.s32 %v1766, %v1768
      %v1770 = vrot.slane %v1755, %v1769
      %v1772 = vunpack.c.l.s4 1966171168
      %v1773 = vunpack.c.0.s8 %v1772
      %v1774 = vlaneseq
      %v1775 = vshrl.u32 %v1774, 7
      %v1776 = vsub.s32 %v1773, %v1775
      %v1777 = vrot.slane %v1756, %v1776
      %v1778 = vcombine.high %v1770, %v1770
      %v1779 = vcombine.low %v1729, %v1730
      %v1780 = vcombine.high %v1729, %v1730
      %v1782 = vunpack.c.l.s4 1966171168
      %v1783 = vunpack.c.0.s8 %v1782
      %v1784 = vlaneseq
      %v1785 = vshrl.u32 %v1784, 7
      %v1786 = vsub.s32 %v1783, %v1785
      %v1787 = vrot.slane %v1779, %v1786
      %v1789 = vunpack.c.l.s4 1966171168
      %v1790 = vunpack.c.0.s8 %v1789
      %v1791 = vlaneseq
      %v1792 = vshrl.u32 %v1791, 7
      %v1793 = vsub.s32 %v1790, %v1792
      %v1794 = vrot.slane %v1780, %v1793
      %v1795 = vcombine.high %v1787, %v1787
      %v1796 = vcombine.high %v1794, %v1794
      %v1798 = vunpack.c.l.s4 1966171168
      %v1799 = vunpack.c.0.s8 %v1798
      %v1800 = vlaneseq
      %v1801 = vshrl.u32 %v1800, 7
      %v1802 = vsub.s32 %v1799, %v1801
      %v1803 = vrot.slane %v1794, %v1802
      %v1805 = vunpack.c.l.s4 1966171168
      %v1806 = vunpack.c.0.s8 %v1805
      %v1807 = vlaneseq
      %v1808 = vshrl.u32 %v1807, 7
      %v1809 = vsub.s32 %v1806, %v1808
      %v1810 = vrot.slane %v1795, %v1809
      %v1812 = vunpack.c.l.s4 1966171168
      %v1813 = vunpack.c.0.s8 %v1812
      %v1814 = vlaneseq
      %v1815 = vshrl.u32 %v1814, 7
      %v1816 = vsub.s32 %v1813, %v1815
      %v1817 = vrot.slane %v1796, %v1816
      %v1818 = vcombine.high %v1810, %v1810
      %v1819 = vcombine.low %v1731, %v1732
      %v1820 = vcombine.high %v1731, %v1732
      %v1822 = vunpack.c.l.s4 1966171168
      %v1823 = vunpack.c.0.s8 %v1822
      %v1824 = vlaneseq
      %v1825 = vshrl.u32 %v1824, 7
      %v1826 = vsub.s32 %v1823, %v1825
      %v1827 = vrot.slane %v1819, %v1826
      %v1829 = vunpack.c.l.s4 1966171168
      %v1830 = vunpack.c.0.s8 %v1829
      %v1831 = vlaneseq
      %v1832 = vshrl.u32 %v1831, 7
      %v1833 = vsub.s32 %v1830, %v1832
      %v1834 = vrot.slane %v1820, %v1833
      %v1835 = vcombine.high %v1827, %v1827
      %v1836 = vcombine.high %v1834, %v1834
      %v1838 = vunpack.c.l.s4 1966171168
      %v1839 = vunpack.c.0.s8 %v1838
      %v1840 = vlaneseq
      %v1841 = vshrl.u32 %v1840, 7
      %v1842 = vsub.s32 %v1839, %v1841
      %v1843 = vrot.slane %v1834, %v1842
      %v1845 = vunpack.c.l.s4 1966171168
      %v1846 = vunpack.c.0.s8 %v1845
      %v1847 = vlaneseq
      %v1848 = vshrl.u32 %v1847, 7
      %v1849 = vsub.s32 %v1846, %v1848
      %v1850 = vrot.slane %v1835, %v1849
      %v1852 = vunpack.c.l.s4 1966171168
      %v1853 = vunpack.c.0.s8 %v1852
      %v1854 = vlaneseq
      %v1855 = vshrl.u32 %v1854, 7
      %v1856 = vsub.s32 %v1853, %v1855
      %v1857 = vrot.slane %v1836, %v1856
      %v1858 = vcombine.high %v1850, %v1850
      %s1859 = scalar_lea.vmem %s244, 3072
      %v1860 = vld [vmem:[%s1859] sm:$0xff]
      %v1861 = vld [vmem:[%s1859 + $0x8] sm:$0xff]
      %v1862 = vld [vmem:[%s1859 + $0x10] sm:$0xff]
      %v1863 = vld [vmem:[%s1859 + $0x18] sm:$0xff]
      %v1864 = vld [vmem:[%s1859 + $0x20] sm:$0xff]
      %v1865 = vld [vmem:[%s1859 + $0x28] sm:$0xff]
      %v1866 = vld [vmem:[%s1859 + $0x30] sm:$0xff]
      %v1867 = vld [vmem:[%s1859 + $0x38] sm:$0xff]
      %v1868 = vld [vmem:[%s1859 + $0x40] sm:$0xff]
      %v1869 = vld [vmem:[%s1859 + $0x48] sm:$0xff]
      %v1870 = vld [vmem:[%s1859 + $0x50] sm:$0xff]
      %v1871 = vld [vmem:[%s1859 + $0x58] sm:$0xff]
      %v1872 = vld [vmem:[%s1859 + $0x60] sm:$0xff]
      %v1873 = vld [vmem:[%s1859 + $0x68] sm:$0xff]
      %v1874 = vld [vmem:[%s1859 + $0x70] sm:$0xff]
      %v1875 = vld [vmem:[%s1859 + $0x78] sm:$0xff]
      %v1876 = vld [vmem:[%s1859 + $0x80] sm:$0xff]
      %v1877 = vld [vmem:[%s1859 + $0x88] sm:$0xff]
      %v1878 = vld [vmem:[%s1859 + $0x90] sm:$0xff]
      %v1879 = vld [vmem:[%s1859 + $0x98] sm:$0xff]
      %v1880 = vld [vmem:[%s1859 + $0xa0] sm:$0xff]
      %v1881 = vld [vmem:[%s1859 + $0xa8] sm:$0xff]
      %v1882 = vld [vmem:[%s1859 + $0xb0] sm:$0xff]
      %v1883 = vld [vmem:[%s1859 + $0xb8] sm:$0xff]
      %v1884 = vld [vmem:[%s1859 + $0xc0] sm:$0xff]
      %v1885 = vld [vmem:[%s1859 + $0xc8] sm:$0xff]
      %v1886 = vld [vmem:[%s1859 + $0xd0] sm:$0xff]
      %v1887 = vld [vmem:[%s1859 + $0xd8] sm:$0xff]
      %v1888 = vld [vmem:[%s1859 + $0xe0] sm:$0xff]
      %v1889 = vld [vmem:[%s1859 + $0xe8] sm:$0xff]
      %v1890 = vld [vmem:[%s1859 + $0xf0] sm:$0xff]
      %v1891 = vld [vmem:[%s1859 + $0xf8] sm:$0xff]
      %v1892 = vld [vmem:[%s1859 + $0x100] sm:$0xff]
      %v1893 = vld [vmem:[%s1859 + $0x108] sm:$0xff]
      %v1894 = vld [vmem:[%s1859 + $0x110] sm:$0xff]
      %v1895 = vld [vmem:[%s1859 + $0x118] sm:$0xff]
      %v1896 = vld [vmem:[%s1859 + $0x120] sm:$0xff]
      %v1897 = vld [vmem:[%s1859 + $0x128] sm:$0xff]
      %v1898 = vld [vmem:[%s1859 + $0x130] sm:$0xff]
      %v1899 = vld [vmem:[%s1859 + $0x138] sm:$0xff]
      %v1900 = vld [vmem:[%s1859 + $0x140] sm:$0xff]
      %v1901 = vld [vmem:[%s1859 + $0x148] sm:$0xff]
      %v1902 = vld [vmem:[%s1859 + $0x150] sm:$0xff]
      %v1903 = vld [vmem:[%s1859 + $0x158] sm:$0xff]
      %v1904 = vld [vmem:[%s1859 + $0x160] sm:$0xff]
      %v1905 = vld [vmem:[%s1859 + $0x168] sm:$0xff]
      %v1906 = vld [vmem:[%s1859 + $0x170] sm:$0xff]
      %v1907 = vld [vmem:[%s1859 + $0x178] sm:$0xff]
      %v1908 = vld [vmem:[%s1859 + $0x180] sm:$0xff]
      %v1909 = vld [vmem:[%s1859 + $0x188] sm:$0xff]
      %v1910 = vld [vmem:[%s1859 + $0x190] sm:$0xff]
      %v1911 = vld [vmem:[%s1859 + $0x198] sm:$0xff]
      %v1912 = vld [vmem:[%s1859 + $0x1a0] sm:$0xff]
      %v1913 = vld [vmem:[%s1859 + $0x1a8] sm:$0xff]
      %v1914 = vld [vmem:[%s1859 + $0x1b0] sm:$0xff]
      %v1915 = vld [vmem:[%s1859 + $0x1b8] sm:$0xff]
      %v1916 = vld [vmem:[%s1859 + $0x1c0] sm:$0xff]
      %v1917 = vld [vmem:[%s1859 + $0x1c8] sm:$0xff]
      %v1918 = vld [vmem:[%s1859 + $0x1d0] sm:$0xff]
      %v1919 = vld [vmem:[%s1859 + $0x1d8] sm:$0xff]
      %v1920 = vld [vmem:[%s1859 + $0x1e0] sm:$0xff]
      %v1921 = vld [vmem:[%s1859 + $0x1e8] sm:$0xff]
      %v1922 = vld [vmem:[%s1859 + $0x1f0] sm:$0xff]
      %v1923 = vld [vmem:[%s1859 + $0x1f8] sm:$0xff]
      %v1924 = vld [vmem:[%s1859 + $0x200] sm:$0xff]
      %v1925 = vld [vmem:[%s1859 + $0x208] sm:$0xff]
      %v1926 = vld [vmem:[%s1859 + $0x210] sm:$0xff]
      %v1927 = vld [vmem:[%s1859 + $0x218] sm:$0xff]
      %v1928 = vld [vmem:[%s1859 + $0x220] sm:$0xff]
      %v1929 = vld [vmem:[%s1859 + $0x228] sm:$0xff]
      %v1930 = vld [vmem:[%s1859 + $0x230] sm:$0xff]
      %v1931 = vld [vmem:[%s1859 + $0x238] sm:$0xff]
      %v1932 = vld [vmem:[%s1859 + $0x240] sm:$0xff]
      %v1933 = vld [vmem:[%s1859 + $0x248] sm:$0xff]
      %v1934 = vld [vmem:[%s1859 + $0x250] sm:$0xff]
      %v1935 = vld [vmem:[%s1859 + $0x258] sm:$0xff]
      %v1936 = vld [vmem:[%s1859 + $0x260] sm:$0xff]
      %v1937 = vld [vmem:[%s1859 + $0x268] sm:$0xff]
      %v1938 = vld [vmem:[%s1859 + $0x270] sm:$0xff]
      %v1939 = vld [vmem:[%s1859 + $0x278] sm:$0xff]
      %v1940 = vld [vmem:[%s1859 + $0x280] sm:$0xff]
      %v1941 = vld [vmem:[%s1859 + $0x288] sm:$0xff]
      %v1942 = vld [vmem:[%s1859 + $0x290] sm:$0xff]
      %v1943 = vld [vmem:[%s1859 + $0x298] sm:$0xff]
      %v1944 = vld [vmem:[%s1859 + $0x2a0] sm:$0xff]
      %v1945 = vld [vmem:[%s1859 + $0x2a8] sm:$0xff]
      %v1946 = vld [vmem:[%s1859 + $0x2b0] sm:$0xff]
      %v1947 = vld [vmem:[%s1859 + $0x2b8] sm:$0xff]
      %v1948 = vld [vmem:[%s1859 + $0x2c0] sm:$0xff]
      %v1949 = vld [vmem:[%s1859 + $0x2c8] sm:$0xff]
      %v1950 = vld [vmem:[%s1859 + $0x2d0] sm:$0xff]
      %v1951 = vld [vmem:[%s1859 + $0x2d8] sm:$0xff]
      %v1952 = vld [vmem:[%s1859 + $0x2e0] sm:$0xff]
      %v1953 = vld [vmem:[%s1859 + $0x2e8] sm:$0xff]
      %v1954 = vld [vmem:[%s1859 + $0x2f0] sm:$0xff]
      %v1955 = vld [vmem:[%s1859 + $0x2f8] sm:$0xff]
      %v1956 = vld [vmem:[%s1859 + $0x300] sm:$0xff]
      %v1957 = vld [vmem:[%s1859 + $0x308] sm:$0xff]
      %v1958 = vld [vmem:[%s1859 + $0x310] sm:$0xff]
      %v1959 = vld [vmem:[%s1859 + $0x318] sm:$0xff]
      %v1960 = vld [vmem:[%s1859 + $0x320] sm:$0xff]
      %v1961 = vld [vmem:[%s1859 + $0x328] sm:$0xff]
      %v1962 = vld [vmem:[%s1859 + $0x330] sm:$0xff]
      %v1963 = vld [vmem:[%s1859 + $0x338] sm:$0xff]
      %v1964 = vld [vmem:[%s1859 + $0x340] sm:$0xff]
      %v1965 = vld [vmem:[%s1859 + $0x348] sm:$0xff]
      %v1966 = vld [vmem:[%s1859 + $0x350] sm:$0xff]
      %v1967 = vld [vmem:[%s1859 + $0x358] sm:$0xff]
      %v1968 = vld [vmem:[%s1859 + $0x360] sm:$0xff]
      %v1969 = vld [vmem:[%s1859 + $0x368] sm:$0xff]
      %v1970 = vld [vmem:[%s1859 + $0x370] sm:$0xff]
      %v1971 = vld [vmem:[%s1859 + $0x378] sm:$0xff]
      %v1972 = vld [vmem:[%s1859 + $0x380] sm:$0xff]
      %v1973 = vld [vmem:[%s1859 + $0x388] sm:$0xff]
      %v1974 = vld [vmem:[%s1859 + $0x390] sm:$0xff]
      %v1975 = vld [vmem:[%s1859 + $0x398] sm:$0xff]
      %v1976 = vld [vmem:[%s1859 + $0x3a0] sm:$0xff]
      %v1977 = vld [vmem:[%s1859 + $0x3a8] sm:$0xff]
      %v1978 = vld [vmem:[%s1859 + $0x3b0] sm:$0xff]
      %v1979 = vld [vmem:[%s1859 + $0x3b8] sm:$0xff]
      %v1980 = vld [vmem:[%s1859 + $0x3c0] sm:$0xff]
      %v1981 = vld [vmem:[%s1859 + $0x3c8] sm:$0xff]
      %v1982 = vld [vmem:[%s1859 + $0x3d0] sm:$0xff]
      %v1983 = vld [vmem:[%s1859 + $0x3d8] sm:$0xff]
      %v1984 = vld [vmem:[%s1859 + $0x3e0] sm:$0xff]
      %v1985 = vld [vmem:[%s1859 + $0x3e8] sm:$0xff]
      %v1986 = vld [vmem:[%s1859 + $0x3f0] sm:$0xff]
      %v1987 = vld [vmem:[%s1859 + $0x3f8] sm:$0xff]
      %v1988 = vcombine.low %v1778, %v1763
      %v1989 = vcombine.low %v1777, %v1818
      %v1990 = vcombine.low %v1803, %v1817
      %v1991 = vcombine.low %v1858, %v1843
      %v1993 = vunpack.c.l.s4 1966171168
      %v1994 = vunpack.c.0.s8 %v1993
      %v1995 = vlaneseq
      %v1996 = vshrl.u32 %v1995, 7
      %v1997 = vsub.s32 %v1994, %v1996
      %v1998 = vrot.slane %v1988, %v1997
      %v2000 = vunpack.c.l.s4 1966171168
      %v2001 = vunpack.c.0.s8 %v2000
      %v2002 = vlaneseq
      %v2003 = vshrl.u32 %v2002, 7
      %v2004 = vsub.s32 %v2001, %v2003
      %v2005 = vrot.slane %v1989, %v2004
      %v2007 = vunpack.c.l.s4 1966171168
      %v2008 = vunpack.c.0.s8 %v2007
      %v2009 = vlaneseq
      %v2010 = vshrl.u32 %v2009, 7
      %v2011 = vsub.s32 %v2008, %v2010
      %v2012 = vrot.slane %v1990, %v2011
      %v2014 = vunpack.c.l.s4 1966171168
      %v2015 = vunpack.c.0.s8 %v2014
      %v2016 = vlaneseq
      %v2017 = vshrl.u32 %v2016, 7
      %v2018 = vsub.s32 %v2015, %v2017
      %v2019 = vrot.slane %v1991, %v2018
      %v2020 = vcombine.low %v1998, %v2005
      %v2021 = vcombine.high %v1998, %v2005
      %v2022 = vcombine.low %v2012, %v2019
      %v2023 = vcombine.high %v2012, %v2019
      %v2025 = vunpack.c.l.s4 1966171168
      %v2026 = vunpack.c.0.s8 %v2025
      %v2027 = vlaneseq
      %v2028 = vshrl.u32 %v2027, 7
      %v2029 = vsub.s32 %v2026, %v2028
      %v2030 = vrot.slane %v2020, %v2029
      %v2032 = vunpack.c.l.s4 1966171168
      %v2033 = vunpack.c.0.s8 %v2032
      %v2034 = vlaneseq
      %v2035 = vshrl.u32 %v2034, 7
      %v2036 = vsub.s32 %v2033, %v2035
      %v2037 = vrot.slane %v2021, %v2036
      %v2039 = vunpack.c.l.s4 1966171168
      %v2040 = vunpack.c.0.s8 %v2039
      %v2041 = vlaneseq
      %v2042 = vshrl.u32 %v2041, 7
      %v2043 = vsub.s32 %v2040, %v2042
      %v2044 = vrot.slane %v2022, %v2043
      %v2046 = vunpack.c.l.s4 1966171168
      %v2047 = vunpack.c.0.s8 %v2046
      %v2048 = vlaneseq
      %v2049 = vshrl.u32 %v2048, 7
      %v2050 = vsub.s32 %v2047, %v2049
      %v2051 = vrot.slane %v2023, %v2050
      %v2052 = vcombine.low %v2030, %v2044
      %v2053 = vcombine.low %v2037, %v2051
      %v2055 = vunpack.c.l.s4 1966171168
      %v2056 = vunpack.c.0.s8 %v2055
      %v2057 = vlaneseq
      %v2058 = vshrl.u32 %v2057, 7
      %v2059 = vsub.s32 %v2056, %v2058
      %v2060 = vrot.slane %v1857, %v2059
      %v2061 = vcombine.high %v2060, %v2060
      %v2063 = vunpack.c.l.s4 1966171168
      %v2064 = vunpack.c.0.s8 %v2063
      %v2065 = vlaneseq
      %v2066 = vshrl.u32 %v2065, 7
      %v2067 = vsub.s32 %v2064, %v2066
      %v2068 = vrot.slane %v2060, %v2067
      %v2070 = vunpack.c.l.s4 1966171168
      %v2071 = vunpack.c.0.s8 %v2070
      %v2072 = vlaneseq
      %v2073 = vshrl.u32 %v2072, 7
      %v2074 = vsub.s32 %v2071, %v2073
      %v2075 = vrot.slane %v2061, %v2074
      %2080 = vmatprep.subr.mxu0 %v1861
      %2081 = vmatpush1.msra.mxu0 %v1860
      %2082 = vmatprep.subr.mxu0 %v1865
      %2083 = vmatpush1.msra.mxu0 %v1864
      %2084 = vmatprep.subr.mxu0 %v1869
      %2085 = vmatpush1.msra.mxu0 %v1868
      %2086 = vmatprep.subr.mxu0 %v1873
      %2087 = vmatpush1.msra.mxu0 %v1872
      %2088 = vmatprep.subr.mxu0 %v1877
      %2089 = vmatpush1.msra.mxu0 %v1876
      %2090 = vmatprep.subr.mxu0 %v1881
      %2091 = vmatpush1.msra.mxu0 %v1880
      %2092 = vmatprep.subr.mxu0 %v1885
      %2093 = vmatpush1.msra.mxu0 %v1884
      %2094 = vmatprep.subr.mxu0 %v1889
      %2095 = vmatpush1.msra.mxu0 %v1888
      %2096 = vmatprep.subr.mxu0 %v1893
      %2097 = vmatpush1.msra.mxu0 %v1892
      %2098 = vmatprep.subr.mxu0 %v1897
      %2099 = vmatpush1.msra.mxu0 %v1896
      %2100 = vmatprep.subr.mxu0 %v1901
      %2101 = vmatpush1.msra.mxu0 %v1900
      %2102 = vmatprep.subr.mxu0 %v1905
      %2103 = vmatpush1.msra.mxu0 %v1904
      %2104 = vmatprep.subr.mxu0 %v1909
      %2105 = vmatpush1.msra.mxu0 %v1908
      %2106 = vmatprep.subr.mxu0 %v1913
      %2107 = vmatpush1.msra.mxu0 %v1912
      %2108 = vmatprep.subr.mxu0 %v1917
      %2109 = vmatpush1.msra.mxu0 %v1916
      %2110 = vmatprep.subr.mxu0 %v1921
      %2111 = vmatpush1.msra.mxu0 %v1920
      %2112 = vmatprep.subr.mxu0 %v1925
      %2113 = vmatpush1.msra.mxu0 %v1924
      %2114 = vmatprep.subr.mxu0 %v1929
      %2115 = vmatpush1.msra.mxu0 %v1928
      %2116 = vmatprep.subr.mxu0 %v1933
      %2117 = vmatpush1.msra.mxu0 %v1932
      %2118 = vmatprep.subr.mxu0 %v1937
      %2119 = vmatpush1.msra.mxu0 %v1936
      %2120 = vmatprep.subr.mxu0 %v1941
      %2121 = vmatpush1.msra.mxu0 %v1940
      %2122 = vmatprep.subr.mxu0 %v1945
      %2123 = vmatpush1.msra.mxu0 %v1944
      %2124 = vmatprep.subr.mxu0 %v1949
      %2125 = vmatpush1.msra.mxu0 %v1948
      %2126 = vmatprep.subr.mxu0 %v1953
      %2127 = vmatpush1.msra.mxu0 %v1952
      %2128 = vmatprep.subr.mxu0 %v1957
      %2129 = vmatpush1.msra.mxu0 %v1956
      %2130 = vmatprep.subr.mxu0 %v1961
      %2131 = vmatpush1.msra.mxu0 %v1960
      %2132 = vmatprep.subr.mxu0 %v1965
      %2133 = vmatpush1.msra.mxu0 %v1964
      %2134 = vmatprep.subr.mxu0 %v1969
      %2135 = vmatpush1.msra.mxu0 %v1968
      %2136 = vmatprep.subr.mxu0 %v1973
      %2137 = vmatpush1.msra.mxu0 %v1972
      %2138 = vmatprep.subr.mxu0 %v1977
      %2139 = vmatpush1.msra.mxu0 %v1976
      %2140 = vmatprep.subr.mxu0 %v1981
      %2141 = vmatpush1.msra.mxu0 %v1980
      %2142 = vmatprep.subr.mxu0 %v1985
      %2143 = vmatpush1.msra.mxu0 %v1984
      %2144 = vmatprep.mubr.f32.mxu0 %v2053
      %2145 = vmatmul.mubr.f32.gmra.mrb[0].mxu0 %v2052
      %v2146 = vpop.f32.mrb[0].mxu0
      %v2147 = vadd.f32 0.0, %v2146
      %v2148 = vpop.f32.mrb[0].mxu0
      %v2149 = vadd.f32 0.0, %v2148
      %2150 = vmatprep.mubr.f32.mxu0 %v2075
      %2151 = vmatmul.mubr.f32.gmra.mrb[0].mxu0 %v2068
      %v2152 = vpop.f32.mrb[0].mxu0
      %v2153 = vadd.f32 0.0, %v2152
      %v2154 = vpop.f32.mrb[0].mxu0
      %v2155 = vadd.f32 0.0, %v2154
      %2156 = vdwg.mxu0
      %2157 = vmatprep.subr.mxu0 %v1863
      %2158 = vmatpush1.msra.mxu0 %v1862
      %2159 = vmatprep.subr.mxu0 %v1867
      %2160 = vmatpush1.msra.mxu0 %v1866
      %2161 = vmatprep.subr.mxu0 %v1871
      %2162 = vmatpush1.msra.mxu0 %v1870
      %2163 = vmatprep.subr.mxu0 %v1875
      %2164 = vmatpush1.msra.mxu0 %v1874
      %2165 = vmatprep.subr.mxu0 %v1879
      %2166 = vmatpush1.msra.mxu0 %v1878
      %2167 = vmatprep.subr.mxu0 %v1883
      %2168 = vmatpush1.msra.mxu0 %v1882
      %2169 = vmatprep.subr.mxu0 %v1887
      %2170 = vmatpush1.msra.mxu0 %v1886
      %2171 = vmatprep.subr.mxu0 %v1891
      %2172 = vmatpush1.msra.mxu0 %v1890
      %2173 = vmatprep.subr.mxu0 %v1895
      %2174 = vmatpush1.msra.mxu0 %v1894
      %2175 = vmatprep.subr.mxu0 %v1899
      %2176 = vmatpush1.msra.mxu0 %v1898
      %2177 = vmatprep.subr.mxu0 %v1903
      %2178 = vmatpush1.msra.mxu0 %v1902
      %2179 = vmatprep.subr.mxu0 %v1907
      %2180 = vmatpush1.msra.mxu0 %v1906
      %2181 = vmatprep.subr.mxu0 %v1911
      %2182 = vmatpush1.msra.mxu0 %v1910
      %2183 = vmatprep.subr.mxu0 %v1915
      %2184 = vmatpush1.msra.mxu0 %v1914
      %2185 = vmatprep.subr.mxu0 %v1919
      %2186 = vmatpush1.msra.mxu0 %v1918
      %2187 = vmatprep.subr.mxu0 %v1923
      %2188 = vmatpush1.msra.mxu0 %v1922
      %2189 = vmatprep.subr.mxu0 %v1927
      %2190 = vmatpush1.msra.mxu0 %v1926
      %2191 = vmatprep.subr.mxu0 %v1931
      %2192 = vmatpush1.msra.mxu0 %v1930
      %2193 = vmatprep.subr.mxu0 %v1935
      %2194 = vmatpush1.msra.mxu0 %v1934
      %2195 = vmatprep.subr.mxu0 %v1939
      %2196 = vmatpush1.msra.mxu0 %v1938
      %2197 = vmatprep.subr.mxu0 %v1943
      %2198 = vmatpush1.msra.mxu0 %v1942
      %2199 = vmatprep.subr.mxu0 %v1947
      %2200 = vmatpush1.msra.mxu0 %v1946
      %2201 = vmatprep.subr.mxu0 %v1951
      %2202 = vmatpush1.msra.mxu0 %v1950
      %2203 = vmatprep.subr.mxu0 %v1955
      %2204 = vmatpush1.msra.mxu0 %v1954
      %2205 = vmatprep.subr.mxu0 %v1959
      %2206 = vmatpush1.msra.mxu0 %v1958
      %2207 = vmatprep.subr.mxu0 %v1963
      %2208 = vmatpush1.msra.mxu0 %v1962
      %2209 = vmatprep.subr.mxu0 %v1967
      %2210 = vmatpush1.msra.mxu0 %v1966
      %2211 = vmatprep.subr.mxu0 %v1971
      %2212 = vmatpush1.msra.mxu0 %v1970
      %2213 = vmatprep.subr.mxu0 %v1975
      %2214 = vmatpush1.msra.mxu0 %v1974
      %2215 = vmatprep.subr.mxu0 %v1979
      %2216 = vmatpush1.msra.mxu0 %v1978
      %2217 = vmatprep.subr.mxu0 %v1983
      %2218 = vmatpush1.msra.mxu0 %v1982
      %2219 = vmatprep.subr.mxu0 %v1987
      %2220 = vmatpush1.msra.mxu0 %v1986
      %2221 = vmatprep.mubr.f32.mxu0 %v2053
      %2222 = vmatmul.mubr.f32.gmra.mrb[0].mxu0 %v2052
      %v2223 = vpop.f32.mrb[0].mxu0
      %v2224 = vadd.f32 0.0, %v2223
      %v2225 = vpop.f32.mrb[0].mxu0
      %v2226 = vadd.f32 0.0, %v2225
      %2227 = vmatprep.mubr.f32.mxu0 %v2075
      %2228 = vmatmul.mubr.f32.gmra.mrb[0].mxu0 %v2068
      %v2229 = vpop.f32.mrb[0].mxu0
      %v2230 = vadd.f32 0.0, %v2229
      %v2231 = vpop.f32.mrb[0].mxu0
      %v2232 = vadd.f32 0.0, %v2231
      %2233 = vdwg.mxu0
      %v2234 = vadd.f32 %v1719, %v2147
      %v2235 = vadd.f32 %v1720, %v2149
      %v2236 = vadd.f32 %v1721, %v2224
      %v2237 = vadd.f32 %v1722, %v2226
      %v2238 = vadd.f32 %v1723, %v2153
      %v2239 = vadd.f32 %v1724, %v2155
      %v2240 = vadd.f32 %v1725, %v2230
      %v2241 = vadd.f32 %v1726, %v2232
      %2242 = vst [vmem:[#allocation2] sm:$0xff] %v2234
      %2243 = vst [vmem:[#allocation2 + $0x8] sm:$0xff] %v2235
      %2244 = vst [vmem:[#allocation2 + $0x10] sm:$0xff] %v2236
      %2245 = vst [vmem:[#allocation2 + $0x18] sm:$0xff] %v2237
      %2246 = vst [vmem:[#allocation2 + $0x20] sm:$0x1] %v2238
      %2247 = vst [vmem:[#allocation2 + $0x28] sm:$0x1] %v2239
      %2248 = vst [vmem:[#allocation2 + $0x30] sm:$0x1] %v2240
      %2249 = vst [vmem:[#allocation2 + $0x38] sm:$0x1] %v2241
      %p2250 = scmp.eq.s32.totalorder %s21, 3
      // Predicated region
      $region37: #{_lambda_.8} parent=31 // pred_check
        %p2251 = pneg %p2250
      $region38: #{_lambda_.8} parent=31 // pred_check_branch
        %2253 = sbr.rel (%p2251) target = $region40
      $region39: #{_lambda_.8} parent=31 // pred_region
        %v2254 = vld [vmem:[%s2] sm:$0xf]
        %v2256 = vlaneseq
        %v2257 = vshrl.u32 %v2256, 7
        %v2258 = vsub.s32 0, %v2257
        %v2259 = vrot.slane %v2254, %v2258
        %v2260 = vlaneseq
        %v2261 = vshrl.u32 %v2260, 7
        %v2262 = vsub.s32 1, %v2261
        %v2263 = vrot.slane %v2254, %v2262
        %v2264 = vlaneseq
        %v2265 = vshrl.u32 %v2264, 7
        %v2266 = vsub.s32 2, %v2265
        %v2267 = vrot.slane %v2254, %v2266
        %v2268 = vlaneseq
        %v2269 = vshrl.u32 %v2268, 7
        %v2270 = vsub.s32 3, %v2269
        %v2271 = vrot.slane %v2254, %v2270
        %v2276 = vadd.f32 %v2234, %v2259
        %v2277 = vadd.f32 %v2235, %v2263
        %v2278 = vadd.f32 %v2236, %v2267
        %v2279 = vadd.f32 %v2237, %v2271
        %v2280 = vadd.f32 %v2238, %v2259
        %v2281 = vadd.f32 %v2239, %v2263
        %v2282 = vadd.f32 %v2240, %v2267
        %v2283 = vadd.f32 %v2241, %v2271
        %vm2284 = vcmask 1040384
        %v2285 = vsel %vm2284, %v2280, 0.0
        %v2286 = vadd.f32 %v2276, %v2285
        %v2287 = vrot.slane %v2286, 4
        %v2288 = vadd.f32 %v2286, %v2287
        %v2289 = vrot.slane %v2288, 2
        %v2290 = vadd.f32 %v2288, %v2289
        %v2291 = vrot.slane %v2290, 1
        %v2292 = vadd.f32 %v2290, %v2291
        %v2293 = vsel %vm2284, %v2281, 0.0
        %v2294 = vadd.f32 %v2277, %v2293
        %v2295 = vrot.slane %v2294, 4
        %v2296 = vadd.f32 %v2294, %v2295
        %v2297 = vrot.slane %v2296, 2
        %v2298 = vadd.f32 %v2296, %v2297
        %v2299 = vrot.slane %v2298, 1
        %v2300 = vadd.f32 %v2298, %v2299
        %v2301 = vsel %vm2284, %v2282, 0.0
        %v2302 = vadd.f32 %v2278, %v2301
        %v2303 = vrot.slane %v2302, 4
        %v2304 = vadd.f32 %v2302, %v2303
        %v2305 = vrot.slane %v2304, 2
        %v2306 = vadd.f32 %v2304, %v2305
        %v2307 = vrot.slane %v2306, 1
        %v2308 = vadd.f32 %v2306, %v2307
        %v2309 = vsel %vm2284, %v2283, 0.0
        %v2310 = vadd.f32 %v2279, %v2309
        %v2311 = vrot.slane %v2310, 4
        %v2312 = vadd.f32 %v2310, %v2311
        %v2313 = vrot.slane %v2312, 2
        %v2314 = vadd.f32 %v2312, %v2313
        %v2315 = vrot.slane %v2314, 1
        %v2316 = vadd.f32 %v2314, %v2315
        %v2317 = vrcp.pop 9.0
        %v2318 = vmul.f32 %v2292, %v2317
        %v2319 = vmul.f32 %v2300, %v2317
        %v2320 = vmul.f32 %v2308, %v2317
        %v2321 = vmul.f32 %v2316, %v2317
        %v2322 = vsub.f32 %v2276, %v2318
        %v2323 = vsub.f32 %v2277, %v2319
        %v2324 = vsub.f32 %v2278, %v2320
        %v2325 = vsub.f32 %v2279, %v2321
        %v2326 = vsub.f32 %v2280, %v2318
        %v2327 = vsub.f32 %v2281, %v2319
        %v2328 = vsub.f32 %v2282, %v2320
        %v2329 = vsub.f32 %v2283, %v2321
        %v2330 = vmul.f32 %v2322, %v2322
        %v2331 = vmul.f32 %v2323, %v2323
        %v2332 = vmul.f32 %v2324, %v2324
        %v2333 = vmul.f32 %v2325, %v2325
        %v2334 = vmul.f32 %v2326, %v2326
        %v2335 = vmul.f32 %v2327, %v2327
        %v2336 = vmul.f32 %v2328, %v2328
        %v2337 = vmul.f32 %v2329, %v2329
        %v2338 = vsel %vm2284, %v2334, 0.0
        %v2339 = vadd.f32 %v2330, %v2338
        %v2340 = vrot.slane %v2339, 4
        %v2341 = vadd.f32 %v2339, %v2340
        %v2342 = vrot.slane %v2341, 2
        %v2343 = vadd.f32 %v2341, %v2342
        %v2344 = vrot.slane %v2343, 1
        %v2345 = vadd.f32 %v2343, %v2344
        %v2346 = vsel %vm2284, %v2335, 0.0
        %v2347 = vadd.f32 %v2331, %v2346
        %v2348 = vrot.slane %v2347, 4
        %v2349 = vadd.f32 %v2347, %v2348
        %v2350 = vrot.slane %v2349, 2
        %v2351 = vadd.f32 %v2349, %v2350
        %v2352 = vrot.slane %v2351, 1
        %v2353 = vadd.f32 %v2351, %v2352
        %v2354 = vsel %vm2284, %v2336, 0.0
        %v2355 = vadd.f32 %v2332, %v2354
        %v2356 = vrot.slane %v2355, 4
        %v2357 = vadd.f32 %v2355, %v2356
        %v2358 = vrot.slane %v2357, 2
        %v2359 = vadd.f32 %v2357, %v2358
        %v2360 = vrot.slane %v2359, 1
        %v2361 = vadd.f32 %v2359, %v2360
        %v2362 = vsel %vm2284, %v2337, 0.0
        %v2363 = vadd.f32 %v2333, %v2362
        %v2364 = vrot.slane %v2363, 4
        %v2365 = vadd.f32 %v2363, %v2364
        %v2366 = vrot.slane %v2365, 2
        %v2367 = vadd.f32 %v2365, %v2366
        %v2368 = vrot.slane %v2367, 1
        %v2369 = vadd.f32 %v2367, %v2368
        %v2370 = vmul.f32 %v2345, %v2317
        %v2371 = vmul.f32 %v2353, %v2317
        %v2372 = vmul.f32 %v2361, %v2317
        %v2373 = vmul.f32 %v2369, %v2317
        %v2374 = vadd.f32 %v2370, 1e-05
        %v2375 = vadd.f32 %v2371, 1e-05
        %v2376 = vadd.f32 %v2372, 1e-05
        %v2377 = vadd.f32 %v2373, 1e-05
        %v2378 = vrsqrt.pop %v2374
        %v2379 = vrsqrt.pop %v2375
        %v2380 = vrsqrt.pop %v2376
        %v2381 = vrsqrt.pop %v2377
        %v2382 = vmul.f32 %v2322, %v2378
        %v2383 = vmul.f32 %v2323, %v2379
        %v2384 = vmul.f32 %v2324, %v2380
        %v2385 = vmul.f32 %v2325, %v2381
        %v2386 = vmul.f32 %v2326, %v2378
        %v2387 = vmul.f32 %v2327, %v2379
        %v2388 = vmul.f32 %v2328, %v2380
        %v2389 = vmul.f32 %v2329, %v2381
        %vm2390 = vcmp.ge.f32.partialorder %v2382, 0.0
        %vm2391 = vcmp.ge.f32.partialorder %v2383, 0.0
        %vm2392 = vcmp.ge.f32.partialorder %v2384, 0.0
        %vm2393 = vcmp.ge.f32.partialorder %v2385, 0.0
        %vm2394 = vcmp.ge.f32.partialorder %v2386, 0.0
        %vm2395 = vcmp.ge.f32.partialorder %v2387, 0.0
        %vm2396 = vcmp.ge.f32.partialorder %v2388, 0.0
        %vm2397 = vcmp.ge.f32.partialorder %v2389, 0.0
        %v2398 = vmul.f32 %v2382, 0.2
        %v2399 = vmul.f32 %v2383, 0.2
        %v2400 = vmul.f32 %v2384, 0.2
        %v2401 = vmul.f32 %v2385, 0.2
        %v2402 = vmul.f32 %v2386, 0.2
        %v2403 = vmul.f32 %v2387, 0.2
        %v2404 = vmul.f32 %v2388, 0.2
        %v2405 = vmul.f32 %v2389, 0.2
        %v2406 = vsel %vm2390, %v2382, %v2398
        %v2407 = vsel %vm2391, %v2383, %v2399
        %v2408 = vsel %vm2392, %v2384, %v2400
        %v2409 = vsel %vm2393, %v2385, %v2401
        %v2410 = vsel %vm2394, %v2386, %v2402
        %v2411 = vsel %vm2395, %v2387, %v2403
        %v2412 = vsel %vm2396, %v2388, %v2404
        %v2413 = vsel %vm2397, %v2389, %v2405
        %2414 = vst [vmem:[%s254] sm:$0xff] %v2406
        %2415 = vst [vmem:[%s254 + $0x8] sm:$0xff] %v2407
        %2416 = vst [vmem:[%s254 + $0x10] sm:$0xff] %v2408
        %2417 = vst [vmem:[%s254 + $0x18] sm:$0xff] %v2409
        %2418 = vst [vmem:[%s254 + $0x20] sm:$0x1] %v2410
        %2419 = vst [vmem:[%s254 + $0x28] sm:$0x1] %v2411
        %2420 = vst [vmem:[%s254 + $0x30] sm:$0x1] %v2412
        %2421 = vst [vmem:[%s254 + $0x38] sm:$0x1] %v2413
      $region40: #{_lambda_.8} parent=31 // pred_fallthru
        _
      %s2422 = smul.u32 2, %s20
      %p2423 = scmp.lt.s32.totalorder %s19, 1
      %s2424 = scalar_select %p2423, %s19, 1
      %p2425 = scmp.lt.s32.totalorder %s2422, 1
      %s2426 = scalar_select %p2425, %s2422, 1
      %s2427 = smul.addr %s2426, 4
      %s2428 = smul.addr %s2424, 8
      %s2429 = sadd.s32 %s2427, %s2428
      %s2430 = smul.addr %s2429, 8
      %s2431 = scalar_lea.vmem %s3, %s2430
      // Predicated region
      $region41: #{_lambda_.8} parent=31 // pred_check
        %p2432 = pneg %p130
      $region42: #{_lambda_.8} parent=31 // pred_check_branch
        %2434 = sbr.rel (%p2432) target = $region44
      $region43: #{_lambda_.8} parent=31 // pred_region
        %s2435 = smul.u32 2, %s20
      $region44: #{_lambda_.8} parent=31 // pred_fallthru
        _
    $region32: #{_lambda_.8} parent=5 // pred_fallthru
      _
    %p2436 = scmp.le.s32.totalorder 2, %s9
    // Predicated region
    $region45: #{_lambda_.8} parent=5 // pred_check
      %p2437 = pneg %p2436
    $region46: #{_lambda_.8} parent=5 // pred_check_branch
      %2439 = sbr.rel (%p2437) target = $region48
    $region47: #{_lambda_.8} parent=5 // pred_region
      %s2440 = ssub.s32 %s9, 2
      // Predicated region
      $region49: #{_lambda_.8} parent=47 // pred_check
        %p2441 = pneg %p136
      $region50: #{_lambda_.8} parent=47 // pred_check_branch
        %2443 = sbr.rel (%p2441) target = $region52
      $region51: #{_lambda_.8} parent=47 // pred_region
        %s2444 = smul.u32 2, %s23
        %p2445 = scmp.lt.s32.totalorder %s22, 1
        %s2446 = scalar_select %p2445, %s22, 1
        %p2447 = scmp.lt.s32.totalorder %s2444, 1
        %s2448 = scalar_select %p2447, %s2444, 1
        %s2449 = smul.addr %s2448, 4
        %s2450 = smul.addr %s2446, 8
        %s2451 = sadd.s32 %s2449, %s2450
        %s2452 = smul.addr %s2451, 8
        %s2453 = scalar_lea.vmem %s3, %s2452
      $region52: #{_lambda_.8} parent=47 // pred_fallthru
        _
    $region48: #{_lambda_.8} parent=5 // pred_fallthru
      _
  $region6: #{_lambda_.8} parent=0 // loop_footer
    %s13 = sadd.s32 1, %s9
  $region7: #{_lambda_.8} parent=0 // loop_footer_branch
    %8 = sbr.rel target = $region3
  $region8: #{_lambda_.8} parent=0 // loop_exit
    _

</llo_original>
